<compile_context>
chip_gen: v6e
topology: v6e:2x2x1
jax: 0.10.0
libtpu: 0.0.40
codegen_flags: <defaults>
</compile_context>

<pallas_src>
import math

import jax
import jax.numpy as jnp
from jax.experimental import pallas as pl
from jax.experimental.pallas import tpu as pltpu

# ----------------------------- config (small) -------------------------------
IMG = 16            # 3D volume side (D = H = W)
IN_CH = 1           # input channels
PATCH = 4           # cubic patch size
HIDDEN = 32         # config.hidden_size
HEADS = 4           # config.transformer.num_heads
HEAD_DIM = HIDDEN // HEADS
MLP_DIM = 64        # config.transformer.mlp_dim
LAYERS = 2          # config.transformer.num_layers
NPATCH = (IMG // PATCH) ** 3          # 64 tokens
PDIM = IN_CH * PATCH ** 3             # flattened patch dim = 64

_PER_LAYER = 12  # ln1_g, ln1_b, w_qkv, b_qkv, wo, bo, ln2_g, ln2_b, w1, b1, w2, b2


# --------------------------- in-kernel helpers --------------------------------
def _layernorm(x, g, b, eps):
    mean = jnp.mean(x, axis=-1, keepdims=True)
    xc = x - mean
    var = jnp.mean(xc * xc, axis=-1, keepdims=True)
    return xc * jax.lax.rsqrt(var + eps) * g + b


def _gelu_exact(x):
    # Exact erf-GELU, matching PyTorch nn.GELU default used by the reference.
    return 0.5 * x * (1.0 + jax.lax.erf(x * (1.0 / math.sqrt(2.0))))


# ------------------------------ fused kernel ----------------------------------
def _encoder_kernel(*refs):
    # refs layout (matches the wrapper's argument order):
    #   [0] patches (1, NPATCH, PDIM)      -- this batch element's patch rows
    #   [1] pos     (1, NPATCH, HIDDEN)
    #   [2] patch_w (PDIM, HIDDEN)   [3] patch_b (1, HIDDEN)
    #   [4 .. 4+LAYERS*_PER_LAYER)   per-layer weights
    #   [-5..-2] enc_ln_g, enc_ln_b, norm1_g, norm1_b  (each (1, HIDDEN))
    #   [-1] out (1, NPATCH, HIDDEN)
    x_ref, pos_ref, pw_ref, pb_ref = refs[0:4]
    layer_refs = refs[4:4 + LAYERS * _PER_LAYER]
    enc_g, enc_b, n1_g, n1_b = refs[4 + LAYERS * _PER_LAYER:8 + LAYERS * _PER_LAYER]
    out_ref = refs[-1]

    scale = 1.0 / math.sqrt(HEAD_DIM)

    # ---- patch embedding (Conv3d with kernel==stride -> matmul) + pos emb ----
    xp = x_ref[0].astype(jnp.float32)                               # (N, PDIM)
    h = jnp.dot(xp, pw_ref[...], preferred_element_type=jnp.float32) + pb_ref[...]
    h = h + pos_ref[0].astype(jnp.float32)                          # (N, HIDDEN)
    # Dropout: eval mode -> identity.

    # ---- transformer encoder blocks (pre-LN), unrolled in Python ----
    for l in range(LAYERS):
        (ln1_g, ln1_b, w_qkv, b_qkv, wo, bo,
         ln2_g, ln2_b, w1, b1, w2, b2) = layer_refs[l * _PER_LAYER:(l + 1) * _PER_LAYER]

        # fused LN1 + QKV projection (single (N,32)@(32,96) matmul)
        hn = _layernorm(h, ln1_g[...], ln1_b[...], 1e-6)
        qkv = jnp.dot(hn, w_qkv[...], preferred_element_type=jnp.float32) + b_qkv[...]
        q = qkv[:, 0 * HIDDEN:1 * HIDDEN]
        k = qkv[:, 1 * HIDDEN:2 * HIDDEN]
        v = qkv[:, 2 * HIDDEN:3 * HIDDEN]

        # multi-head softmax attention, all heads of this batch element here
        wo_v = wo[...]                                              # (HIDDEN, HIDDEN)
        attn_out = jnp.zeros((NPATCH, HIDDEN), jnp.float32) + bo[...]
        for hd in range(HEADS):
            lo, hi = hd * HEAD_DIM, (hd + 1) * HEAD_DIM
            qh, kh, vh = q[:, lo:hi], k[:, lo:hi], v[:, lo:hi]      # (N, Dh)
            s = jnp.dot(qh, kh.T, preferred_element_type=jnp.float32) * scale  # (N, N)
            s = s - jnp.max(s, axis=-1, keepdims=True)
            p = jnp.exp(s)
            p = p * pl.reciprocal(jnp.sum(p, axis=-1, keepdims=True), approx=True)
            ctx_h = jnp.dot(p, vh, preferred_element_type=jnp.float32)         # (N, Dh)
            # fold the per-head context straight into the output projection:
            # ctx @ wo == sum_h ctx_h @ wo[h*Dh:(h+1)*Dh, :]   (avoids lane concat)
            attn_out = attn_out + jnp.dot(ctx_h, wo_v[lo:hi, :],
                                          preferred_element_type=jnp.float32)
        h = h + attn_out                                            # residual

        # MLP (LN2 -> Linear -> exact GELU -> Linear) + residual
        hn = _layernorm(h, ln2_g[...], ln2_b[...], 1e-6)
        m = jnp.dot(hn, w1[...], preferred_element_type=jnp.float32) + b1[...]
        m = _gelu_exact(m)
        m = jnp.dot(m, w2[...], preferred_element_type=jnp.float32) + b2[...]
        h = h + m

    # ---- encoder LayerNorm (eps=1e-6) then Teacher.norm1 (eps=1e-5), fused ----
    h = _layernorm(h, enc_g[...], enc_b[...], 1e-6)
    h = _layernorm(h, n1_g[...], n1_b[...], 1e-5)
    out_ref[0] = h.astype(out_ref.dtype)


# ------------------------------- parameters ----------------------------------
def init_params(key):
    def nrm(k, shape, scale=0.02):
        return (scale * jax.random.normal(k, shape)).astype(jnp.float32)

    keys = iter(jax.random.split(key, 8 + LAYERS * 8))
    p = {
        # Conv3d(IN_CH, HIDDEN, kernel=stride=PATCH) flattened to a matmul:
        # PyTorch weight (HIDDEN, C, p, p, p) -> (C*p^3, HIDDEN), flatten order (C,pd,ph,pw).
        "patch_w": nrm(next(keys), (PDIM, HIDDEN)),
        "patch_b": jnp.zeros((HIDDEN,), jnp.float32),
        "pos": nrm(next(keys), (1, NPATCH, HIDDEN)),
        "enc_ln_g": jnp.ones((HIDDEN,), jnp.float32),
        "enc_ln_b": jnp.zeros((HIDDEN,), jnp.float32),
        "norm1_g": jnp.ones((HIDDEN,), jnp.float32),
        "norm1_b": jnp.zeros((HIDDEN,), jnp.float32),
        "blocks": [],
    }
    for _ in range(LAYERS):
        blk = {
            "ln1_g": jnp.ones((HIDDEN,), jnp.float32),
            "ln1_b": jnp.zeros((HIDDEN,), jnp.float32),
            "wq": nrm(next(keys), (HIDDEN, HIDDEN)),
            "bq": jnp.zeros((HIDDEN,), jnp.float32),
            "wk": nrm(next(keys), (HIDDEN, HIDDEN)),
            "bk": jnp.zeros((HIDDEN,), jnp.float32),
            "wv": nrm(next(keys), (HIDDEN, HIDDEN)),
            "bv": jnp.zeros((HIDDEN,), jnp.float32),
            "wo": nrm(next(keys), (HIDDEN, HIDDEN)),
            "bo": jnp.zeros((HIDDEN,), jnp.float32),
            "ln2_g": jnp.ones((HIDDEN,), jnp.float32),
            "ln2_b": jnp.zeros((HIDDEN,), jnp.float32),
            "w1": nrm(next(keys), (HIDDEN, MLP_DIM)),
            "b1": jnp.zeros((MLP_DIM,), jnp.float32),
            "w2": nrm(next(keys), (MLP_DIM, HIDDEN)),
            "b2": jnp.zeros((HIDDEN,), jnp.float32),
        }
        p["blocks"].append(blk)
    return p


# ------------------------------- forward --------------------------------------
def teacher_forward(x, params):
    """x: (B, C, D, H, W) float32 (PyTorch NCDHW). Returns (B, NPATCH, HIDDEN)."""
    B, C, D, H, W = x.shape
    p = PATCH
    # Conv3d(kernel==stride) patch extraction as reshape/transpose glue (no compute):
    xp = x.reshape(B, C, D // p, p, H // p, p, W // p, p)
    xp = xp.transpose(0, 2, 4, 6, 1, 3, 5, 7)           # (B, d, h, w, C, pd, ph, pw)
    xp = xp.reshape(B, NPATCH, PDIM)

    def row(a):  # 1D params as (1, N) 2D VMEM tiles
        return a.reshape(1, -1)

    weights = [params["patch_w"], row(params["patch_b"])]
    for blk in params["blocks"]:
        w_qkv = jnp.concatenate([blk["wq"], blk["wk"], blk["wv"]], axis=1)   # (32, 96)
        b_qkv = jnp.concatenate([blk["bq"], blk["bk"], blk["bv"]], axis=0)   # (96,)
        weights += [
            row(blk["ln1_g"]), row(blk["ln1_b"]), w_qkv, row(b_qkv),
            blk["wo"], row(blk["bo"]), row(blk["ln2_g"]), row(blk["ln2_b"]),
            blk["w1"], row(blk["b1"]), blk["w2"], row(blk["b2"]),
        ]
    weights += [row(params["enc_ln_g"]), row(params["enc_ln_b"]),
                row(params["norm1_g"]), row(params["norm1_b"])]

    in_specs = [
        pl.BlockSpec((1, NPATCH, PDIM), lambda b: (b, 0, 0)),      # patches (per batch)
        pl.BlockSpec((1, NPATCH, HIDDEN), lambda b: (0, 0, 0)),    # pos emb (shared)
    ]
    # Weights: full-array blocks, constant index_map -> resident across grid steps.
    in_specs += [pl.BlockSpec(w.shape, lambda b: (0, 0)) for w in weights]

    return pl.pallas_call(
        _encoder_kernel,
        out_shape=jax.ShapeDtypeStruct((B, NPATCH, HIDDEN), x.dtype),
        grid=(B,),
        in_specs=in_specs,
        out_specs=pl.BlockSpec((1, NPATCH, HIDDEN), lambda b: (b, 0, 0)),
        compiler_params=pltpu.CompilerParams(
            dimension_semantics=("parallel",)),   # v7x: one batch element per TC
    )(xp, params["pos"], *weights)


# --------------------------------- main ----------------------------------------
if __name__ == "__main__":
    key = jax.random.PRNGKey(0)
    k_x, k_p = jax.random.split(key)
    x = jax.random.normal(k_x, (2, IN_CH, IMG, IMG, IMG), dtype=jnp.float32)
    params = init_params(k_p)

    out = jax.jit(teacher_forward)(x, params)
    out = jax.block_until_ready(out)

    assert out.shape == (2, NPATCH, HIDDEN), out.shape
    assert jnp.all(jnp.isfinite(out))
    print("KERNEL_OK")
</pallas_src>

<mosaic_0001>
module attributes {stable_mosaic.version = 11 : i64} {
  func.func @_encoder_kernel(%arg0: i32, %arg1: memref<1x64x64xf32, #tpu.memory_space<vmem>>, %arg2: memref<1x64x32xf32, #tpu.memory_space<vmem>>, %arg3: memref<64x32xf32, #tpu.memory_space<vmem>>, %arg4: memref<1x32xf32, #tpu.memory_space<vmem>>, %arg5: memref<1x32xf32, #tpu.memory_space<vmem>>, %arg6: memref<1x32xf32, #tpu.memory_space<vmem>>, %arg7: memref<32x96xf32, #tpu.memory_space<vmem>>, %arg8: memref<1x96xf32, #tpu.memory_space<vmem>>, %arg9: memref<32x32xf32, #tpu.memory_space<vmem>>, %arg10: memref<1x32xf32, #tpu.memory_space<vmem>>, %arg11: memref<1x32xf32, #tpu.memory_space<vmem>>, %arg12: memref<1x32xf32, #tpu.memory_space<vmem>>, %arg13: memref<32x64xf32, #tpu.memory_space<vmem>>, %arg14: memref<1x64xf32, #tpu.memory_space<vmem>>, %arg15: memref<64x32xf32, #tpu.memory_space<vmem>>, %arg16: memref<1x32xf32, #tpu.memory_space<vmem>>, %arg17: memref<1x32xf32, #tpu.memory_space<vmem>>, %arg18: memref<1x32xf32, #tpu.memory_space<vmem>>, %arg19: memref<32x96xf32, #tpu.memory_space<vmem>>, %arg20: memref<1x96xf32, #tpu.memory_space<vmem>>, %arg21: memref<32x32xf32, #tpu.memory_space<vmem>>, %arg22: memref<1x32xf32, #tpu.memory_space<vmem>>, %arg23: memref<1x32xf32, #tpu.memory_space<vmem>>, %arg24: memref<1x32xf32, #tpu.memory_space<vmem>>, %arg25: memref<32x64xf32, #tpu.memory_space<vmem>>, %arg26: memref<1x64xf32, #tpu.memory_space<vmem>>, %arg27: memref<64x32xf32, #tpu.memory_space<vmem>>, %arg28: memref<1x32xf32, #tpu.memory_space<vmem>>, %arg29: memref<1x32xf32, #tpu.memory_space<vmem>>, %arg30: memref<1x32xf32, #tpu.memory_space<vmem>>, %arg31: memref<1x32xf32, #tpu.memory_space<vmem>>, %arg32: memref<1x32xf32, #tpu.memory_space<vmem>>, %arg33: memref<1x64x32xf32, #tpu.memory_space<vmem>>) attributes {dimension_semantics = [#tpu.dimension_semantics<parallel>], iteration_bounds = array<i64: 2>, scalar_prefetch = 0 : i64, scratch_operands = 0 : i64, tpu.core_type = #tpu.core_type<tc>, window_params = [{transform_indices = @transform_0, window_bounds = array<i64: 1, 64, 64>}, {pipeline_mode = #tpu.pipeline_mode<synchronous>, transform_indices = @transform_1, window_bounds = array<i64: 1, 64, 32>}, {pipeline_mode = #tpu.pipeline_mode<synchronous>, transform_indices = @transform_2, window_bounds = array<i64: 64, 32>}, {pipeline_mode = #tpu.pipeline_mode<synchronous>, transform_indices = @transform_3, window_bounds = array<i64: 1, 32>}, {pipeline_mode = #tpu.pipeline_mode<synchronous>, transform_indices = @transform_4, window_bounds = array<i64: 1, 32>}, {pipeline_mode = #tpu.pipeline_mode<synchronous>, transform_indices = @transform_5, window_bounds = array<i64: 1, 32>}, {pipeline_mode = #tpu.pipeline_mode<synchronous>, transform_indices = @transform_6, window_bounds = array<i64: 32, 96>}, {pipeline_mode = #tpu.pipeline_mode<synchronous>, transform_indices = @transform_7, window_bounds = array<i64: 1, 96>}, {pipeline_mode = #tpu.pipeline_mode<synchronous>, transform_indices = @transform_8, window_bounds = array<i64: 32, 32>}, {pipeline_mode = #tpu.pipeline_mode<synchronous>, transform_indices = @transform_9, window_bounds = array<i64: 1, 32>}, {pipeline_mode = #tpu.pipeline_mode<synchronous>, transform_indices = @transform_10, window_bounds = array<i64: 1, 32>}, {pipeline_mode = #tpu.pipeline_mode<synchronous>, transform_indices = @transform_11, window_bounds = array<i64: 1, 32>}, {pipeline_mode = #tpu.pipeline_mode<synchronous>, transform_indices = @transform_12, window_bounds = array<i64: 32, 64>}, {pipeline_mode = #tpu.pipeline_mode<synchronous>, transform_indices = @transform_13, window_bounds = array<i64: 1, 64>}, {pipeline_mode = #tpu.pipeline_mode<synchronous>, transform_indices = @transform_14, window_bounds = array<i64: 64, 32>}, {pipeline_mode = #tpu.pipeline_mode<synchronous>, transform_indices = @transform_15, window_bounds = array<i64: 1, 32>}, {pipeline_mode = #tpu.pipeline_mode<synchronous>, transform_indices = @transform_16, window_bounds = array<i64: 1, 32>}, {pipeline_mode = #tpu.pipeline_mode<synchronous>, transform_indices = @transform_17, window_bounds = array<i64: 1, 32>}, {pipeline_mode = #tpu.pipeline_mode<synchronous>, transform_indices = @transform_18, window_bounds = array<i64: 32, 96>}, {pipeline_mode = #tpu.pipeline_mode<synchronous>, transform_indices = @transform_19, window_bounds = array<i64: 1, 96>}, {pipeline_mode = #tpu.pipeline_mode<synchronous>, transform_indices = @transform_20, window_bounds = array<i64: 32, 32>}, {pipeline_mode = #tpu.pipeline_mode<synchronous>, transform_indices = @transform_21, window_bounds = array<i64: 1, 32>}, {pipeline_mode = #tpu.pipeline_mode<synchronous>, transform_indices = @transform_22, window_bounds = array<i64: 1, 32>}, {pipeline_mode = #tpu.pipeline_mode<synchronous>, transform_indices = @transform_23, window_bounds = array<i64: 1, 32>}, {pipeline_mode = #tpu.pipeline_mode<synchronous>, transform_indices = @transform_24, window_bounds = array<i64: 32, 64>}, {pipeline_mode = #tpu.pipeline_mode<synchronous>, transform_indices = @transform_25, window_bounds = array<i64: 1, 64>}, {pipeline_mode = #tpu.pipeline_mode<synchronous>, transform_indices = @transform_26, window_bounds = array<i64: 64, 32>}, {pipeline_mode = #tpu.pipeline_mode<synchronous>, transform_indices = @transform_27, window_bounds = array<i64: 1, 32>}, {pipeline_mode = #tpu.pipeline_mode<synchronous>, transform_indices = @transform_28, window_bounds = array<i64: 1, 32>}, {pipeline_mode = #tpu.pipeline_mode<synchronous>, transform_indices = @transform_29, window_bounds = array<i64: 1, 32>}, {pipeline_mode = #tpu.pipeline_mode<synchronous>, transform_indices = @transform_30, window_bounds = array<i64: 1, 32>}, {pipeline_mode = #tpu.pipeline_mode<synchronous>, transform_indices = @transform_31, window_bounds = array<i64: 1, 32>}, {transform_indices = @transform_32, window_bounds = array<i64: 1, 64, 32>}]} {
    %c0 = arith.constant 0 : index
    %c0_0 = arith.constant 0 : index
    %c0_1 = arith.constant 0 : index
    %0 = vector.load %arg1[%c0, %c0_0, %c0_1] : memref<1x64x64xf32, #tpu.memory_space<vmem>>, vector<1x64x64xf32>
    %1 = vector.shape_cast %0 : vector<1x64x64xf32> to vector<64x64xf32>
    %c0_2 = arith.constant 0 : index
    %c0_3 = arith.constant 0 : index
    %2 = vector.load %arg3[%c0_2, %c0_3] : memref<64x32xf32, #tpu.memory_space<vmem>>, vector<64x32xf32>
    %cst = arith.constant dense<0.000000e+00> : vector<64x32xf32>
    %3 = tpu.matmul %1, %2, %cst {dimension_numbers = #tpu.dot_dimension_numbers<[1], [0], [0], [1], [0, 0, 1, 1], [], []>} : vector<64x64xf32>, vector<64x32xf32>, vector<64x32xf32> -> vector<64x32xf32>
    %c0_4 = arith.constant 0 : index
    %c0_5 = arith.constant 0 : index
    %4 = vector.load %arg4[%c0_4, %c0_5] : memref<1x32xf32, #tpu.memory_space<vmem>>, vector<1x32xf32>
    %5 = vector.broadcast %4 : vector<1x32xf32> to vector<64x32xf32>
    %6 = arith.addf %3, %5 : vector<64x32xf32>
    %c0_6 = arith.constant 0 : index
    %c0_7 = arith.constant 0 : index
    %c0_8 = arith.constant 0 : index
    %7 = vector.load %arg2[%c0_6, %c0_7, %c0_8] : memref<1x64x32xf32, #tpu.memory_space<vmem>>, vector<1x64x32xf32>
    %8 = vector.shape_cast %7 : vector<1x64x32xf32> to vector<64x32xf32>
    %9 = arith.addf %6, %8 : vector<64x32xf32>
    %c0_9 = arith.constant 0 : index
    %c0_10 = arith.constant 0 : index
    %10 = vector.load %arg5[%c0_9, %c0_10] : memref<1x32xf32, #tpu.memory_space<vmem>>, vector<1x32xf32>
    %c0_11 = arith.constant 0 : index
    %c0_12 = arith.constant 0 : index
    %11 = vector.load %arg6[%c0_11, %c0_12] : memref<1x32xf32, #tpu.memory_space<vmem>>, vector<1x32xf32>
    %cst_13 = arith.constant dense<0.000000e+00> : vector<64xf32>
    %12 = vector.multi_reduction <add>, %9, %cst_13 [1] : vector<64x32xf32> to vector<64xf32>
    %13 = vector.shape_cast %12 : vector<64xf32> to vector<64x1xf32>
    %cst_14 = arith.constant 3.200000e+01 : f32
    %14 = vector.broadcast %cst_14 : f32 to vector<64x1xf32>
    %15 = arith.divf %13, %14 : vector<64x1xf32>
    %16 = vector.broadcast %15 : vector<64x1xf32> to vector<64x32xf32>
    %17 = arith.subf %9, %16 : vector<64x32xf32>
    %18 = arith.mulf %17, %17 : vector<64x32xf32>
    %cst_15 = arith.constant dense<0.000000e+00> : vector<64xf32>
    %19 = vector.multi_reduction <add>, %18, %cst_15 [1] : vector<64x32xf32> to vector<64xf32>
    %20 = vector.shape_cast %19 : vector<64xf32> to vector<64x1xf32>
    %cst_16 = arith.constant 3.200000e+01 : f32
    %21 = vector.broadcast %cst_16 : f32 to vector<64x1xf32>
    %22 = arith.divf %20, %21 : vector<64x1xf32>
    %cst_17 = arith.constant 9.99999997E-7 : f32
    %23 = vector.broadcast %cst_17 : f32 to vector<64x1xf32>
    %24 = arith.addf %22, %23 : vector<64x1xf32>
    %25 = math.rsqrt %24 : vector<64x1xf32>
    %26 = vector.broadcast %25 : vector<64x1xf32> to vector<64x32xf32>
    %27 = arith.mulf %17, %26 : vector<64x32xf32>
    %28 = vector.broadcast %10 : vector<1x32xf32> to vector<64x32xf32>
    %29 = arith.mulf %27, %28 : vector<64x32xf32>
    %30 = vector.broadcast %11 : vector<1x32xf32> to vector<64x32xf32>
    %31 = arith.addf %29, %30 : vector<64x32xf32>
    %c0_18 = arith.constant 0 : index
    %c0_19 = arith.constant 0 : index
    %32 = vector.load %arg7[%c0_18, %c0_19] : memref<32x96xf32, #tpu.memory_space<vmem>>, vector<32x96xf32>
    %cst_20 = arith.constant dense<0.000000e+00> : vector<64x96xf32>
    %33 = tpu.matmul %31, %32, %cst_20 {dimension_numbers = #tpu.dot_dimension_numbers<[1], [0], [0], [1], [0, 0, 1, 1], [], []>} : vector<64x32xf32>, vector<32x96xf32>, vector<64x96xf32> -> vector<64x96xf32>
    %c0_21 = arith.constant 0 : index
    %c0_22 = arith.constant 0 : index
    %34 = vector.load %arg8[%c0_21, %c0_22] : memref<1x96xf32, #tpu.memory_space<vmem>>, vector<1x96xf32>
    %35 = vector.broadcast %34 : vector<1x96xf32> to vector<64x96xf32>
    %36 = arith.addf %33, %35 : vector<64x96xf32>
    %37 = vector.extract_strided_slice %36 {offsets = [0, 0], sizes = [64, 32], strides = [1, 1]} : vector<64x96xf32> to vector<64x32xf32>
    %38 = vector.extract_strided_slice %36 {offsets = [0, 32], sizes = [64, 32], strides = [1, 1]} : vector<64x96xf32> to vector<64x32xf32>
    %39 = vector.extract_strided_slice %36 {offsets = [0, 64], sizes = [64, 32], strides = [1, 1]} : vector<64x96xf32> to vector<64x32xf32>
    %c0_23 = arith.constant 0 : index
    %c0_24 = arith.constant 0 : index
    %40 = vector.load %arg9[%c0_23, %c0_24] : memref<32x32xf32, #tpu.memory_space<vmem>>, vector<32x32xf32>
    %cst_25 = arith.constant 0.000000e+00 : f32
    %41 = vector.broadcast %cst_25 : f32 to vector<64x32xf32>
    %c0_26 = arith.constant 0 : index
    %c0_27 = arith.constant 0 : index
    %42 = vector.load %arg10[%c0_26, %c0_27] : memref<1x32xf32, #tpu.memory_space<vmem>>, vector<1x32xf32>
    %43 = vector.broadcast %42 : vector<1x32xf32> to vector<64x32xf32>
    %44 = arith.addf %41, %43 : vector<64x32xf32>
    %45 = vector.extract_strided_slice %37 {offsets = [0, 0], sizes = [64, 8], strides = [1, 1]} : vector<64x32xf32> to vector<64x8xf32>
    %46 = vector.extract_strided_slice %38 {offsets = [0, 0], sizes = [64, 8], strides = [1, 1]} : vector<64x32xf32> to vector<64x8xf32>
    %47 = vector.extract_strided_slice %39 {offsets = [0, 0], sizes = [64, 8], strides = [1, 1]} : vector<64x32xf32> to vector<64x8xf32>
    %48 = tpu.transpose %46, [1, 0] : vector<64x8xf32> -> vector<8x64xf32>
    %cst_28 = arith.constant dense<0.000000e+00> : vector<64x64xf32>
    %49 = tpu.matmul %45, %48, %cst_28 {dimension_numbers = #tpu.dot_dimension_numbers<[1], [0], [0], [1], [0, 0, 1, 1], [], []>} : vector<64x8xf32>, vector<8x64xf32>, vector<64x64xf32> -> vector<64x64xf32>
    %cst_29 = arith.constant 0.353553385 : f32
    %50 = vector.broadcast %cst_29 : f32 to vector<64x64xf32>
    %51 = arith.mulf %49, %50 : vector<64x64xf32>
    %cst_30 = arith.constant dense<0xFF800000> : vector<64xf32>
    %52 = vector.multi_reduction <maximumf>, %51, %cst_30 [1] : vector<64x64xf32> to vector<64xf32>
    %53 = vector.shape_cast %52 : vector<64xf32> to vector<64x1xf32>
    %54 = vector.broadcast %53 : vector<64x1xf32> to vector<64x64xf32>
    %55 = arith.subf %51, %54 : vector<64x64xf32>
    %56 = math.exp %55 : vector<64x64xf32>
    %cst_31 = arith.constant dense<0.000000e+00> : vector<64xf32>
    %57 = vector.multi_reduction <add>, %56, %cst_31 [1] : vector<64x64xf32> to vector<64xf32>
    %58 = vector.shape_cast %57 : vector<64xf32> to vector<64x1xf32>
    %59 = tpu.reciprocal %58 {approx = true} : vector<64x1xf32> -> vector<64x1xf32>
    %60 = vector.broadcast %59 : vector<64x1xf32> to vector<64x64xf32>
    %61 = arith.mulf %56, %60 : vector<64x64xf32>
    %cst_32 = arith.constant dense<0.000000e+00> : vector<64x8xf32>
    %62 = tpu.matmul %61, %47, %cst_32 {dimension_numbers = #tpu.dot_dimension_numbers<[1], [0], [0], [1], [0, 0, 1, 1], [], []>} : vector<64x64xf32>, vector<64x8xf32>, vector<64x8xf32> -> vector<64x8xf32>
    %63 = vector.extract_strided_slice %40 {offsets = [0, 0], sizes = [8, 32], strides = [1, 1]} : vector<32x32xf32> to vector<8x32xf32>
    %cst_33 = arith.constant dense<0.000000e+00> : vector<64x32xf32>
    %64 = tpu.matmul %62, %63, %cst_33 {dimension_numbers = #tpu.dot_dimension_numbers<[1], [0], [0], [1], [0, 0, 1, 1], [], []>} : vector<64x8xf32>, vector<8x32xf32>, vector<64x32xf32> -> vector<64x32xf32>
    %65 = arith.addf %44, %64 : vector<64x32xf32>
    %66 = vector.extract_strided_slice %37 {offsets = [0, 8], sizes = [64, 8], strides = [1, 1]} : vector<64x32xf32> to vector<64x8xf32>
    %67 = vector.extract_strided_slice %38 {offsets = [0, 8], sizes = [64, 8], strides = [1, 1]} : vector<64x32xf32> to vector<64x8xf32>
    %68 = vector.extract_strided_slice %39 {offsets = [0, 8], sizes = [64, 8], strides = [1, 1]} : vector<64x32xf32> to vector<64x8xf32>
    %69 = tpu.transpose %67, [1, 0] : vector<64x8xf32> -> vector<8x64xf32>
    %cst_34 = arith.constant dense<0.000000e+00> : vector<64x64xf32>
    %70 = tpu.matmul %66, %69, %cst_34 {dimension_numbers = #tpu.dot_dimension_numbers<[1], [0], [0], [1], [0, 0, 1, 1], [], []>} : vector<64x8xf32>, vector<8x64xf32>, vector<64x64xf32> -> vector<64x64xf32>
    %cst_35 = arith.constant 0.353553385 : f32
    %71 = vector.broadcast %cst_35 : f32 to vector<64x64xf32>
    %72 = arith.mulf %70, %71 : vector<64x64xf32>
    %cst_36 = arith.constant dense<0xFF800000> : vector<64xf32>
    %73 = vector.multi_reduction <maximumf>, %72, %cst_36 [1] : vector<64x64xf32> to vector<64xf32>
    %74 = vector.shape_cast %73 : vector<64xf32> to vector<64x1xf32>
    %75 = vector.broadcast %74 : vector<64x1xf32> to vector<64x64xf32>
    %76 = arith.subf %72, %75 : vector<64x64xf32>
    %77 = math.exp %76 : vector<64x64xf32>
    %cst_37 = arith.constant dense<0.000000e+00> : vector<64xf32>
    %78 = vector.multi_reduction <add>, %77, %cst_37 [1] : vector<64x64xf32> to vector<64xf32>
    %79 = vector.shape_cast %78 : vector<64xf32> to vector<64x1xf32>
    %80 = tpu.reciprocal %79 {approx = true} : vector<64x1xf32> -> vector<64x1xf32>
    %81 = vector.broadcast %80 : vector<64x1xf32> to vector<64x64xf32>
    %82 = arith.mulf %77, %81 : vector<64x64xf32>
    %cst_38 = arith.constant dense<0.000000e+00> : vector<64x8xf32>
    %83 = tpu.matmul %82, %68, %cst_38 {dimension_numbers = #tpu.dot_dimension_numbers<[1], [0], [0], [1], [0, 0, 1, 1], [], []>} : vector<64x64xf32>, vector<64x8xf32>, vector<64x8xf32> -> vector<64x8xf32>
    %84 = vector.extract_strided_slice %40 {offsets = [8, 0], sizes = [8, 32], strides = [1, 1]} : vector<32x32xf32> to vector<8x32xf32>
    %cst_39 = arith.constant dense<0.000000e+00> : vector<64x32xf32>
    %85 = tpu.matmul %83, %84, %cst_39 {dimension_numbers = #tpu.dot_dimension_numbers<[1], [0], [0], [1], [0, 0, 1, 1], [], []>} : vector<64x8xf32>, vector<8x32xf32>, vector<64x32xf32> -> vector<64x32xf32>
    %86 = arith.addf %65, %85 : vector<64x32xf32>
    %87 = vector.extract_strided_slice %37 {offsets = [0, 16], sizes = [64, 8], strides = [1, 1]} : vector<64x32xf32> to vector<64x8xf32>
    %88 = vector.extract_strided_slice %38 {offsets = [0, 16], sizes = [64, 8], strides = [1, 1]} : vector<64x32xf32> to vector<64x8xf32>
    %89 = vector.extract_strided_slice %39 {offsets = [0, 16], sizes = [64, 8], strides = [1, 1]} : vector<64x32xf32> to vector<64x8xf32>
    %90 = tpu.transpose %88, [1, 0] : vector<64x8xf32> -> vector<8x64xf32>
    %cst_40 = arith.constant dense<0.000000e+00> : vector<64x64xf32>
    %91 = tpu.matmul %87, %90, %cst_40 {dimension_numbers = #tpu.dot_dimension_numbers<[1], [0], [0], [1], [0, 0, 1, 1], [], []>} : vector<64x8xf32>, vector<8x64xf32>, vector<64x64xf32> -> vector<64x64xf32>
    %cst_41 = arith.constant 0.353553385 : f32
    %92 = vector.broadcast %cst_41 : f32 to vector<64x64xf32>
    %93 = arith.mulf %91, %92 : vector<64x64xf32>
    %cst_42 = arith.constant dense<0xFF800000> : vector<64xf32>
    %94 = vector.multi_reduction <maximumf>, %93, %cst_42 [1] : vector<64x64xf32> to vector<64xf32>
    %95 = vector.shape_cast %94 : vector<64xf32> to vector<64x1xf32>
    %96 = vector.broadcast %95 : vector<64x1xf32> to vector<64x64xf32>
    %97 = arith.subf %93, %96 : vector<64x64xf32>
    %98 = math.exp %97 : vector<64x64xf32>
    %cst_43 = arith.constant dense<0.000000e+00> : vector<64xf32>
    %99 = vector.multi_reduction <add>, %98, %cst_43 [1] : vector<64x64xf32> to vector<64xf32>
    %100 = vector.shape_cast %99 : vector<64xf32> to vector<64x1xf32>
    %101 = tpu.reciprocal %100 {approx = true} : vector<64x1xf32> -> vector<64x1xf32>
    %102 = vector.broadcast %101 : vector<64x1xf32> to vector<64x64xf32>
    %103 = arith.mulf %98, %102 : vector<64x64xf32>
    %cst_44 = arith.constant dense<0.000000e+00> : vector<64x8xf32>
    %104 = tpu.matmul %103, %89, %cst_44 {dimension_numbers = #tpu.dot_dimension_numbers<[1], [0], [0], [1], [0, 0, 1, 1], [], []>} : vector<64x64xf32>, vector<64x8xf32>, vector<64x8xf32> -> vector<64x8xf32>
    %105 = vector.extract_strided_slice %40 {offsets = [16, 0], sizes = [8, 32], strides = [1, 1]} : vector<32x32xf32> to vector<8x32xf32>
    %cst_45 = arith.constant dense<0.000000e+00> : vector<64x32xf32>
    %106 = tpu.matmul %104, %105, %cst_45 {dimension_numbers = #tpu.dot_dimension_numbers<[1], [0], [0], [1], [0, 0, 1, 1], [], []>} : vector<64x8xf32>, vector<8x32xf32>, vector<64x32xf32> -> vector<64x32xf32>
    %107 = arith.addf %86, %106 : vector<64x32xf32>
    %108 = vector.extract_strided_slice %37 {offsets = [0, 24], sizes = [64, 8], strides = [1, 1]} : vector<64x32xf32> to vector<64x8xf32>
    %109 = vector.extract_strided_slice %38 {offsets = [0, 24], sizes = [64, 8], strides = [1, 1]} : vector<64x32xf32> to vector<64x8xf32>
    %110 = vector.extract_strided_slice %39 {offsets = [0, 24], sizes = [64, 8], strides = [1, 1]} : vector<64x32xf32> to vector<64x8xf32>
    %111 = tpu.transpose %109, [1, 0] : vector<64x8xf32> -> vector<8x64xf32>
    %cst_46 = arith.constant dense<0.000000e+00> : vector<64x64xf32>
    %112 = tpu.matmul %108, %111, %cst_46 {dimension_numbers = #tpu.dot_dimension_numbers<[1], [0], [0], [1], [0, 0, 1, 1], [], []>} : vector<64x8xf32>, vector<8x64xf32>, vector<64x64xf32> -> vector<64x64xf32>
    %cst_47 = arith.constant 0.353553385 : f32
    %113 = vector.broadcast %cst_47 : f32 to vector<64x64xf32>
    %114 = arith.mulf %112, %113 : vector<64x64xf32>
    %cst_48 = arith.constant dense<0xFF800000> : vector<64xf32>
    %115 = vector.multi_reduction <maximumf>, %114, %cst_48 [1] : vector<64x64xf32> to vector<64xf32>
    %116 = vector.shape_cast %115 : vector<64xf32> to vector<64x1xf32>
    %117 = vector.broadcast %116 : vector<64x1xf32> to vector<64x64xf32>
    %118 = arith.subf %114, %117 : vector<64x64xf32>
    %119 = math.exp %118 : vector<64x64xf32>
    %cst_49 = arith.constant dense<0.000000e+00> : vector<64xf32>
    %120 = vector.multi_reduction <add>, %119, %cst_49 [1] : vector<64x64xf32> to vector<64xf32>
    %121 = vector.shape_cast %120 : vector<64xf32> to vector<64x1xf32>
    %122 = tpu.reciprocal %121 {approx = true} : vector<64x1xf32> -> vector<64x1xf32>
    %123 = vector.broadcast %122 : vector<64x1xf32> to vector<64x64xf32>
    %124 = arith.mulf %119, %123 : vector<64x64xf32>
    %cst_50 = arith.constant dense<0.000000e+00> : vector<64x8xf32>
    %125 = tpu.matmul %124, %110, %cst_50 {dimension_numbers = #tpu.dot_dimension_numbers<[1], [0], [0], [1], [0, 0, 1, 1], [], []>} : vector<64x64xf32>, vector<64x8xf32>, vector<64x8xf32> -> vector<64x8xf32>
    %126 = vector.extract_strided_slice %40 {offsets = [24, 0], sizes = [8, 32], strides = [1, 1]} : vector<32x32xf32> to vector<8x32xf32>
    %cst_51 = arith.constant dense<0.000000e+00> : vector<64x32xf32>
    %127 = tpu.matmul %125, %126, %cst_51 {dimension_numbers = #tpu.dot_dimension_numbers<[1], [0], [0], [1], [0, 0, 1, 1], [], []>} : vector<64x8xf32>, vector<8x32xf32>, vector<64x32xf32> -> vector<64x32xf32>
    %128 = arith.addf %107, %127 : vector<64x32xf32>
    %129 = arith.addf %9, %128 : vector<64x32xf32>
    %c0_52 = arith.constant 0 : index
    %c0_53 = arith.constant 0 : index
    %130 = vector.load %arg11[%c0_52, %c0_53] : memref<1x32xf32, #tpu.memory_space<vmem>>, vector<1x32xf32>
    %c0_54 = arith.constant 0 : index
    %c0_55 = arith.constant 0 : index
    %131 = vector.load %arg12[%c0_54, %c0_55] : memref<1x32xf32, #tpu.memory_space<vmem>>, vector<1x32xf32>
    %cst_56 = arith.constant dense<0.000000e+00> : vector<64xf32>
    %132 = vector.multi_reduction <add>, %129, %cst_56 [1] : vector<64x32xf32> to vector<64xf32>
    %133 = vector.shape_cast %132 : vector<64xf32> to vector<64x1xf32>
    %cst_57 = arith.constant 3.200000e+01 : f32
    %134 = vector.broadcast %cst_57 : f32 to vector<64x1xf32>
    %135 = arith.divf %133, %134 : vector<64x1xf32>
    %136 = vector.broadcast %135 : vector<64x1xf32> to vector<64x32xf32>
    %137 = arith.subf %129, %136 : vector<64x32xf32>
    %138 = arith.mulf %137, %137 : vector<64x32xf32>
    %cst_58 = arith.constant dense<0.000000e+00> : vector<64xf32>
    %139 = vector.multi_reduction <add>, %138, %cst_58 [1] : vector<64x32xf32> to vector<64xf32>
    %140 = vector.shape_cast %139 : vector<64xf32> to vector<64x1xf32>
    %cst_59 = arith.constant 3.200000e+01 : f32
    %141 = vector.broadcast %cst_59 : f32 to vector<64x1xf32>
    %142 = arith.divf %140, %141 : vector<64x1xf32>
    %cst_60 = arith.constant 9.99999997E-7 : f32
    %143 = vector.broadcast %cst_60 : f32 to vector<64x1xf32>
    %144 = arith.addf %142, %143 : vector<64x1xf32>
    %145 = math.rsqrt %144 : vector<64x1xf32>
    %146 = vector.broadcast %145 : vector<64x1xf32> to vector<64x32xf32>
    %147 = arith.mulf %137, %146 : vector<64x32xf32>
    %148 = vector.broadcast %130 : vector<1x32xf32> to vector<64x32xf32>
    %149 = arith.mulf %147, %148 : vector<64x32xf32>
    %150 = vector.broadcast %131 : vector<1x32xf32> to vector<64x32xf32>
    %151 = arith.addf %149, %150 : vector<64x32xf32>
    %c0_61 = arith.constant 0 : index
    %c0_62 = arith.constant 0 : index
    %152 = vector.load %arg13[%c0_61, %c0_62] : memref<32x64xf32, #tpu.memory_space<vmem>>, vector<32x64xf32>
    %cst_63 = arith.constant dense<0.000000e+00> : vector<64x64xf32>
    %153 = tpu.matmul %151, %152, %cst_63 {dimension_numbers = #tpu.dot_dimension_numbers<[1], [0], [0], [1], [0, 0, 1, 1], [], []>} : vector<64x32xf32>, vector<32x64xf32>, vector<64x64xf32> -> vector<64x64xf32>
    %c0_64 = arith.constant 0 : index
    %c0_65 = arith.constant 0 : index
    %154 = vector.load %arg14[%c0_64, %c0_65] : memref<1x64xf32, #tpu.memory_space<vmem>>, vector<1x64xf32>
    %155 = vector.broadcast %154 : vector<1x64xf32> to vector<64x64xf32>
    %156 = arith.addf %153, %155 : vector<64x64xf32>
    %cst_66 = arith.constant 5.000000e-01 : f32
    %157 = vector.broadcast %cst_66 : f32 to vector<64x64xf32>
    %158 = arith.mulf %157, %156 : vector<64x64xf32>
    %cst_67 = arith.constant 0.707106769 : f32
    %159 = vector.broadcast %cst_67 : f32 to vector<64x64xf32>
    %160 = arith.mulf %156, %159 : vector<64x64xf32>
    %161 = math.erf %160 : vector<64x64xf32>
    %cst_68 = arith.constant 1.000000e+00 : f32
    %162 = vector.broadcast %cst_68 : f32 to vector<64x64xf32>
    %163 = arith.addf %162, %161 : vector<64x64xf32>
    %164 = arith.mulf %158, %163 : vector<64x64xf32>
    %c0_69 = arith.constant 0 : index
    %c0_70 = arith.constant 0 : index
    %165 = vector.load %arg15[%c0_69, %c0_70] : memref<64x32xf32, #tpu.memory_space<vmem>>, vector<64x32xf32>
    %cst_71 = arith.constant dense<0.000000e+00> : vector<64x32xf32>
    %166 = tpu.matmul %164, %165, %cst_71 {dimension_numbers = #tpu.dot_dimension_numbers<[1], [0], [0], [1], [0, 0, 1, 1], [], []>} : vector<64x64xf32>, vector<64x32xf32>, vector<64x32xf32> -> vector<64x32xf32>
    %c0_72 = arith.constant 0 : index
    %c0_73 = arith.constant 0 : index
    %167 = vector.load %arg16[%c0_72, %c0_73] : memref<1x32xf32, #tpu.memory_space<vmem>>, vector<1x32xf32>
    %168 = vector.broadcast %167 : vector<1x32xf32> to vector<64x32xf32>
    %169 = arith.addf %166, %168 : vector<64x32xf32>
    %170 = arith.addf %129, %169 : vector<64x32xf32>
    %c0_74 = arith.constant 0 : index
    %c0_75 = arith.constant 0 : index
    %171 = vector.load %arg17[%c0_74, %c0_75] : memref<1x32xf32, #tpu.memory_space<vmem>>, vector<1x32xf32>
    %c0_76 = arith.constant 0 : index
    %c0_77 = arith.constant 0 : index
    %172 = vector.load %arg18[%c0_76, %c0_77] : memref<1x32xf32, #tpu.memory_space<vmem>>, vector<1x32xf32>
    %cst_78 = arith.constant dense<0.000000e+00> : vector<64xf32>
    %173 = vector.multi_reduction <add>, %170, %cst_78 [1] : vector<64x32xf32> to vector<64xf32>
    %174 = vector.shape_cast %173 : vector<64xf32> to vector<64x1xf32>
    %cst_79 = arith.constant 3.200000e+01 : f32
    %175 = vector.broadcast %cst_79 : f32 to vector<64x1xf32>
    %176 = arith.divf %174, %175 : vector<64x1xf32>
    %177 = vector.broadcast %176 : vector<64x1xf32> to vector<64x32xf32>
    %178 = arith.subf %170, %177 : vector<64x32xf32>
    %179 = arith.mulf %178, %178 : vector<64x32xf32>
    %cst_80 = arith.constant dense<0.000000e+00> : vector<64xf32>
    %180 = vector.multi_reduction <add>, %179, %cst_80 [1] : vector<64x32xf32> to vector<64xf32>
    %181 = vector.shape_cast %180 : vector<64xf32> to vector<64x1xf32>
    %cst_81 = arith.constant 3.200000e+01 : f32
    %182 = vector.broadcast %cst_81 : f32 to vector<64x1xf32>
    %183 = arith.divf %181, %182 : vector<64x1xf32>
    %cst_82 = arith.constant 9.99999997E-7 : f32
    %184 = vector.broadcast %cst_82 : f32 to vector<64x1xf32>
    %185 = arith.addf %183, %184 : vector<64x1xf32>
    %186 = math.rsqrt %185 : vector<64x1xf32>
    %187 = vector.broadcast %186 : vector<64x1xf32> to vector<64x32xf32>
    %188 = arith.mulf %178, %187 : vector<64x32xf32>
    %189 = vector.broadcast %171 : vector<1x32xf32> to vector<64x32xf32>
    %190 = arith.mulf %188, %189 : vector<64x32xf32>
    %191 = vector.broadcast %172 : vector<1x32xf32> to vector<64x32xf32>
    %192 = arith.addf %190, %191 : vector<64x32xf32>
    %c0_83 = arith.constant 0 : index
    %c0_84 = arith.constant 0 : index
    %193 = vector.load %arg19[%c0_83, %c0_84] : memref<32x96xf32, #tpu.memory_space<vmem>>, vector<32x96xf32>
    %cst_85 = arith.constant dense<0.000000e+00> : vector<64x96xf32>
    %194 = tpu.matmul %192, %193, %cst_85 {dimension_numbers = #tpu.dot_dimension_numbers<[1], [0], [0], [1], [0, 0, 1, 1], [], []>} : vector<64x32xf32>, vector<32x96xf32>, vector<64x96xf32> -> vector<64x96xf32>
    %c0_86 = arith.constant 0 : index
    %c0_87 = arith.constant 0 : index
    %195 = vector.load %arg20[%c0_86, %c0_87] : memref<1x96xf32, #tpu.memory_space<vmem>>, vector<1x96xf32>
    %196 = vector.broadcast %195 : vector<1x96xf32> to vector<64x96xf32>
    %197 = arith.addf %194, %196 : vector<64x96xf32>
    %198 = vector.extract_strided_slice %197 {offsets = [0, 0], sizes = [64, 32], strides = [1, 1]} : vector<64x96xf32> to vector<64x32xf32>
    %199 = vector.extract_strided_slice %197 {offsets = [0, 32], sizes = [64, 32], strides = [1, 1]} : vector<64x96xf32> to vector<64x32xf32>
    %200 = vector.extract_strided_slice %197 {offsets = [0, 64], sizes = [64, 32], strides = [1, 1]} : vector<64x96xf32> to vector<64x32xf32>
    %c0_88 = arith.constant 0 : index
    %c0_89 = arith.constant 0 : index
    %201 = vector.load %arg21[%c0_88, %c0_89] : memref<32x32xf32, #tpu.memory_space<vmem>>, vector<32x32xf32>
    %cst_90 = arith.constant 0.000000e+00 : f32
    %202 = vector.broadcast %cst_90 : f32 to vector<64x32xf32>
    %c0_91 = arith.constant 0 : index
    %c0_92 = arith.constant 0 : index
    %203 = vector.load %arg22[%c0_91, %c0_92] : memref<1x32xf32, #tpu.memory_space<vmem>>, vector<1x32xf32>
    %204 = vector.broadcast %203 : vector<1x32xf32> to vector<64x32xf32>
    %205 = arith.addf %202, %204 : vector<64x32xf32>
    %206 = vector.extract_strided_slice %198 {offsets = [0, 0], sizes = [64, 8], strides = [1, 1]} : vector<64x32xf32> to vector<64x8xf32>
    %207 = vector.extract_strided_slice %199 {offsets = [0, 0], sizes = [64, 8], strides = [1, 1]} : vector<64x32xf32> to vector<64x8xf32>
    %208 = vector.extract_strided_slice %200 {offsets = [0, 0], sizes = [64, 8], strides = [1, 1]} : vector<64x32xf32> to vector<64x8xf32>
    %209 = tpu.transpose %207, [1, 0] : vector<64x8xf32> -> vector<8x64xf32>
    %cst_93 = arith.constant dense<0.000000e+00> : vector<64x64xf32>
    %210 = tpu.matmul %206, %209, %cst_93 {dimension_numbers = #tpu.dot_dimension_numbers<[1], [0], [0], [1], [0, 0, 1, 1], [], []>} : vector<64x8xf32>, vector<8x64xf32>, vector<64x64xf32> -> vector<64x64xf32>
    %cst_94 = arith.constant 0.353553385 : f32
    %211 = vector.broadcast %cst_94 : f32 to vector<64x64xf32>
    %212 = arith.mulf %210, %211 : vector<64x64xf32>
    %cst_95 = arith.constant dense<0xFF800000> : vector<64xf32>
    %213 = vector.multi_reduction <maximumf>, %212, %cst_95 [1] : vector<64x64xf32> to vector<64xf32>
    %214 = vector.shape_cast %213 : vector<64xf32> to vector<64x1xf32>
    %215 = vector.broadcast %214 : vector<64x1xf32> to vector<64x64xf32>
    %216 = arith.subf %212, %215 : vector<64x64xf32>
    %217 = math.exp %216 : vector<64x64xf32>
    %cst_96 = arith.constant dense<0.000000e+00> : vector<64xf32>
    %218 = vector.multi_reduction <add>, %217, %cst_96 [1] : vector<64x64xf32> to vector<64xf32>
    %219 = vector.shape_cast %218 : vector<64xf32> to vector<64x1xf32>
    %220 = tpu.reciprocal %219 {approx = true} : vector<64x1xf32> -> vector<64x1xf32>
    %221 = vector.broadcast %220 : vector<64x1xf32> to vector<64x64xf32>
    %222 = arith.mulf %217, %221 : vector<64x64xf32>
    %cst_97 = arith.constant dense<0.000000e+00> : vector<64x8xf32>
    %223 = tpu.matmul %222, %208, %cst_97 {dimension_numbers = #tpu.dot_dimension_numbers<[1], [0], [0], [1], [0, 0, 1, 1], [], []>} : vector<64x64xf32>, vector<64x8xf32>, vector<64x8xf32> -> vector<64x8xf32>
    %224 = vector.extract_strided_slice %201 {offsets = [0, 0], sizes = [8, 32], strides = [1, 1]} : vector<32x32xf32> to vector<8x32xf32>
    %cst_98 = arith.constant dense<0.000000e+00> : vector<64x32xf32>
    %225 = tpu.matmul %223, %224, %cst_98 {dimension_numbers = #tpu.dot_dimension_numbers<[1], [0], [0], [1], [0, 0, 1, 1], [], []>} : vector<64x8xf32>, vector<8x32xf32>, vector<64x32xf32> -> vector<64x32xf32>
    %226 = arith.addf %205, %225 : vector<64x32xf32>
    %227 = vector.extract_strided_slice %198 {offsets = [0, 8], sizes = [64, 8], strides = [1, 1]} : vector<64x32xf32> to vector<64x8xf32>
    %228 = vector.extract_strided_slice %199 {offsets = [0, 8], sizes = [64, 8], strides = [1, 1]} : vector<64x32xf32> to vector<64x8xf32>
    %229 = vector.extract_strided_slice %200 {offsets = [0, 8], sizes = [64, 8], strides = [1, 1]} : vector<64x32xf32> to vector<64x8xf32>
    %230 = tpu.transpose %228, [1, 0] : vector<64x8xf32> -> vector<8x64xf32>
    %cst_99 = arith.constant dense<0.000000e+00> : vector<64x64xf32>
    %231 = tpu.matmul %227, %230, %cst_99 {dimension_numbers = #tpu.dot_dimension_numbers<[1], [0], [0], [1], [0, 0, 1, 1], [], []>} : vector<64x8xf32>, vector<8x64xf32>, vector<64x64xf32> -> vector<64x64xf32>
    %cst_100 = arith.constant 0.353553385 : f32
    %232 = vector.broadcast %cst_100 : f32 to vector<64x64xf32>
    %233 = arith.mulf %231, %232 : vector<64x64xf32>
    %cst_101 = arith.constant dense<0xFF800000> : vector<64xf32>
    %234 = vector.multi_reduction <maximumf>, %233, %cst_101 [1] : vector<64x64xf32> to vector<64xf32>
    %235 = vector.shape_cast %234 : vector<64xf32> to vector<64x1xf32>
    %236 = vector.broadcast %235 : vector<64x1xf32> to vector<64x64xf32>
    %237 = arith.subf %233, %236 : vector<64x64xf32>
    %238 = math.exp %237 : vector<64x64xf32>
    %cst_102 = arith.constant dense<0.000000e+00> : vector<64xf32>
    %239 = vector.multi_reduction <add>, %238, %cst_102 [1] : vector<64x64xf32> to vector<64xf32>
    %240 = vector.shape_cast %239 : vector<64xf32> to vector<64x1xf32>
    %241 = tpu.reciprocal %240 {approx = true} : vector<64x1xf32> -> vector<64x1xf32>
    %242 = vector.broadcast %241 : vector<64x1xf32> to vector<64x64xf32>
    %243 = arith.mulf %238, %242 : vector<64x64xf32>
    %cst_103 = arith.constant dense<0.000000e+00> : vector<64x8xf32>
    %244 = tpu.matmul %243, %229, %cst_103 {dimension_numbers = #tpu.dot_dimension_numbers<[1], [0], [0], [1], [0, 0, 1, 1], [], []>} : vector<64x64xf32>, vector<64x8xf32>, vector<64x8xf32> -> vector<64x8xf32>
    %245 = vector.extract_strided_slice %201 {offsets = [8, 0], sizes = [8, 32], strides = [1, 1]} : vector<32x32xf32> to vector<8x32xf32>
    %cst_104 = arith.constant dense<0.000000e+00> : vector<64x32xf32>
    %246 = tpu.matmul %244, %245, %cst_104 {dimension_numbers = #tpu.dot_dimension_numbers<[1], [0], [0], [1], [0, 0, 1, 1], [], []>} : vector<64x8xf32>, vector<8x32xf32>, vector<64x32xf32> -> vector<64x32xf32>
    %247 = arith.addf %226, %246 : vector<64x32xf32>
    %248 = vector.extract_strided_slice %198 {offsets = [0, 16], sizes = [64, 8], strides = [1, 1]} : vector<64x32xf32> to vector<64x8xf32>
    %249 = vector.extract_strided_slice %199 {offsets = [0, 16], sizes = [64, 8], strides = [1, 1]} : vector<64x32xf32> to vector<64x8xf32>
    %250 = vector.extract_strided_slice %200 {offsets = [0, 16], sizes = [64, 8], strides = [1, 1]} : vector<64x32xf32> to vector<64x8xf32>
    %251 = tpu.transpose %249, [1, 0] : vector<64x8xf32> -> vector<8x64xf32>
    %cst_105 = arith.constant dense<0.000000e+00> : vector<64x64xf32>
    %252 = tpu.matmul %248, %251, %cst_105 {dimension_numbers = #tpu.dot_dimension_numbers<[1], [0], [0], [1], [0, 0, 1, 1], [], []>} : vector<64x8xf32>, vector<8x64xf32>, vector<64x64xf32> -> vector<64x64xf32>
    %cst_106 = arith.constant 0.353553385 : f32
    %253 = vector.broadcast %cst_106 : f32 to vector<64x64xf32>
    %254 = arith.mulf %252, %253 : vector<64x64xf32>
    %cst_107 = arith.constant dense<0xFF800000> : vector<64xf32>
    %255 = vector.multi_reduction <maximumf>, %254, %cst_107 [1] : vector<64x64xf32> to vector<64xf32>
    %256 = vector.shape_cast %255 : vector<64xf32> to vector<64x1xf32>
    %257 = vector.broadcast %256 : vector<64x1xf32> to vector<64x64xf32>
    %258 = arith.subf %254, %257 : vector<64x64xf32>
    %259 = math.exp %258 : vector<64x64xf32>
    %cst_108 = arith.constant dense<0.000000e+00> : vector<64xf32>
    %260 = vector.multi_reduction <add>, %259, %cst_108 [1] : vector<64x64xf32> to vector<64xf32>
    %261 = vector.shape_cast %260 : vector<64xf32> to vector<64x1xf32>
    %262 = tpu.reciprocal %261 {approx = true} : vector<64x1xf32> -> vector<64x1xf32>
    %263 = vector.broadcast %262 : vector<64x1xf32> to vector<64x64xf32>
    %264 = arith.mulf %259, %263 : vector<64x64xf32>
    %cst_109 = arith.constant dense<0.000000e+00> : vector<64x8xf32>
    %265 = tpu.matmul %264, %250, %cst_109 {dimension_numbers = #tpu.dot_dimension_numbers<[1], [0], [0], [1], [0, 0, 1, 1], [], []>} : vector<64x64xf32>, vector<64x8xf32>, vector<64x8xf32> -> vector<64x8xf32>
    %266 = vector.extract_strided_slice %201 {offsets = [16, 0], sizes = [8, 32], strides = [1, 1]} : vector<32x32xf32> to vector<8x32xf32>
    %cst_110 = arith.constant dense<0.000000e+00> : vector<64x32xf32>
    %267 = tpu.matmul %265, %266, %cst_110 {dimension_numbers = #tpu.dot_dimension_numbers<[1], [0], [0], [1], [0, 0, 1, 1], [], []>} : vector<64x8xf32>, vector<8x32xf32>, vector<64x32xf32> -> vector<64x32xf32>
    %268 = arith.addf %247, %267 : vector<64x32xf32>
    %269 = vector.extract_strided_slice %198 {offsets = [0, 24], sizes = [64, 8], strides = [1, 1]} : vector<64x32xf32> to vector<64x8xf32>
    %270 = vector.extract_strided_slice %199 {offsets = [0, 24], sizes = [64, 8], strides = [1, 1]} : vector<64x32xf32> to vector<64x8xf32>
    %271 = vector.extract_strided_slice %200 {offsets = [0, 24], sizes = [64, 8], strides = [1, 1]} : vector<64x32xf32> to vector<64x8xf32>
    %272 = tpu.transpose %270, [1, 0] : vector<64x8xf32> -> vector<8x64xf32>
    %cst_111 = arith.constant dense<0.000000e+00> : vector<64x64xf32>
    %273 = tpu.matmul %269, %272, %cst_111 {dimension_numbers = #tpu.dot_dimension_numbers<[1], [0], [0], [1], [0, 0, 1, 1], [], []>} : vector<64x8xf32>, vector<8x64xf32>, vector<64x64xf32> -> vector<64x64xf32>
    %cst_112 = arith.constant 0.353553385 : f32
    %274 = vector.broadcast %cst_112 : f32 to vector<64x64xf32>
    %275 = arith.mulf %273, %274 : vector<64x64xf32>
    %cst_113 = arith.constant dense<0xFF800000> : vector<64xf32>
    %276 = vector.multi_reduction <maximumf>, %275, %cst_113 [1] : vector<64x64xf32> to vector<64xf32>
    %277 = vector.shape_cast %276 : vector<64xf32> to vector<64x1xf32>
    %278 = vector.broadcast %277 : vector<64x1xf32> to vector<64x64xf32>
    %279 = arith.subf %275, %278 : vector<64x64xf32>
    %280 = math.exp %279 : vector<64x64xf32>
    %cst_114 = arith.constant dense<0.000000e+00> : vector<64xf32>
    %281 = vector.multi_reduction <add>, %280, %cst_114 [1] : vector<64x64xf32> to vector<64xf32>
    %282 = vector.shape_cast %281 : vector<64xf32> to vector<64x1xf32>
    %283 = tpu.reciprocal %282 {approx = true} : vector<64x1xf32> -> vector<64x1xf32>
    %284 = vector.broadcast %283 : vector<64x1xf32> to vector<64x64xf32>
    %285 = arith.mulf %280, %284 : vector<64x64xf32>
    %cst_115 = arith.constant dense<0.000000e+00> : vector<64x8xf32>
    %286 = tpu.matmul %285, %271, %cst_115 {dimension_numbers = #tpu.dot_dimension_numbers<[1], [0], [0], [1], [0, 0, 1, 1], [], []>} : vector<64x64xf32>, vector<64x8xf32>, vector<64x8xf32> -> vector<64x8xf32>
    %287 = vector.extract_strided_slice %201 {offsets = [24, 0], sizes = [8, 32], strides = [1, 1]} : vector<32x32xf32> to vector<8x32xf32>
    %cst_116 = arith.constant dense<0.000000e+00> : vector<64x32xf32>
    %288 = tpu.matmul %286, %287, %cst_116 {dimension_numbers = #tpu.dot_dimension_numbers<[1], [0], [0], [1], [0, 0, 1, 1], [], []>} : vector<64x8xf32>, vector<8x32xf32>, vector<64x32xf32> -> vector<64x32xf32>
    %289 = arith.addf %268, %288 : vector<64x32xf32>
    %290 = arith.addf %170, %289 : vector<64x32xf32>
    %c0_117 = arith.constant 0 : index
    %c0_118 = arith.constant 0 : index
    %291 = vector.load %arg23[%c0_117, %c0_118] : memref<1x32xf32, #tpu.memory_space<vmem>>, vector<1x32xf32>
    %c0_119 = arith.constant 0 : index
    %c0_120 = arith.constant 0 : index
    %292 = vector.load %arg24[%c0_119, %c0_120] : memref<1x32xf32, #tpu.memory_space<vmem>>, vector<1x32xf32>
    %cst_121 = arith.constant dense<0.000000e+00> : vector<64xf32>
    %293 = vector.multi_reduction <add>, %290, %cst_121 [1] : vector<64x32xf32> to vector<64xf32>
    %294 = vector.shape_cast %293 : vector<64xf32> to vector<64x1xf32>
    %cst_122 = arith.constant 3.200000e+01 : f32
    %295 = vector.broadcast %cst_122 : f32 to vector<64x1xf32>
    %296 = arith.divf %294, %295 : vector<64x1xf32>
    %297 = vector.broadcast %296 : vector<64x1xf32> to vector<64x32xf32>
    %298 = arith.subf %290, %297 : vector<64x32xf32>
    %299 = arith.mulf %298, %298 : vector<64x32xf32>
    %cst_123 = arith.constant dense<0.000000e+00> : vector<64xf32>
    %300 = vector.multi_reduction <add>, %299, %cst_123 [1] : vector<64x32xf32> to vector<64xf32>
    %301 = vector.shape_cast %300 : vector<64xf32> to vector<64x1xf32>
    %cst_124 = arith.constant 3.200000e+01 : f32
    %302 = vector.broadcast %cst_124 : f32 to vector<64x1xf32>
    %303 = arith.divf %301, %302 : vector<64x1xf32>
    %cst_125 = arith.constant 9.99999997E-7 : f32
    %304 = vector.broadcast %cst_125 : f32 to vector<64x1xf32>
    %305 = arith.addf %303, %304 : vector<64x1xf32>
    %306 = math.rsqrt %305 : vector<64x1xf32>
    %307 = vector.broadcast %306 : vector<64x1xf32> to vector<64x32xf32>
    %308 = arith.mulf %298, %307 : vector<64x32xf32>
    %309 = vector.broadcast %291 : vector<1x32xf32> to vector<64x32xf32>
    %310 = arith.mulf %308, %309 : vector<64x32xf32>
    %311 = vector.broadcast %292 : vector<1x32xf32> to vector<64x32xf32>
    %312 = arith.addf %310, %311 : vector<64x32xf32>
    %c0_126 = arith.constant 0 : index
    %c0_127 = arith.constant 0 : index
    %313 = vector.load %arg25[%c0_126, %c0_127] : memref<32x64xf32, #tpu.memory_space<vmem>>, vector<32x64xf32>
    %cst_128 = arith.constant dense<0.000000e+00> : vector<64x64xf32>
    %314 = tpu.matmul %312, %313, %cst_128 {dimension_numbers = #tpu.dot_dimension_numbers<[1], [0], [0], [1], [0, 0, 1, 1], [], []>} : vector<64x32xf32>, vector<32x64xf32>, vector<64x64xf32> -> vector<64x64xf32>
    %c0_129 = arith.constant 0 : index
    %c0_130 = arith.constant 0 : index
    %315 = vector.load %arg26[%c0_129, %c0_130] : memref<1x64xf32, #tpu.memory_space<vmem>>, vector<1x64xf32>
    %316 = vector.broadcast %315 : vector<1x64xf32> to vector<64x64xf32>
    %317 = arith.addf %314, %316 : vector<64x64xf32>
    %cst_131 = arith.constant 5.000000e-01 : f32
    %318 = vector.broadcast %cst_131 : f32 to vector<64x64xf32>
    %319 = arith.mulf %318, %317 : vector<64x64xf32>
    %cst_132 = arith.constant 0.707106769 : f32
    %320 = vector.broadcast %cst_132 : f32 to vector<64x64xf32>
    %321 = arith.mulf %317, %320 : vector<64x64xf32>
    %322 = math.erf %321 : vector<64x64xf32>
    %cst_133 = arith.constant 1.000000e+00 : f32
    %323 = vector.broadcast %cst_133 : f32 to vector<64x64xf32>
    %324 = arith.addf %323, %322 : vector<64x64xf32>
    %325 = arith.mulf %319, %324 : vector<64x64xf32>
    %c0_134 = arith.constant 0 : index
    %c0_135 = arith.constant 0 : index
    %326 = vector.load %arg27[%c0_134, %c0_135] : memref<64x32xf32, #tpu.memory_space<vmem>>, vector<64x32xf32>
    %cst_136 = arith.constant dense<0.000000e+00> : vector<64x32xf32>
    %327 = tpu.matmul %325, %326, %cst_136 {dimension_numbers = #tpu.dot_dimension_numbers<[1], [0], [0], [1], [0, 0, 1, 1], [], []>} : vector<64x64xf32>, vector<64x32xf32>, vector<64x32xf32> -> vector<64x32xf32>
    %c0_137 = arith.constant 0 : index
    %c0_138 = arith.constant 0 : index
    %328 = vector.load %arg28[%c0_137, %c0_138] : memref<1x32xf32, #tpu.memory_space<vmem>>, vector<1x32xf32>
    %329 = vector.broadcast %328 : vector<1x32xf32> to vector<64x32xf32>
    %330 = arith.addf %327, %329 : vector<64x32xf32>
    %331 = arith.addf %290, %330 : vector<64x32xf32>
    %c0_139 = arith.constant 0 : index
    %c0_140 = arith.constant 0 : index
    %332 = vector.load %arg29[%c0_139, %c0_140] : memref<1x32xf32, #tpu.memory_space<vmem>>, vector<1x32xf32>
    %c0_141 = arith.constant 0 : index
    %c0_142 = arith.constant 0 : index
    %333 = vector.load %arg30[%c0_141, %c0_142] : memref<1x32xf32, #tpu.memory_space<vmem>>, vector<1x32xf32>
    %cst_143 = arith.constant dense<0.000000e+00> : vector<64xf32>
    %334 = vector.multi_reduction <add>, %331, %cst_143 [1] : vector<64x32xf32> to vector<64xf32>
    %335 = vector.shape_cast %334 : vector<64xf32> to vector<64x1xf32>
    %cst_144 = arith.constant 3.200000e+01 : f32
    %336 = vector.broadcast %cst_144 : f32 to vector<64x1xf32>
    %337 = arith.divf %335, %336 : vector<64x1xf32>
    %338 = vector.broadcast %337 : vector<64x1xf32> to vector<64x32xf32>
    %339 = arith.subf %331, %338 : vector<64x32xf32>
    %340 = arith.mulf %339, %339 : vector<64x32xf32>
    %cst_145 = arith.constant dense<0.000000e+00> : vector<64xf32>
    %341 = vector.multi_reduction <add>, %340, %cst_145 [1] : vector<64x32xf32> to vector<64xf32>
    %342 = vector.shape_cast %341 : vector<64xf32> to vector<64x1xf32>
    %cst_146 = arith.constant 3.200000e+01 : f32
    %343 = vector.broadcast %cst_146 : f32 to vector<64x1xf32>
    %344 = arith.divf %342, %343 : vector<64x1xf32>
    %cst_147 = arith.constant 9.99999997E-7 : f32
    %345 = vector.broadcast %cst_147 : f32 to vector<64x1xf32>
    %346 = arith.addf %344, %345 : vector<64x1xf32>
    %347 = math.rsqrt %346 : vector<64x1xf32>
    %348 = vector.broadcast %347 : vector<64x1xf32> to vector<64x32xf32>
    %349 = arith.mulf %339, %348 : vector<64x32xf32>
    %350 = vector.broadcast %332 : vector<1x32xf32> to vector<64x32xf32>
    %351 = arith.mulf %349, %350 : vector<64x32xf32>
    %352 = vector.broadcast %333 : vector<1x32xf32> to vector<64x32xf32>
    %353 = arith.addf %351, %352 : vector<64x32xf32>
    %c0_148 = arith.constant 0 : index
    %c0_149 = arith.constant 0 : index
    %354 = vector.load %arg31[%c0_148, %c0_149] : memref<1x32xf32, #tpu.memory_space<vmem>>, vector<1x32xf32>
    %c0_150 = arith.constant 0 : index
    %c0_151 = arith.constant 0 : index
    %355 = vector.load %arg32[%c0_150, %c0_151] : memref<1x32xf32, #tpu.memory_space<vmem>>, vector<1x32xf32>
    %cst_152 = arith.constant dense<0.000000e+00> : vector<64xf32>
    %356 = vector.multi_reduction <add>, %353, %cst_152 [1] : vector<64x32xf32> to vector<64xf32>
    %357 = vector.shape_cast %356 : vector<64xf32> to vector<64x1xf32>
    %cst_153 = arith.constant 3.200000e+01 : f32
    %358 = vector.broadcast %cst_153 : f32 to vector<64x1xf32>
    %359 = arith.divf %357, %358 : vector<64x1xf32>
    %360 = vector.broadcast %359 : vector<64x1xf32> to vector<64x32xf32>
    %361 = arith.subf %353, %360 : vector<64x32xf32>
    %362 = arith.mulf %361, %361 : vector<64x32xf32>
    %cst_154 = arith.constant dense<0.000000e+00> : vector<64xf32>
    %363 = vector.multi_reduction <add>, %362, %cst_154 [1] : vector<64x32xf32> to vector<64xf32>
    %364 = vector.shape_cast %363 : vector<64xf32> to vector<64x1xf32>
    %cst_155 = arith.constant 3.200000e+01 : f32
    %365 = vector.broadcast %cst_155 : f32 to vector<64x1xf32>
    %366 = arith.divf %364, %365 : vector<64x1xf32>
    %cst_156 = arith.constant 9.99999974E-6 : f32
    %367 = vector.broadcast %cst_156 : f32 to vector<64x1xf32>
    %368 = arith.addf %366, %367 : vector<64x1xf32>
    %369 = math.rsqrt %368 : vector<64x1xf32>
    %370 = vector.broadcast %369 : vector<64x1xf32> to vector<64x32xf32>
    %371 = arith.mulf %361, %370 : vector<64x32xf32>
    %372 = vector.broadcast %354 : vector<1x32xf32> to vector<64x32xf32>
    %373 = arith.mulf %371, %372 : vector<64x32xf32>
    %374 = vector.broadcast %355 : vector<1x32xf32> to vector<64x32xf32>
    %375 = arith.addf %373, %374 : vector<64x32xf32>
    %c0_157 = arith.constant 0 : index
    %c0_158 = arith.constant 0 : index
    %c0_159 = arith.constant 0 : index
    %376 = vector.load %arg33[%c0_157, %c0_158, %c0_159] : memref<1x64x32xf32, #tpu.memory_space<vmem>>, vector<1x64x32xf32>
    %377 = vector.shape_cast %376 : vector<1x64x32xf32> to vector<64x32xf32>
    %378 = vector.shape_cast %375 : vector<64x32xf32> to vector<1x64x32xf32>
    tpu.vector_store %arg33[%c0_157, %c0_158, %c0_159], %378 {strides = array<i32>} : memref<1x64x32xf32, #tpu.memory_space<vmem>>, vector<1x64x32xf32>,
    return
  }
  func.func @transform_0(%arg0: i32) -> (i32, i32, i32) {
    %c0_i32 = arith.constant 0 : i32
    %c0_i32_0 = arith.constant 0 : i32
    %c0_i32_1 = arith.constant 0 : i32
    return %arg0, %c0_i32, %c0_i32_0 : i32, i32, i32
  }
  func.func @transform_1(%arg0: i32) -> (i32, i32, i32) {
    %c0_i32 = arith.constant 0 : i32
    %c0_i32_0 = arith.constant 0 : i32
    %c0_i32_1 = arith.constant 0 : i32
    %c0_i32_2 = arith.constant 0 : i32
    return %c0_i32, %c0_i32_0, %c0_i32_1 : i32, i32, i32
  }
  func.func @transform_2(%arg0: i32) -> (i32, i32) {
    %c0_i32 = arith.constant 0 : i32
    %c0_i32_0 = arith.constant 0 : i32
    %c0_i32_1 = arith.constant 0 : i32
    return %c0_i32, %c0_i32_0 : i32, i32
  }
  func.func @transform_3(%arg0: i32) -> (i32, i32) {
    %c0_i32 = arith.constant 0 : i32
    %c0_i32_0 = arith.constant 0 : i32
    %c0_i32_1 = arith.constant 0 : i32
    return %c0_i32, %c0_i32_0 : i32, i32
  }
  func.func @transform_4(%arg0: i32) -> (i32, i32) {
    %c0_i32 = arith.constant 0 : i32
    %c0_i32_0 = arith.constant 0 : i32
    %c0_i32_1 = arith.constant 0 : i32
    return %c0_i32, %c0_i32_0 : i32, i32
  }
  func.func @transform_5(%arg0: i32) -> (i32, i32) {
    %c0_i32 = arith.constant 0 : i32
    %c0_i32_0 = arith.constant 0 : i32
    %c0_i32_1 = arith.constant 0 : i32
    return %c0_i32, %c0_i32_0 : i32, i32
  }
  func.func @transform_6(%arg0: i32) -> (i32, i32) {
    %c0_i32 = arith.constant 0 : i32
    %c0_i32_0 = arith.constant 0 : i32
    %c0_i32_1 = arith.constant 0 : i32
    return %c0_i32, %c0_i32_0 : i32, i32
  }
  func.func @transform_7(%arg0: i32) -> (i32, i32) {
    %c0_i32 = arith.constant 0 : i32
    %c0_i32_0 = arith.constant 0 : i32
    %c0_i32_1 = arith.constant 0 : i32
    return %c0_i32, %c0_i32_0 : i32, i32
  }
  func.func @transform_8(%arg0: i32) -> (i32, i32) {
    %c0_i32 = arith.constant 0 : i32
    %c0_i32_0 = arith.constant 0 : i32
    %c0_i32_1 = arith.constant 0 : i32
    return %c0_i32, %c0_i32_0 : i32, i32
  }
  func.func @transform_9(%arg0: i32) -> (i32, i32) {
    %c0_i32 = arith.constant 0 : i32
    %c0_i32_0 = arith.constant 0 : i32
    %c0_i32_1 = arith.constant 0 : i32
    return %c0_i32, %c0_i32_0 : i32, i32
  }
  func.func @transform_10(%arg0: i32) -> (i32, i32) {
    %c0_i32 = arith.constant 0 : i32
    %c0_i32_0 = arith.constant 0 : i32
    %c0_i32_1 = arith.constant 0 : i32
    return %c0_i32, %c0_i32_0 : i32, i32
  }
  func.func @transform_11(%arg0: i32) -> (i32, i32) {
    %c0_i32 = arith.constant 0 : i32
    %c0_i32_0 = arith.constant 0 : i32
    %c0_i32_1 = arith.constant 0 : i32
    return %c0_i32, %c0_i32_0 : i32, i32
  }
  func.func @transform_12(%arg0: i32) -> (i32, i32) {
    %c0_i32 = arith.constant 0 : i32
    %c0_i32_0 = arith.constant 0 : i32
    %c0_i32_1 = arith.constant 0 : i32
    return %c0_i32, %c0_i32_0 : i32, i32
  }
  func.func @transform_13(%arg0: i32) -> (i32, i32) {
    %c0_i32 = arith.constant 0 : i32
    %c0_i32_0 = arith.constant 0 : i32
    %c0_i32_1 = arith.constant 0 : i32
    return %c0_i32, %c0_i32_0 : i32, i32
  }
  func.func @transform_14(%arg0: i32) -> (i32, i32) {
    %c0_i32 = arith.constant 0 : i32
    %c0_i32_0 = arith.constant 0 : i32
    %c0_i32_1 = arith.constant 0 : i32
    return %c0_i32, %c0_i32_0 : i32, i32
  }
  func.func @transform_15(%arg0: i32) -> (i32, i32) {
    %c0_i32 = arith.constant 0 : i32
    %c0_i32_0 = arith.constant 0 : i32
    %c0_i32_1 = arith.constant 0 : i32
    return %c0_i32, %c0_i32_0 : i32, i32
  }
  func.func @transform_16(%arg0: i32) -> (i32, i32) {
    %c0_i32 = arith.constant 0 : i32
    %c0_i32_0 = arith.constant 0 : i32
    %c0_i32_1 = arith.constant 0 : i32
    return %c0_i32, %c0_i32_0 : i32, i32
  }
  func.func @transform_17(%arg0: i32) -> (i32, i32) {
    %c0_i32 = arith.constant 0 : i32
    %c0_i32_0 = arith.constant 0 : i32
    %c0_i32_1 = arith.constant 0 : i32
    return %c0_i32, %c0_i32_0 : i32, i32
  }
  func.func @transform_18(%arg0: i32) -> (i32, i32) {
    %c0_i32 = arith.constant 0 : i32
    %c0_i32_0 = arith.constant 0 : i32
    %c0_i32_1 = arith.constant 0 : i32
    return %c0_i32, %c0_i32_0 : i32, i32
  }
  func.func @transform_19(%arg0: i32) -> (i32, i32) {
    %c0_i32 = arith.constant 0 : i32
    %c0_i32_0 = arith.constant 0 : i32
    %c0_i32_1 = arith.constant 0 : i32
    return %c0_i32, %c0_i32_0 : i32, i32
  }
  func.func @transform_20(%arg0: i32) -> (i32, i32) {
    %c0_i32 = arith.constant 0 : i32
    %c0_i32_0 = arith.constant 0 : i32
    %c0_i32_1 = arith.constant 0 : i32
    return %c0_i32, %c0_i32_0 : i32, i32
  }
  func.func @transform_21(%arg0: i32) -> (i32, i32) {
    %c0_i32 = arith.constant 0 : i32
    %c0_i32_0 = arith.constant 0 : i32
    %c0_i32_1 = arith.constant 0 : i32
    return %c0_i32, %c0_i32_0 : i32, i32
  }
  func.func @transform_22(%arg0: i32) -> (i32, i32) {
    %c0_i32 = arith.constant 0 : i32
    %c0_i32_0 = arith.constant 0 : i32
    %c0_i32_1 = arith.constant 0 : i32
    return %c0_i32, %c0_i32_0 : i32, i32
  }
  func.func @transform_23(%arg0: i32) -> (i32, i32) {
    %c0_i32 = arith.constant 0 : i32
    %c0_i32_0 = arith.constant 0 : i32
    %c0_i32_1 = arith.constant 0 : i32
    return %c0_i32, %c0_i32_0 : i32, i32
  }
  func.func @transform_24(%arg0: i32) -> (i32, i32) {
    %c0_i32 = arith.constant 0 : i32
    %c0_i32_0 = arith.constant 0 : i32
    %c0_i32_1 = arith.constant 0 : i32
    return %c0_i32, %c0_i32_0 : i32, i32
  }
  func.func @transform_25(%arg0: i32) -> (i32, i32) {
    %c0_i32 = arith.constant 0 : i32
    %c0_i32_0 = arith.constant 0 : i32
    %c0_i32_1 = arith.constant 0 : i32
    return %c0_i32, %c0_i32_0 : i32, i32
  }
  func.func @transform_26(%arg0: i32) -> (i32, i32) {
    %c0_i32 = arith.constant 0 : i32
    %c0_i32_0 = arith.constant 0 : i32
    %c0_i32_1 = arith.constant 0 : i32
    return %c0_i32, %c0_i32_0 : i32, i32
  }
  func.func @transform_27(%arg0: i32) -> (i32, i32) {
    %c0_i32 = arith.constant 0 : i32
    %c0_i32_0 = arith.constant 0 : i32
    %c0_i32_1 = arith.constant 0 : i32
    return %c0_i32, %c0_i32_0 : i32, i32
  }
  func.func @transform_28(%arg0: i32) -> (i32, i32) {
    %c0_i32 = arith.constant 0 : i32
    %c0_i32_0 = arith.constant 0 : i32
    %c0_i32_1 = arith.constant 0 : i32
    return %c0_i32, %c0_i32_0 : i32, i32
  }
  func.func @transform_29(%arg0: i32) -> (i32, i32) {
    %c0_i32 = arith.constant 0 : i32
    %c0_i32_0 = arith.constant 0 : i32
    %c0_i32_1 = arith.constant 0 : i32
    return %c0_i32, %c0_i32_0 : i32, i32
  }
  func.func @transform_30(%arg0: i32) -> (i32, i32) {
    %c0_i32 = arith.constant 0 : i32
    %c0_i32_0 = arith.constant 0 : i32
    %c0_i32_1 = arith.constant 0 : i32
    return %c0_i32, %c0_i32_0 : i32, i32
  }
  func.func @transform_31(%arg0: i32) -> (i32, i32) {
    %c0_i32 = arith.constant 0 : i32
    %c0_i32_0 = arith.constant 0 : i32
    %c0_i32_1 = arith.constant 0 : i32
    return %c0_i32, %c0_i32_0 : i32, i32
  }
  func.func @transform_32(%arg0: i32) -> (i32, i32, i32) {
    %c0_i32 = arith.constant 0 : i32
    %c0_i32_0 = arith.constant 0 : i32
    %c0_i32_1 = arith.constant 0 : i32
    return %arg0, %c0_i32, %c0_i32_0 : i32, i32, i32
  }
}

</mosaic_0001>

<llo_original>
// kernel: teacher_forward.1
$region0: #{teacher_forward.1}
  #allocation0 [shape = 'u32[]', space=smem, size = 0x4, offset = 0x4, fixed_abs, tag = 'smem constant byte address 0x4 - core index']
  #allocation1 [shape = 'u32[144,128]{1,0:T(1,128)}', space=vmem, size = 0x12000, scoped, tag = 'internal scratch']
  %s0 = inlined_call_operand.smem [shape: u32[33], index: -1, kind: input, shape index: {}]
  %s1 = sld [smem:[%s0]]
  %s2 = scalar_lea.smem %s0, 1
  %s3 = sld [smem:[%s2]]
  %s4 = scalar_lea.smem %s0, 2
  %s5 = sld [smem:[%s4]]
  %s6 = scalar_lea.smem %s0, 3
  %s7 = sld [smem:[%s6]]
  %s8 = scalar_lea.smem %s0, 4
  %s9 = sld [smem:[%s8]]
  %s10 = scalar_lea.smem %s0, 5
  %s11 = sld [smem:[%s10]]
  %s12 = scalar_lea.smem %s0, 6
  %s13 = sld [smem:[%s12]]
  %s14 = scalar_lea.smem %s0, 7
  %s15 = sld [smem:[%s14]]
  %s16 = scalar_lea.smem %s0, 8
  %s17 = sld [smem:[%s16]]
  %s18 = scalar_lea.smem %s0, 9
  %s19 = sld [smem:[%s18]]
  %s20 = scalar_lea.smem %s0, 10
  %s21 = sld [smem:[%s20]]
  %s22 = scalar_lea.smem %s0, 11
  %s23 = sld [smem:[%s22]]
  %s24 = scalar_lea.smem %s0, 12
  %s25 = sld [smem:[%s24]]
  %s26 = scalar_lea.smem %s0, 13
  %s27 = sld [smem:[%s26]]
  %s28 = scalar_lea.smem %s0, 14
  %s29 = sld [smem:[%s28]]
  %s30 = scalar_lea.smem %s0, 15
  %s31 = sld [smem:[%s30]]
  %s32 = scalar_lea.smem %s0, 16
  %s33 = sld [smem:[%s32]]
  %s34 = scalar_lea.smem %s0, 17
  %s35 = sld [smem:[%s34]]
  %s36 = scalar_lea.smem %s0, 18
  %s37 = sld [smem:[%s36]]
  %s38 = scalar_lea.smem %s0, 19
  %s39 = sld [smem:[%s38]]
  %s40 = scalar_lea.smem %s0, 20
  %s41 = sld [smem:[%s40]]
  %s42 = scalar_lea.smem %s0, 21
  %s43 = sld [smem:[%s42]]
  %s44 = scalar_lea.smem %s0, 22
  %s45 = sld [smem:[%s44]]
  %s46 = scalar_lea.smem %s0, 23
  %s47 = sld [smem:[%s46]]
  %s48 = scalar_lea.smem %s0, 24
  %s49 = sld [smem:[%s48]]
  %s50 = scalar_lea.smem %s0, 25
  %s51 = sld [smem:[%s50]]
  %s52 = scalar_lea.smem %s0, 26
  %s53 = sld [smem:[%s52]]
  %s54 = scalar_lea.smem %s0, 27
  %s55 = sld [smem:[%s54]]
  %s56 = scalar_lea.smem %s0, 28
  %s57 = sld [smem:[%s56]]
  %s58 = scalar_lea.smem %s0, 29
  %s59 = sld [smem:[%s58]]
  %s60 = scalar_lea.smem %s0, 30
  %s61 = sld [smem:[%s60]]
  %s62 = scalar_lea.smem %s0, 31
  %s63 = sld [smem:[%s62]]
  %s64 = scalar_lea.smem %s0, 32
  %s65 = sld [smem:[%s64]]
  %s66 = sld [smem:[#allocation0]]
  $region161: #{teacher_forward.1} parent=0
    _
  %s68 = ssub.s32 1, %s66
  %s69 = scalar_select 0, %s68, %s66
  loop: start=0, step=1, limit=4
  $region2: #{teacher_forward.1} parent=0 // loop_pre_header
    _
  $region3: #{teacher_forward.1} parent=0 // loop_header
    %s71 = sphi 0, %s75
    %p72 = scmp.ge.s32.totalorder %s71, 4
    %s81 = sphi 0, %s83
    %s84 = sphi 0, %s81
    %s85 = sphi 0, %s84
    %s101 = sphi 0, %s85
    %s105 = sphi 0, %s105
    %s107 = sphi 0, %s105
    %s108 = sphi 0, %s107
    %s122 = sphi 0, %s108
    %s126 = sphi 0, %s126
    %s128 = sphi 0, %s126
    %s129 = sphi 0, %s128
    %s143 = sphi 0, %s129
    %s147 = sphi 0, %s147
    %s149 = sphi 0, %s147
    %s150 = sphi 0, %s149
    %s164 = sphi 0, %s150
    %s168 = sphi 0, %s168
    %s170 = sphi 0, %s168
    %s171 = sphi 0, %s170
    %s185 = sphi 0, %s171
    %s189 = sphi 0, %s189
    %s191 = sphi 0, %s189
    %s192 = sphi 0, %s191
    %s206 = sphi 0, %s192
    %s210 = sphi 0, %s210
    %s212 = sphi 0, %s210
    %s213 = sphi 0, %s212
    %s227 = sphi 0, %s213
    %s231 = sphi 0, %s231
    %s233 = sphi 0, %s231
    %s234 = sphi 0, %s233
    %s248 = sphi 0, %s234
    %s252 = sphi 0, %s252
    %s254 = sphi 0, %s252
    %s255 = sphi 0, %s254
    %s269 = sphi 0, %s255
    %s273 = sphi 0, %s273
    %s275 = sphi 0, %s273
    %s276 = sphi 0, %s275
    %s290 = sphi 0, %s276
    %s294 = sphi 0, %s294
    %s296 = sphi 0, %s294
    %s297 = sphi 0, %s296
    %s311 = sphi 0, %s297
    %s315 = sphi 0, %s315
    %s317 = sphi 0, %s315
    %s318 = sphi 0, %s317
    %s332 = sphi 0, %s318
    %s336 = sphi 0, %s336
    %s338 = sphi 0, %s336
    %s339 = sphi 0, %s338
    %s353 = sphi 0, %s339
    %s357 = sphi 0, %s357
    %s359 = sphi 0, %s357
    %s360 = sphi 0, %s359
    %s374 = sphi 0, %s360
    %s378 = sphi 0, %s378
    %s380 = sphi 0, %s378
    %s381 = sphi 0, %s380
    %s395 = sphi 0, %s381
    %s399 = sphi 0, %s399
    %s401 = sphi 0, %s399
    %s402 = sphi 0, %s401
    %s416 = sphi 0, %s402
    %s420 = sphi 0, %s420
    %s422 = sphi 0, %s420
    %s423 = sphi 0, %s422
    %s437 = sphi 0, %s423
    %s441 = sphi 0, %s441
    %s443 = sphi 0, %s441
    %s444 = sphi 0, %s443
    %s458 = sphi 0, %s444
    %s462 = sphi 0, %s462
    %s464 = sphi 0, %s462
    %s465 = sphi 0, %s464
    %s479 = sphi 0, %s465
    %s483 = sphi 0, %s483
    %s485 = sphi 0, %s483
    %s486 = sphi 0, %s485
    %s500 = sphi 0, %s486
    %s504 = sphi 0, %s504
    %s506 = sphi 0, %s504
    %s507 = sphi 0, %s506
    %s521 = sphi 0, %s507
    %s525 = sphi 0, %s525
    %s527 = sphi 0, %s525
    %s528 = sphi 0, %s527
    %s542 = sphi 0, %s528
    %s546 = sphi 0, %s546
    %s548 = sphi 0, %s546
    %s549 = sphi 0, %s548
    %s563 = sphi 0, %s549
    %s567 = sphi 0, %s567
    %s569 = sphi 0, %s567
    %s570 = sphi 0, %s569
    %s584 = sphi 0, %s570
    %s588 = sphi 0, %s588
    %s590 = sphi 0, %s588
    %s591 = sphi 0, %s590
    %s605 = sphi 0, %s591
    %s609 = sphi 0, %s609
    %s611 = sphi 0, %s609
    %s612 = sphi 0, %s611
    %s626 = sphi 0, %s612
    %s630 = sphi 0, %s630
    %s632 = sphi 0, %s630
    %s633 = sphi 0, %s632
    %s647 = sphi 0, %s633
    %s651 = sphi 0, %s651
    %s653 = sphi 0, %s651
    %s654 = sphi 0, %s653
    %s668 = sphi 0, %s654
    %s672 = sphi 0, %s672
    %s674 = sphi 0, %s672
    %s675 = sphi 0, %s674
    %s689 = sphi 0, %s675
    %s693 = sphi 0, %s693
    %s695 = sphi 0, %s693
    %s696 = sphi 0, %s695
    %s710 = sphi 0, %s696
    %s714 = sphi 0, %s714
    %s716 = sphi 0, %s714
    %s717 = sphi 0, %s716
    %s731 = sphi 0, %s717
    %s735 = sphi 0, %s735
    %s737 = sphi 0, %s735
    %s738 = sphi 0, %s737
    %s752 = sphi 0, %s738
    %s758 = sphi 0, %s760
    %s761 = sphi 0, %s758
    %s762 = sphi 0, %s761
    %s778 = sphi 0, %s762
  $region4: #{teacher_forward.1} parent=0 // loop_header_branch
    %74 = sbr.rel (%p72) target = $region8
  $region5: #{teacher_forward.1} parent=0 // loop_body
    %s76 = ssub.s32 %s71, 1
    %s77 = ssub.s32 %s71, 2
    %s78 = sadd.s32 %s71, 1
    %s79 = ssub.s32 %s71, %s78
    %p80 = scmp.eq.s32.totalorder %s79, 0
    %s82 = sadd.s32 %s81, 1
    %s83 = scalar_select %p80, %s81, %s82
    %p86 = pneg %p80
    %p87 = scmp.eq.s32.totalorder %s71, 1
    %p88 = por %p86, %p87
    %p89 = scmp.ne.s32.totalorder %s81, %s84
    %p90 = scmp.eq.s32.totalorder %s71, 0
    %p91 = por %p89, %p90
    %p92 = scmp.ne.s32.totalorder %s81, %s84
    %p93 = scmp.eq.s32.totalorder %s76, 1
    %p94 = por %p92, %p93
    %p95 = scmp.ne.s32.totalorder %s84, %s85
    %p96 = scmp.eq.s32.totalorder %s76, 0
    %p97 = por %p95, %p96
    %p98 = scmp.ne.s32.totalorder %s84, %s85
    %p99 = scmp.eq.s32.totalorder %s77, 1
    %p100 = por %p98, %p99
    %p102 = scmp.ne.s32.totalorder %s85, %s101
    %p103 = scmp.eq.s32.totalorder %s77, 0
    %p104 = por %p102, %p103
    %s106 = sadd.s32 %s105, 1
    %p109 = scmp.eq.s32.totalorder %s71, 1
    %p110 = scmp.ne.s32.totalorder %s105, %s107
    %p111 = scmp.eq.s32.totalorder %s71, 0
    %p112 = por %p110, %p111
    %p113 = scmp.ne.s32.totalorder %s105, %s107
    %p114 = scmp.eq.s32.totalorder %s76, 1
    %p115 = por %p113, %p114
    %p116 = scmp.ne.s32.totalorder %s107, %s108
    %p117 = scmp.eq.s32.totalorder %s76, 0
    %p118 = por %p116, %p117
    %p119 = scmp.ne.s32.totalorder %s107, %s108
    %p120 = scmp.eq.s32.totalorder %s77, 1
    %p121 = por %p119, %p120
    %p123 = scmp.ne.s32.totalorder %s108, %s122
    %p124 = scmp.eq.s32.totalorder %s77, 0
    %p125 = por %p123, %p124
    %s127 = sadd.s32 %s126, 1
    %p130 = scmp.eq.s32.totalorder %s71, 1
    %p131 = scmp.ne.s32.totalorder %s126, %s128
    %p132 = scmp.eq.s32.totalorder %s71, 0
    %p133 = por %p131, %p132
    %p134 = scmp.ne.s32.totalorder %s126, %s128
    %p135 = scmp.eq.s32.totalorder %s76, 1
    %p136 = por %p134, %p135
    %p137 = scmp.ne.s32.totalorder %s128, %s129
    %p138 = scmp.eq.s32.totalorder %s76, 0
    %p139 = por %p137, %p138
    %p140 = scmp.ne.s32.totalorder %s128, %s129
    %p141 = scmp.eq.s32.totalorder %s77, 1
    %p142 = por %p140, %p141
    %p144 = scmp.ne.s32.totalorder %s129, %s143
    %p145 = scmp.eq.s32.totalorder %s77, 0
    %p146 = por %p144, %p145
    %s148 = sadd.s32 %s147, 1
    %p151 = scmp.eq.s32.totalorder %s71, 1
    %p152 = scmp.ne.s32.totalorder %s147, %s149
    %p153 = scmp.eq.s32.totalorder %s71, 0
    %p154 = por %p152, %p153
    %p155 = scmp.ne.s32.totalorder %s147, %s149
    %p156 = scmp.eq.s32.totalorder %s76, 1
    %p157 = por %p155, %p156
    %p158 = scmp.ne.s32.totalorder %s149, %s150
    %p159 = scmp.eq.s32.totalorder %s76, 0
    %p160 = por %p158, %p159
    %p161 = scmp.ne.s32.totalorder %s149, %s150
    %p162 = scmp.eq.s32.totalorder %s77, 1
    %p163 = por %p161, %p162
    %p165 = scmp.ne.s32.totalorder %s150, %s164
    %p166 = scmp.eq.s32.totalorder %s77, 0
    %p167 = por %p165, %p166
    %s169 = sadd.s32 %s168, 1
    %p172 = scmp.eq.s32.totalorder %s71, 1
    %p173 = scmp.ne.s32.totalorder %s168, %s170
    %p174 = scmp.eq.s32.totalorder %s71, 0
    %p175 = por %p173, %p174
    %p176 = scmp.ne.s32.totalorder %s168, %s170
    %p177 = scmp.eq.s32.totalorder %s76, 1
    %p178 = por %p176, %p177
    %p179 = scmp.ne.s32.totalorder %s170, %s171
    %p180 = scmp.eq.s32.totalorder %s76, 0
    %p181 = por %p179, %p180
    %p182 = scmp.ne.s32.totalorder %s170, %s171
    %p183 = scmp.eq.s32.totalorder %s77, 1
    %p184 = por %p182, %p183
    %p186 = scmp.ne.s32.totalorder %s171, %s185
    %p187 = scmp.eq.s32.totalorder %s77, 0
    %p188 = por %p186, %p187
    %s190 = sadd.s32 %s189, 1
    %p193 = scmp.eq.s32.totalorder %s71, 1
    %p194 = scmp.ne.s32.totalorder %s189, %s191
    %p195 = scmp.eq.s32.totalorder %s71, 0
    %p196 = por %p194, %p195
    %p197 = scmp.ne.s32.totalorder %s189, %s191
    %p198 = scmp.eq.s32.totalorder %s76, 1
    %p199 = por %p197, %p198
    %p200 = scmp.ne.s32.totalorder %s191, %s192
    %p201 = scmp.eq.s32.totalorder %s76, 0
    %p202 = por %p200, %p201
    %p203 = scmp.ne.s32.totalorder %s191, %s192
    %p204 = scmp.eq.s32.totalorder %s77, 1
    %p205 = por %p203, %p204
    %p207 = scmp.ne.s32.totalorder %s192, %s206
    %p208 = scmp.eq.s32.totalorder %s77, 0
    %p209 = por %p207, %p208
    %s211 = sadd.s32 %s210, 1
    %p214 = scmp.eq.s32.totalorder %s71, 1
    %p215 = scmp.ne.s32.totalorder %s210, %s212
    %p216 = scmp.eq.s32.totalorder %s71, 0
    %p217 = por %p215, %p216
    %p218 = scmp.ne.s32.totalorder %s210, %s212
    %p219 = scmp.eq.s32.totalorder %s76, 1
    %p220 = por %p218, %p219
    %p221 = scmp.ne.s32.totalorder %s212, %s213
    %p222 = scmp.eq.s32.totalorder %s76, 0
    %p223 = por %p221, %p222
    %p224 = scmp.ne.s32.totalorder %s212, %s213
    %p225 = scmp.eq.s32.totalorder %s77, 1
    %p226 = por %p224, %p225
    %p228 = scmp.ne.s32.totalorder %s213, %s227
    %p229 = scmp.eq.s32.totalorder %s77, 0
    %p230 = por %p228, %p229
    %s232 = sadd.s32 %s231, 1
    %p235 = scmp.eq.s32.totalorder %s71, 1
    %p236 = scmp.ne.s32.totalorder %s231, %s233
    %p237 = scmp.eq.s32.totalorder %s71, 0
    %p238 = por %p236, %p237
    %p239 = scmp.ne.s32.totalorder %s231, %s233
    %p240 = scmp.eq.s32.totalorder %s76, 1
    %p241 = por %p239, %p240
    %p242 = scmp.ne.s32.totalorder %s233, %s234
    %p243 = scmp.eq.s32.totalorder %s76, 0
    %p244 = por %p242, %p243
    %p245 = scmp.ne.s32.totalorder %s233, %s234
    %p246 = scmp.eq.s32.totalorder %s77, 1
    %p247 = por %p245, %p246
    %p249 = scmp.ne.s32.totalorder %s234, %s248
    %p250 = scmp.eq.s32.totalorder %s77, 0
    %p251 = por %p249, %p250
    %s253 = sadd.s32 %s252, 1
    %p256 = scmp.eq.s32.totalorder %s71, 1
    %p257 = scmp.ne.s32.totalorder %s252, %s254
    %p258 = scmp.eq.s32.totalorder %s71, 0
    %p259 = por %p257, %p258
    %p260 = scmp.ne.s32.totalorder %s252, %s254
    %p261 = scmp.eq.s32.totalorder %s76, 1
    %p262 = por %p260, %p261
    %p263 = scmp.ne.s32.totalorder %s254, %s255
    %p264 = scmp.eq.s32.totalorder %s76, 0
    %p265 = por %p263, %p264
    %p266 = scmp.ne.s32.totalorder %s254, %s255
    %p267 = scmp.eq.s32.totalorder %s77, 1
    %p268 = por %p266, %p267
    %p270 = scmp.ne.s32.totalorder %s255, %s269
    %p271 = scmp.eq.s32.totalorder %s77, 0
    %p272 = por %p270, %p271
    %s274 = sadd.s32 %s273, 1
    %p277 = scmp.eq.s32.totalorder %s71, 1
    %p278 = scmp.ne.s32.totalorder %s273, %s275
    %p279 = scmp.eq.s32.totalorder %s71, 0
    %p280 = por %p278, %p279
    %p281 = scmp.ne.s32.totalorder %s273, %s275
    %p282 = scmp.eq.s32.totalorder %s76, 1
    %p283 = por %p281, %p282
    %p284 = scmp.ne.s32.totalorder %s275, %s276
    %p285 = scmp.eq.s32.totalorder %s76, 0
    %p286 = por %p284, %p285
    %p287 = scmp.ne.s32.totalorder %s275, %s276
    %p288 = scmp.eq.s32.totalorder %s77, 1
    %p289 = por %p287, %p288
    %p291 = scmp.ne.s32.totalorder %s276, %s290
    %p292 = scmp.eq.s32.totalorder %s77, 0
    %p293 = por %p291, %p292
    %s295 = sadd.s32 %s294, 1
    %p298 = scmp.eq.s32.totalorder %s71, 1
    %p299 = scmp.ne.s32.totalorder %s294, %s296
    %p300 = scmp.eq.s32.totalorder %s71, 0
    %p301 = por %p299, %p300
    %p302 = scmp.ne.s32.totalorder %s294, %s296
    %p303 = scmp.eq.s32.totalorder %s76, 1
    %p304 = por %p302, %p303
    %p305 = scmp.ne.s32.totalorder %s296, %s297
    %p306 = scmp.eq.s32.totalorder %s76, 0
    %p307 = por %p305, %p306
    %p308 = scmp.ne.s32.totalorder %s296, %s297
    %p309 = scmp.eq.s32.totalorder %s77, 1
    %p310 = por %p308, %p309
    %p312 = scmp.ne.s32.totalorder %s297, %s311
    %p313 = scmp.eq.s32.totalorder %s77, 0
    %p314 = por %p312, %p313
    %s316 = sadd.s32 %s315, 1
    %p319 = scmp.eq.s32.totalorder %s71, 1
    %p320 = scmp.ne.s32.totalorder %s315, %s317
    %p321 = scmp.eq.s32.totalorder %s71, 0
    %p322 = por %p320, %p321
    %p323 = scmp.ne.s32.totalorder %s315, %s317
    %p324 = scmp.eq.s32.totalorder %s76, 1
    %p325 = por %p323, %p324
    %p326 = scmp.ne.s32.totalorder %s317, %s318
    %p327 = scmp.eq.s32.totalorder %s76, 0
    %p328 = por %p326, %p327
    %p329 = scmp.ne.s32.totalorder %s317, %s318
    %p330 = scmp.eq.s32.totalorder %s77, 1
    %p331 = por %p329, %p330
    %p333 = scmp.ne.s32.totalorder %s318, %s332
    %p334 = scmp.eq.s32.totalorder %s77, 0
    %p335 = por %p333, %p334
    %s337 = sadd.s32 %s336, 1
    %p340 = scmp.eq.s32.totalorder %s71, 1
    %p341 = scmp.ne.s32.totalorder %s336, %s338
    %p342 = scmp.eq.s32.totalorder %s71, 0
    %p343 = por %p341, %p342
    %p344 = scmp.ne.s32.totalorder %s336, %s338
    %p345 = scmp.eq.s32.totalorder %s76, 1
    %p346 = por %p344, %p345
    %p347 = scmp.ne.s32.totalorder %s338, %s339
    %p348 = scmp.eq.s32.totalorder %s76, 0
    %p349 = por %p347, %p348
    %p350 = scmp.ne.s32.totalorder %s338, %s339
    %p351 = scmp.eq.s32.totalorder %s77, 1
    %p352 = por %p350, %p351
    %p354 = scmp.ne.s32.totalorder %s339, %s353
    %p355 = scmp.eq.s32.totalorder %s77, 0
    %p356 = por %p354, %p355
    %s358 = sadd.s32 %s357, 1
    %p361 = scmp.eq.s32.totalorder %s71, 1
    %p362 = scmp.ne.s32.totalorder %s357, %s359
    %p363 = scmp.eq.s32.totalorder %s71, 0
    %p364 = por %p362, %p363
    %p365 = scmp.ne.s32.totalorder %s357, %s359
    %p366 = scmp.eq.s32.totalorder %s76, 1
    %p367 = por %p365, %p366
    %p368 = scmp.ne.s32.totalorder %s359, %s360
    %p369 = scmp.eq.s32.totalorder %s76, 0
    %p370 = por %p368, %p369
    %p371 = scmp.ne.s32.totalorder %s359, %s360
    %p372 = scmp.eq.s32.totalorder %s77, 1
    %p373 = por %p371, %p372
    %p375 = scmp.ne.s32.totalorder %s360, %s374
    %p376 = scmp.eq.s32.totalorder %s77, 0
    %p377 = por %p375, %p376
    %s379 = sadd.s32 %s378, 1
    %p382 = scmp.eq.s32.totalorder %s71, 1
    %p383 = scmp.ne.s32.totalorder %s378, %s380
    %p384 = scmp.eq.s32.totalorder %s71, 0
    %p385 = por %p383, %p384
    %p386 = scmp.ne.s32.totalorder %s378, %s380
    %p387 = scmp.eq.s32.totalorder %s76, 1
    %p388 = por %p386, %p387
    %p389 = scmp.ne.s32.totalorder %s380, %s381
    %p390 = scmp.eq.s32.totalorder %s76, 0
    %p391 = por %p389, %p390
    %p392 = scmp.ne.s32.totalorder %s380, %s381
    %p393 = scmp.eq.s32.totalorder %s77, 1
    %p394 = por %p392, %p393
    %p396 = scmp.ne.s32.totalorder %s381, %s395
    %p397 = scmp.eq.s32.totalorder %s77, 0
    %p398 = por %p396, %p397
    %s400 = sadd.s32 %s399, 1
    %p403 = scmp.eq.s32.totalorder %s71, 1
    %p404 = scmp.ne.s32.totalorder %s399, %s401
    %p405 = scmp.eq.s32.totalorder %s71, 0
    %p406 = por %p404, %p405
    %p407 = scmp.ne.s32.totalorder %s399, %s401
    %p408 = scmp.eq.s32.totalorder %s76, 1
    %p409 = por %p407, %p408
    %p410 = scmp.ne.s32.totalorder %s401, %s402
    %p411 = scmp.eq.s32.totalorder %s76, 0
    %p412 = por %p410, %p411
    %p413 = scmp.ne.s32.totalorder %s401, %s402
    %p414 = scmp.eq.s32.totalorder %s77, 1
    %p415 = por %p413, %p414
    %p417 = scmp.ne.s32.totalorder %s402, %s416
    %p418 = scmp.eq.s32.totalorder %s77, 0
    %p419 = por %p417, %p418
    %s421 = sadd.s32 %s420, 1
    %p424 = scmp.eq.s32.totalorder %s71, 1
    %p425 = scmp.ne.s32.totalorder %s420, %s422
    %p426 = scmp.eq.s32.totalorder %s71, 0
    %p427 = por %p425, %p426
    %p428 = scmp.ne.s32.totalorder %s420, %s422
    %p429 = scmp.eq.s32.totalorder %s76, 1
    %p430 = por %p428, %p429
    %p431 = scmp.ne.s32.totalorder %s422, %s423
    %p432 = scmp.eq.s32.totalorder %s76, 0
    %p433 = por %p431, %p432
    %p434 = scmp.ne.s32.totalorder %s422, %s423
    %p435 = scmp.eq.s32.totalorder %s77, 1
    %p436 = por %p434, %p435
    %p438 = scmp.ne.s32.totalorder %s423, %s437
    %p439 = scmp.eq.s32.totalorder %s77, 0
    %p440 = por %p438, %p439
    %s442 = sadd.s32 %s441, 1
    %p445 = scmp.eq.s32.totalorder %s71, 1
    %p446 = scmp.ne.s32.totalorder %s441, %s443
    %p447 = scmp.eq.s32.totalorder %s71, 0
    %p448 = por %p446, %p447
    %p449 = scmp.ne.s32.totalorder %s441, %s443
    %p450 = scmp.eq.s32.totalorder %s76, 1
    %p451 = por %p449, %p450
    %p452 = scmp.ne.s32.totalorder %s443, %s444
    %p453 = scmp.eq.s32.totalorder %s76, 0
    %p454 = por %p452, %p453
    %p455 = scmp.ne.s32.totalorder %s443, %s444
    %p456 = scmp.eq.s32.totalorder %s77, 1
    %p457 = por %p455, %p456
    %p459 = scmp.ne.s32.totalorder %s444, %s458
    %p460 = scmp.eq.s32.totalorder %s77, 0
    %p461 = por %p459, %p460
    %s463 = sadd.s32 %s462, 1
    %p466 = scmp.eq.s32.totalorder %s71, 1
    %p467 = scmp.ne.s32.totalorder %s462, %s464
    %p468 = scmp.eq.s32.totalorder %s71, 0
    %p469 = por %p467, %p468
    %p470 = scmp.ne.s32.totalorder %s462, %s464
    %p471 = scmp.eq.s32.totalorder %s76, 1
    %p472 = por %p470, %p471
    %p473 = scmp.ne.s32.totalorder %s464, %s465
    %p474 = scmp.eq.s32.totalorder %s76, 0
    %p475 = por %p473, %p474
    %p476 = scmp.ne.s32.totalorder %s464, %s465
    %p477 = scmp.eq.s32.totalorder %s77, 1
    %p478 = por %p476, %p477
    %p480 = scmp.ne.s32.totalorder %s465, %s479
    %p481 = scmp.eq.s32.totalorder %s77, 0
    %p482 = por %p480, %p481
    %s484 = sadd.s32 %s483, 1
    %p487 = scmp.eq.s32.totalorder %s71, 1
    %p488 = scmp.ne.s32.totalorder %s483, %s485
    %p489 = scmp.eq.s32.totalorder %s71, 0
    %p490 = por %p488, %p489
    %p491 = scmp.ne.s32.totalorder %s483, %s485
    %p492 = scmp.eq.s32.totalorder %s76, 1
    %p493 = por %p491, %p492
    %p494 = scmp.ne.s32.totalorder %s485, %s486
    %p495 = scmp.eq.s32.totalorder %s76, 0
    %p496 = por %p494, %p495
    %p497 = scmp.ne.s32.totalorder %s485, %s486
    %p498 = scmp.eq.s32.totalorder %s77, 1
    %p499 = por %p497, %p498
    %p501 = scmp.ne.s32.totalorder %s486, %s500
    %p502 = scmp.eq.s32.totalorder %s77, 0
    %p503 = por %p501, %p502
    %s505 = sadd.s32 %s504, 1
    %p508 = scmp.eq.s32.totalorder %s71, 1
    %p509 = scmp.ne.s32.totalorder %s504, %s506
    %p510 = scmp.eq.s32.totalorder %s71, 0
    %p511 = por %p509, %p510
    %p512 = scmp.ne.s32.totalorder %s504, %s506
    %p513 = scmp.eq.s32.totalorder %s76, 1
    %p514 = por %p512, %p513
    %p515 = scmp.ne.s32.totalorder %s506, %s507
    %p516 = scmp.eq.s32.totalorder %s76, 0
    %p517 = por %p515, %p516
    %p518 = scmp.ne.s32.totalorder %s506, %s507
    %p519 = scmp.eq.s32.totalorder %s77, 1
    %p520 = por %p518, %p519
    %p522 = scmp.ne.s32.totalorder %s507, %s521
    %p523 = scmp.eq.s32.totalorder %s77, 0
    %p524 = por %p522, %p523
    %s526 = sadd.s32 %s525, 1
    %p529 = scmp.eq.s32.totalorder %s71, 1
    %p530 = scmp.ne.s32.totalorder %s525, %s527
    %p531 = scmp.eq.s32.totalorder %s71, 0
    %p532 = por %p530, %p531
    %p533 = scmp.ne.s32.totalorder %s525, %s527
    %p534 = scmp.eq.s32.totalorder %s76, 1
    %p535 = por %p533, %p534
    %p536 = scmp.ne.s32.totalorder %s527, %s528
    %p537 = scmp.eq.s32.totalorder %s76, 0
    %p538 = por %p536, %p537
    %p539 = scmp.ne.s32.totalorder %s527, %s528
    %p540 = scmp.eq.s32.totalorder %s77, 1
    %p541 = por %p539, %p540
    %p543 = scmp.ne.s32.totalorder %s528, %s542
    %p544 = scmp.eq.s32.totalorder %s77, 0
    %p545 = por %p543, %p544
    %s547 = sadd.s32 %s546, 1
    %p550 = scmp.eq.s32.totalorder %s71, 1
    %p551 = scmp.ne.s32.totalorder %s546, %s548
    %p552 = scmp.eq.s32.totalorder %s71, 0
    %p553 = por %p551, %p552
    %p554 = scmp.ne.s32.totalorder %s546, %s548
    %p555 = scmp.eq.s32.totalorder %s76, 1
    %p556 = por %p554, %p555
    %p557 = scmp.ne.s32.totalorder %s548, %s549
    %p558 = scmp.eq.s32.totalorder %s76, 0
    %p559 = por %p557, %p558
    %p560 = scmp.ne.s32.totalorder %s548, %s549
    %p561 = scmp.eq.s32.totalorder %s77, 1
    %p562 = por %p560, %p561
    %p564 = scmp.ne.s32.totalorder %s549, %s563
    %p565 = scmp.eq.s32.totalorder %s77, 0
    %p566 = por %p564, %p565
    %s568 = sadd.s32 %s567, 1
    %p571 = scmp.eq.s32.totalorder %s71, 1
    %p572 = scmp.ne.s32.totalorder %s567, %s569
    %p573 = scmp.eq.s32.totalorder %s71, 0
    %p574 = por %p572, %p573
    %p575 = scmp.ne.s32.totalorder %s567, %s569
    %p576 = scmp.eq.s32.totalorder %s76, 1
    %p577 = por %p575, %p576
    %p578 = scmp.ne.s32.totalorder %s569, %s570
    %p579 = scmp.eq.s32.totalorder %s76, 0
    %p580 = por %p578, %p579
    %p581 = scmp.ne.s32.totalorder %s569, %s570
    %p582 = scmp.eq.s32.totalorder %s77, 1
    %p583 = por %p581, %p582
    %p585 = scmp.ne.s32.totalorder %s570, %s584
    %p586 = scmp.eq.s32.totalorder %s77, 0
    %p587 = por %p585, %p586
    %s589 = sadd.s32 %s588, 1
    %p592 = scmp.eq.s32.totalorder %s71, 1
    %p593 = scmp.ne.s32.totalorder %s588, %s590
    %p594 = scmp.eq.s32.totalorder %s71, 0
    %p595 = por %p593, %p594
    %p596 = scmp.ne.s32.totalorder %s588, %s590
    %p597 = scmp.eq.s32.totalorder %s76, 1
    %p598 = por %p596, %p597
    %p599 = scmp.ne.s32.totalorder %s590, %s591
    %p600 = scmp.eq.s32.totalorder %s76, 0
    %p601 = por %p599, %p600
    %p602 = scmp.ne.s32.totalorder %s590, %s591
    %p603 = scmp.eq.s32.totalorder %s77, 1
    %p604 = por %p602, %p603
    %p606 = scmp.ne.s32.totalorder %s591, %s605
    %p607 = scmp.eq.s32.totalorder %s77, 0
    %p608 = por %p606, %p607
    %s610 = sadd.s32 %s609, 1
    %p613 = scmp.eq.s32.totalorder %s71, 1
    %p614 = scmp.ne.s32.totalorder %s609, %s611
    %p615 = scmp.eq.s32.totalorder %s71, 0
    %p616 = por %p614, %p615
    %p617 = scmp.ne.s32.totalorder %s609, %s611
    %p618 = scmp.eq.s32.totalorder %s76, 1
    %p619 = por %p617, %p618
    %p620 = scmp.ne.s32.totalorder %s611, %s612
    %p621 = scmp.eq.s32.totalorder %s76, 0
    %p622 = por %p620, %p621
    %p623 = scmp.ne.s32.totalorder %s611, %s612
    %p624 = scmp.eq.s32.totalorder %s77, 1
    %p625 = por %p623, %p624
    %p627 = scmp.ne.s32.totalorder %s612, %s626
    %p628 = scmp.eq.s32.totalorder %s77, 0
    %p629 = por %p627, %p628
    %s631 = sadd.s32 %s630, 1
    %p634 = scmp.eq.s32.totalorder %s71, 1
    %p635 = scmp.ne.s32.totalorder %s630, %s632
    %p636 = scmp.eq.s32.totalorder %s71, 0
    %p637 = por %p635, %p636
    %p638 = scmp.ne.s32.totalorder %s630, %s632
    %p639 = scmp.eq.s32.totalorder %s76, 1
    %p640 = por %p638, %p639
    %p641 = scmp.ne.s32.totalorder %s632, %s633
    %p642 = scmp.eq.s32.totalorder %s76, 0
    %p643 = por %p641, %p642
    %p644 = scmp.ne.s32.totalorder %s632, %s633
    %p645 = scmp.eq.s32.totalorder %s77, 1
    %p646 = por %p644, %p645
    %p648 = scmp.ne.s32.totalorder %s633, %s647
    %p649 = scmp.eq.s32.totalorder %s77, 0
    %p650 = por %p648, %p649
    %s652 = sadd.s32 %s651, 1
    %p655 = scmp.eq.s32.totalorder %s71, 1
    %p656 = scmp.ne.s32.totalorder %s651, %s653
    %p657 = scmp.eq.s32.totalorder %s71, 0
    %p658 = por %p656, %p657
    %p659 = scmp.ne.s32.totalorder %s651, %s653
    %p660 = scmp.eq.s32.totalorder %s76, 1
    %p661 = por %p659, %p660
    %p662 = scmp.ne.s32.totalorder %s653, %s654
    %p663 = scmp.eq.s32.totalorder %s76, 0
    %p664 = por %p662, %p663
    %p665 = scmp.ne.s32.totalorder %s653, %s654
    %p666 = scmp.eq.s32.totalorder %s77, 1
    %p667 = por %p665, %p666
    %p669 = scmp.ne.s32.totalorder %s654, %s668
    %p670 = scmp.eq.s32.totalorder %s77, 0
    %p671 = por %p669, %p670
    %s673 = sadd.s32 %s672, 1
    %p676 = scmp.eq.s32.totalorder %s71, 1
    %p677 = scmp.ne.s32.totalorder %s672, %s674
    %p678 = scmp.eq.s32.totalorder %s71, 0
    %p679 = por %p677, %p678
    %p680 = scmp.ne.s32.totalorder %s672, %s674
    %p681 = scmp.eq.s32.totalorder %s76, 1
    %p682 = por %p680, %p681
    %p683 = scmp.ne.s32.totalorder %s674, %s675
    %p684 = scmp.eq.s32.totalorder %s76, 0
    %p685 = por %p683, %p684
    %p686 = scmp.ne.s32.totalorder %s674, %s675
    %p687 = scmp.eq.s32.totalorder %s77, 1
    %p688 = por %p686, %p687
    %p690 = scmp.ne.s32.totalorder %s675, %s689
    %p691 = scmp.eq.s32.totalorder %s77, 0
    %p692 = por %p690, %p691
    %s694 = sadd.s32 %s693, 1
    %p697 = scmp.eq.s32.totalorder %s71, 1
    %p698 = scmp.ne.s32.totalorder %s693, %s695
    %p699 = scmp.eq.s32.totalorder %s71, 0
    %p700 = por %p698, %p699
    %p701 = scmp.ne.s32.totalorder %s693, %s695
    %p702 = scmp.eq.s32.totalorder %s76, 1
    %p703 = por %p701, %p702
    %p704 = scmp.ne.s32.totalorder %s695, %s696
    %p705 = scmp.eq.s32.totalorder %s76, 0
    %p706 = por %p704, %p705
    %p707 = scmp.ne.s32.totalorder %s695, %s696
    %p708 = scmp.eq.s32.totalorder %s77, 1
    %p709 = por %p707, %p708
    %p711 = scmp.ne.s32.totalorder %s696, %s710
    %p712 = scmp.eq.s32.totalorder %s77, 0
    %p713 = por %p711, %p712
    %s715 = sadd.s32 %s714, 1
    %p718 = scmp.eq.s32.totalorder %s71, 1
    %p719 = scmp.ne.s32.totalorder %s714, %s716
    %p720 = scmp.eq.s32.totalorder %s71, 0
    %p721 = por %p719, %p720
    %p722 = scmp.ne.s32.totalorder %s714, %s716
    %p723 = scmp.eq.s32.totalorder %s76, 1
    %p724 = por %p722, %p723
    %p725 = scmp.ne.s32.totalorder %s716, %s717
    %p726 = scmp.eq.s32.totalorder %s76, 0
    %p727 = por %p725, %p726
    %p728 = scmp.ne.s32.totalorder %s716, %s717
    %p729 = scmp.eq.s32.totalorder %s77, 1
    %p730 = por %p728, %p729
    %p732 = scmp.ne.s32.totalorder %s717, %s731
    %p733 = scmp.eq.s32.totalorder %s77, 0
    %p734 = por %p732, %p733
    %s736 = sadd.s32 %s735, 1
    %p739 = scmp.eq.s32.totalorder %s71, 1
    %p740 = scmp.ne.s32.totalorder %s735, %s737
    %p741 = scmp.eq.s32.totalorder %s71, 0
    %p742 = por %p740, %p741
    %p743 = scmp.ne.s32.totalorder %s735, %s737
    %p744 = scmp.eq.s32.totalorder %s76, 1
    %p745 = por %p743, %p744
    %p746 = scmp.ne.s32.totalorder %s737, %s738
    %p747 = scmp.eq.s32.totalorder %s76, 0
    %p748 = por %p746, %p747
    %p749 = scmp.ne.s32.totalorder %s737, %s738
    %p750 = scmp.eq.s32.totalorder %s77, 1
    %p751 = por %p749, %p750
    %p753 = scmp.ne.s32.totalorder %s738, %s752
    %p754 = scmp.eq.s32.totalorder %s77, 0
    %p755 = por %p753, %p754
    %s756 = ssub.s32 %s71, %s78
    %p757 = scmp.eq.s32.totalorder %s756, 0
    %s759 = sadd.s32 %s758, 1
    %s760 = scalar_select %p757, %s758, %s759
    %p763 = pneg %p757
    %p764 = scmp.eq.s32.totalorder %s71, 1
    %p765 = por %p763, %p764
    %p766 = scmp.ne.s32.totalorder %s758, %s761
    %p767 = scmp.eq.s32.totalorder %s71, 0
    %p768 = por %p766, %p767
    %p769 = scmp.ne.s32.totalorder %s758, %s761
    %p770 = scmp.eq.s32.totalorder %s76, 1
    %p771 = por %p769, %p770
    %p772 = scmp.ne.s32.totalorder %s761, %s762
    %p773 = scmp.eq.s32.totalorder %s76, 0
    %p774 = por %p772, %p773
    %p775 = scmp.ne.s32.totalorder %s761, %s762
    %p776 = scmp.eq.s32.totalorder %s77, 1
    %p777 = por %p775, %p776
    %p779 = scmp.ne.s32.totalorder %s762, %s778
    %p780 = scmp.eq.s32.totalorder %s77, 0
    %p781 = por %p779, %p780
    %p782 = scmp.le.s32.totalorder 1, %s71
    %p783 = scmp.lt.s32.totalorder %s71, 3
    %p784 = pnand %p782, %p783
    %p785 = pneg %p784
    // Predicated region
    $region9: #{teacher_forward.1} parent=5 // pred_check
      _
    $region10: #{teacher_forward.1} parent=5 // pred_check_branch
      %787 = sbr.rel (%p784) target = $region12
    $region11: #{teacher_forward.1} parent=5 // pred_region
      %s788 = ssub.s32 %s71, 1
      // Predicated region
      $region13: #{teacher_forward.1} parent=11 // pred_check
        %p789 = pneg %p118
      $region14: #{teacher_forward.1} parent=11 // pred_check_branch
        %791 = sbr.rel (%p789) target = $region16
      $region15: #{teacher_forward.1} parent=11 // pred_region
        _
      $region16: #{teacher_forward.1} parent=11 // pred_fallthru
        _
      // Predicated region
      $region17: #{teacher_forward.1} parent=11 // pred_check
        %p792 = pneg %p139
      $region18: #{teacher_forward.1} parent=11 // pred_check_branch
        %794 = sbr.rel (%p792) target = $region20
      $region19: #{teacher_forward.1} parent=11 // pred_region
        _
      $region20: #{teacher_forward.1} parent=11 // pred_fallthru
        _
      // Predicated region
      $region21: #{teacher_forward.1} parent=11 // pred_check
        %p795 = pneg %p160
      $region22: #{teacher_forward.1} parent=11 // pred_check_branch
        %797 = sbr.rel (%p795) target = $region24
      $region23: #{teacher_forward.1} parent=11 // pred_region
        _
      $region24: #{teacher_forward.1} parent=11 // pred_fallthru
        _
      // Predicated region
      $region25: #{teacher_forward.1} parent=11 // pred_check
        %p798 = pneg %p181
      $region26: #{teacher_forward.1} parent=11 // pred_check_branch
        %800 = sbr.rel (%p798) target = $region28
      $region27: #{teacher_forward.1} parent=11 // pred_region
        _
      $region28: #{teacher_forward.1} parent=11 // pred_fallthru
        _
      // Predicated region
      $region29: #{teacher_forward.1} parent=11 // pred_check
        %p801 = pneg %p202
      $region30: #{teacher_forward.1} parent=11 // pred_check_branch
        %803 = sbr.rel (%p801) target = $region32
      $region31: #{teacher_forward.1} parent=11 // pred_region
        _
      $region32: #{teacher_forward.1} parent=11 // pred_fallthru
        _
      // Predicated region
      $region33: #{teacher_forward.1} parent=11 // pred_check
        %p804 = pneg %p223
      $region34: #{teacher_forward.1} parent=11 // pred_check_branch
        %806 = sbr.rel (%p804) target = $region36
      $region35: #{teacher_forward.1} parent=11 // pred_region
        _
      $region36: #{teacher_forward.1} parent=11 // pred_fallthru
        _
      // Predicated region
      $region37: #{teacher_forward.1} parent=11 // pred_check
        %p807 = pneg %p244
      $region38: #{teacher_forward.1} parent=11 // pred_check_branch
        %809 = sbr.rel (%p807) target = $region40
      $region39: #{teacher_forward.1} parent=11 // pred_region
        _
      $region40: #{teacher_forward.1} parent=11 // pred_fallthru
        _
      // Predicated region
      $region41: #{teacher_forward.1} parent=11 // pred_check
        %p810 = pneg %p265
      $region42: #{teacher_forward.1} parent=11 // pred_check_branch
        %812 = sbr.rel (%p810) target = $region44
      $region43: #{teacher_forward.1} parent=11 // pred_region
        _
      $region44: #{teacher_forward.1} parent=11 // pred_fallthru
        _
      // Predicated region
      $region45: #{teacher_forward.1} parent=11 // pred_check
        %p813 = pneg %p286
      $region46: #{teacher_forward.1} parent=11 // pred_check_branch
        %815 = sbr.rel (%p813) target = $region48
      $region47: #{teacher_forward.1} parent=11 // pred_region
        _
      $region48: #{teacher_forward.1} parent=11 // pred_fallthru
        _
      // Predicated region
      $region49: #{teacher_forward.1} parent=11 // pred_check
        %p816 = pneg %p307
      $region50: #{teacher_forward.1} parent=11 // pred_check_branch
        %818 = sbr.rel (%p816) target = $region52
      $region51: #{teacher_forward.1} parent=11 // pred_region
        _
      $region52: #{teacher_forward.1} parent=11 // pred_fallthru
        _
      // Predicated region
      $region53: #{teacher_forward.1} parent=11 // pred_check
        %p819 = pneg %p328
      $region54: #{teacher_forward.1} parent=11 // pred_check_branch
        %821 = sbr.rel (%p819) target = $region56
      $region55: #{teacher_forward.1} parent=11 // pred_region
        _
      $region56: #{teacher_forward.1} parent=11 // pred_fallthru
        _
      // Predicated region
      $region57: #{teacher_forward.1} parent=11 // pred_check
        %p822 = pneg %p349
      $region58: #{teacher_forward.1} parent=11 // pred_check_branch
        %824 = sbr.rel (%p822) target = $region60
      $region59: #{teacher_forward.1} parent=11 // pred_region
        _
      $region60: #{teacher_forward.1} parent=11 // pred_fallthru
        _
      // Predicated region
      $region61: #{teacher_forward.1} parent=11 // pred_check
        %p825 = pneg %p370
      $region62: #{teacher_forward.1} parent=11 // pred_check_branch
        %827 = sbr.rel (%p825) target = $region64
      $region63: #{teacher_forward.1} parent=11 // pred_region
        _
      $region64: #{teacher_forward.1} parent=11 // pred_fallthru
        _
      // Predicated region
      $region65: #{teacher_forward.1} parent=11 // pred_check
        %p828 = pneg %p391
      $region66: #{teacher_forward.1} parent=11 // pred_check_branch
        %830 = sbr.rel (%p828) target = $region68
      $region67: #{teacher_forward.1} parent=11 // pred_region
        _
      $region68: #{teacher_forward.1} parent=11 // pred_fallthru
        _
      // Predicated region
      $region69: #{teacher_forward.1} parent=11 // pred_check
        %p831 = pneg %p412
      $region70: #{teacher_forward.1} parent=11 // pred_check_branch
        %833 = sbr.rel (%p831) target = $region72
      $region71: #{teacher_forward.1} parent=11 // pred_region
        _
      $region72: #{teacher_forward.1} parent=11 // pred_fallthru
        _
      // Predicated region
      $region73: #{teacher_forward.1} parent=11 // pred_check
        %p834 = pneg %p433
      $region74: #{teacher_forward.1} parent=11 // pred_check_branch
        %836 = sbr.rel (%p834) target = $region76
      $region75: #{teacher_forward.1} parent=11 // pred_region
        _
      $region76: #{teacher_forward.1} parent=11 // pred_fallthru
        _
      // Predicated region
      $region77: #{teacher_forward.1} parent=11 // pred_check
        %p837 = pneg %p454
      $region78: #{teacher_forward.1} parent=11 // pred_check_branch
        %839 = sbr.rel (%p837) target = $region80
      $region79: #{teacher_forward.1} parent=11 // pred_region
        _
      $region80: #{teacher_forward.1} parent=11 // pred_fallthru
        _
      // Predicated region
      $region81: #{teacher_forward.1} parent=11 // pred_check
        %p840 = pneg %p475
      $region82: #{teacher_forward.1} parent=11 // pred_check_branch
        %842 = sbr.rel (%p840) target = $region84
      $region83: #{teacher_forward.1} parent=11 // pred_region
        _
      $region84: #{teacher_forward.1} parent=11 // pred_fallthru
        _
      // Predicated region
      $region85: #{teacher_forward.1} parent=11 // pred_check
        %p843 = pneg %p496
      $region86: #{teacher_forward.1} parent=11 // pred_check_branch
        %845 = sbr.rel (%p843) target = $region88
      $region87: #{teacher_forward.1} parent=11 // pred_region
        _
      $region88: #{teacher_forward.1} parent=11 // pred_fallthru
        _
      // Predicated region
      $region89: #{teacher_forward.1} parent=11 // pred_check
        %p846 = pneg %p517
      $region90: #{teacher_forward.1} parent=11 // pred_check_branch
        %848 = sbr.rel (%p846) target = $region92
      $region91: #{teacher_forward.1} parent=11 // pred_region
        _
      $region92: #{teacher_forward.1} parent=11 // pred_fallthru
        _
      // Predicated region
      $region93: #{teacher_forward.1} parent=11 // pred_check
        %p849 = pneg %p538
      $region94: #{teacher_forward.1} parent=11 // pred_check_branch
        %851 = sbr.rel (%p849) target = $region96
      $region95: #{teacher_forward.1} parent=11 // pred_region
        _
      $region96: #{teacher_forward.1} parent=11 // pred_fallthru
        _
      // Predicated region
      $region97: #{teacher_forward.1} parent=11 // pred_check
        %p852 = pneg %p559
      $region98: #{teacher_forward.1} parent=11 // pred_check_branch
        %854 = sbr.rel (%p852) target = $region100
      $region99: #{teacher_forward.1} parent=11 // pred_region
        _
      $region100: #{teacher_forward.1} parent=11 // pred_fallthru
        _
      // Predicated region
      $region101: #{teacher_forward.1} parent=11 // pred_check
        %p855 = pneg %p580
      $region102: #{teacher_forward.1} parent=11 // pred_check_branch
        %857 = sbr.rel (%p855) target = $region104
      $region103: #{teacher_forward.1} parent=11 // pred_region
        _
      $region104: #{teacher_forward.1} parent=11 // pred_fallthru
        _
      // Predicated region
      $region105: #{teacher_forward.1} parent=11 // pred_check
        %p858 = pneg %p601
      $region106: #{teacher_forward.1} parent=11 // pred_check_branch
        %860 = sbr.rel (%p858) target = $region108
      $region107: #{teacher_forward.1} parent=11 // pred_region
        _
      $region108: #{teacher_forward.1} parent=11 // pred_fallthru
        _
      // Predicated region
      $region109: #{teacher_forward.1} parent=11 // pred_check
        %p861 = pneg %p622
      $region110: #{teacher_forward.1} parent=11 // pred_check_branch
        %863 = sbr.rel (%p861) target = $region112
      $region111: #{teacher_forward.1} parent=11 // pred_region
        _
      $region112: #{teacher_forward.1} parent=11 // pred_fallthru
        _
      // Predicated region
      $region113: #{teacher_forward.1} parent=11 // pred_check
        %p864 = pneg %p643
      $region114: #{teacher_forward.1} parent=11 // pred_check_branch
        %866 = sbr.rel (%p864) target = $region116
      $region115: #{teacher_forward.1} parent=11 // pred_region
        _
      $region116: #{teacher_forward.1} parent=11 // pred_fallthru
        _
      // Predicated region
      $region117: #{teacher_forward.1} parent=11 // pred_check
        %p867 = pneg %p664
      $region118: #{teacher_forward.1} parent=11 // pred_check_branch
        %869 = sbr.rel (%p867) target = $region120
      $region119: #{teacher_forward.1} parent=11 // pred_region
        _
      $region120: #{teacher_forward.1} parent=11 // pred_fallthru
        _
      // Predicated region
      $region121: #{teacher_forward.1} parent=11 // pred_check
        %p870 = pneg %p685
      $region122: #{teacher_forward.1} parent=11 // pred_check_branch
        %872 = sbr.rel (%p870) target = $region124
      $region123: #{teacher_forward.1} parent=11 // pred_region
        _
      $region124: #{teacher_forward.1} parent=11 // pred_fallthru
        _
      // Predicated region
      $region125: #{teacher_forward.1} parent=11 // pred_check
        %p873 = pneg %p706
      $region126: #{teacher_forward.1} parent=11 // pred_check_branch
        %875 = sbr.rel (%p873) target = $region128
      $region127: #{teacher_forward.1} parent=11 // pred_region
        _
      $region128: #{teacher_forward.1} parent=11 // pred_fallthru
        _
      // Predicated region
      $region129: #{teacher_forward.1} parent=11 // pred_check
        %p876 = pneg %p727
      $region130: #{teacher_forward.1} parent=11 // pred_check_branch
        %878 = sbr.rel (%p876) target = $region132
      $region131: #{teacher_forward.1} parent=11 // pred_region
        _
      $region132: #{teacher_forward.1} parent=11 // pred_fallthru
        _
      // Predicated region
      $region133: #{teacher_forward.1} parent=11 // pred_check
        %p879 = pneg %p748
      $region134: #{teacher_forward.1} parent=11 // pred_check_branch
        %881 = sbr.rel (%p879) target = $region136
      $region135: #{teacher_forward.1} parent=11 // pred_region
        _
      $region136: #{teacher_forward.1} parent=11 // pred_fallthru
        _
    $region12: #{teacher_forward.1} parent=5 // pred_fallthru
      _
    %p882 = scmp.lt.s32.totalorder %s71, 2
    // Predicated region
    $region137: #{teacher_forward.1} parent=5 // pred_check
      %p883 = pneg %p882
    $region138: #{teacher_forward.1} parent=5 // pred_check_branch
      %885 = sbr.rel (%p883) target = $region140
    $region139: #{teacher_forward.1} parent=5 // pred_region
      // Predicated region
      $region141: #{teacher_forward.1} parent=139 // pred_check
        %p886 = pneg %p91
      $region142: #{teacher_forward.1} parent=139 // pred_check_branch
        %888 = sbr.rel (%p886) target = $region144
      $region143: #{teacher_forward.1} parent=139 // pred_region
        %p889 = scmp.lt.s32.totalorder %s71, 1
        %s890 = scalar_select %p889, %s71, 1
        %s891 = smul.addr %s890, 8
        %s892 = smul.addr %s891, 8
        %s893 = scalar_lea.vmem %s1, %s892
      $region144: #{teacher_forward.1} parent=139 // pred_fallthru
        _
    $region140: #{teacher_forward.1} parent=5 // pred_fallthru
      _
    %p894 = scmp.le.s32.totalorder 1, %s71
    %p895 = scmp.lt.s32.totalorder %s71, 3
    %p896 = pnand %p894, %p895
    %p897 = pneg %p896
    // Predicated region
    $region145: #{teacher_forward.1} parent=5 // pred_check
      _
    $region146: #{teacher_forward.1} parent=5 // pred_check_branch
      %899 = sbr.rel (%p896) target = $region148
    $region147: #{teacher_forward.1} parent=5 // pred_region
      %s900 = ssub.s32 %s71, 1
      %p901 = scmp.lt.s32.totalorder %s76, 1
      %s902 = scalar_select %p901, %s76, 1
      %s903 = smul.addr %s902, 8
      %s904 = smul.addr %s903, 8
      %s905 = scalar_lea.vmem %s1, %s904
      %p906 = pneg %p97
      %p907 = pneg %p94
      %p908 = pneg %p118
      %p909 = pneg %p115
      %p910 = pneg %p139
      %p911 = pneg %p136
      %p912 = pneg %p160
      %p913 = pneg %p157
      %p914 = pneg %p181
      %p915 = pneg %p178
      %p916 = pneg %p202
      %p917 = pneg %p199
      %p918 = pneg %p223
      %p919 = pneg %p220
      %p920 = pneg %p244
      %p921 = pneg %p241
      %p922 = pneg %p265
      %p923 = pneg %p262
      %p924 = pneg %p286
      %p925 = pneg %p283
      %p926 = pneg %p307
      %p927 = pneg %p304
      %p928 = pneg %p328
      %p929 = pneg %p325
      %p930 = pneg %p349
      %p931 = pneg %p346
      %p932 = pneg %p370
      %p933 = pneg %p367
      %p934 = pneg %p391
      %p935 = pneg %p388
      %p936 = pneg %p412
      %p937 = pneg %p409
      %p938 = pneg %p433
      %p939 = pneg %p430
      %p940 = pneg %p454
      %p941 = pneg %p451
      %p942 = pneg %p475
      %p943 = pneg %p472
      %p944 = pneg %p496
      %p945 = pneg %p493
      %p946 = pneg %p517
      %p947 = pneg %p514
      %p948 = pneg %p538
      %p949 = pneg %p535
      %p950 = pneg %p559
      %p951 = pneg %p556
      %p952 = pneg %p580
      %p953 = pneg %p577
      %p954 = pneg %p601
      %p955 = pneg %p598
      %p956 = pneg %p622
      %p957 = pneg %p619
      %p958 = pneg %p643
      %p959 = pneg %p640
      %p960 = pneg %p664
      %p961 = pneg %p661
      %p962 = pneg %p685
      %p963 = pneg %p682
      %p964 = pneg %p706
      %p965 = pneg %p703
      %p966 = pneg %p727
      %p967 = pneg %p724
      %p968 = pneg %p748
      %p969 = pneg %p745
      %p970 = pneg %p774
      %p971 = pneg %p771
      %p972 = scmp.lt.s32.totalorder %s76, 1
      %s973 = scalar_select %p972, %s76, 1
      %s974 = smul.addr %s973, 8
      %s975 = smul.addr %s974, 8
      %s976 = scalar_lea.vmem %s65, %s975
      %p977 = scmp.lt.s32.totalorder %s76, 1
      %s978 = scalar_select %p977, %s76, 1
      %s979 = smul.addr %s978, 8
      %s980 = smul.addr %s979, 8
      %s981 = scalar_lea.vmem %s1, %s980
      %p982 = scmp.lt.s32.totalorder %s76, 1
      %s983 = scalar_select %p982, %s76, 1
      %s984 = smul.addr %s983, 8
      %s985 = smul.addr %s984, 8
      %s986 = scalar_lea.vmem %s65, %s985
      %v987 = vld [vmem:[%s981] sm:$0xff]
      %v988 = vld [vmem:[%s981 + $0x8] sm:$0xff]
      %v989 = vld [vmem:[%s981 + $0x10] sm:$0xff]
      %v990 = vld [vmem:[%s981 + $0x18] sm:$0xff]
      %v991 = vld [vmem:[%s981 + $0x20] sm:$0xff]
      %v992 = vld [vmem:[%s981 + $0x28] sm:$0xff]
      %v993 = vld [vmem:[%s981 + $0x30] sm:$0xff]
      %v994 = vld [vmem:[%s981 + $0x38] sm:$0xff]
      %v995 = vld [vmem:[%s5] sm:$0xff]
      %v996 = vld [vmem:[%s5 + $0x8] sm:$0xff]
      %v997 = vld [vmem:[%s5 + $0x10] sm:$0xff]
      %v998 = vld [vmem:[%s5 + $0x18] sm:$0xff]
      %v999 = vld [vmem:[%s5 + $0x20] sm:$0xff]
      %v1000 = vld [vmem:[%s5 + $0x28] sm:$0xff]
      %v1001 = vld [vmem:[%s5 + $0x30] sm:$0xff]
      %v1002 = vld [vmem:[%s5 + $0x38] sm:$0xff]
      %v1003 = vld [vmem:[%s7] sm:$0x1]
      %v1005 = vlaneseq
      %v1006 = vshrl.u32 %v1005, 7
      %v1007 = vsub.s32 0, %v1006
      %v1008 = vrot.slane %v1003, %v1007
      %vm1010 = vcmask 523264
      %v1012 = vsel %vm1010, %v987, 0
      %v1015 = vsel %vm1010, %v988, 0
      %v1018 = vsel %vm1010, %v989, 0
      %v1021 = vsel %vm1010, %v990, 0
      %v1024 = vsel %vm1010, %v991, 0
      %v1027 = vsel %vm1010, %v992, 0
      %v1030 = vsel %vm1010, %v993, 0
      %v1033 = vsel %vm1010, %v994, 0
      %1035 = vmatprep.subr.mxu0 0.0
      %1036 = vmatpush1.msra.mxu0 0.0
      %1037 = vmatprep.subr.mxu0 0.0
      %1038 = vmatpush1.msra.mxu0 0.0
      %1039 = vmatprep.subr.mxu0 0.0
      %1040 = vmatpush1.msra.mxu0 0.0
      %1041 = vmatprep.subr.mxu0 0.0
      %1042 = vmatpush1.msra.mxu0 0.0
      %1043 = vmatprep.subr.mxu0 0.0
      %1044 = vmatpush1.msra.mxu0 0.0
      %1045 = vmatprep.subr.mxu0 0.0
      %1046 = vmatpush1.msra.mxu0 0.0
      %1047 = vmatprep.subr.mxu0 0.0
      %1048 = vmatpush1.msra.mxu0 0.0
      %1049 = vmatprep.subr.mxu0 0.0
      %1050 = vmatpush1.msra.mxu0 0.0
      %1051 = vmatprep.subr.mxu0 0.0
      %1052 = vmatpush1.msra.mxu0 %v1002
      %1053 = vmatprep.subr.mxu0 0.0
      %1054 = vmatpush1.msra.mxu0 %v1001
      %1055 = vmatprep.subr.mxu0 0.0
      %1056 = vmatpush1.msra.mxu0 %v1000
      %1057 = vmatprep.subr.mxu0 0.0
      %1058 = vmatpush1.msra.mxu0 %v999
      %1059 = vmatprep.subr.mxu0 0.0
      %1060 = vmatpush1.msra.mxu0 %v998
      %1061 = vmatprep.subr.mxu0 0.0
      %1062 = vmatpush1.msra.mxu0 %v997
      %1063 = vmatprep.subr.mxu0 0.0
      %1064 = vmatpush1.msra.mxu0 %v996
      %1065 = vmatprep.subr.mxu0 0.0
      %1066 = vmatpush1.msra.mxu0 %v995
      %1067 = vmatprep.subr.mxu0 0.0
      %1068 = vmatpush2.msra.mxu0 0.0
      %1069 = vmatprep.subr.mxu0 0.0
      %1070 = vmatpush2.msra.mxu0 0.0
      %1071 = vmatprep.subr.mxu0 0.0
      %1072 = vmatpush2.msra.mxu0 0.0
      %1073 = vmatprep.subr.mxu0 0.0
      %1074 = vmatpush2.msra.mxu0 0.0
      %1075 = vmatprep.subr.mxu0 0.0
      %1076 = vmatpush2.msra.mxu0 0.0
      %1077 = vmatprep.subr.mxu0 0.0
      %1078 = vmatpush2.msra.mxu0 0.0
      %1079 = vmatprep.subr.mxu0 0.0
      %1080 = vmatpush2.msra.mxu0 0.0
      %1081 = vmatprep.subr.mxu0 0.0
      %1082 = vmatpush2.msra.mxu0 0.0
      %1083 = vmatprep.subr.mxu0 0.0
      %1084 = vmatpush2.msra.mxu0 0.0
      %1085 = vmatprep.subr.mxu0 0.0
      %1086 = vmatpush2.msra.mxu0 0.0
      %1087 = vmatprep.subr.mxu0 0.0
      %1088 = vmatpush2.msra.mxu0 0.0
      %1089 = vmatprep.subr.mxu0 0.0
      %1090 = vmatpush2.msra.mxu0 0.0
      %1091 = vmatprep.subr.mxu0 0.0
      %1092 = vmatpush2.msra.mxu0 0.0
      %1093 = vmatprep.subr.mxu0 0.0
      %1094 = vmatpush2.msra.mxu0 0.0
      %1095 = vmatprep.subr.mxu0 0.0
      %1096 = vmatpush2.msra.mxu0 0.0
      %1097 = vmatprep.subr.mxu0 0.0
      %1098 = vmatpush2.msra.mxu0 0.0
      %1099 = vmatprep.mubr.f32.mxu0 0.0
      %1100 = vmatmul.mubr.f32.gmra.mxu0 %v1012
      %v1101 = vpop.f32.mrf.mxu0
      %v1102 = vadd.f32 %v1008, %v1101
      %v1103 = vpop.f32.mrf.mxu0
      %1104 = vmatprep.mubr.f32.mxu0 0.0
      %1105 = vmatmul.mubr.f32.gmra.mxu0 %v1015
      %v1106 = vpop.f32.mrf.mxu0
      %v1107 = vadd.f32 %v1008, %v1106
      %v1108 = vpop.f32.mrf.mxu0
      %1109 = vmatprep.mubr.f32.mxu0 0.0
      %1110 = vmatmul.mubr.f32.gmra.mxu0 %v1018
      %v1111 = vpop.f32.mrf.mxu0
      %v1112 = vadd.f32 %v1008, %v1111
      %v1113 = vpop.f32.mrf.mxu0
      %1114 = vmatprep.mubr.f32.mxu0 0.0
      %1115 = vmatmul.mubr.f32.gmra.mxu0 %v1021
      %v1116 = vpop.f32.mrf.mxu0
      %v1117 = vadd.f32 %v1008, %v1116
      %v1118 = vpop.f32.mrf.mxu0
      %1119 = vmatprep.mubr.f32.mxu0 0.0
      %1120 = vmatmul.mubr.f32.gmra.mxu0 %v1024
      %v1121 = vpop.f32.mrf.mxu0
      %v1122 = vadd.f32 %v1008, %v1121
      %v1123 = vpop.f32.mrf.mxu0
      %1124 = vmatprep.mubr.f32.mxu0 0.0
      %1125 = vmatmul.mubr.f32.gmra.mxu0 %v1027
      %v1126 = vpop.f32.mrf.mxu0
      %v1127 = vadd.f32 %v1008, %v1126
      %v1128 = vpop.f32.mrf.mxu0
      %1129 = vmatprep.mubr.f32.mxu0 0.0
      %1130 = vmatmul.mubr.f32.gmra.mxu0 %v1030
      %v1131 = vpop.f32.mrf.mxu0
      %v1132 = vadd.f32 %v1008, %v1131
      %v1133 = vpop.f32.mrf.mxu0
      %1134 = vmatprep.mubr.f32.mxu0 0.0
      %1135 = vmatmul.mubr.f32.gmra.mxu0 %v1033
      %v1136 = vpop.f32.mrf.mxu0
      %v1137 = vadd.f32 %v1008, %v1136
      %v1138 = vpop.f32.mrf.mxu0
      %1139 = vdwg.mxu0
      %v1140 = vld [vmem:[%s3] sm:$0xff]
      %v1141 = vld [vmem:[%s3 + $0x8] sm:$0xff]
      %v1142 = vld [vmem:[%s3 + $0x10] sm:$0xff]
      %v1143 = vld [vmem:[%s3 + $0x18] sm:$0xff]
      %v1144 = vld [vmem:[%s3 + $0x20] sm:$0xff]
      %v1145 = vld [vmem:[%s3 + $0x28] sm:$0xff]
      %v1146 = vld [vmem:[%s3 + $0x30] sm:$0xff]
      %v1147 = vld [vmem:[%s3 + $0x38] sm:$0xff]
      %v1148 = vadd.f32 %v1102, %v1140
      %v1149 = vadd.f32 %v1107, %v1141
      %v1150 = vadd.f32 %v1112, %v1142
      %v1151 = vadd.f32 %v1117, %v1143
      %v1152 = vadd.f32 %v1122, %v1144
      %v1153 = vadd.f32 %v1127, %v1145
      %v1154 = vadd.f32 %v1132, %v1146
      %v1155 = vadd.f32 %v1137, %v1147
      %v1156 = vld [vmem:[%s9] sm:$0x1]
      %v1157 = vld [vmem:[%s11] sm:$0x1]
      %vm1158 = vcmask 261120
      %v1159 = vsel %vm1158, %v1148, 0.0
      %1160 = vadd.xlane.f32.xlu0 %v1159
      %v1161 = vpop.xlane.xlu0 %1160
      %v1162 = vsel %vm1158, %v1149, 0.0
      %1163 = vadd.xlane.f32.xlu0 %v1162
      %v1164 = vpop.xlane.xlu0 %1163
      %v1165 = vsel %vm1158, %v1150, 0.0
      %1166 = vadd.xlane.f32.xlu0 %v1165
      %v1167 = vpop.xlane.xlu0 %1166
      %v1168 = vsel %vm1158, %v1151, 0.0
      %1169 = vadd.xlane.f32.xlu0 %v1168
      %v1170 = vpop.xlane.xlu0 %1169
      %v1171 = vsel %vm1158, %v1152, 0.0
      %1172 = vadd.xlane.f32.xlu0 %v1171
      %v1173 = vpop.xlane.xlu0 %1172
      %v1174 = vsel %vm1158, %v1153, 0.0
      %1175 = vadd.xlane.f32.xlu0 %v1174
      %v1176 = vpop.xlane.xlu0 %1175
      %v1177 = vsel %vm1158, %v1154, 0.0
      %1178 = vadd.xlane.f32.xlu0 %v1177
      %v1179 = vpop.xlane.xlu0 %1178
      %v1180 = vsel %vm1158, %v1155, 0.0
      %1181 = vadd.xlane.f32.xlu0 %v1180
      %v1182 = vpop.xlane.xlu0 %1181
      %v1183 = vrcp.pop 32.0
      %v1184 = vmul.f32 %v1161, %v1183
      %v1185 = vmul.f32 %v1164, %v1183
      %v1186 = vmul.f32 %v1167, %v1183
      %v1187 = vmul.f32 %v1170, %v1183
      %v1188 = vmul.f32 %v1173, %v1183
      %v1189 = vmul.f32 %v1176, %v1183
      %v1190 = vmul.f32 %v1179, %v1183
      %v1191 = vmul.f32 %v1182, %v1183
      %v1192 = vsub.f32 %v1148, %v1184
      %v1193 = vsub.f32 %v1149, %v1185
      %v1194 = vsub.f32 %v1150, %v1186
      %v1195 = vsub.f32 %v1151, %v1187
      %v1196 = vsub.f32 %v1152, %v1188
      %v1197 = vsub.f32 %v1153, %v1189
      %v1198 = vsub.f32 %v1154, %v1190
      %v1199 = vsub.f32 %v1155, %v1191
      %v1200 = vmul.f32 %v1192, %v1192
      %v1201 = vmul.f32 %v1193, %v1193
      %v1202 = vmul.f32 %v1194, %v1194
      %v1203 = vmul.f32 %v1195, %v1195
      %v1204 = vmul.f32 %v1196, %v1196
      %v1205 = vmul.f32 %v1197, %v1197
      %v1206 = vmul.f32 %v1198, %v1198
      %v1207 = vmul.f32 %v1199, %v1199
      %v1208 = vsel %vm1158, %v1200, 0.0
      %1209 = vadd.xlane.f32.xlu0 %v1208
      %v1210 = vpop.xlane.xlu0 %1209
      %v1211 = vsel %vm1158, %v1201, 0.0
      %1212 = vadd.xlane.f32.xlu0 %v1211
      %v1213 = vpop.xlane.xlu0 %1212
      %v1214 = vsel %vm1158, %v1202, 0.0
      %1215 = vadd.xlane.f32.xlu0 %v1214
      %v1216 = vpop.xlane.xlu0 %1215
      %v1217 = vsel %vm1158, %v1203, 0.0
      %1218 = vadd.xlane.f32.xlu0 %v1217
      %v1219 = vpop.xlane.xlu0 %1218
      %v1220 = vsel %vm1158, %v1204, 0.0
      %1221 = vadd.xlane.f32.xlu0 %v1220
      %v1222 = vpop.xlane.xlu0 %1221
      %v1223 = vsel %vm1158, %v1205, 0.0
      %1224 = vadd.xlane.f32.xlu0 %v1223
      %v1225 = vpop.xlane.xlu0 %1224
      %v1226 = vsel %vm1158, %v1206, 0.0
      %1227 = vadd.xlane.f32.xlu0 %v1226
      %v1228 = vpop.xlane.xlu0 %1227
      %v1229 = vsel %vm1158, %v1207, 0.0
      %1230 = vadd.xlane.f32.xlu0 %v1229
      %v1231 = vpop.xlane.xlu0 %1230
      %v1232 = vmul.f32 %v1210, %v1183
      %v1233 = vmul.f32 %v1213, %v1183
      %v1234 = vmul.f32 %v1216, %v1183
      %v1235 = vmul.f32 %v1219, %v1183
      %v1236 = vmul.f32 %v1222, %v1183
      %v1237 = vmul.f32 %v1225, %v1183
      %v1238 = vmul.f32 %v1228, %v1183
      %v1239 = vmul.f32 %v1231, %v1183
      %v1240 = vadd.f32 %v1232, 1e-06
      %v1241 = vadd.f32 %v1233, 1e-06
      %v1242 = vadd.f32 %v1234, 1e-06
      %v1243 = vadd.f32 %v1235, 1e-06
      %v1244 = vadd.f32 %v1236, 1e-06
      %v1245 = vadd.f32 %v1237, 1e-06
      %v1246 = vadd.f32 %v1238, 1e-06
      %v1247 = vadd.f32 %v1239, 1e-06
      %v1248 = vrsqrt.pop %v1240
      %v1249 = vrsqrt.pop %v1241
      %v1250 = vrsqrt.pop %v1242
      %v1251 = vrsqrt.pop %v1243
      %v1252 = vrsqrt.pop %v1244
      %v1253 = vrsqrt.pop %v1245
      %v1254 = vrsqrt.pop %v1246
      %v1255 = vrsqrt.pop %v1247
      %v1256 = vmul.f32 %v1192, %v1248
      %v1257 = vmul.f32 %v1193, %v1249
      %v1258 = vmul.f32 %v1194, %v1250
      %v1259 = vmul.f32 %v1195, %v1251
      %v1260 = vmul.f32 %v1196, %v1252
      %v1261 = vmul.f32 %v1197, %v1253
      %v1262 = vmul.f32 %v1198, %v1254
      %v1263 = vmul.f32 %v1199, %v1255
      %v1265 = vlaneseq
      %v1266 = vshrl.u32 %v1265, 7
      %v1267 = vsub.s32 0, %v1266
      %v1268 = vrot.slane %v1156, %v1267
      %v1270 = vmul.f32 %v1256, %v1268
      %v1271 = vmul.f32 %v1257, %v1268
      %v1272 = vmul.f32 %v1258, %v1268
      %v1273 = vmul.f32 %v1259, %v1268
      %v1274 = vmul.f32 %v1260, %v1268
      %v1275 = vmul.f32 %v1261, %v1268
      %v1276 = vmul.f32 %v1262, %v1268
      %v1277 = vmul.f32 %v1263, %v1268
      %v1279 = vlaneseq
      %v1280 = vshrl.u32 %v1279, 7
      %v1281 = vsub.s32 0, %v1280
      %v1282 = vrot.slane %v1157, %v1281
      %v1284 = vadd.f32 %v1270, %v1282
      %v1285 = vadd.f32 %v1271, %v1282
      %v1286 = vadd.f32 %v1272, %v1282
      %v1287 = vadd.f32 %v1273, %v1282
      %v1288 = vadd.f32 %v1274, %v1282
      %v1289 = vadd.f32 %v1275, %v1282
      %v1290 = vadd.f32 %v1276, %v1282
      %v1291 = vadd.f32 %v1277, %v1282
      %v1292 = vld [vmem:[%s13] sm:$0xff]
      %v1293 = vld [vmem:[%s13 + $0x8] sm:$0xff]
      %v1294 = vld [vmem:[%s13 + $0x10] sm:$0xff]
      %v1295 = vld [vmem:[%s13 + $0x18] sm:$0xff]
      %v1296 = vld [vmem:[%s15] sm:$0x1]
      %v1298 = vlaneseq
      %v1299 = vshrl.u32 %v1298, 7
      %v1300 = vsub.s32 0, %v1299
      %v1301 = vrot.slane %v1296, %v1300
      %v1304 = vsel %vm1158, %v1284, 0
      %v1307 = vsel %vm1158, %v1285, 0
      %v1310 = vsel %vm1158, %v1286, 0
      %v1313 = vsel %vm1158, %v1287, 0
      %v1316 = vsel %vm1158, %v1288, 0
      %v1319 = vsel %vm1158, %v1289, 0
      %v1322 = vsel %vm1158, %v1290, 0
      %v1325 = vsel %vm1158, %v1291, 0
      %1327 = vmatprep.subr.mxu0 0.0
      %1328 = vmatpush1.msra.mxu0 0.0
      %1329 = vmatprep.subr.mxu0 0.0
      %1330 = vmatpush1.msra.mxu0 0.0
      %1331 = vmatprep.subr.mxu0 0.0
      %1332 = vmatpush1.msra.mxu0 0.0
      %1333 = vmatprep.subr.mxu0 0.0
      %1334 = vmatpush1.msra.mxu0 0.0
      %1335 = vmatprep.subr.mxu0 0.0
      %1336 = vmatpush1.msra.mxu0 0.0
      %1337 = vmatprep.subr.mxu0 0.0
      %1338 = vmatpush1.msra.mxu0 0.0
      %1339 = vmatprep.subr.mxu0 0.0
      %1340 = vmatpush1.msra.mxu0 0.0
      %1341 = vmatprep.subr.mxu0 0.0
      %1342 = vmatpush1.msra.mxu0 0.0
      %1343 = vmatprep.subr.mxu0 0.0
      %1344 = vmatpush1.msra.mxu0 0.0
      %1345 = vmatprep.subr.mxu0 0.0
      %1346 = vmatpush1.msra.mxu0 0.0
      %1347 = vmatprep.subr.mxu0 0.0
      %1348 = vmatpush1.msra.mxu0 0.0
      %1349 = vmatprep.subr.mxu0 0.0
      %1350 = vmatpush1.msra.mxu0 0.0
      %1351 = vmatprep.subr.mxu0 0.0
      %1352 = vmatpush1.msra.mxu0 %v1295
      %1353 = vmatprep.subr.mxu0 0.0
      %1354 = vmatpush1.msra.mxu0 %v1294
      %1355 = vmatprep.subr.mxu0 0.0
      %1356 = vmatpush1.msra.mxu0 %v1293
      %1357 = vmatprep.subr.mxu0 0.0
      %1358 = vmatpush1.msra.mxu0 %v1292
      %1359 = vmatprep.subr.mxu0 0.0
      %1360 = vmatpush2.msra.mxu0 0.0
      %1361 = vmatprep.subr.mxu0 0.0
      %1362 = vmatpush2.msra.mxu0 0.0
      %1363 = vmatprep.subr.mxu0 0.0
      %1364 = vmatpush2.msra.mxu0 0.0
      %1365 = vmatprep.subr.mxu0 0.0
      %1366 = vmatpush2.msra.mxu0 0.0
      %1367 = vmatprep.subr.mxu0 0.0
      %1368 = vmatpush2.msra.mxu0 0.0
      %1369 = vmatprep.subr.mxu0 0.0
      %1370 = vmatpush2.msra.mxu0 0.0
      %1371 = vmatprep.subr.mxu0 0.0
      %1372 = vmatpush2.msra.mxu0 0.0
      %1373 = vmatprep.subr.mxu0 0.0
      %1374 = vmatpush2.msra.mxu0 0.0
      %1375 = vmatprep.subr.mxu0 0.0
      %1376 = vmatpush2.msra.mxu0 0.0
      %1377 = vmatprep.subr.mxu0 0.0
      %1378 = vmatpush2.msra.mxu0 0.0
      %1379 = vmatprep.subr.mxu0 0.0
      %1380 = vmatpush2.msra.mxu0 0.0
      %1381 = vmatprep.subr.mxu0 0.0
      %1382 = vmatpush2.msra.mxu0 0.0
      %1383 = vmatprep.subr.mxu0 0.0
      %1384 = vmatpush2.msra.mxu0 0.0
      %1385 = vmatprep.subr.mxu0 0.0
      %1386 = vmatpush2.msra.mxu0 0.0
      %1387 = vmatprep.subr.mxu0 0.0
      %1388 = vmatpush2.msra.mxu0 0.0
      %1389 = vmatprep.subr.mxu0 0.0
      %1390 = vmatpush2.msra.mxu0 0.0
      %1391 = vmatprep.mubr.f32.mxu0 0.0
      %1392 = vmatmul.mubr.f32.gmra.mxu0 %v1304
      %v1393 = vpop.f32.mrf.mxu0
      %v1394 = vadd.f32 %v1301, %v1393
      %v1395 = vpop.f32.mrf.mxu0
      %1396 = vmatprep.mubr.f32.mxu0 0.0
      %1397 = vmatmul.mubr.f32.gmra.mxu0 %v1307
      %v1398 = vpop.f32.mrf.mxu0
      %v1399 = vadd.f32 %v1301, %v1398
      %v1400 = vpop.f32.mrf.mxu0
      %1401 = vmatprep.mubr.f32.mxu0 0.0
      %1402 = vmatmul.mubr.f32.gmra.mxu0 %v1310
      %v1403 = vpop.f32.mrf.mxu0
      %v1404 = vadd.f32 %v1301, %v1403
      %v1405 = vpop.f32.mrf.mxu0
      %1406 = vmatprep.mubr.f32.mxu0 0.0
      %1407 = vmatmul.mubr.f32.gmra.mxu0 %v1313
      %v1408 = vpop.f32.mrf.mxu0
      %v1409 = vadd.f32 %v1301, %v1408
      %v1410 = vpop.f32.mrf.mxu0
      %1411 = vmatprep.mubr.f32.mxu0 0.0
      %1412 = vmatmul.mubr.f32.gmra.mxu0 %v1316
      %v1413 = vpop.f32.mrf.mxu0
      %v1414 = vadd.f32 %v1301, %v1413
      %v1415 = vpop.f32.mrf.mxu0
      %1416 = vmatprep.mubr.f32.mxu0 0.0
      %1417 = vmatmul.mubr.f32.gmra.mxu0 %v1319
      %v1418 = vpop.f32.mrf.mxu0
      %v1419 = vadd.f32 %v1301, %v1418
      %v1420 = vpop.f32.mrf.mxu0
      %1421 = vmatprep.mubr.f32.mxu0 0.0
      %1422 = vmatmul.mubr.f32.gmra.mxu0 %v1322
      %v1423 = vpop.f32.mrf.mxu0
      %v1424 = vadd.f32 %v1301, %v1423
      %v1425 = vpop.f32.mrf.mxu0
      %1426 = vmatprep.mubr.f32.mxu0 0.0
      %1427 = vmatmul.mubr.f32.gmra.mxu0 %v1325
      %v1428 = vpop.f32.mrf.mxu0
      %v1429 = vadd.f32 %v1301, %v1428
      %v1430 = vpop.f32.mrf.mxu0
      %1431 = vdwg.mxu0
      %v1432 = vld [vmem:[%s17] sm:$0xff]
      %v1433 = vld [vmem:[%s17 + $0x8] sm:$0xff]
      %v1434 = vld [vmem:[%s17 + $0x10] sm:$0xff]
      %v1435 = vld [vmem:[%s17 + $0x18] sm:$0xff]
      %v1436 = vld [vmem:[%s19] sm:$0x1]
      %v1438 = vlaneseq
      %v1439 = vshrl.u32 %v1438, 7
      %v1440 = vsub.s32 0, %v1439
      %v1441 = vrot.slane %v1436, %v1440
      %v1443 = vadd.f32 %v1441, 0.0
      %1452 = vrot.lane.b32.xlu0 %v1394, 96
      %v1453 = vpop.permute.xlu0 %1452
      %1454 = vrot.lane.b32.xlu0 %v1399, 96
      %v1455 = vpop.permute.xlu0 %1454
      %1456 = vrot.lane.b32.xlu0 %v1404, 96
      %v1457 = vpop.permute.xlu0 %1456
      %1458 = vrot.lane.b32.xlu0 %v1409, 96
      %v1459 = vpop.permute.xlu0 %1458
      %1460 = vrot.lane.b32.xlu0 %v1414, 96
      %v1461 = vpop.permute.xlu0 %1460
      %1462 = vrot.lane.b32.xlu0 %v1419, 96
      %v1463 = vpop.permute.xlu0 %1462
      %1464 = vrot.lane.b32.xlu0 %v1424, 96
      %v1465 = vpop.permute.xlu0 %1464
      %1466 = vrot.lane.b32.xlu0 %v1429, 96
      %v1467 = vpop.permute.xlu0 %1466
      %vm1468 = vcmask 64512
      %v1469 = vsel %vm1468, %v1394, 0
      %v1471 = vsel %vm1468, %v1399, 0
      %v1473 = vsel %vm1468, %v1404, 0
      %v1475 = vsel %vm1468, %v1409, 0
      %v1477 = vsel %vm1468, %v1414, 0
      %v1479 = vsel %vm1468, %v1419, 0
      %v1481 = vsel %vm1468, %v1424, 0
      %v1483 = vsel %vm1468, %v1429, 0
      %v1485 = vsel %vm1468, %v1453, 0
      %v1487 = vsel %vm1468, %v1455, 0
      %v1489 = vsel %vm1468, %v1457, 0
      %v1491 = vsel %vm1468, %v1459, 0
      %v1493 = vsel %vm1468, %v1461, 0
      %v1495 = vsel %vm1468, %v1463, 0
      %v1497 = vsel %vm1468, %v1465, 0
      %v1499 = vsel %vm1468, %v1467, 0
      %1501 = vmatprep.subr.mxu0 0.0
      %1502 = vmatpush1.xpose.msra.mxu0 0.0
      %1503 = vmatprep.subr.mxu0 0.0
      %1504 = vmatpush1.xpose.msra.mxu0 0.0
      %1505 = vmatprep.subr.mxu0 0.0
      %1506 = vmatpush1.xpose.msra.mxu0 0.0
      %1507 = vmatprep.subr.mxu0 0.0
      %1508 = vmatpush1.xpose.msra.mxu0 0.0
      %1509 = vmatprep.subr.mxu0 0.0
      %1510 = vmatpush1.xpose.msra.mxu0 0.0
      %1511 = vmatprep.subr.mxu0 0.0
      %1512 = vmatpush1.xpose.msra.mxu0 0.0
      %1513 = vmatprep.subr.mxu0 0.0
      %1514 = vmatpush1.xpose.msra.mxu0 0.0
      %1515 = vmatprep.subr.mxu0 0.0
      %1516 = vmatpush1.xpose.msra.mxu0 0.0
      %1517 = vmatprep.subr.mxu0 0.0
      %1518 = vmatpush1.xpose.msra.mxu0 %v1499
      %1519 = vmatprep.subr.mxu0 0.0
      %1520 = vmatpush1.xpose.msra.mxu0 %v1497
      %1521 = vmatprep.subr.mxu0 0.0
      %1522 = vmatpush1.xpose.msra.mxu0 %v1495
      %1523 = vmatprep.subr.mxu0 0.0
      %1524 = vmatpush1.xpose.msra.mxu0 %v1493
      %1525 = vmatprep.subr.mxu0 0.0
      %1526 = vmatpush1.xpose.msra.mxu0 %v1491
      %1527 = vmatprep.subr.mxu0 0.0
      %1528 = vmatpush1.xpose.msra.mxu0 %v1489
      %1529 = vmatprep.subr.mxu0 0.0
      %1530 = vmatpush1.xpose.msra.mxu0 %v1487
      %1531 = vmatprep.subr.mxu0 0.0
      %1532 = vmatpush1.xpose.msra.mxu0 %v1485
      %1533 = vmatprep.subr.mxu0 0.0
      %1534 = vmatpush2.xpose.msra.mxu0 0.0
      %1535 = vmatprep.subr.mxu0 0.0
      %1536 = vmatpush2.xpose.msra.mxu0 0.0
      %1537 = vmatprep.subr.mxu0 0.0
      %1538 = vmatpush2.xpose.msra.mxu0 0.0
      %1539 = vmatprep.subr.mxu0 0.0
      %1540 = vmatpush2.xpose.msra.mxu0 0.0
      %1541 = vmatprep.subr.mxu0 0.0
      %1542 = vmatpush2.xpose.msra.mxu0 0.0
      %1543 = vmatprep.subr.mxu0 0.0
      %1544 = vmatpush2.xpose.msra.mxu0 0.0
      %1545 = vmatprep.subr.mxu0 0.0
      %1546 = vmatpush2.xpose.msra.mxu0 0.0
      %1547 = vmatprep.subr.mxu0 0.0
      %1548 = vmatpush2.xpose.msra.mxu0 0.0
      %1549 = vmatprep.subr.mxu0 0.0
      %1550 = vmatpush2.xpose.msra.mxu0 0.0
      %1551 = vmatprep.subr.mxu0 0.0
      %1552 = vmatpush2.xpose.msra.mxu0 0.0
      %1553 = vmatprep.subr.mxu0 0.0
      %1554 = vmatpush2.xpose.msra.mxu0 0.0
      %1555 = vmatprep.subr.mxu0 0.0
      %1556 = vmatpush2.xpose.msra.mxu0 0.0
      %1557 = vmatprep.subr.mxu0 0.0
      %1558 = vmatpush2.xpose.msra.mxu0 0.0
      %1559 = vmatprep.subr.mxu0 0.0
      %1560 = vmatpush2.xpose.msra.mxu0 0.0
      %1561 = vmatprep.subr.mxu0 0.0
      %1562 = vmatpush2.xpose.msra.mxu0 0.0
      %1563 = vmatprep.subr.mxu0 0.0
      %1564 = vmatpush2.xpose.msra.mxu0 0.0
      %1565 = vmatprep.mubr.f32.mxu0 0.0
      %1566 = vmatmul.mubr.f32.gmra.mxu0 %v1469
      %v1567 = vpop.f32.mrf.mxu0
      %v1568 = vadd.f32 0.0, %v1567
      %v1569 = vpop.f32.mrf.mxu0
      %1570 = vmatprep.mubr.f32.mxu0 0.0
      %1571 = vmatmul.mubr.f32.gmra.mxu0 %v1471
      %v1572 = vpop.f32.mrf.mxu0
      %v1573 = vadd.f32 0.0, %v1572
      %v1574 = vpop.f32.mrf.mxu0
      %1575 = vmatprep.mubr.f32.mxu0 0.0
      %1576 = vmatmul.mubr.f32.gmra.mxu0 %v1473
      %v1577 = vpop.f32.mrf.mxu0
      %v1578 = vadd.f32 0.0, %v1577
      %v1579 = vpop.f32.mrf.mxu0
      %1580 = vmatprep.mubr.f32.mxu0 0.0
      %1581 = vmatmul.mubr.f32.gmra.mxu0 %v1475
      %v1582 = vpop.f32.mrf.mxu0
      %v1583 = vadd.f32 0.0, %v1582
      %v1584 = vpop.f32.mrf.mxu0
      %1585 = vmatprep.mubr.f32.mxu0 0.0
      %1586 = vmatmul.mubr.f32.gmra.mxu0 %v1477
      %v1587 = vpop.f32.mrf.mxu0
      %v1588 = vadd.f32 0.0, %v1587
      %v1589 = vpop.f32.mrf.mxu0
      %1590 = vmatprep.mubr.f32.mxu0 0.0
      %1591 = vmatmul.mubr.f32.gmra.mxu0 %v1479
      %v1592 = vpop.f32.mrf.mxu0
      %v1593 = vadd.f32 0.0, %v1592
      %v1594 = vpop.f32.mrf.mxu0
      %1595 = vmatprep.mubr.f32.mxu0 0.0
      %1596 = vmatmul.mubr.f32.gmra.mxu0 %v1481
      %v1597 = vpop.f32.mrf.mxu0
      %v1598 = vadd.f32 0.0, %v1597
      %v1599 = vpop.f32.mrf.mxu0
      %1600 = vmatprep.mubr.f32.mxu0 0.0
      %1601 = vmatmul.mubr.f32.gmra.mxu0 %v1483
      %v1602 = vpop.f32.mrf.mxu0
      %v1603 = vadd.f32 0.0, %v1602
      %v1604 = vpop.f32.mrf.mxu0
      %1605 = vdwg.mxu0
      %v1606 = vmul.f32 %v1568, 0.35355338
      %v1607 = vmul.f32 %v1573, 0.35355338
      %v1608 = vmul.f32 %v1578, 0.35355338
      %v1609 = vmul.f32 %v1583, 0.35355338
      %v1610 = vmul.f32 %v1588, 0.35355338
      %v1611 = vmul.f32 %v1593, 0.35355338
      %v1612 = vmul.f32 %v1598, 0.35355338
      %v1613 = vmul.f32 %v1603, 0.35355338
      %v1614 = vsel %vm1010, %v1606, -inf
      %1615 = vmax.xlane.f32.xlu0 %v1614
      %v1616 = vpop.xlane.xlu0 %1615
      %v1617 = vsel %vm1010, %v1607, -inf
      %1618 = vmax.xlane.f32.xlu0 %v1617
      %v1619 = vpop.xlane.xlu0 %1618
      %v1620 = vsel %vm1010, %v1608, -inf
      %1621 = vmax.xlane.f32.xlu0 %v1620
      %v1622 = vpop.xlane.xlu0 %1621
      %v1623 = vsel %vm1010, %v1609, -inf
      %1624 = vmax.xlane.f32.xlu0 %v1623
      %v1625 = vpop.xlane.xlu0 %1624
      %v1626 = vsel %vm1010, %v1610, -inf
      %1627 = vmax.xlane.f32.xlu0 %v1626
      %v1628 = vpop.xlane.xlu0 %1627
      %v1629 = vsel %vm1010, %v1611, -inf
      %1630 = vmax.xlane.f32.xlu0 %v1629
      %v1631 = vpop.xlane.xlu0 %1630
      %v1632 = vsel %vm1010, %v1612, -inf
      %1633 = vmax.xlane.f32.xlu0 %v1632
      %v1634 = vpop.xlane.xlu0 %1633
      %v1635 = vsel %vm1010, %v1613, -inf
      %1636 = vmax.xlane.f32.xlu0 %v1635
      %v1637 = vpop.xlane.xlu0 %1636
      %v1638 = vsub.f32 %v1606, %v1616
      %v1639 = vsub.f32 %v1607, %v1619
      %v1640 = vsub.f32 %v1608, %v1622
      %v1641 = vsub.f32 %v1609, %v1625
      %v1642 = vsub.f32 %v1610, %v1628
      %v1643 = vsub.f32 %v1611, %v1631
      %v1644 = vsub.f32 %v1612, %v1634
      %v1645 = vsub.f32 %v1613, %v1637
      %v1646 = vmul.f32 %v1638, 1.442695
      %v1647 = vpow.pop %v1646
      %v1648 = vmul.f32 %v1639, 1.442695
      %v1649 = vpow.pop %v1648
      %v1650 = vmul.f32 %v1640, 1.442695
      %v1651 = vpow.pop %v1650
      %v1652 = vmul.f32 %v1641, 1.442695
      %v1653 = vpow.pop %v1652
      %v1654 = vmul.f32 %v1642, 1.442695
      %v1655 = vpow.pop %v1654
      %v1656 = vmul.f32 %v1643, 1.442695
      %v1657 = vpow.pop %v1656
      %v1658 = vmul.f32 %v1644, 1.442695
      %v1659 = vpow.pop %v1658
      %v1660 = vmul.f32 %v1645, 1.442695
      %v1661 = vpow.pop %v1660
      %v1662 = vsel %vm1010, %v1647, 0.0
      %1663 = vadd.xlane.f32.xlu0 %v1662
      %v1664 = vpop.xlane.xlu0 %1663
      %v1665 = vsel %vm1010, %v1649, 0.0
      %1666 = vadd.xlane.f32.xlu0 %v1665
      %v1667 = vpop.xlane.xlu0 %1666
      %v1668 = vsel %vm1010, %v1651, 0.0
      %1669 = vadd.xlane.f32.xlu0 %v1668
      %v1670 = vpop.xlane.xlu0 %1669
      %v1671 = vsel %vm1010, %v1653, 0.0
      %1672 = vadd.xlane.f32.xlu0 %v1671
      %v1673 = vpop.xlane.xlu0 %1672
      %v1674 = vsel %vm1010, %v1655, 0.0
      %1675 = vadd.xlane.f32.xlu0 %v1674
      %v1676 = vpop.xlane.xlu0 %1675
      %v1677 = vsel %vm1010, %v1657, 0.0
      %1678 = vadd.xlane.f32.xlu0 %v1677
      %v1679 = vpop.xlane.xlu0 %1678
      %v1680 = vsel %vm1010, %v1659, 0.0
      %1681 = vadd.xlane.f32.xlu0 %v1680
      %v1682 = vpop.xlane.xlu0 %1681
      %v1683 = vsel %vm1010, %v1661, 0.0
      %1684 = vadd.xlane.f32.xlu0 %v1683
      %v1685 = vpop.xlane.xlu0 %1684
      %v1686 = vrcp.pop %v1664
      %v1687 = vrcp.pop %v1667
      %v1688 = vrcp.pop %v1670
      %v1689 = vrcp.pop %v1673
      %v1690 = vrcp.pop %v1676
      %v1691 = vrcp.pop %v1679
      %v1692 = vrcp.pop %v1682
      %v1693 = vrcp.pop %v1685
      %v1694 = vmul.f32 %v1647, %v1686
      %v1695 = vmul.f32 %v1649, %v1687
      %v1696 = vmul.f32 %v1651, %v1688
      %v1697 = vmul.f32 %v1653, %v1689
      %v1698 = vmul.f32 %v1655, %v1690
      %v1699 = vmul.f32 %v1657, %v1691
      %v1700 = vmul.f32 %v1659, %v1692
      %v1701 = vmul.f32 %v1661, %v1693
      %1702 = vrot.lane.b32.xlu0 %v1394, 64
      %v1703 = vpop.permute.xlu0 %1702
      %1704 = vrot.lane.b32.xlu0 %v1399, 64
      %v1705 = vpop.permute.xlu0 %1704
      %1706 = vrot.lane.b32.xlu0 %v1404, 64
      %v1707 = vpop.permute.xlu0 %1706
      %1708 = vrot.lane.b32.xlu0 %v1409, 64
      %v1709 = vpop.permute.xlu0 %1708
      %1710 = vrot.lane.b32.xlu0 %v1414, 64
      %v1711 = vpop.permute.xlu0 %1710
      %1712 = vrot.lane.b32.xlu0 %v1419, 64
      %v1713 = vpop.permute.xlu0 %1712
      %1714 = vrot.lane.b32.xlu0 %v1424, 64
      %v1715 = vpop.permute.xlu0 %1714
      %1716 = vrot.lane.b32.xlu0 %v1429, 64
      %v1717 = vpop.permute.xlu0 %1716
      %v1727 = vsel %vm1010, %v1694, 0
      %v1730 = vsel %vm1010, %v1695, 0
      %v1733 = vsel %vm1010, %v1696, 0
      %v1736 = vsel %vm1010, %v1697, 0
      %v1739 = vsel %vm1010, %v1698, 0
      %v1742 = vsel %vm1010, %v1699, 0
      %v1745 = vsel %vm1010, %v1700, 0
      %v1748 = vsel %vm1010, %v1701, 0
      %1750 = vmatprep.subr.mxu0 0.0
      %1751 = vmatpush1.msra.mxu0 0.0
      %1752 = vmatprep.subr.mxu0 0.0
      %1753 = vmatpush1.msra.mxu0 0.0
      %1754 = vmatprep.subr.mxu0 0.0
      %1755 = vmatpush1.msra.mxu0 0.0
      %1756 = vmatprep.subr.mxu0 0.0
      %1757 = vmatpush1.msra.mxu0 0.0
      %1758 = vmatprep.subr.mxu0 0.0
      %1759 = vmatpush1.msra.mxu0 0.0
      %1760 = vmatprep.subr.mxu0 0.0
      %1761 = vmatpush1.msra.mxu0 0.0
      %1762 = vmatprep.subr.mxu0 0.0
      %1763 = vmatpush1.msra.mxu0 0.0
      %1764 = vmatprep.subr.mxu0 0.0
      %1765 = vmatpush1.msra.mxu0 0.0
      %1766 = vmatprep.subr.mxu0 0.0
      %1767 = vmatpush1.msra.mxu0 %v1717
      %1768 = vmatprep.subr.mxu0 0.0
      %1769 = vmatpush1.msra.mxu0 %v1715
      %1770 = vmatprep.subr.mxu0 0.0
      %1771 = vmatpush1.msra.mxu0 %v1713
      %1772 = vmatprep.subr.mxu0 0.0
      %1773 = vmatpush1.msra.mxu0 %v1711
      %1774 = vmatprep.subr.mxu0 0.0
      %1775 = vmatpush1.msra.mxu0 %v1709
      %1776 = vmatprep.subr.mxu0 0.0
      %1777 = vmatpush1.msra.mxu0 %v1707
      %1778 = vmatprep.subr.mxu0 0.0
      %1779 = vmatpush1.msra.mxu0 %v1705
      %1780 = vmatprep.subr.mxu0 0.0
      %1781 = vmatpush1.msra.mxu0 %v1703
      %1782 = vmatprep.subr.mxu0 0.0
      %1783 = vmatpush2.msra.mxu0 0.0
      %1784 = vmatprep.subr.mxu0 0.0
      %1785 = vmatpush2.msra.mxu0 0.0
      %1786 = vmatprep.subr.mxu0 0.0
      %1787 = vmatpush2.msra.mxu0 0.0
      %1788 = vmatprep.subr.mxu0 0.0
      %1789 = vmatpush2.msra.mxu0 0.0
      %1790 = vmatprep.subr.mxu0 0.0
      %1791 = vmatpush2.msra.mxu0 0.0
      %1792 = vmatprep.subr.mxu0 0.0
      %1793 = vmatpush2.msra.mxu0 0.0
      %1794 = vmatprep.subr.mxu0 0.0
      %1795 = vmatpush2.msra.mxu0 0.0
      %1796 = vmatprep.subr.mxu0 0.0
      %1797 = vmatpush2.msra.mxu0 0.0
      %1798 = vmatprep.subr.mxu0 0.0
      %1799 = vmatpush2.msra.mxu0 0.0
      %1800 = vmatprep.subr.mxu0 0.0
      %1801 = vmatpush2.msra.mxu0 0.0
      %1802 = vmatprep.subr.mxu0 0.0
      %1803 = vmatpush2.msra.mxu0 0.0
      %1804 = vmatprep.subr.mxu0 0.0
      %1805 = vmatpush2.msra.mxu0 0.0
      %1806 = vmatprep.subr.mxu0 0.0
      %1807 = vmatpush2.msra.mxu0 0.0
      %1808 = vmatprep.subr.mxu0 0.0
      %1809 = vmatpush2.msra.mxu0 0.0
      %1810 = vmatprep.subr.mxu0 0.0
      %1811 = vmatpush2.msra.mxu0 0.0
      %1812 = vmatprep.subr.mxu0 0.0
      %1813 = vmatpush2.msra.mxu0 0.0
      %1814 = vmatprep.mubr.f32.mxu0 0.0
      %1815 = vmatmul.mubr.f32.gmra.mxu0 %v1727
      %v1816 = vpop.f32.mrf.mxu0
      %v1817 = vadd.f32 0.0, %v1816
      %v1818 = vpop.f32.mrf.mxu0
      %1819 = vmatprep.mubr.f32.mxu0 0.0
      %1820 = vmatmul.mubr.f32.gmra.mxu0 %v1730
      %v1821 = vpop.f32.mrf.mxu0
      %v1822 = vadd.f32 0.0, %v1821
      %v1823 = vpop.f32.mrf.mxu0
      %1824 = vmatprep.mubr.f32.mxu0 0.0
      %1825 = vmatmul.mubr.f32.gmra.mxu0 %v1733
      %v1826 = vpop.f32.mrf.mxu0
      %v1827 = vadd.f32 0.0, %v1826
      %v1828 = vpop.f32.mrf.mxu0
      %1829 = vmatprep.mubr.f32.mxu0 0.0
      %1830 = vmatmul.mubr.f32.gmra.mxu0 %v1736
      %v1831 = vpop.f32.mrf.mxu0
      %v1832 = vadd.f32 0.0, %v1831
      %v1833 = vpop.f32.mrf.mxu0
      %1834 = vmatprep.mubr.f32.mxu0 0.0
      %1835 = vmatmul.mubr.f32.gmra.mxu0 %v1739
      %v1836 = vpop.f32.mrf.mxu0
      %v1837 = vadd.f32 0.0, %v1836
      %v1838 = vpop.f32.mrf.mxu0
      %1839 = vmatprep.mubr.f32.mxu0 0.0
      %1840 = vmatmul.mubr.f32.gmra.mxu0 %v1742
      %v1841 = vpop.f32.mrf.mxu0
      %v1842 = vadd.f32 0.0, %v1841
      %v1843 = vpop.f32.mrf.mxu0
      %1844 = vmatprep.mubr.f32.mxu0 0.0
      %1845 = vmatmul.mubr.f32.gmra.mxu0 %v1745
      %v1846 = vpop.f32.mrf.mxu0
      %v1847 = vadd.f32 0.0, %v1846
      %v1848 = vpop.f32.mrf.mxu0
      %1849 = vmatprep.mubr.f32.mxu0 0.0
      %1850 = vmatmul.mubr.f32.gmra.mxu0 %v1748
      %v1851 = vpop.f32.mrf.mxu0
      %v1852 = vadd.f32 0.0, %v1851
      %v1853 = vpop.f32.mrf.mxu0
      %1854 = vdwg.mxu0
      %v1856 = vsel %vm1468, %v1817, 0
      %v1859 = vsel %vm1468, %v1822, 0
      %v1862 = vsel %vm1468, %v1827, 0
      %v1865 = vsel %vm1468, %v1832, 0
      %v1868 = vsel %vm1468, %v1837, 0
      %v1871 = vsel %vm1468, %v1842, 0
      %v1874 = vsel %vm1468, %v1847, 0
      %v1877 = vsel %vm1468, %v1852, 0
      %1879 = vmatprep.subr.mxu0 0.0
      %1880 = vmatpush1.msra.mxu0 0.0
      %1881 = vmatprep.subr.mxu0 0.0
      %1882 = vmatpush1.msra.mxu0 0.0
      %1883 = vmatprep.subr.mxu0 0.0
      %1884 = vmatpush1.msra.mxu0 0.0
      %1885 = vmatprep.subr.mxu0 0.0
      %1886 = vmatpush1.msra.mxu0 0.0
      %1887 = vmatprep.subr.mxu0 0.0
      %1888 = vmatpush1.msra.mxu0 0.0
      %1889 = vmatprep.subr.mxu0 0.0
      %1890 = vmatpush1.msra.mxu0 0.0
      %1891 = vmatprep.subr.mxu0 0.0
      %1892 = vmatpush1.msra.mxu0 0.0
      %1893 = vmatprep.subr.mxu0 0.0
      %1894 = vmatpush1.msra.mxu0 0.0
      %1895 = vmatprep.subr.mxu0 0.0
      %1896 = vmatpush1.msra.mxu0 0.0
      %1897 = vmatprep.subr.mxu0 0.0
      %1898 = vmatpush1.msra.mxu0 0.0
      %1899 = vmatprep.subr.mxu0 0.0
      %1900 = vmatpush1.msra.mxu0 0.0
      %1901 = vmatprep.subr.mxu0 0.0
      %1902 = vmatpush1.msra.mxu0 0.0
      %1903 = vmatprep.subr.mxu0 0.0
      %1904 = vmatpush1.msra.mxu0 0.0
      %1905 = vmatprep.subr.mxu0 0.0
      %1906 = vmatpush1.msra.mxu0 0.0
      %1907 = vmatprep.subr.mxu0 0.0
      %1908 = vmatpush1.msra.mxu0 0.0
      %1909 = vmatprep.subr.mxu0 0.0
      %1910 = vmatpush1.msra.mxu0 %v1432
      %1911 = vmatprep.subr.mxu0 0.0
      %1912 = vmatpush2.msra.mxu0 0.0
      %1913 = vmatprep.subr.mxu0 0.0
      %1914 = vmatpush2.msra.mxu0 0.0
      %1915 = vmatprep.subr.mxu0 0.0
      %1916 = vmatpush2.msra.mxu0 0.0
      %1917 = vmatprep.subr.mxu0 0.0
      %1918 = vmatpush2.msra.mxu0 0.0
      %1919 = vmatprep.subr.mxu0 0.0
      %1920 = vmatpush2.msra.mxu0 0.0
      %1921 = vmatprep.subr.mxu0 0.0
      %1922 = vmatpush2.msra.mxu0 0.0
      %1923 = vmatprep.subr.mxu0 0.0
      %1924 = vmatpush2.msra.mxu0 0.0
      %1925 = vmatprep.subr.mxu0 0.0
      %1926 = vmatpush2.msra.mxu0 0.0
      %1927 = vmatprep.subr.mxu0 0.0
      %1928 = vmatpush2.msra.mxu0 0.0
      %1929 = vmatprep.subr.mxu0 0.0
      %1930 = vmatpush2.msra.mxu0 0.0
      %1931 = vmatprep.subr.mxu0 0.0
      %1932 = vmatpush2.msra.mxu0 0.0
      %1933 = vmatprep.subr.mxu0 0.0
      %1934 = vmatpush2.msra.mxu0 0.0
      %1935 = vmatprep.subr.mxu0 0.0
      %1936 = vmatpush2.msra.mxu0 0.0
      %1937 = vmatprep.subr.mxu0 0.0
      %1938 = vmatpush2.msra.mxu0 0.0
      %1939 = vmatprep.subr.mxu0 0.0
      %1940 = vmatpush2.msra.mxu0 0.0
      %1941 = vmatprep.subr.mxu0 0.0
      %1942 = vmatpush2.msra.mxu0 0.0
      %1943 = vmatprep.mubr.f32.mxu0 0.0
      %1944 = vmatmul.mubr.f32.gmra.mxu0 %v1856
      %v1945 = vpop.f32.mrf.mxu0
      %v1946 = vadd.f32 0.0, %v1945
      %v1947 = vpop.f32.mrf.mxu0
      %1948 = vmatprep.mubr.f32.mxu0 0.0
      %1949 = vmatmul.mubr.f32.gmra.mxu0 %v1859
      %v1950 = vpop.f32.mrf.mxu0
      %v1951 = vadd.f32 0.0, %v1950
      %v1952 = vpop.f32.mrf.mxu0
      %1953 = vmatprep.mubr.f32.mxu0 0.0
      %1954 = vmatmul.mubr.f32.gmra.mxu0 %v1862
      %v1955 = vpop.f32.mrf.mxu0
      %v1956 = vadd.f32 0.0, %v1955
      %v1957 = vpop.f32.mrf.mxu0
      %1958 = vmatprep.mubr.f32.mxu0 0.0
      %1959 = vmatmul.mubr.f32.gmra.mxu0 %v1865
      %v1960 = vpop.f32.mrf.mxu0
      %v1961 = vadd.f32 0.0, %v1960
      %v1962 = vpop.f32.mrf.mxu0
      %1963 = vmatprep.mubr.f32.mxu0 0.0
      %1964 = vmatmul.mubr.f32.gmra.mxu0 %v1868
      %v1965 = vpop.f32.mrf.mxu0
      %v1966 = vadd.f32 0.0, %v1965
      %v1967 = vpop.f32.mrf.mxu0
      %1968 = vmatprep.mubr.f32.mxu0 0.0
      %1969 = vmatmul.mubr.f32.gmra.mxu0 %v1871
      %v1970 = vpop.f32.mrf.mxu0
      %v1971 = vadd.f32 0.0, %v1970
      %v1972 = vpop.f32.mrf.mxu0
      %1973 = vmatprep.mubr.f32.mxu0 0.0
      %1974 = vmatmul.mubr.f32.gmra.mxu0 %v1874
      %v1975 = vpop.f32.mrf.mxu0
      %v1976 = vadd.f32 0.0, %v1975
      %v1977 = vpop.f32.mrf.mxu0
      %1978 = vmatprep.mubr.f32.mxu0 0.0
      %1979 = vmatmul.mubr.f32.gmra.mxu0 %v1877
      %v1980 = vpop.f32.mrf.mxu0
      %v1981 = vadd.f32 0.0, %v1980
      %v1982 = vpop.f32.mrf.mxu0
      %1983 = vdwg.mxu0
      %v1984 = vadd.f32 %v1443, %v1946
      %v1985 = vadd.f32 %v1443, %v1951
      %v1986 = vadd.f32 %v1443, %v1956
      %v1987 = vadd.f32 %v1443, %v1961
      %v1988 = vadd.f32 %v1443, %v1966
      %v1989 = vadd.f32 %v1443, %v1971
      %v1990 = vadd.f32 %v1443, %v1976
      %v1991 = vadd.f32 %v1443, %v1981
      %1992 = vrot.lane.b32.xlu0 %v1394, 120
      %v1993 = vpop.permute.xlu0 %1992
      %1994 = vrot.lane.b32.xlu0 %v1399, 120
      %v1995 = vpop.permute.xlu0 %1994
      %1996 = vrot.lane.b32.xlu0 %v1404, 120
      %v1997 = vpop.permute.xlu0 %1996
      %1998 = vrot.lane.b32.xlu0 %v1409, 120
      %v1999 = vpop.permute.xlu0 %1998
      %2000 = vrot.lane.b32.xlu0 %v1414, 120
      %v2001 = vpop.permute.xlu0 %2000
      %2002 = vrot.lane.b32.xlu0 %v1419, 120
      %v2003 = vpop.permute.xlu0 %2002
      %2004 = vrot.lane.b32.xlu0 %v1424, 120
      %v2005 = vpop.permute.xlu0 %2004
      %2006 = vrot.lane.b32.xlu0 %v1429, 120
      %v2007 = vpop.permute.xlu0 %2006
      %2008 = vrot.lane.b32.xlu0 %v1394, 88
      %v2009 = vpop.permute.xlu0 %2008
      %2010 = vrot.lane.b32.xlu0 %v1399, 88
      %v2011 = vpop.permute.xlu0 %2010
      %2012 = vrot.lane.b32.xlu0 %v1404, 88
      %v2013 = vpop.permute.xlu0 %2012
      %2014 = vrot.lane.b32.xlu0 %v1409, 88
      %v2015 = vpop.permute.xlu0 %2014
      %2016 = vrot.lane.b32.xlu0 %v1414, 88
      %v2017 = vpop.permute.xlu0 %2016
      %2018 = vrot.lane.b32.xlu0 %v1419, 88
      %v2019 = vpop.permute.xlu0 %2018
      %2020 = vrot.lane.b32.xlu0 %v1424, 88
      %v2021 = vpop.permute.xlu0 %2020
      %2022 = vrot.lane.b32.xlu0 %v1429, 88
      %v2023 = vpop.permute.xlu0 %2022
      %v2024 = vsel %vm1468, %v1993, 0
      %v2026 = vsel %vm1468, %v1995, 0
      %v2028 = vsel %vm1468, %v1997, 0
      %v2030 = vsel %vm1468, %v1999, 0
      %v2032 = vsel %vm1468, %v2001, 0
      %v2034 = vsel %vm1468, %v2003, 0
      %v2036 = vsel %vm1468, %v2005, 0
      %v2038 = vsel %vm1468, %v2007, 0
      %v2040 = vsel %vm1468, %v2009, 0
      %v2042 = vsel %vm1468, %v2011, 0
      %v2044 = vsel %vm1468, %v2013, 0
      %v2046 = vsel %vm1468, %v2015, 0
      %v2048 = vsel %vm1468, %v2017, 0
      %v2050 = vsel %vm1468, %v2019, 0
      %v2052 = vsel %vm1468, %v2021, 0
      %v2054 = vsel %vm1468, %v2023, 0
      %2056 = vmatprep.subr.mxu0 0.0
      %2057 = vmatpush1.xpose.msra.mxu0 0.0
      %2058 = vmatprep.subr.mxu0 0.0
      %2059 = vmatpush1.xpose.msra.mxu0 0.0
      %2060 = vmatprep.subr.mxu0 0.0
      %2061 = vmatpush1.xpose.msra.mxu0 0.0
      %2062 = vmatprep.subr.mxu0 0.0
      %2063 = vmatpush1.xpose.msra.mxu0 0.0
      %2064 = vmatprep.subr.mxu0 0.0
      %2065 = vmatpush1.xpose.msra.mxu0 0.0
      %2066 = vmatprep.subr.mxu0 0.0
      %2067 = vmatpush1.xpose.msra.mxu0 0.0
      %2068 = vmatprep.subr.mxu0 0.0
      %2069 = vmatpush1.xpose.msra.mxu0 0.0
      %2070 = vmatprep.subr.mxu0 0.0
      %2071 = vmatpush1.xpose.msra.mxu0 0.0
      %2072 = vmatprep.subr.mxu0 0.0
      %2073 = vmatpush1.xpose.msra.mxu0 %v2054
      %2074 = vmatprep.subr.mxu0 0.0
      %2075 = vmatpush1.xpose.msra.mxu0 %v2052
      %2076 = vmatprep.subr.mxu0 0.0
      %2077 = vmatpush1.xpose.msra.mxu0 %v2050
      %2078 = vmatprep.subr.mxu0 0.0
      %2079 = vmatpush1.xpose.msra.mxu0 %v2048
      %2080 = vmatprep.subr.mxu0 0.0
      %2081 = vmatpush1.xpose.msra.mxu0 %v2046
      %2082 = vmatprep.subr.mxu0 0.0
      %2083 = vmatpush1.xpose.msra.mxu0 %v2044
      %2084 = vmatprep.subr.mxu0 0.0
      %2085 = vmatpush1.xpose.msra.mxu0 %v2042
      %2086 = vmatprep.subr.mxu0 0.0
      %2087 = vmatpush1.xpose.msra.mxu0 %v2040
      %2088 = vmatprep.subr.mxu0 0.0
      %2089 = vmatpush2.xpose.msra.mxu0 0.0
      %2090 = vmatprep.subr.mxu0 0.0
      %2091 = vmatpush2.xpose.msra.mxu0 0.0
      %2092 = vmatprep.subr.mxu0 0.0
      %2093 = vmatpush2.xpose.msra.mxu0 0.0
      %2094 = vmatprep.subr.mxu0 0.0
      %2095 = vmatpush2.xpose.msra.mxu0 0.0
      %2096 = vmatprep.subr.mxu0 0.0
      %2097 = vmatpush2.xpose.msra.mxu0 0.0
      %2098 = vmatprep.subr.mxu0 0.0
      %2099 = vmatpush2.xpose.msra.mxu0 0.0
      %2100 = vmatprep.subr.mxu0 0.0
      %2101 = vmatpush2.xpose.msra.mxu0 0.0
      %2102 = vmatprep.subr.mxu0 0.0
      %2103 = vmatpush2.xpose.msra.mxu0 0.0
      %2104 = vmatprep.subr.mxu0 0.0
      %2105 = vmatpush2.xpose.msra.mxu0 0.0
      %2106 = vmatprep.subr.mxu0 0.0
      %2107 = vmatpush2.xpose.msra.mxu0 0.0
      %2108 = vmatprep.subr.mxu0 0.0
      %2109 = vmatpush2.xpose.msra.mxu0 0.0
      %2110 = vmatprep.subr.mxu0 0.0
      %2111 = vmatpush2.xpose.msra.mxu0 0.0
      %2112 = vmatprep.subr.mxu0 0.0
      %2113 = vmatpush2.xpose.msra.mxu0 0.0
      %2114 = vmatprep.subr.mxu0 0.0
      %2115 = vmatpush2.xpose.msra.mxu0 0.0
      %2116 = vmatprep.subr.mxu0 0.0
      %2117 = vmatpush2.xpose.msra.mxu0 0.0
      %2118 = vmatprep.subr.mxu0 0.0
      %2119 = vmatpush2.xpose.msra.mxu0 0.0
      %2120 = vmatprep.mubr.f32.mxu0 0.0
      %2121 = vmatmul.mubr.f32.gmra.mxu0 %v2024
      %v2122 = vpop.f32.mrf.mxu0
      %v2123 = vadd.f32 0.0, %v2122
      %v2124 = vpop.f32.mrf.mxu0
      %2125 = vmatprep.mubr.f32.mxu0 0.0
      %2126 = vmatmul.mubr.f32.gmra.mxu0 %v2026
      %v2127 = vpop.f32.mrf.mxu0
      %v2128 = vadd.f32 0.0, %v2127
      %v2129 = vpop.f32.mrf.mxu0
      %2130 = vmatprep.mubr.f32.mxu0 0.0
      %2131 = vmatmul.mubr.f32.gmra.mxu0 %v2028
      %v2132 = vpop.f32.mrf.mxu0
      %v2133 = vadd.f32 0.0, %v2132
      %v2134 = vpop.f32.mrf.mxu0
      %2135 = vmatprep.mubr.f32.mxu0 0.0
      %2136 = vmatmul.mubr.f32.gmra.mxu0 %v2030
      %v2137 = vpop.f32.mrf.mxu0
      %v2138 = vadd.f32 0.0, %v2137
      %v2139 = vpop.f32.mrf.mxu0
      %2140 = vmatprep.mubr.f32.mxu0 0.0
      %2141 = vmatmul.mubr.f32.gmra.mxu0 %v2032
      %v2142 = vpop.f32.mrf.mxu0
      %v2143 = vadd.f32 0.0, %v2142
      %v2144 = vpop.f32.mrf.mxu0
      %2145 = vmatprep.mubr.f32.mxu0 0.0
      %2146 = vmatmul.mubr.f32.gmra.mxu0 %v2034
      %v2147 = vpop.f32.mrf.mxu0
      %v2148 = vadd.f32 0.0, %v2147
      %v2149 = vpop.f32.mrf.mxu0
      %2150 = vmatprep.mubr.f32.mxu0 0.0
      %2151 = vmatmul.mubr.f32.gmra.mxu0 %v2036
      %v2152 = vpop.f32.mrf.mxu0
      %v2153 = vadd.f32 0.0, %v2152
      %v2154 = vpop.f32.mrf.mxu0
      %2155 = vmatprep.mubr.f32.mxu0 0.0
      %2156 = vmatmul.mubr.f32.gmra.mxu0 %v2038
      %v2157 = vpop.f32.mrf.mxu0
      %v2158 = vadd.f32 0.0, %v2157
      %v2159 = vpop.f32.mrf.mxu0
      %2160 = vdwg.mxu0
      %v2161 = vmul.f32 %v2123, 0.35355338
      %v2162 = vmul.f32 %v2128, 0.35355338
      %v2163 = vmul.f32 %v2133, 0.35355338
      %v2164 = vmul.f32 %v2138, 0.35355338
      %v2165 = vmul.f32 %v2143, 0.35355338
      %v2166 = vmul.f32 %v2148, 0.35355338
      %v2167 = vmul.f32 %v2153, 0.35355338
      %v2168 = vmul.f32 %v2158, 0.35355338
      %v2169 = vsel %vm1010, %v2161, -inf
      %2170 = vmax.xlane.f32.xlu0 %v2169
      %v2171 = vpop.xlane.xlu0 %2170
      %v2172 = vsel %vm1010, %v2162, -inf
      %2173 = vmax.xlane.f32.xlu0 %v2172
      %v2174 = vpop.xlane.xlu0 %2173
      %v2175 = vsel %vm1010, %v2163, -inf
      %2176 = vmax.xlane.f32.xlu0 %v2175
      %v2177 = vpop.xlane.xlu0 %2176
      %v2178 = vsel %vm1010, %v2164, -inf
      %2179 = vmax.xlane.f32.xlu0 %v2178
      %v2180 = vpop.xlane.xlu0 %2179
      %v2181 = vsel %vm1010, %v2165, -inf
      %2182 = vmax.xlane.f32.xlu0 %v2181
      %v2183 = vpop.xlane.xlu0 %2182
      %v2184 = vsel %vm1010, %v2166, -inf
      %2185 = vmax.xlane.f32.xlu0 %v2184
      %v2186 = vpop.xlane.xlu0 %2185
      %v2187 = vsel %vm1010, %v2167, -inf
      %2188 = vmax.xlane.f32.xlu0 %v2187
      %v2189 = vpop.xlane.xlu0 %2188
      %v2190 = vsel %vm1010, %v2168, -inf
      %2191 = vmax.xlane.f32.xlu0 %v2190
      %v2192 = vpop.xlane.xlu0 %2191
      %v2193 = vsub.f32 %v2161, %v2171
      %v2194 = vsub.f32 %v2162, %v2174
      %v2195 = vsub.f32 %v2163, %v2177
      %v2196 = vsub.f32 %v2164, %v2180
      %v2197 = vsub.f32 %v2165, %v2183
      %v2198 = vsub.f32 %v2166, %v2186
      %v2199 = vsub.f32 %v2167, %v2189
      %v2200 = vsub.f32 %v2168, %v2192
      %v2201 = vmul.f32 %v2193, 1.442695
      %v2202 = vpow.pop %v2201
      %v2203 = vmul.f32 %v2194, 1.442695
      %v2204 = vpow.pop %v2203
      %v2205 = vmul.f32 %v2195, 1.442695
      %v2206 = vpow.pop %v2205
      %v2207 = vmul.f32 %v2196, 1.442695
      %v2208 = vpow.pop %v2207
      %v2209 = vmul.f32 %v2197, 1.442695
      %v2210 = vpow.pop %v2209
      %v2211 = vmul.f32 %v2198, 1.442695
      %v2212 = vpow.pop %v2211
      %v2213 = vmul.f32 %v2199, 1.442695
      %v2214 = vpow.pop %v2213
      %v2215 = vmul.f32 %v2200, 1.442695
      %v2216 = vpow.pop %v2215
      %v2217 = vsel %vm1010, %v2202, 0.0
      %2218 = vadd.xlane.f32.xlu0 %v2217
      %v2219 = vpop.xlane.xlu0 %2218
      %v2220 = vsel %vm1010, %v2204, 0.0
      %2221 = vadd.xlane.f32.xlu0 %v2220
      %v2222 = vpop.xlane.xlu0 %2221
      %v2223 = vsel %vm1010, %v2206, 0.0
      %2224 = vadd.xlane.f32.xlu0 %v2223
      %v2225 = vpop.xlane.xlu0 %2224
      %v2226 = vsel %vm1010, %v2208, 0.0
      %2227 = vadd.xlane.f32.xlu0 %v2226
      %v2228 = vpop.xlane.xlu0 %2227
      %v2229 = vsel %vm1010, %v2210, 0.0
      %2230 = vadd.xlane.f32.xlu0 %v2229
      %v2231 = vpop.xlane.xlu0 %2230
      %v2232 = vsel %vm1010, %v2212, 0.0
      %2233 = vadd.xlane.f32.xlu0 %v2232
      %v2234 = vpop.xlane.xlu0 %2233
      %v2235 = vsel %vm1010, %v2214, 0.0
      %2236 = vadd.xlane.f32.xlu0 %v2235
      %v2237 = vpop.xlane.xlu0 %2236
      %v2238 = vsel %vm1010, %v2216, 0.0
      %2239 = vadd.xlane.f32.xlu0 %v2238
      %v2240 = vpop.xlane.xlu0 %2239
      %v2241 = vrcp.pop %v2219
      %v2242 = vrcp.pop %v2222
      %v2243 = vrcp.pop %v2225
      %v2244 = vrcp.pop %v2228
      %v2245 = vrcp.pop %v2231
      %v2246 = vrcp.pop %v2234
      %v2247 = vrcp.pop %v2237
      %v2248 = vrcp.pop %v2240
      %v2249 = vmul.f32 %v2202, %v2241
      %v2250 = vmul.f32 %v2204, %v2242
      %v2251 = vmul.f32 %v2206, %v2243
      %v2252 = vmul.f32 %v2208, %v2244
      %v2253 = vmul.f32 %v2210, %v2245
      %v2254 = vmul.f32 %v2212, %v2246
      %v2255 = vmul.f32 %v2214, %v2247
      %v2256 = vmul.f32 %v2216, %v2248
      %2257 = vrot.lane.b32.xlu0 %v1394, 56
      %v2258 = vpop.permute.xlu0 %2257
      %2259 = vrot.lane.b32.xlu0 %v1399, 56
      %v2260 = vpop.permute.xlu0 %2259
      %2261 = vrot.lane.b32.xlu0 %v1404, 56
      %v2262 = vpop.permute.xlu0 %2261
      %2263 = vrot.lane.b32.xlu0 %v1409, 56
      %v2264 = vpop.permute.xlu0 %2263
      %2265 = vrot.lane.b32.xlu0 %v1414, 56
      %v2266 = vpop.permute.xlu0 %2265
      %2267 = vrot.lane.b32.xlu0 %v1419, 56
      %v2268 = vpop.permute.xlu0 %2267
      %2269 = vrot.lane.b32.xlu0 %v1424, 56
      %v2270 = vpop.permute.xlu0 %2269
      %2271 = vrot.lane.b32.xlu0 %v1429, 56
      %v2272 = vpop.permute.xlu0 %2271
      %v2282 = vsel %vm1010, %v2249, 0
      %v2285 = vsel %vm1010, %v2250, 0
      %v2288 = vsel %vm1010, %v2251, 0
      %v2291 = vsel %vm1010, %v2252, 0
      %v2294 = vsel %vm1010, %v2253, 0
      %v2297 = vsel %vm1010, %v2254, 0
      %v2300 = vsel %vm1010, %v2255, 0
      %v2303 = vsel %vm1010, %v2256, 0
      %2305 = vmatprep.subr.mxu0 0.0
      %2306 = vmatpush1.msra.mxu0 0.0
      %2307 = vmatprep.subr.mxu0 0.0
      %2308 = vmatpush1.msra.mxu0 0.0
      %2309 = vmatprep.subr.mxu0 0.0
      %2310 = vmatpush1.msra.mxu0 0.0
      %2311 = vmatprep.subr.mxu0 0.0
      %2312 = vmatpush1.msra.mxu0 0.0
      %2313 = vmatprep.subr.mxu0 0.0
      %2314 = vmatpush1.msra.mxu0 0.0
      %2315 = vmatprep.subr.mxu0 0.0
      %2316 = vmatpush1.msra.mxu0 0.0
      %2317 = vmatprep.subr.mxu0 0.0
      %2318 = vmatpush1.msra.mxu0 0.0
      %2319 = vmatprep.subr.mxu0 0.0
      %2320 = vmatpush1.msra.mxu0 0.0
      %2321 = vmatprep.subr.mxu0 0.0
      %2322 = vmatpush1.msra.mxu0 %v2272
      %2323 = vmatprep.subr.mxu0 0.0
      %2324 = vmatpush1.msra.mxu0 %v2270
      %2325 = vmatprep.subr.mxu0 0.0
      %2326 = vmatpush1.msra.mxu0 %v2268
      %2327 = vmatprep.subr.mxu0 0.0
      %2328 = vmatpush1.msra.mxu0 %v2266
      %2329 = vmatprep.subr.mxu0 0.0
      %2330 = vmatpush1.msra.mxu0 %v2264
      %2331 = vmatprep.subr.mxu0 0.0
      %2332 = vmatpush1.msra.mxu0 %v2262
      %2333 = vmatprep.subr.mxu0 0.0
      %2334 = vmatpush1.msra.mxu0 %v2260
      %2335 = vmatprep.subr.mxu0 0.0
      %2336 = vmatpush1.msra.mxu0 %v2258
      %2337 = vmatprep.subr.mxu0 0.0
      %2338 = vmatpush2.msra.mxu0 0.0
      %2339 = vmatprep.subr.mxu0 0.0
      %2340 = vmatpush2.msra.mxu0 0.0
      %2341 = vmatprep.subr.mxu0 0.0
      %2342 = vmatpush2.msra.mxu0 0.0
      %2343 = vmatprep.subr.mxu0 0.0
      %2344 = vmatpush2.msra.mxu0 0.0
      %2345 = vmatprep.subr.mxu0 0.0
      %2346 = vmatpush2.msra.mxu0 0.0
      %2347 = vmatprep.subr.mxu0 0.0
      %2348 = vmatpush2.msra.mxu0 0.0
      %2349 = vmatprep.subr.mxu0 0.0
      %2350 = vmatpush2.msra.mxu0 0.0
      %2351 = vmatprep.subr.mxu0 0.0
      %2352 = vmatpush2.msra.mxu0 0.0
      %2353 = vmatprep.subr.mxu0 0.0
      %2354 = vmatpush2.msra.mxu0 0.0
      %2355 = vmatprep.subr.mxu0 0.0
      %2356 = vmatpush2.msra.mxu0 0.0
      %2357 = vmatprep.subr.mxu0 0.0
      %2358 = vmatpush2.msra.mxu0 0.0
      %2359 = vmatprep.subr.mxu0 0.0
      %2360 = vmatpush2.msra.mxu0 0.0
      %2361 = vmatprep.subr.mxu0 0.0
      %2362 = vmatpush2.msra.mxu0 0.0
      %2363 = vmatprep.subr.mxu0 0.0
      %2364 = vmatpush2.msra.mxu0 0.0
      %2365 = vmatprep.subr.mxu0 0.0
      %2366 = vmatpush2.msra.mxu0 0.0
      %2367 = vmatprep.subr.mxu0 0.0
      %2368 = vmatpush2.msra.mxu0 0.0
      %2369 = vmatprep.mubr.f32.mxu0 0.0
      %2370 = vmatmul.mubr.f32.gmra.mxu0 %v2282
      %v2371 = vpop.f32.mrf.mxu0
      %v2372 = vadd.f32 0.0, %v2371
      %v2373 = vpop.f32.mrf.mxu0
      %2374 = vmatprep.mubr.f32.mxu0 0.0
      %2375 = vmatmul.mubr.f32.gmra.mxu0 %v2285
      %v2376 = vpop.f32.mrf.mxu0
      %v2377 = vadd.f32 0.0, %v2376
      %v2378 = vpop.f32.mrf.mxu0
      %2379 = vmatprep.mubr.f32.mxu0 0.0
      %2380 = vmatmul.mubr.f32.gmra.mxu0 %v2288
      %v2381 = vpop.f32.mrf.mxu0
      %v2382 = vadd.f32 0.0, %v2381
      %v2383 = vpop.f32.mrf.mxu0
      %2384 = vmatprep.mubr.f32.mxu0 0.0
      %2385 = vmatmul.mubr.f32.gmra.mxu0 %v2291
      %v2386 = vpop.f32.mrf.mxu0
      %v2387 = vadd.f32 0.0, %v2386
      %v2388 = vpop.f32.mrf.mxu0
      %2389 = vmatprep.mubr.f32.mxu0 0.0
      %2390 = vmatmul.mubr.f32.gmra.mxu0 %v2294
      %v2391 = vpop.f32.mrf.mxu0
      %v2392 = vadd.f32 0.0, %v2391
      %v2393 = vpop.f32.mrf.mxu0
      %2394 = vmatprep.mubr.f32.mxu0 0.0
      %2395 = vmatmul.mubr.f32.gmra.mxu0 %v2297
      %v2396 = vpop.f32.mrf.mxu0
      %v2397 = vadd.f32 0.0, %v2396
      %v2398 = vpop.f32.mrf.mxu0
      %2399 = vmatprep.mubr.f32.mxu0 0.0
      %2400 = vmatmul.mubr.f32.gmra.mxu0 %v2300
      %v2401 = vpop.f32.mrf.mxu0
      %v2402 = vadd.f32 0.0, %v2401
      %v2403 = vpop.f32.mrf.mxu0
      %2404 = vmatprep.mubr.f32.mxu0 0.0
      %2405 = vmatmul.mubr.f32.gmra.mxu0 %v2303
      %v2406 = vpop.f32.mrf.mxu0
      %v2407 = vadd.f32 0.0, %v2406
      %v2408 = vpop.f32.mrf.mxu0
      %2409 = vdwg.mxu0
      %v2411 = vsel %vm1468, %v2372, 0
      %v2414 = vsel %vm1468, %v2377, 0
      %v2417 = vsel %vm1468, %v2382, 0
      %v2420 = vsel %vm1468, %v2387, 0
      %v2423 = vsel %vm1468, %v2392, 0
      %v2426 = vsel %vm1468, %v2397, 0
      %v2429 = vsel %vm1468, %v2402, 0
      %v2432 = vsel %vm1468, %v2407, 0
      %2434 = vmatprep.subr.mxu0 0.0
      %2435 = vmatpush1.msra.mxu0 0.0
      %2436 = vmatprep.subr.mxu0 0.0
      %2437 = vmatpush1.msra.mxu0 0.0
      %2438 = vmatprep.subr.mxu0 0.0
      %2439 = vmatpush1.msra.mxu0 0.0
      %2440 = vmatprep.subr.mxu0 0.0
      %2441 = vmatpush1.msra.mxu0 0.0
      %2442 = vmatprep.subr.mxu0 0.0
      %2443 = vmatpush1.msra.mxu0 0.0
      %2444 = vmatprep.subr.mxu0 0.0
      %2445 = vmatpush1.msra.mxu0 0.0
      %2446 = vmatprep.subr.mxu0 0.0
      %2447 = vmatpush1.msra.mxu0 0.0
      %2448 = vmatprep.subr.mxu0 0.0
      %2449 = vmatpush1.msra.mxu0 0.0
      %2450 = vmatprep.subr.mxu0 0.0
      %2451 = vmatpush1.msra.mxu0 0.0
      %2452 = vmatprep.subr.mxu0 0.0
      %2453 = vmatpush1.msra.mxu0 0.0
      %2454 = vmatprep.subr.mxu0 0.0
      %2455 = vmatpush1.msra.mxu0 0.0
      %2456 = vmatprep.subr.mxu0 0.0
      %2457 = vmatpush1.msra.mxu0 0.0
      %2458 = vmatprep.subr.mxu0 0.0
      %2459 = vmatpush1.msra.mxu0 0.0
      %2460 = vmatprep.subr.mxu0 0.0
      %2461 = vmatpush1.msra.mxu0 0.0
      %2462 = vmatprep.subr.mxu0 0.0
      %2463 = vmatpush1.msra.mxu0 0.0
      %2464 = vmatprep.subr.mxu0 0.0
      %2465 = vmatpush1.msra.mxu0 %v1433
      %2466 = vmatprep.subr.mxu0 0.0
      %2467 = vmatpush2.msra.mxu0 0.0
      %2468 = vmatprep.subr.mxu0 0.0
      %2469 = vmatpush2.msra.mxu0 0.0
      %2470 = vmatprep.subr.mxu0 0.0
      %2471 = vmatpush2.msra.mxu0 0.0
      %2472 = vmatprep.subr.mxu0 0.0
      %2473 = vmatpush2.msra.mxu0 0.0
      %2474 = vmatprep.subr.mxu0 0.0
      %2475 = vmatpush2.msra.mxu0 0.0
      %2476 = vmatprep.subr.mxu0 0.0
      %2477 = vmatpush2.msra.mxu0 0.0
      %2478 = vmatprep.subr.mxu0 0.0
      %2479 = vmatpush2.msra.mxu0 0.0
      %2480 = vmatprep.subr.mxu0 0.0
      %2481 = vmatpush2.msra.mxu0 0.0
      %2482 = vmatprep.subr.mxu0 0.0
      %2483 = vmatpush2.msra.mxu0 0.0
      %2484 = vmatprep.subr.mxu0 0.0
      %2485 = vmatpush2.msra.mxu0 0.0
      %2486 = vmatprep.subr.mxu0 0.0
      %2487 = vmatpush2.msra.mxu0 0.0
      %2488 = vmatprep.subr.mxu0 0.0
      %2489 = vmatpush2.msra.mxu0 0.0
      %2490 = vmatprep.subr.mxu0 0.0
      %2491 = vmatpush2.msra.mxu0 0.0
      %2492 = vmatprep.subr.mxu0 0.0
      %2493 = vmatpush2.msra.mxu0 0.0
      %2494 = vmatprep.subr.mxu0 0.0
      %2495 = vmatpush2.msra.mxu0 0.0
      %2496 = vmatprep.subr.mxu0 0.0
      %2497 = vmatpush2.msra.mxu0 0.0
      %2498 = vmatprep.mubr.f32.mxu0 0.0
      %2499 = vmatmul.mubr.f32.gmra.mxu0 %v2411
      %v2500 = vpop.f32.mrf.mxu0
      %v2501 = vadd.f32 0.0, %v2500
      %v2502 = vpop.f32.mrf.mxu0
      %2503 = vmatprep.mubr.f32.mxu0 0.0
      %2504 = vmatmul.mubr.f32.gmra.mxu0 %v2414
      %v2505 = vpop.f32.mrf.mxu0
      %v2506 = vadd.f32 0.0, %v2505
      %v2507 = vpop.f32.mrf.mxu0
      %2508 = vmatprep.mubr.f32.mxu0 0.0
      %2509 = vmatmul.mubr.f32.gmra.mxu0 %v2417
      %v2510 = vpop.f32.mrf.mxu0
      %v2511 = vadd.f32 0.0, %v2510
      %v2512 = vpop.f32.mrf.mxu0
      %2513 = vmatprep.mubr.f32.mxu0 0.0
      %2514 = vmatmul.mubr.f32.gmra.mxu0 %v2420
      %v2515 = vpop.f32.mrf.mxu0
      %v2516 = vadd.f32 0.0, %v2515
      %v2517 = vpop.f32.mrf.mxu0
      %2518 = vmatprep.mubr.f32.mxu0 0.0
      %2519 = vmatmul.mubr.f32.gmra.mxu0 %v2423
      %v2520 = vpop.f32.mrf.mxu0
      %v2521 = vadd.f32 0.0, %v2520
      %v2522 = vpop.f32.mrf.mxu0
      %2523 = vmatprep.mubr.f32.mxu0 0.0
      %2524 = vmatmul.mubr.f32.gmra.mxu0 %v2426
      %v2525 = vpop.f32.mrf.mxu0
      %v2526 = vadd.f32 0.0, %v2525
      %v2527 = vpop.f32.mrf.mxu0
      %2528 = vmatprep.mubr.f32.mxu0 0.0
      %2529 = vmatmul.mubr.f32.gmra.mxu0 %v2429
      %v2530 = vpop.f32.mrf.mxu0
      %v2531 = vadd.f32 0.0, %v2530
      %v2532 = vpop.f32.mrf.mxu0
      %2533 = vmatprep.mubr.f32.mxu0 0.0
      %2534 = vmatmul.mubr.f32.gmra.mxu0 %v2432
      %v2535 = vpop.f32.mrf.mxu0
      %v2536 = vadd.f32 0.0, %v2535
      %v2537 = vpop.f32.mrf.mxu0
      %2538 = vdwg.mxu0
      %v2539 = vadd.f32 %v1984, %v2501
      %v2540 = vadd.f32 %v1985, %v2506
      %v2541 = vadd.f32 %v1986, %v2511
      %v2542 = vadd.f32 %v1987, %v2516
      %v2543 = vadd.f32 %v1988, %v2521
      %v2544 = vadd.f32 %v1989, %v2526
      %v2545 = vadd.f32 %v1990, %v2531
      %v2546 = vadd.f32 %v1991, %v2536
      %2547 = vrot.lane.b32.xlu0 %v1394, 112
      %v2548 = vpop.permute.xlu0 %2547
      %2549 = vrot.lane.b32.xlu0 %v1399, 112
      %v2550 = vpop.permute.xlu0 %2549
      %2551 = vrot.lane.b32.xlu0 %v1404, 112
      %v2552 = vpop.permute.xlu0 %2551
      %2553 = vrot.lane.b32.xlu0 %v1409, 112
      %v2554 = vpop.permute.xlu0 %2553
      %2555 = vrot.lane.b32.xlu0 %v1414, 112
      %v2556 = vpop.permute.xlu0 %2555
      %2557 = vrot.lane.b32.xlu0 %v1419, 112
      %v2558 = vpop.permute.xlu0 %2557
      %2559 = vrot.lane.b32.xlu0 %v1424, 112
      %v2560 = vpop.permute.xlu0 %2559
      %2561 = vrot.lane.b32.xlu0 %v1429, 112
      %v2562 = vpop.permute.xlu0 %2561
      %2563 = vrot.lane.b32.xlu0 %v1394, 80
      %v2564 = vpop.permute.xlu0 %2563
      %2565 = vrot.lane.b32.xlu0 %v1399, 80
      %v2566 = vpop.permute.xlu0 %2565
      %2567 = vrot.lane.b32.xlu0 %v1404, 80
      %v2568 = vpop.permute.xlu0 %2567
      %2569 = vrot.lane.b32.xlu0 %v1409, 80
      %v2570 = vpop.permute.xlu0 %2569
      %2571 = vrot.lane.b32.xlu0 %v1414, 80
      %v2572 = vpop.permute.xlu0 %2571
      %2573 = vrot.lane.b32.xlu0 %v1419, 80
      %v2574 = vpop.permute.xlu0 %2573
      %2575 = vrot.lane.b32.xlu0 %v1424, 80
      %v2576 = vpop.permute.xlu0 %2575
      %2577 = vrot.lane.b32.xlu0 %v1429, 80
      %v2578 = vpop.permute.xlu0 %2577
      %v2579 = vsel %vm1468, %v2548, 0
      %v2581 = vsel %vm1468, %v2550, 0
      %v2583 = vsel %vm1468, %v2552, 0
      %v2585 = vsel %vm1468, %v2554, 0
      %v2587 = vsel %vm1468, %v2556, 0
      %v2589 = vsel %vm1468, %v2558, 0
      %v2591 = vsel %vm1468, %v2560, 0
      %v2593 = vsel %vm1468, %v2562, 0
      %v2595 = vsel %vm1468, %v2564, 0
      %v2597 = vsel %vm1468, %v2566, 0
      %v2599 = vsel %vm1468, %v2568, 0
      %v2601 = vsel %vm1468, %v2570, 0
      %v2603 = vsel %vm1468, %v2572, 0
      %v2605 = vsel %vm1468, %v2574, 0
      %v2607 = vsel %vm1468, %v2576, 0
      %v2609 = vsel %vm1468, %v2578, 0
      %2611 = vmatprep.subr.mxu0 0.0
      %2612 = vmatpush1.xpose.msra.mxu0 0.0
      %2613 = vmatprep.subr.mxu0 0.0
      %2614 = vmatpush1.xpose.msra.mxu0 0.0
      %2615 = vmatprep.subr.mxu0 0.0
      %2616 = vmatpush1.xpose.msra.mxu0 0.0
      %2617 = vmatprep.subr.mxu0 0.0
      %2618 = vmatpush1.xpose.msra.mxu0 0.0
      %2619 = vmatprep.subr.mxu0 0.0
      %2620 = vmatpush1.xpose.msra.mxu0 0.0
      %2621 = vmatprep.subr.mxu0 0.0
      %2622 = vmatpush1.xpose.msra.mxu0 0.0
      %2623 = vmatprep.subr.mxu0 0.0
      %2624 = vmatpush1.xpose.msra.mxu0 0.0
      %2625 = vmatprep.subr.mxu0 0.0
      %2626 = vmatpush1.xpose.msra.mxu0 0.0
      %2627 = vmatprep.subr.mxu0 0.0
      %2628 = vmatpush1.xpose.msra.mxu0 %v2609
      %2629 = vmatprep.subr.mxu0 0.0
      %2630 = vmatpush1.xpose.msra.mxu0 %v2607
      %2631 = vmatprep.subr.mxu0 0.0
      %2632 = vmatpush1.xpose.msra.mxu0 %v2605
      %2633 = vmatprep.subr.mxu0 0.0
      %2634 = vmatpush1.xpose.msra.mxu0 %v2603
      %2635 = vmatprep.subr.mxu0 0.0
      %2636 = vmatpush1.xpose.msra.mxu0 %v2601
      %2637 = vmatprep.subr.mxu0 0.0
      %2638 = vmatpush1.xpose.msra.mxu0 %v2599
      %2639 = vmatprep.subr.mxu0 0.0
      %2640 = vmatpush1.xpose.msra.mxu0 %v2597
      %2641 = vmatprep.subr.mxu0 0.0
      %2642 = vmatpush1.xpose.msra.mxu0 %v2595
      %2643 = vmatprep.subr.mxu0 0.0
      %2644 = vmatpush2.xpose.msra.mxu0 0.0
      %2645 = vmatprep.subr.mxu0 0.0
      %2646 = vmatpush2.xpose.msra.mxu0 0.0
      %2647 = vmatprep.subr.mxu0 0.0
      %2648 = vmatpush2.xpose.msra.mxu0 0.0
      %2649 = vmatprep.subr.mxu0 0.0
      %2650 = vmatpush2.xpose.msra.mxu0 0.0
      %2651 = vmatprep.subr.mxu0 0.0
      %2652 = vmatpush2.xpose.msra.mxu0 0.0
      %2653 = vmatprep.subr.mxu0 0.0
      %2654 = vmatpush2.xpose.msra.mxu0 0.0
      %2655 = vmatprep.subr.mxu0 0.0
      %2656 = vmatpush2.xpose.msra.mxu0 0.0
      %2657 = vmatprep.subr.mxu0 0.0
      %2658 = vmatpush2.xpose.msra.mxu0 0.0
      %2659 = vmatprep.subr.mxu0 0.0
      %2660 = vmatpush2.xpose.msra.mxu0 0.0
      %2661 = vmatprep.subr.mxu0 0.0
      %2662 = vmatpush2.xpose.msra.mxu0 0.0
      %2663 = vmatprep.subr.mxu0 0.0
      %2664 = vmatpush2.xpose.msra.mxu0 0.0
      %2665 = vmatprep.subr.mxu0 0.0
      %2666 = vmatpush2.xpose.msra.mxu0 0.0
      %2667 = vmatprep.subr.mxu0 0.0
      %2668 = vmatpush2.xpose.msra.mxu0 0.0
      %2669 = vmatprep.subr.mxu0 0.0
      %2670 = vmatpush2.xpose.msra.mxu0 0.0
      %2671 = vmatprep.subr.mxu0 0.0
      %2672 = vmatpush2.xpose.msra.mxu0 0.0
      %2673 = vmatprep.subr.mxu0 0.0
      %2674 = vmatpush2.xpose.msra.mxu0 0.0
      %2675 = vmatprep.mubr.f32.mxu0 0.0
      %2676 = vmatmul.mubr.f32.gmra.mxu0 %v2579
      %v2677 = vpop.f32.mrf.mxu0
      %v2678 = vadd.f32 0.0, %v2677
      %v2679 = vpop.f32.mrf.mxu0
      %2680 = vmatprep.mubr.f32.mxu0 0.0
      %2681 = vmatmul.mubr.f32.gmra.mxu0 %v2581
      %v2682 = vpop.f32.mrf.mxu0
      %v2683 = vadd.f32 0.0, %v2682
      %v2684 = vpop.f32.mrf.mxu0
      %2685 = vmatprep.mubr.f32.mxu0 0.0
      %2686 = vmatmul.mubr.f32.gmra.mxu0 %v2583
      %v2687 = vpop.f32.mrf.mxu0
      %v2688 = vadd.f32 0.0, %v2687
      %v2689 = vpop.f32.mrf.mxu0
      %2690 = vmatprep.mubr.f32.mxu0 0.0
      %2691 = vmatmul.mubr.f32.gmra.mxu0 %v2585
      %v2692 = vpop.f32.mrf.mxu0
      %v2693 = vadd.f32 0.0, %v2692
      %v2694 = vpop.f32.mrf.mxu0
      %2695 = vmatprep.mubr.f32.mxu0 0.0
      %2696 = vmatmul.mubr.f32.gmra.mxu0 %v2587
      %v2697 = vpop.f32.mrf.mxu0
      %v2698 = vadd.f32 0.0, %v2697
      %v2699 = vpop.f32.mrf.mxu0
      %2700 = vmatprep.mubr.f32.mxu0 0.0
      %2701 = vmatmul.mubr.f32.gmra.mxu0 %v2589
      %v2702 = vpop.f32.mrf.mxu0
      %v2703 = vadd.f32 0.0, %v2702
      %v2704 = vpop.f32.mrf.mxu0
      %2705 = vmatprep.mubr.f32.mxu0 0.0
      %2706 = vmatmul.mubr.f32.gmra.mxu0 %v2591
      %v2707 = vpop.f32.mrf.mxu0
      %v2708 = vadd.f32 0.0, %v2707
      %v2709 = vpop.f32.mrf.mxu0
      %2710 = vmatprep.mubr.f32.mxu0 0.0
      %2711 = vmatmul.mubr.f32.gmra.mxu0 %v2593
      %v2712 = vpop.f32.mrf.mxu0
      %v2713 = vadd.f32 0.0, %v2712
      %v2714 = vpop.f32.mrf.mxu0
      %2715 = vdwg.mxu0
      %v2716 = vmul.f32 %v2678, 0.35355338
      %v2717 = vmul.f32 %v2683, 0.35355338
      %v2718 = vmul.f32 %v2688, 0.35355338
      %v2719 = vmul.f32 %v2693, 0.35355338
      %v2720 = vmul.f32 %v2698, 0.35355338
      %v2721 = vmul.f32 %v2703, 0.35355338
      %v2722 = vmul.f32 %v2708, 0.35355338
      %v2723 = vmul.f32 %v2713, 0.35355338
      %v2724 = vsel %vm1010, %v2716, -inf
      %2725 = vmax.xlane.f32.xlu0 %v2724
      %v2726 = vpop.xlane.xlu0 %2725
      %v2727 = vsel %vm1010, %v2717, -inf
      %2728 = vmax.xlane.f32.xlu0 %v2727
      %v2729 = vpop.xlane.xlu0 %2728
      %v2730 = vsel %vm1010, %v2718, -inf
      %2731 = vmax.xlane.f32.xlu0 %v2730
      %v2732 = vpop.xlane.xlu0 %2731
      %v2733 = vsel %vm1010, %v2719, -inf
      %2734 = vmax.xlane.f32.xlu0 %v2733
      %v2735 = vpop.xlane.xlu0 %2734
      %v2736 = vsel %vm1010, %v2720, -inf
      %2737 = vmax.xlane.f32.xlu0 %v2736
      %v2738 = vpop.xlane.xlu0 %2737
      %v2739 = vsel %vm1010, %v2721, -inf
      %2740 = vmax.xlane.f32.xlu0 %v2739
      %v2741 = vpop.xlane.xlu0 %2740
      %v2742 = vsel %vm1010, %v2722, -inf
      %2743 = vmax.xlane.f32.xlu0 %v2742
      %v2744 = vpop.xlane.xlu0 %2743
      %v2745 = vsel %vm1010, %v2723, -inf
      %2746 = vmax.xlane.f32.xlu0 %v2745
      %v2747 = vpop.xlane.xlu0 %2746
      %v2748 = vsub.f32 %v2716, %v2726
      %v2749 = vsub.f32 %v2717, %v2729
      %v2750 = vsub.f32 %v2718, %v2732
      %v2751 = vsub.f32 %v2719, %v2735
      %v2752 = vsub.f32 %v2720, %v2738
      %v2753 = vsub.f32 %v2721, %v2741
      %v2754 = vsub.f32 %v2722, %v2744
      %v2755 = vsub.f32 %v2723, %v2747
      %v2756 = vmul.f32 %v2748, 1.442695
      %v2757 = vpow.pop %v2756
      %v2758 = vmul.f32 %v2749, 1.442695
      %v2759 = vpow.pop %v2758
      %v2760 = vmul.f32 %v2750, 1.442695
      %v2761 = vpow.pop %v2760
      %v2762 = vmul.f32 %v2751, 1.442695
      %v2763 = vpow.pop %v2762
      %v2764 = vmul.f32 %v2752, 1.442695
      %v2765 = vpow.pop %v2764
      %v2766 = vmul.f32 %v2753, 1.442695
      %v2767 = vpow.pop %v2766
      %v2768 = vmul.f32 %v2754, 1.442695
      %v2769 = vpow.pop %v2768
      %v2770 = vmul.f32 %v2755, 1.442695
      %v2771 = vpow.pop %v2770
      %v2772 = vsel %vm1010, %v2757, 0.0
      %2773 = vadd.xlane.f32.xlu0 %v2772
      %v2774 = vpop.xlane.xlu0 %2773
      %v2775 = vsel %vm1010, %v2759, 0.0
      %2776 = vadd.xlane.f32.xlu0 %v2775
      %v2777 = vpop.xlane.xlu0 %2776
      %v2778 = vsel %vm1010, %v2761, 0.0
      %2779 = vadd.xlane.f32.xlu0 %v2778
      %v2780 = vpop.xlane.xlu0 %2779
      %v2781 = vsel %vm1010, %v2763, 0.0
      %2782 = vadd.xlane.f32.xlu0 %v2781
      %v2783 = vpop.xlane.xlu0 %2782
      %v2784 = vsel %vm1010, %v2765, 0.0
      %2785 = vadd.xlane.f32.xlu0 %v2784
      %v2786 = vpop.xlane.xlu0 %2785
      %v2787 = vsel %vm1010, %v2767, 0.0
      %2788 = vadd.xlane.f32.xlu0 %v2787
      %v2789 = vpop.xlane.xlu0 %2788
      %v2790 = vsel %vm1010, %v2769, 0.0
      %2791 = vadd.xlane.f32.xlu0 %v2790
      %v2792 = vpop.xlane.xlu0 %2791
      %v2793 = vsel %vm1010, %v2771, 0.0
      %2794 = vadd.xlane.f32.xlu0 %v2793
      %v2795 = vpop.xlane.xlu0 %2794
      %v2796 = vrcp.pop %v2774
      %v2797 = vrcp.pop %v2777
      %v2798 = vrcp.pop %v2780
      %v2799 = vrcp.pop %v2783
      %v2800 = vrcp.pop %v2786
      %v2801 = vrcp.pop %v2789
      %v2802 = vrcp.pop %v2792
      %v2803 = vrcp.pop %v2795
      %v2804 = vmul.f32 %v2757, %v2796
      %v2805 = vmul.f32 %v2759, %v2797
      %v2806 = vmul.f32 %v2761, %v2798
      %v2807 = vmul.f32 %v2763, %v2799
      %v2808 = vmul.f32 %v2765, %v2800
      %v2809 = vmul.f32 %v2767, %v2801
      %v2810 = vmul.f32 %v2769, %v2802
      %v2811 = vmul.f32 %v2771, %v2803
      %2812 = vrot.lane.b32.xlu0 %v1394, 48
      %v2813 = vpop.permute.xlu0 %2812
      %2814 = vrot.lane.b32.xlu0 %v1399, 48
      %v2815 = vpop.permute.xlu0 %2814
      %2816 = vrot.lane.b32.xlu0 %v1404, 48
      %v2817 = vpop.permute.xlu0 %2816
      %2818 = vrot.lane.b32.xlu0 %v1409, 48
      %v2819 = vpop.permute.xlu0 %2818
      %2820 = vrot.lane.b32.xlu0 %v1414, 48
      %v2821 = vpop.permute.xlu0 %2820
      %2822 = vrot.lane.b32.xlu0 %v1419, 48
      %v2823 = vpop.permute.xlu0 %2822
      %2824 = vrot.lane.b32.xlu0 %v1424, 48
      %v2825 = vpop.permute.xlu0 %2824
      %2826 = vrot.lane.b32.xlu0 %v1429, 48
      %v2827 = vpop.permute.xlu0 %2826
      %v2837 = vsel %vm1010, %v2804, 0
      %v2840 = vsel %vm1010, %v2805, 0
      %v2843 = vsel %vm1010, %v2806, 0
      %v2846 = vsel %vm1010, %v2807, 0
      %v2849 = vsel %vm1010, %v2808, 0
      %v2852 = vsel %vm1010, %v2809, 0
      %v2855 = vsel %vm1010, %v2810, 0
      %v2858 = vsel %vm1010, %v2811, 0
      %2860 = vmatprep.subr.mxu0 0.0
      %2861 = vmatpush1.msra.mxu0 0.0
      %2862 = vmatprep.subr.mxu0 0.0
      %2863 = vmatpush1.msra.mxu0 0.0
      %2864 = vmatprep.subr.mxu0 0.0
      %2865 = vmatpush1.msra.mxu0 0.0
      %2866 = vmatprep.subr.mxu0 0.0
      %2867 = vmatpush1.msra.mxu0 0.0
      %2868 = vmatprep.subr.mxu0 0.0
      %2869 = vmatpush1.msra.mxu0 0.0
      %2870 = vmatprep.subr.mxu0 0.0
      %2871 = vmatpush1.msra.mxu0 0.0
      %2872 = vmatprep.subr.mxu0 0.0
      %2873 = vmatpush1.msra.mxu0 0.0
      %2874 = vmatprep.subr.mxu0 0.0
      %2875 = vmatpush1.msra.mxu0 0.0
      %2876 = vmatprep.subr.mxu0 0.0
      %2877 = vmatpush1.msra.mxu0 %v2827
      %2878 = vmatprep.subr.mxu0 0.0
      %2879 = vmatpush1.msra.mxu0 %v2825
      %2880 = vmatprep.subr.mxu0 0.0
      %2881 = vmatpush1.msra.mxu0 %v2823
      %2882 = vmatprep.subr.mxu0 0.0
      %2883 = vmatpush1.msra.mxu0 %v2821
      %2884 = vmatprep.subr.mxu0 0.0
      %2885 = vmatpush1.msra.mxu0 %v2819
      %2886 = vmatprep.subr.mxu0 0.0
      %2887 = vmatpush1.msra.mxu0 %v2817
      %2888 = vmatprep.subr.mxu0 0.0
      %2889 = vmatpush1.msra.mxu0 %v2815
      %2890 = vmatprep.subr.mxu0 0.0
      %2891 = vmatpush1.msra.mxu0 %v2813
      %2892 = vmatprep.subr.mxu0 0.0
      %2893 = vmatpush2.msra.mxu0 0.0
      %2894 = vmatprep.subr.mxu0 0.0
      %2895 = vmatpush2.msra.mxu0 0.0
      %2896 = vmatprep.subr.mxu0 0.0
      %2897 = vmatpush2.msra.mxu0 0.0
      %2898 = vmatprep.subr.mxu0 0.0
      %2899 = vmatpush2.msra.mxu0 0.0
      %2900 = vmatprep.subr.mxu0 0.0
      %2901 = vmatpush2.msra.mxu0 0.0
      %2902 = vmatprep.subr.mxu0 0.0
      %2903 = vmatpush2.msra.mxu0 0.0
      %2904 = vmatprep.subr.mxu0 0.0
      %2905 = vmatpush2.msra.mxu0 0.0
      %2906 = vmatprep.subr.mxu0 0.0
      %2907 = vmatpush2.msra.mxu0 0.0
      %2908 = vmatprep.subr.mxu0 0.0
      %2909 = vmatpush2.msra.mxu0 0.0
      %2910 = vmatprep.subr.mxu0 0.0
      %2911 = vmatpush2.msra.mxu0 0.0
      %2912 = vmatprep.subr.mxu0 0.0
      %2913 = vmatpush2.msra.mxu0 0.0
      %2914 = vmatprep.subr.mxu0 0.0
      %2915 = vmatpush2.msra.mxu0 0.0
      %2916 = vmatprep.subr.mxu0 0.0
      %2917 = vmatpush2.msra.mxu0 0.0
      %2918 = vmatprep.subr.mxu0 0.0
      %2919 = vmatpush2.msra.mxu0 0.0
      %2920 = vmatprep.subr.mxu0 0.0
      %2921 = vmatpush2.msra.mxu0 0.0
      %2922 = vmatprep.subr.mxu0 0.0
      %2923 = vmatpush2.msra.mxu0 0.0
      %2924 = vmatprep.mubr.f32.mxu0 0.0
      %2925 = vmatmul.mubr.f32.gmra.mxu0 %v2837
      %v2926 = vpop.f32.mrf.mxu0
      %v2927 = vadd.f32 0.0, %v2926
      %v2928 = vpop.f32.mrf.mxu0
      %2929 = vmatprep.mubr.f32.mxu0 0.0
      %2930 = vmatmul.mubr.f32.gmra.mxu0 %v2840
      %v2931 = vpop.f32.mrf.mxu0
      %v2932 = vadd.f32 0.0, %v2931
      %v2933 = vpop.f32.mrf.mxu0
      %2934 = vmatprep.mubr.f32.mxu0 0.0
      %2935 = vmatmul.mubr.f32.gmra.mxu0 %v2843
      %v2936 = vpop.f32.mrf.mxu0
      %v2937 = vadd.f32 0.0, %v2936
      %v2938 = vpop.f32.mrf.mxu0
      %2939 = vmatprep.mubr.f32.mxu0 0.0
      %2940 = vmatmul.mubr.f32.gmra.mxu0 %v2846
      %v2941 = vpop.f32.mrf.mxu0
      %v2942 = vadd.f32 0.0, %v2941
      %v2943 = vpop.f32.mrf.mxu0
      %2944 = vmatprep.mubr.f32.mxu0 0.0
      %2945 = vmatmul.mubr.f32.gmra.mxu0 %v2849
      %v2946 = vpop.f32.mrf.mxu0
      %v2947 = vadd.f32 0.0, %v2946
      %v2948 = vpop.f32.mrf.mxu0
      %2949 = vmatprep.mubr.f32.mxu0 0.0
      %2950 = vmatmul.mubr.f32.gmra.mxu0 %v2852
      %v2951 = vpop.f32.mrf.mxu0
      %v2952 = vadd.f32 0.0, %v2951
      %v2953 = vpop.f32.mrf.mxu0
      %2954 = vmatprep.mubr.f32.mxu0 0.0
      %2955 = vmatmul.mubr.f32.gmra.mxu0 %v2855
      %v2956 = vpop.f32.mrf.mxu0
      %v2957 = vadd.f32 0.0, %v2956
      %v2958 = vpop.f32.mrf.mxu0
      %2959 = vmatprep.mubr.f32.mxu0 0.0
      %2960 = vmatmul.mubr.f32.gmra.mxu0 %v2858
      %v2961 = vpop.f32.mrf.mxu0
      %v2962 = vadd.f32 0.0, %v2961
      %v2963 = vpop.f32.mrf.mxu0
      %2964 = vdwg.mxu0
      %v2966 = vsel %vm1468, %v2927, 0
      %v2969 = vsel %vm1468, %v2932, 0
      %v2972 = vsel %vm1468, %v2937, 0
      %v2975 = vsel %vm1468, %v2942, 0
      %v2978 = vsel %vm1468, %v2947, 0
      %v2981 = vsel %vm1468, %v2952, 0
      %v2984 = vsel %vm1468, %v2957, 0
      %v2987 = vsel %vm1468, %v2962, 0
      %2989 = vmatprep.subr.mxu0 0.0
      %2990 = vmatpush1.msra.mxu0 0.0
      %2991 = vmatprep.subr.mxu0 0.0
      %2992 = vmatpush1.msra.mxu0 0.0
      %2993 = vmatprep.subr.mxu0 0.0
      %2994 = vmatpush1.msra.mxu0 0.0
      %2995 = vmatprep.subr.mxu0 0.0
      %2996 = vmatpush1.msra.mxu0 0.0
      %2997 = vmatprep.subr.mxu0 0.0
      %2998 = vmatpush1.msra.mxu0 0.0
      %2999 = vmatprep.subr.mxu0 0.0
      %3000 = vmatpush1.msra.mxu0 0.0
      %3001 = vmatprep.subr.mxu0 0.0
      %3002 = vmatpush1.msra.mxu0 0.0
      %3003 = vmatprep.subr.mxu0 0.0
      %3004 = vmatpush1.msra.mxu0 0.0
      %3005 = vmatprep.subr.mxu0 0.0
      %3006 = vmatpush1.msra.mxu0 0.0
      %3007 = vmatprep.subr.mxu0 0.0
      %3008 = vmatpush1.msra.mxu0 0.0
      %3009 = vmatprep.subr.mxu0 0.0
      %3010 = vmatpush1.msra.mxu0 0.0
      %3011 = vmatprep.subr.mxu0 0.0
      %3012 = vmatpush1.msra.mxu0 0.0
      %3013 = vmatprep.subr.mxu0 0.0
      %3014 = vmatpush1.msra.mxu0 0.0
      %3015 = vmatprep.subr.mxu0 0.0
      %3016 = vmatpush1.msra.mxu0 0.0
      %3017 = vmatprep.subr.mxu0 0.0
      %3018 = vmatpush1.msra.mxu0 0.0
      %3019 = vmatprep.subr.mxu0 0.0
      %3020 = vmatpush1.msra.mxu0 %v1434
      %3021 = vmatprep.subr.mxu0 0.0
      %3022 = vmatpush2.msra.mxu0 0.0
      %3023 = vmatprep.subr.mxu0 0.0
      %3024 = vmatpush2.msra.mxu0 0.0
      %3025 = vmatprep.subr.mxu0 0.0
      %3026 = vmatpush2.msra.mxu0 0.0
      %3027 = vmatprep.subr.mxu0 0.0
      %3028 = vmatpush2.msra.mxu0 0.0
      %3029 = vmatprep.subr.mxu0 0.0
      %3030 = vmatpush2.msra.mxu0 0.0
      %3031 = vmatprep.subr.mxu0 0.0
      %3032 = vmatpush2.msra.mxu0 0.0
      %3033 = vmatprep.subr.mxu0 0.0
      %3034 = vmatpush2.msra.mxu0 0.0
      %3035 = vmatprep.subr.mxu0 0.0
      %3036 = vmatpush2.msra.mxu0 0.0
      %3037 = vmatprep.subr.mxu0 0.0
      %3038 = vmatpush2.msra.mxu0 0.0
      %3039 = vmatprep.subr.mxu0 0.0
      %3040 = vmatpush2.msra.mxu0 0.0
      %3041 = vmatprep.subr.mxu0 0.0
      %3042 = vmatpush2.msra.mxu0 0.0
      %3043 = vmatprep.subr.mxu0 0.0
      %3044 = vmatpush2.msra.mxu0 0.0
      %3045 = vmatprep.subr.mxu0 0.0
      %3046 = vmatpush2.msra.mxu0 0.0
      %3047 = vmatprep.subr.mxu0 0.0
      %3048 = vmatpush2.msra.mxu0 0.0
      %3049 = vmatprep.subr.mxu0 0.0
      %3050 = vmatpush2.msra.mxu0 0.0
      %3051 = vmatprep.subr.mxu0 0.0
      %3052 = vmatpush2.msra.mxu0 0.0
      %3053 = vmatprep.mubr.f32.mxu0 0.0
      %3054 = vmatmul.mubr.f32.gmra.mxu0 %v2966
      %v3055 = vpop.f32.mrf.mxu0
      %v3056 = vadd.f32 0.0, %v3055
      %v3057 = vpop.f32.mrf.mxu0
      %3058 = vmatprep.mubr.f32.mxu0 0.0
      %3059 = vmatmul.mubr.f32.gmra.mxu0 %v2969
      %v3060 = vpop.f32.mrf.mxu0
      %v3061 = vadd.f32 0.0, %v3060
      %v3062 = vpop.f32.mrf.mxu0
      %3063 = vmatprep.mubr.f32.mxu0 0.0
      %3064 = vmatmul.mubr.f32.gmra.mxu0 %v2972
      %v3065 = vpop.f32.mrf.mxu0
      %v3066 = vadd.f32 0.0, %v3065
      %v3067 = vpop.f32.mrf.mxu0
      %3068 = vmatprep.mubr.f32.mxu0 0.0
      %3069 = vmatmul.mubr.f32.gmra.mxu0 %v2975
      %v3070 = vpop.f32.mrf.mxu0
      %v3071 = vadd.f32 0.0, %v3070
      %v3072 = vpop.f32.mrf.mxu0
      %3073 = vmatprep.mubr.f32.mxu0 0.0
      %3074 = vmatmul.mubr.f32.gmra.mxu0 %v2978
      %v3075 = vpop.f32.mrf.mxu0
      %v3076 = vadd.f32 0.0, %v3075
      %v3077 = vpop.f32.mrf.mxu0
      %3078 = vmatprep.mubr.f32.mxu0 0.0
      %3079 = vmatmul.mubr.f32.gmra.mxu0 %v2981
      %v3080 = vpop.f32.mrf.mxu0
      %v3081 = vadd.f32 0.0, %v3080
      %v3082 = vpop.f32.mrf.mxu0
      %3083 = vmatprep.mubr.f32.mxu0 0.0
      %3084 = vmatmul.mubr.f32.gmra.mxu0 %v2984
      %v3085 = vpop.f32.mrf.mxu0
      %v3086 = vadd.f32 0.0, %v3085
      %v3087 = vpop.f32.mrf.mxu0
      %3088 = vmatprep.mubr.f32.mxu0 0.0
      %3089 = vmatmul.mubr.f32.gmra.mxu0 %v2987
      %v3090 = vpop.f32.mrf.mxu0
      %v3091 = vadd.f32 0.0, %v3090
      %v3092 = vpop.f32.mrf.mxu0
      %3093 = vdwg.mxu0
      %v3094 = vadd.f32 %v2539, %v3056
      %v3095 = vadd.f32 %v2540, %v3061
      %v3096 = vadd.f32 %v2541, %v3066
      %v3097 = vadd.f32 %v2542, %v3071
      %v3098 = vadd.f32 %v2543, %v3076
      %v3099 = vadd.f32 %v2544, %v3081
      %v3100 = vadd.f32 %v2545, %v3086
      %v3101 = vadd.f32 %v2546, %v3091
      %3102 = vrot.lane.b32.xlu0 %v1394, 104
      %v3103 = vpop.permute.xlu0 %3102
      %3104 = vrot.lane.b32.xlu0 %v1399, 104
      %v3105 = vpop.permute.xlu0 %3104
      %3106 = vrot.lane.b32.xlu0 %v1404, 104
      %v3107 = vpop.permute.xlu0 %3106
      %3108 = vrot.lane.b32.xlu0 %v1409, 104
      %v3109 = vpop.permute.xlu0 %3108
      %3110 = vrot.lane.b32.xlu0 %v1414, 104
      %v3111 = vpop.permute.xlu0 %3110
      %3112 = vrot.lane.b32.xlu0 %v1419, 104
      %v3113 = vpop.permute.xlu0 %3112
      %3114 = vrot.lane.b32.xlu0 %v1424, 104
      %v3115 = vpop.permute.xlu0 %3114
      %3116 = vrot.lane.b32.xlu0 %v1429, 104
      %v3117 = vpop.permute.xlu0 %3116
      %3118 = vrot.lane.b32.xlu0 %v1394, 72
      %v3119 = vpop.permute.xlu0 %3118
      %3120 = vrot.lane.b32.xlu0 %v1399, 72
      %v3121 = vpop.permute.xlu0 %3120
      %3122 = vrot.lane.b32.xlu0 %v1404, 72
      %v3123 = vpop.permute.xlu0 %3122
      %3124 = vrot.lane.b32.xlu0 %v1409, 72
      %v3125 = vpop.permute.xlu0 %3124
      %3126 = vrot.lane.b32.xlu0 %v1414, 72
      %v3127 = vpop.permute.xlu0 %3126
      %3128 = vrot.lane.b32.xlu0 %v1419, 72
      %v3129 = vpop.permute.xlu0 %3128
      %3130 = vrot.lane.b32.xlu0 %v1424, 72
      %v3131 = vpop.permute.xlu0 %3130
      %3132 = vrot.lane.b32.xlu0 %v1429, 72
      %v3133 = vpop.permute.xlu0 %3132
      %v3134 = vsel %vm1468, %v3103, 0
      %v3136 = vsel %vm1468, %v3105, 0
      %v3138 = vsel %vm1468, %v3107, 0
      %v3140 = vsel %vm1468, %v3109, 0
      %v3142 = vsel %vm1468, %v3111, 0
      %v3144 = vsel %vm1468, %v3113, 0
      %v3146 = vsel %vm1468, %v3115, 0
      %v3148 = vsel %vm1468, %v3117, 0
      %v3150 = vsel %vm1468, %v3119, 0
      %v3152 = vsel %vm1468, %v3121, 0
      %v3154 = vsel %vm1468, %v3123, 0
      %v3156 = vsel %vm1468, %v3125, 0
      %v3158 = vsel %vm1468, %v3127, 0
      %v3160 = vsel %vm1468, %v3129, 0
      %v3162 = vsel %vm1468, %v3131, 0
      %v3164 = vsel %vm1468, %v3133, 0
      %3166 = vmatprep.subr.mxu0 0.0
      %3167 = vmatpush1.xpose.msra.mxu0 0.0
      %3168 = vmatprep.subr.mxu0 0.0
      %3169 = vmatpush1.xpose.msra.mxu0 0.0
      %3170 = vmatprep.subr.mxu0 0.0
      %3171 = vmatpush1.xpose.msra.mxu0 0.0
      %3172 = vmatprep.subr.mxu0 0.0
      %3173 = vmatpush1.xpose.msra.mxu0 0.0
      %3174 = vmatprep.subr.mxu0 0.0
      %3175 = vmatpush1.xpose.msra.mxu0 0.0
      %3176 = vmatprep.subr.mxu0 0.0
      %3177 = vmatpush1.xpose.msra.mxu0 0.0
      %3178 = vmatprep.subr.mxu0 0.0
      %3179 = vmatpush1.xpose.msra.mxu0 0.0
      %3180 = vmatprep.subr.mxu0 0.0
      %3181 = vmatpush1.xpose.msra.mxu0 0.0
      %3182 = vmatprep.subr.mxu0 0.0
      %3183 = vmatpush1.xpose.msra.mxu0 %v3164
      %3184 = vmatprep.subr.mxu0 0.0
      %3185 = vmatpush1.xpose.msra.mxu0 %v3162
      %3186 = vmatprep.subr.mxu0 0.0
      %3187 = vmatpush1.xpose.msra.mxu0 %v3160
      %3188 = vmatprep.subr.mxu0 0.0
      %3189 = vmatpush1.xpose.msra.mxu0 %v3158
      %3190 = vmatprep.subr.mxu0 0.0
      %3191 = vmatpush1.xpose.msra.mxu0 %v3156
      %3192 = vmatprep.subr.mxu0 0.0
      %3193 = vmatpush1.xpose.msra.mxu0 %v3154
      %3194 = vmatprep.subr.mxu0 0.0
      %3195 = vmatpush1.xpose.msra.mxu0 %v3152
      %3196 = vmatprep.subr.mxu0 0.0
      %3197 = vmatpush1.xpose.msra.mxu0 %v3150
      %3198 = vmatprep.subr.mxu0 0.0
      %3199 = vmatpush2.xpose.msra.mxu0 0.0
      %3200 = vmatprep.subr.mxu0 0.0
      %3201 = vmatpush2.xpose.msra.mxu0 0.0
      %3202 = vmatprep.subr.mxu0 0.0
      %3203 = vmatpush2.xpose.msra.mxu0 0.0
      %3204 = vmatprep.subr.mxu0 0.0
      %3205 = vmatpush2.xpose.msra.mxu0 0.0
      %3206 = vmatprep.subr.mxu0 0.0
      %3207 = vmatpush2.xpose.msra.mxu0 0.0
      %3208 = vmatprep.subr.mxu0 0.0
      %3209 = vmatpush2.xpose.msra.mxu0 0.0
      %3210 = vmatprep.subr.mxu0 0.0
      %3211 = vmatpush2.xpose.msra.mxu0 0.0
      %3212 = vmatprep.subr.mxu0 0.0
      %3213 = vmatpush2.xpose.msra.mxu0 0.0
      %3214 = vmatprep.subr.mxu0 0.0
      %3215 = vmatpush2.xpose.msra.mxu0 0.0
      %3216 = vmatprep.subr.mxu0 0.0
      %3217 = vmatpush2.xpose.msra.mxu0 0.0
      %3218 = vmatprep.subr.mxu0 0.0
      %3219 = vmatpush2.xpose.msra.mxu0 0.0
      %3220 = vmatprep.subr.mxu0 0.0
      %3221 = vmatpush2.xpose.msra.mxu0 0.0
      %3222 = vmatprep.subr.mxu0 0.0
      %3223 = vmatpush2.xpose.msra.mxu0 0.0
      %3224 = vmatprep.subr.mxu0 0.0
      %3225 = vmatpush2.xpose.msra.mxu0 0.0
      %3226 = vmatprep.subr.mxu0 0.0
      %3227 = vmatpush2.xpose.msra.mxu0 0.0
      %3228 = vmatprep.subr.mxu0 0.0
      %3229 = vmatpush2.xpose.msra.mxu0 0.0
      %3230 = vmatprep.mubr.f32.mxu0 0.0
      %3231 = vmatmul.mubr.f32.gmra.mxu0 %v3134
      %v3232 = vpop.f32.mrf.mxu0
      %v3233 = vadd.f32 0.0, %v3232
      %v3234 = vpop.f32.mrf.mxu0
      %3235 = vmatprep.mubr.f32.mxu0 0.0
      %3236 = vmatmul.mubr.f32.gmra.mxu0 %v3136
      %v3237 = vpop.f32.mrf.mxu0
      %v3238 = vadd.f32 0.0, %v3237
      %v3239 = vpop.f32.mrf.mxu0
      %3240 = vmatprep.mubr.f32.mxu0 0.0
      %3241 = vmatmul.mubr.f32.gmra.mxu0 %v3138
      %v3242 = vpop.f32.mrf.mxu0
      %v3243 = vadd.f32 0.0, %v3242
      %v3244 = vpop.f32.mrf.mxu0
      %3245 = vmatprep.mubr.f32.mxu0 0.0
      %3246 = vmatmul.mubr.f32.gmra.mxu0 %v3140
      %v3247 = vpop.f32.mrf.mxu0
      %v3248 = vadd.f32 0.0, %v3247
      %v3249 = vpop.f32.mrf.mxu0
      %3250 = vmatprep.mubr.f32.mxu0 0.0
      %3251 = vmatmul.mubr.f32.gmra.mxu0 %v3142
      %v3252 = vpop.f32.mrf.mxu0
      %v3253 = vadd.f32 0.0, %v3252
      %v3254 = vpop.f32.mrf.mxu0
      %3255 = vmatprep.mubr.f32.mxu0 0.0
      %3256 = vmatmul.mubr.f32.gmra.mxu0 %v3144
      %v3257 = vpop.f32.mrf.mxu0
      %v3258 = vadd.f32 0.0, %v3257
      %v3259 = vpop.f32.mrf.mxu0
      %3260 = vmatprep.mubr.f32.mxu0 0.0
      %3261 = vmatmul.mubr.f32.gmra.mxu0 %v3146
      %v3262 = vpop.f32.mrf.mxu0
      %v3263 = vadd.f32 0.0, %v3262
      %v3264 = vpop.f32.mrf.mxu0
      %3265 = vmatprep.mubr.f32.mxu0 0.0
      %3266 = vmatmul.mubr.f32.gmra.mxu0 %v3148
      %v3267 = vpop.f32.mrf.mxu0
      %v3268 = vadd.f32 0.0, %v3267
      %v3269 = vpop.f32.mrf.mxu0
      %3270 = vdwg.mxu0
      %v3271 = vmul.f32 %v3233, 0.35355338
      %v3272 = vmul.f32 %v3238, 0.35355338
      %v3273 = vmul.f32 %v3243, 0.35355338
      %v3274 = vmul.f32 %v3248, 0.35355338
      %v3275 = vmul.f32 %v3253, 0.35355338
      %v3276 = vmul.f32 %v3258, 0.35355338
      %v3277 = vmul.f32 %v3263, 0.35355338
      %v3278 = vmul.f32 %v3268, 0.35355338
      %v3279 = vsel %vm1010, %v3271, -inf
      %3280 = vmax.xlane.f32.xlu0 %v3279
      %v3281 = vpop.xlane.xlu0 %3280
      %v3282 = vsel %vm1010, %v3272, -inf
      %3283 = vmax.xlane.f32.xlu0 %v3282
      %v3284 = vpop.xlane.xlu0 %3283
      %v3285 = vsel %vm1010, %v3273, -inf
      %3286 = vmax.xlane.f32.xlu0 %v3285
      %v3287 = vpop.xlane.xlu0 %3286
      %v3288 = vsel %vm1010, %v3274, -inf
      %3289 = vmax.xlane.f32.xlu0 %v3288
      %v3290 = vpop.xlane.xlu0 %3289
      %v3291 = vsel %vm1010, %v3275, -inf
      %3292 = vmax.xlane.f32.xlu0 %v3291
      %v3293 = vpop.xlane.xlu0 %3292
      %v3294 = vsel %vm1010, %v3276, -inf
      %3295 = vmax.xlane.f32.xlu0 %v3294
      %v3296 = vpop.xlane.xlu0 %3295
      %v3297 = vsel %vm1010, %v3277, -inf
      %3298 = vmax.xlane.f32.xlu0 %v3297
      %v3299 = vpop.xlane.xlu0 %3298
      %v3300 = vsel %vm1010, %v3278, -inf
      %3301 = vmax.xlane.f32.xlu0 %v3300
      %v3302 = vpop.xlane.xlu0 %3301
      %v3303 = vsub.f32 %v3271, %v3281
      %v3304 = vsub.f32 %v3272, %v3284
      %v3305 = vsub.f32 %v3273, %v3287
      %v3306 = vsub.f32 %v3274, %v3290
      %v3307 = vsub.f32 %v3275, %v3293
      %v3308 = vsub.f32 %v3276, %v3296
      %v3309 = vsub.f32 %v3277, %v3299
      %v3310 = vsub.f32 %v3278, %v3302
      %v3311 = vmul.f32 %v3303, 1.442695
      %v3312 = vpow.pop %v3311
      %v3313 = vmul.f32 %v3304, 1.442695
      %v3314 = vpow.pop %v3313
      %v3315 = vmul.f32 %v3305, 1.442695
      %v3316 = vpow.pop %v3315
      %v3317 = vmul.f32 %v3306, 1.442695
      %v3318 = vpow.pop %v3317
      %v3319 = vmul.f32 %v3307, 1.442695
      %v3320 = vpow.pop %v3319
      %v3321 = vmul.f32 %v3308, 1.442695
      %v3322 = vpow.pop %v3321
      %v3323 = vmul.f32 %v3309, 1.442695
      %v3324 = vpow.pop %v3323
      %v3325 = vmul.f32 %v3310, 1.442695
      %v3326 = vpow.pop %v3325
      %v3327 = vsel %vm1010, %v3312, 0.0
      %3328 = vadd.xlane.f32.xlu0 %v3327
      %v3329 = vpop.xlane.xlu0 %3328
      %v3330 = vsel %vm1010, %v3314, 0.0
      %3331 = vadd.xlane.f32.xlu0 %v3330
      %v3332 = vpop.xlane.xlu0 %3331
      %v3333 = vsel %vm1010, %v3316, 0.0
      %3334 = vadd.xlane.f32.xlu0 %v3333
      %v3335 = vpop.xlane.xlu0 %3334
      %v3336 = vsel %vm1010, %v3318, 0.0
      %3337 = vadd.xlane.f32.xlu0 %v3336
      %v3338 = vpop.xlane.xlu0 %3337
      %v3339 = vsel %vm1010, %v3320, 0.0
      %3340 = vadd.xlane.f32.xlu0 %v3339
      %v3341 = vpop.xlane.xlu0 %3340
      %v3342 = vsel %vm1010, %v3322, 0.0
      %3343 = vadd.xlane.f32.xlu0 %v3342
      %v3344 = vpop.xlane.xlu0 %3343
      %v3345 = vsel %vm1010, %v3324, 0.0
      %3346 = vadd.xlane.f32.xlu0 %v3345
      %v3347 = vpop.xlane.xlu0 %3346
      %v3348 = vsel %vm1010, %v3326, 0.0
      %3349 = vadd.xlane.f32.xlu0 %v3348
      %v3350 = vpop.xlane.xlu0 %3349
      %v3351 = vrcp.pop %v3329
      %v3352 = vrcp.pop %v3332
      %v3353 = vrcp.pop %v3335
      %v3354 = vrcp.pop %v3338
      %v3355 = vrcp.pop %v3341
      %v3356 = vrcp.pop %v3344
      %v3357 = vrcp.pop %v3347
      %v3358 = vrcp.pop %v3350
      %v3359 = vmul.f32 %v3312, %v3351
      %v3360 = vmul.f32 %v3314, %v3352
      %v3361 = vmul.f32 %v3316, %v3353
      %v3362 = vmul.f32 %v3318, %v3354
      %v3363 = vmul.f32 %v3320, %v3355
      %v3364 = vmul.f32 %v3322, %v3356
      %v3365 = vmul.f32 %v3324, %v3357
      %v3366 = vmul.f32 %v3326, %v3358
      %3367 = vrot.lane.b32.xlu0 %v1394, 40
      %v3368 = vpop.permute.xlu0 %3367
      %3369 = vrot.lane.b32.xlu0 %v1399, 40
      %v3370 = vpop.permute.xlu0 %3369
      %3371 = vrot.lane.b32.xlu0 %v1404, 40
      %v3372 = vpop.permute.xlu0 %3371
      %3373 = vrot.lane.b32.xlu0 %v1409, 40
      %v3374 = vpop.permute.xlu0 %3373
      %3375 = vrot.lane.b32.xlu0 %v1414, 40
      %v3376 = vpop.permute.xlu0 %3375
      %3377 = vrot.lane.b32.xlu0 %v1419, 40
      %v3378 = vpop.permute.xlu0 %3377
      %3379 = vrot.lane.b32.xlu0 %v1424, 40
      %v3380 = vpop.permute.xlu0 %3379
      %3381 = vrot.lane.b32.xlu0 %v1429, 40
      %v3382 = vpop.permute.xlu0 %3381
      %v3392 = vsel %vm1010, %v3359, 0
      %v3395 = vsel %vm1010, %v3360, 0
      %v3398 = vsel %vm1010, %v3361, 0
      %v3401 = vsel %vm1010, %v3362, 0
      %v3404 = vsel %vm1010, %v3363, 0
      %v3407 = vsel %vm1010, %v3364, 0
      %v3410 = vsel %vm1010, %v3365, 0
      %v3413 = vsel %vm1010, %v3366, 0
      %3415 = vmatprep.subr.mxu0 0.0
      %3416 = vmatpush1.msra.mxu0 0.0
      %3417 = vmatprep.subr.mxu0 0.0
      %3418 = vmatpush1.msra.mxu0 0.0
      %3419 = vmatprep.subr.mxu0 0.0
      %3420 = vmatpush1.msra.mxu0 0.0
      %3421 = vmatprep.subr.mxu0 0.0
      %3422 = vmatpush1.msra.mxu0 0.0
      %3423 = vmatprep.subr.mxu0 0.0
      %3424 = vmatpush1.msra.mxu0 0.0
      %3425 = vmatprep.subr.mxu0 0.0
      %3426 = vmatpush1.msra.mxu0 0.0
      %3427 = vmatprep.subr.mxu0 0.0
      %3428 = vmatpush1.msra.mxu0 0.0
      %3429 = vmatprep.subr.mxu0 0.0
      %3430 = vmatpush1.msra.mxu0 0.0
      %3431 = vmatprep.subr.mxu0 0.0
      %3432 = vmatpush1.msra.mxu0 %v3382
      %3433 = vmatprep.subr.mxu0 0.0
      %3434 = vmatpush1.msra.mxu0 %v3380
      %3435 = vmatprep.subr.mxu0 0.0
      %3436 = vmatpush1.msra.mxu0 %v3378
      %3437 = vmatprep.subr.mxu0 0.0
      %3438 = vmatpush1.msra.mxu0 %v3376
      %3439 = vmatprep.subr.mxu0 0.0
      %3440 = vmatpush1.msra.mxu0 %v3374
      %3441 = vmatprep.subr.mxu0 0.0
      %3442 = vmatpush1.msra.mxu0 %v3372
      %3443 = vmatprep.subr.mxu0 0.0
      %3444 = vmatpush1.msra.mxu0 %v3370
      %3445 = vmatprep.subr.mxu0 0.0
      %3446 = vmatpush1.msra.mxu0 %v3368
      %3447 = vmatprep.subr.mxu0 0.0
      %3448 = vmatpush2.msra.mxu0 0.0
      %3449 = vmatprep.subr.mxu0 0.0
      %3450 = vmatpush2.msra.mxu0 0.0
      %3451 = vmatprep.subr.mxu0 0.0
      %3452 = vmatpush2.msra.mxu0 0.0
      %3453 = vmatprep.subr.mxu0 0.0
      %3454 = vmatpush2.msra.mxu0 0.0
      %3455 = vmatprep.subr.mxu0 0.0
      %3456 = vmatpush2.msra.mxu0 0.0
      %3457 = vmatprep.subr.mxu0 0.0
      %3458 = vmatpush2.msra.mxu0 0.0
      %3459 = vmatprep.subr.mxu0 0.0
      %3460 = vmatpush2.msra.mxu0 0.0
      %3461 = vmatprep.subr.mxu0 0.0
      %3462 = vmatpush2.msra.mxu0 0.0
      %3463 = vmatprep.subr.mxu0 0.0
      %3464 = vmatpush2.msra.mxu0 0.0
      %3465 = vmatprep.subr.mxu0 0.0
      %3466 = vmatpush2.msra.mxu0 0.0
      %3467 = vmatprep.subr.mxu0 0.0
      %3468 = vmatpush2.msra.mxu0 0.0
      %3469 = vmatprep.subr.mxu0 0.0
      %3470 = vmatpush2.msra.mxu0 0.0
      %3471 = vmatprep.subr.mxu0 0.0
      %3472 = vmatpush2.msra.mxu0 0.0
      %3473 = vmatprep.subr.mxu0 0.0
      %3474 = vmatpush2.msra.mxu0 0.0
      %3475 = vmatprep.subr.mxu0 0.0
      %3476 = vmatpush2.msra.mxu0 0.0
      %3477 = vmatprep.subr.mxu0 0.0
      %3478 = vmatpush2.msra.mxu0 0.0
      %3479 = vmatprep.mubr.f32.mxu0 0.0
      %3480 = vmatmul.mubr.f32.gmra.mxu0 %v3392
      %v3481 = vpop.f32.mrf.mxu0
      %v3482 = vadd.f32 0.0, %v3481
      %v3483 = vpop.f32.mrf.mxu0
      %3484 = vmatprep.mubr.f32.mxu0 0.0
      %3485 = vmatmul.mubr.f32.gmra.mxu0 %v3395
      %v3486 = vpop.f32.mrf.mxu0
      %v3487 = vadd.f32 0.0, %v3486
      %v3488 = vpop.f32.mrf.mxu0
      %3489 = vmatprep.mubr.f32.mxu0 0.0
      %3490 = vmatmul.mubr.f32.gmra.mxu0 %v3398
      %v3491 = vpop.f32.mrf.mxu0
      %v3492 = vadd.f32 0.0, %v3491
      %v3493 = vpop.f32.mrf.mxu0
      %3494 = vmatprep.mubr.f32.mxu0 0.0
      %3495 = vmatmul.mubr.f32.gmra.mxu0 %v3401
      %v3496 = vpop.f32.mrf.mxu0
      %v3497 = vadd.f32 0.0, %v3496
      %v3498 = vpop.f32.mrf.mxu0
      %3499 = vmatprep.mubr.f32.mxu0 0.0
      %3500 = vmatmul.mubr.f32.gmra.mxu0 %v3404
      %v3501 = vpop.f32.mrf.mxu0
      %v3502 = vadd.f32 0.0, %v3501
      %v3503 = vpop.f32.mrf.mxu0
      %3504 = vmatprep.mubr.f32.mxu0 0.0
      %3505 = vmatmul.mubr.f32.gmra.mxu0 %v3407
      %v3506 = vpop.f32.mrf.mxu0
      %v3507 = vadd.f32 0.0, %v3506
      %v3508 = vpop.f32.mrf.mxu0
      %3509 = vmatprep.mubr.f32.mxu0 0.0
      %3510 = vmatmul.mubr.f32.gmra.mxu0 %v3410
      %v3511 = vpop.f32.mrf.mxu0
      %v3512 = vadd.f32 0.0, %v3511
      %v3513 = vpop.f32.mrf.mxu0
      %3514 = vmatprep.mubr.f32.mxu0 0.0
      %3515 = vmatmul.mubr.f32.gmra.mxu0 %v3413
      %v3516 = vpop.f32.mrf.mxu0
      %v3517 = vadd.f32 0.0, %v3516
      %v3518 = vpop.f32.mrf.mxu0
      %3519 = vdwg.mxu0
      %v3521 = vsel %vm1468, %v3482, 0
      %v3524 = vsel %vm1468, %v3487, 0
      %v3527 = vsel %vm1468, %v3492, 0
      %v3530 = vsel %vm1468, %v3497, 0
      %v3533 = vsel %vm1468, %v3502, 0
      %v3536 = vsel %vm1468, %v3507, 0
      %v3539 = vsel %vm1468, %v3512, 0
      %v3542 = vsel %vm1468, %v3517, 0
      %3544 = vmatprep.subr.mxu0 0.0
      %3545 = vmatpush1.msra.mxu0 0.0
      %3546 = vmatprep.subr.mxu0 0.0
      %3547 = vmatpush1.msra.mxu0 0.0
      %3548 = vmatprep.subr.mxu0 0.0
      %3549 = vmatpush1.msra.mxu0 0.0
      %3550 = vmatprep.subr.mxu0 0.0
      %3551 = vmatpush1.msra.mxu0 0.0
      %3552 = vmatprep.subr.mxu0 0.0
      %3553 = vmatpush1.msra.mxu0 0.0
      %3554 = vmatprep.subr.mxu0 0.0
      %3555 = vmatpush1.msra.mxu0 0.0
      %3556 = vmatprep.subr.mxu0 0.0
      %3557 = vmatpush1.msra.mxu0 0.0
      %3558 = vmatprep.subr.mxu0 0.0
      %3559 = vmatpush1.msra.mxu0 0.0
      %3560 = vmatprep.subr.mxu0 0.0
      %3561 = vmatpush1.msra.mxu0 0.0
      %3562 = vmatprep.subr.mxu0 0.0
      %3563 = vmatpush1.msra.mxu0 0.0
      %3564 = vmatprep.subr.mxu0 0.0
      %3565 = vmatpush1.msra.mxu0 0.0
      %3566 = vmatprep.subr.mxu0 0.0
      %3567 = vmatpush1.msra.mxu0 0.0
      %3568 = vmatprep.subr.mxu0 0.0
      %3569 = vmatpush1.msra.mxu0 0.0
      %3570 = vmatprep.subr.mxu0 0.0
      %3571 = vmatpush1.msra.mxu0 0.0
      %3572 = vmatprep.subr.mxu0 0.0
      %3573 = vmatpush1.msra.mxu0 0.0
      %3574 = vmatprep.subr.mxu0 0.0
      %3575 = vmatpush1.msra.mxu0 %v1435
      %3576 = vmatprep.subr.mxu0 0.0
      %3577 = vmatpush2.msra.mxu0 0.0
      %3578 = vmatprep.subr.mxu0 0.0
      %3579 = vmatpush2.msra.mxu0 0.0
      %3580 = vmatprep.subr.mxu0 0.0
      %3581 = vmatpush2.msra.mxu0 0.0
      %3582 = vmatprep.subr.mxu0 0.0
      %3583 = vmatpush2.msra.mxu0 0.0
      %3584 = vmatprep.subr.mxu0 0.0
      %3585 = vmatpush2.msra.mxu0 0.0
      %3586 = vmatprep.subr.mxu0 0.0
      %3587 = vmatpush2.msra.mxu0 0.0
      %3588 = vmatprep.subr.mxu0 0.0
      %3589 = vmatpush2.msra.mxu0 0.0
      %3590 = vmatprep.subr.mxu0 0.0
      %3591 = vmatpush2.msra.mxu0 0.0
      %3592 = vmatprep.subr.mxu0 0.0
      %3593 = vmatpush2.msra.mxu0 0.0
      %3594 = vmatprep.subr.mxu0 0.0
      %3595 = vmatpush2.msra.mxu0 0.0
      %3596 = vmatprep.subr.mxu0 0.0
      %3597 = vmatpush2.msra.mxu0 0.0
      %3598 = vmatprep.subr.mxu0 0.0
      %3599 = vmatpush2.msra.mxu0 0.0
      %3600 = vmatprep.subr.mxu0 0.0
      %3601 = vmatpush2.msra.mxu0 0.0
      %3602 = vmatprep.subr.mxu0 0.0
      %3603 = vmatpush2.msra.mxu0 0.0
      %3604 = vmatprep.subr.mxu0 0.0
      %3605 = vmatpush2.msra.mxu0 0.0
      %3606 = vmatprep.subr.mxu0 0.0
      %3607 = vmatpush2.msra.mxu0 0.0
      %3608 = vmatprep.mubr.f32.mxu0 0.0
      %3609 = vmatmul.mubr.f32.gmra.mxu0 %v3521
      %v3610 = vpop.f32.mrf.mxu0
      %v3611 = vadd.f32 0.0, %v3610
      %v3612 = vpop.f32.mrf.mxu0
      %3613 = vmatprep.mubr.f32.mxu0 0.0
      %3614 = vmatmul.mubr.f32.gmra.mxu0 %v3524
      %v3615 = vpop.f32.mrf.mxu0
      %v3616 = vadd.f32 0.0, %v3615
      %v3617 = vpop.f32.mrf.mxu0
      %3618 = vmatprep.mubr.f32.mxu0 0.0
      %3619 = vmatmul.mubr.f32.gmra.mxu0 %v3527
      %v3620 = vpop.f32.mrf.mxu0
      %v3621 = vadd.f32 0.0, %v3620
      %v3622 = vpop.f32.mrf.mxu0
      %3623 = vmatprep.mubr.f32.mxu0 0.0
      %3624 = vmatmul.mubr.f32.gmra.mxu0 %v3530
      %v3625 = vpop.f32.mrf.mxu0
      %v3626 = vadd.f32 0.0, %v3625
      %v3627 = vpop.f32.mrf.mxu0
      %3628 = vmatprep.mubr.f32.mxu0 0.0
      %3629 = vmatmul.mubr.f32.gmra.mxu0 %v3533
      %v3630 = vpop.f32.mrf.mxu0
      %v3631 = vadd.f32 0.0, %v3630
      %v3632 = vpop.f32.mrf.mxu0
      %3633 = vmatprep.mubr.f32.mxu0 0.0
      %3634 = vmatmul.mubr.f32.gmra.mxu0 %v3536
      %v3635 = vpop.f32.mrf.mxu0
      %v3636 = vadd.f32 0.0, %v3635
      %v3637 = vpop.f32.mrf.mxu0
      %3638 = vmatprep.mubr.f32.mxu0 0.0
      %3639 = vmatmul.mubr.f32.gmra.mxu0 %v3539
      %v3640 = vpop.f32.mrf.mxu0
      %v3641 = vadd.f32 0.0, %v3640
      %v3642 = vpop.f32.mrf.mxu0
      %3643 = vmatprep.mubr.f32.mxu0 0.0
      %3644 = vmatmul.mubr.f32.gmra.mxu0 %v3542
      %v3645 = vpop.f32.mrf.mxu0
      %v3646 = vadd.f32 0.0, %v3645
      %v3647 = vpop.f32.mrf.mxu0
      %3648 = vdwg.mxu0
      %v3649 = vadd.f32 %v3094, %v3611
      %v3650 = vadd.f32 %v3095, %v3616
      %v3651 = vadd.f32 %v3096, %v3621
      %v3652 = vadd.f32 %v3097, %v3626
      %v3653 = vadd.f32 %v3098, %v3631
      %v3654 = vadd.f32 %v3099, %v3636
      %v3655 = vadd.f32 %v3100, %v3641
      %v3656 = vadd.f32 %v3101, %v3646
      %v3657 = vadd.f32 %v1148, %v3649
      %v3658 = vadd.f32 %v1149, %v3650
      %v3659 = vadd.f32 %v1150, %v3651
      %v3660 = vadd.f32 %v1151, %v3652
      %v3661 = vadd.f32 %v1152, %v3653
      %v3662 = vadd.f32 %v1153, %v3654
      %v3663 = vadd.f32 %v1154, %v3655
      %v3664 = vadd.f32 %v1155, %v3656
      %v3665 = vld [vmem:[%s21] sm:$0x1]
      %v3666 = vld [vmem:[%s23] sm:$0x1]
      %v3667 = vsel %vm1158, %v3657, 0.0
      %3668 = vadd.xlane.f32.xlu0 %v3667
      %v3669 = vpop.xlane.xlu0 %3668
      %v3670 = vsel %vm1158, %v3658, 0.0
      %3671 = vadd.xlane.f32.xlu0 %v3670
      %v3672 = vpop.xlane.xlu0 %3671
      %v3673 = vsel %vm1158, %v3659, 0.0
      %3674 = vadd.xlane.f32.xlu0 %v3673
      %v3675 = vpop.xlane.xlu0 %3674
      %v3676 = vsel %vm1158, %v3660, 0.0
      %3677 = vadd.xlane.f32.xlu0 %v3676
      %v3678 = vpop.xlane.xlu0 %3677
      %v3679 = vsel %vm1158, %v3661, 0.0
      %3680 = vadd.xlane.f32.xlu0 %v3679
      %v3681 = vpop.xlane.xlu0 %3680
      %v3682 = vsel %vm1158, %v3662, 0.0
      %3683 = vadd.xlane.f32.xlu0 %v3682
      %v3684 = vpop.xlane.xlu0 %3683
      %v3685 = vsel %vm1158, %v3663, 0.0
      %3686 = vadd.xlane.f32.xlu0 %v3685
      %v3687 = vpop.xlane.xlu0 %3686
      %v3688 = vsel %vm1158, %v3664, 0.0
      %3689 = vadd.xlane.f32.xlu0 %v3688
      %v3690 = vpop.xlane.xlu0 %3689
      %v3691 = vmul.f32 %v3669, %v1183
      %v3692 = vmul.f32 %v3672, %v1183
      %v3693 = vmul.f32 %v3675, %v1183
      %v3694 = vmul.f32 %v3678, %v1183
      %v3695 = vmul.f32 %v3681, %v1183
      %v3696 = vmul.f32 %v3684, %v1183
      %v3697 = vmul.f32 %v3687, %v1183
      %v3698 = vmul.f32 %v3690, %v1183
      %v3699 = vsub.f32 %v3657, %v3691
      %v3700 = vsub.f32 %v3658, %v3692
      %v3701 = vsub.f32 %v3659, %v3693
      %v3702 = vsub.f32 %v3660, %v3694
      %v3703 = vsub.f32 %v3661, %v3695
      %v3704 = vsub.f32 %v3662, %v3696
      %v3705 = vsub.f32 %v3663, %v3697
      %v3706 = vsub.f32 %v3664, %v3698
      %v3707 = vmul.f32 %v3699, %v3699
      %v3708 = vmul.f32 %v3700, %v3700
      %v3709 = vmul.f32 %v3701, %v3701
      %v3710 = vmul.f32 %v3702, %v3702
      %v3711 = vmul.f32 %v3703, %v3703
      %v3712 = vmul.f32 %v3704, %v3704
      %v3713 = vmul.f32 %v3705, %v3705
      %v3714 = vmul.f32 %v3706, %v3706
      %v3715 = vsel %vm1158, %v3707, 0.0
      %3716 = vadd.xlane.f32.xlu0 %v3715
      %v3717 = vpop.xlane.xlu0 %3716
      %v3718 = vsel %vm1158, %v3708, 0.0
      %3719 = vadd.xlane.f32.xlu0 %v3718
      %v3720 = vpop.xlane.xlu0 %3719
      %v3721 = vsel %vm1158, %v3709, 0.0
      %3722 = vadd.xlane.f32.xlu0 %v3721
      %v3723 = vpop.xlane.xlu0 %3722
      %v3724 = vsel %vm1158, %v3710, 0.0
      %3725 = vadd.xlane.f32.xlu0 %v3724
      %v3726 = vpop.xlane.xlu0 %3725
      %v3727 = vsel %vm1158, %v3711, 0.0
      %3728 = vadd.xlane.f32.xlu0 %v3727
      %v3729 = vpop.xlane.xlu0 %3728
      %v3730 = vsel %vm1158, %v3712, 0.0
      %3731 = vadd.xlane.f32.xlu0 %v3730
      %v3732 = vpop.xlane.xlu0 %3731
      %v3733 = vsel %vm1158, %v3713, 0.0
      %3734 = vadd.xlane.f32.xlu0 %v3733
      %v3735 = vpop.xlane.xlu0 %3734
      %v3736 = vsel %vm1158, %v3714, 0.0
      %3737 = vadd.xlane.f32.xlu0 %v3736
      %v3738 = vpop.xlane.xlu0 %3737
      %v3739 = vmul.f32 %v3717, %v1183
      %v3740 = vmul.f32 %v3720, %v1183
      %v3741 = vmul.f32 %v3723, %v1183
      %v3742 = vmul.f32 %v3726, %v1183
      %v3743 = vmul.f32 %v3729, %v1183
      %v3744 = vmul.f32 %v3732, %v1183
      %v3745 = vmul.f32 %v3735, %v1183
      %v3746 = vmul.f32 %v3738, %v1183
      %v3747 = vadd.f32 %v3739, 1e-06
      %v3748 = vadd.f32 %v3740, 1e-06
      %v3749 = vadd.f32 %v3741, 1e-06
      %v3750 = vadd.f32 %v3742, 1e-06
      %v3751 = vadd.f32 %v3743, 1e-06
      %v3752 = vadd.f32 %v3744, 1e-06
      %v3753 = vadd.f32 %v3745, 1e-06
      %v3754 = vadd.f32 %v3746, 1e-06
      %v3755 = vrsqrt.pop %v3747
      %v3756 = vrsqrt.pop %v3748
      %v3757 = vrsqrt.pop %v3749
      %v3758 = vrsqrt.pop %v3750
      %v3759 = vrsqrt.pop %v3751
      %v3760 = vrsqrt.pop %v3752
      %v3761 = vrsqrt.pop %v3753
      %v3762 = vrsqrt.pop %v3754
      %v3763 = vmul.f32 %v3699, %v3755
      %v3764 = vmul.f32 %v3700, %v3756
      %v3765 = vmul.f32 %v3701, %v3757
      %v3766 = vmul.f32 %v3702, %v3758
      %v3767 = vmul.f32 %v3703, %v3759
      %v3768 = vmul.f32 %v3704, %v3760
      %v3769 = vmul.f32 %v3705, %v3761
      %v3770 = vmul.f32 %v3706, %v3762
      %v3772 = vlaneseq
      %v3773 = vshrl.u32 %v3772, 7
      %v3774 = vsub.s32 0, %v3773
      %v3775 = vrot.slane %v3665, %v3774
      %v3777 = vmul.f32 %v3763, %v3775
      %v3778 = vmul.f32 %v3764, %v3775
      %v3779 = vmul.f32 %v3765, %v3775
      %v3780 = vmul.f32 %v3766, %v3775
      %v3781 = vmul.f32 %v3767, %v3775
      %v3782 = vmul.f32 %v3768, %v3775
      %v3783 = vmul.f32 %v3769, %v3775
      %v3784 = vmul.f32 %v3770, %v3775
      %v3786 = vlaneseq
      %v3787 = vshrl.u32 %v3786, 7
      %v3788 = vsub.s32 0, %v3787
      %v3789 = vrot.slane %v3666, %v3788
      %v3791 = vadd.f32 %v3777, %v3789
      %v3792 = vadd.f32 %v3778, %v3789
      %v3793 = vadd.f32 %v3779, %v3789
      %v3794 = vadd.f32 %v3780, %v3789
      %v3795 = vadd.f32 %v3781, %v3789
      %v3796 = vadd.f32 %v3782, %v3789
      %v3797 = vadd.f32 %v3783, %v3789
      %v3798 = vadd.f32 %v3784, %v3789
      %v3799 = vld [vmem:[%s25] sm:$0xff]
      %v3800 = vld [vmem:[%s25 + $0x8] sm:$0xff]
      %v3801 = vld [vmem:[%s25 + $0x10] sm:$0xff]
      %v3802 = vld [vmem:[%s25 + $0x18] sm:$0xff]
      %v3803 = vld [vmem:[%s27] sm:$0x1]
      %v3805 = vlaneseq
      %v3806 = vshrl.u32 %v3805, 7
      %v3807 = vsub.s32 0, %v3806
      %v3808 = vrot.slane %v3803, %v3807
      %v3811 = vsel %vm1158, %v3791, 0
      %v3814 = vsel %vm1158, %v3792, 0
      %v3817 = vsel %vm1158, %v3793, 0
      %v3820 = vsel %vm1158, %v3794, 0
      %v3823 = vsel %vm1158, %v3795, 0
      %v3826 = vsel %vm1158, %v3796, 0
      %v3829 = vsel %vm1158, %v3797, 0
      %v3832 = vsel %vm1158, %v3798, 0
      %3834 = vmatprep.subr.mxu0 0.0
      %3835 = vmatpush1.msra.mxu0 0.0
      %3836 = vmatprep.subr.mxu0 0.0
      %3837 = vmatpush1.msra.mxu0 0.0
      %3838 = vmatprep.subr.mxu0 0.0
      %3839 = vmatpush1.msra.mxu0 0.0
      %3840 = vmatprep.subr.mxu0 0.0
      %3841 = vmatpush1.msra.mxu0 0.0
      %3842 = vmatprep.subr.mxu0 0.0
      %3843 = vmatpush1.msra.mxu0 0.0
      %3844 = vmatprep.subr.mxu0 0.0
      %3845 = vmatpush1.msra.mxu0 0.0
      %3846 = vmatprep.subr.mxu0 0.0
      %3847 = vmatpush1.msra.mxu0 0.0
      %3848 = vmatprep.subr.mxu0 0.0
      %3849 = vmatpush1.msra.mxu0 0.0
      %3850 = vmatprep.subr.mxu0 0.0
      %3851 = vmatpush1.msra.mxu0 0.0
      %3852 = vmatprep.subr.mxu0 0.0
      %3853 = vmatpush1.msra.mxu0 0.0
      %3854 = vmatprep.subr.mxu0 0.0
      %3855 = vmatpush1.msra.mxu0 0.0
      %3856 = vmatprep.subr.mxu0 0.0
      %3857 = vmatpush1.msra.mxu0 0.0
      %3858 = vmatprep.subr.mxu0 0.0
      %3859 = vmatpush1.msra.mxu0 %v3802
      %3860 = vmatprep.subr.mxu0 0.0
      %3861 = vmatpush1.msra.mxu0 %v3801
      %3862 = vmatprep.subr.mxu0 0.0
      %3863 = vmatpush1.msra.mxu0 %v3800
      %3864 = vmatprep.subr.mxu0 0.0
      %3865 = vmatpush1.msra.mxu0 %v3799
      %3866 = vmatprep.subr.mxu0 0.0
      %3867 = vmatpush2.msra.mxu0 0.0
      %3868 = vmatprep.subr.mxu0 0.0
      %3869 = vmatpush2.msra.mxu0 0.0
      %3870 = vmatprep.subr.mxu0 0.0
      %3871 = vmatpush2.msra.mxu0 0.0
      %3872 = vmatprep.subr.mxu0 0.0
      %3873 = vmatpush2.msra.mxu0 0.0
      %3874 = vmatprep.subr.mxu0 0.0
      %3875 = vmatpush2.msra.mxu0 0.0
      %3876 = vmatprep.subr.mxu0 0.0
      %3877 = vmatpush2.msra.mxu0 0.0
      %3878 = vmatprep.subr.mxu0 0.0
      %3879 = vmatpush2.msra.mxu0 0.0
      %3880 = vmatprep.subr.mxu0 0.0
      %3881 = vmatpush2.msra.mxu0 0.0
      %3882 = vmatprep.subr.mxu0 0.0
      %3883 = vmatpush2.msra.mxu0 0.0
      %3884 = vmatprep.subr.mxu0 0.0
      %3885 = vmatpush2.msra.mxu0 0.0
      %3886 = vmatprep.subr.mxu0 0.0
      %3887 = vmatpush2.msra.mxu0 0.0
      %3888 = vmatprep.subr.mxu0 0.0
      %3889 = vmatpush2.msra.mxu0 0.0
      %3890 = vmatprep.subr.mxu0 0.0
      %3891 = vmatpush2.msra.mxu0 0.0
      %3892 = vmatprep.subr.mxu0 0.0
      %3893 = vmatpush2.msra.mxu0 0.0
      %3894 = vmatprep.subr.mxu0 0.0
      %3895 = vmatpush2.msra.mxu0 0.0
      %3896 = vmatprep.subr.mxu0 0.0
      %3897 = vmatpush2.msra.mxu0 0.0
      %3898 = vmatprep.mubr.f32.mxu0 0.0
      %3899 = vmatmul.mubr.f32.gmra.mxu0 %v3811
      %v3900 = vpop.f32.mrf.mxu0
      %v3901 = vadd.f32 %v3808, %v3900
      %v3902 = vpop.f32.mrf.mxu0
      %3903 = vmatprep.mubr.f32.mxu0 0.0
      %3904 = vmatmul.mubr.f32.gmra.mxu0 %v3814
      %v3905 = vpop.f32.mrf.mxu0
      %v3906 = vadd.f32 %v3808, %v3905
      %v3907 = vpop.f32.mrf.mxu0
      %3908 = vmatprep.mubr.f32.mxu0 0.0
      %3909 = vmatmul.mubr.f32.gmra.mxu0 %v3817
      %v3910 = vpop.f32.mrf.mxu0
      %v3911 = vadd.f32 %v3808, %v3910
      %v3912 = vpop.f32.mrf.mxu0
      %3913 = vmatprep.mubr.f32.mxu0 0.0
      %3914 = vmatmul.mubr.f32.gmra.mxu0 %v3820
      %v3915 = vpop.f32.mrf.mxu0
      %v3916 = vadd.f32 %v3808, %v3915
      %v3917 = vpop.f32.mrf.mxu0
      %3918 = vmatprep.mubr.f32.mxu0 0.0
      %3919 = vmatmul.mubr.f32.gmra.mxu0 %v3823
      %v3920 = vpop.f32.mrf.mxu0
      %v3921 = vadd.f32 %v3808, %v3920
      %v3922 = vpop.f32.mrf.mxu0
      %3923 = vmatprep.mubr.f32.mxu0 0.0
      %3924 = vmatmul.mubr.f32.gmra.mxu0 %v3826
      %v3925 = vpop.f32.mrf.mxu0
      %v3926 = vadd.f32 %v3808, %v3925
      %v3927 = vpop.f32.mrf.mxu0
      %3928 = vmatprep.mubr.f32.mxu0 0.0
      %3929 = vmatmul.mubr.f32.gmra.mxu0 %v3829
      %v3930 = vpop.f32.mrf.mxu0
      %v3931 = vadd.f32 %v3808, %v3930
      %v3932 = vpop.f32.mrf.mxu0
      %3933 = vmatprep.mubr.f32.mxu0 0.0
      %3934 = vmatmul.mubr.f32.gmra.mxu0 %v3832
      %v3935 = vpop.f32.mrf.mxu0
      %v3936 = vadd.f32 %v3808, %v3935
      %v3937 = vpop.f32.mrf.mxu0
      %3938 = vdwg.mxu0
      %v3939 = vmul.f32 %v3901, 0.5
      %v3940 = vmul.f32 %v3906, 0.5
      %v3941 = vmul.f32 %v3911, 0.5
      %v3942 = vmul.f32 %v3916, 0.5
      %v3943 = vmul.f32 %v3921, 0.5
      %v3944 = vmul.f32 %v3926, 0.5
      %v3945 = vmul.f32 %v3931, 0.5
      %v3946 = vmul.f32 %v3936, 0.5
      %v3947 = vmul.f32 %v3901, 0.70710677
      %v3948 = vmul.f32 %v3906, 0.70710677
      %v3949 = vmul.f32 %v3911, 0.70710677
      %v3950 = vmul.f32 %v3916, 0.70710677
      %v3951 = vmul.f32 %v3921, 0.70710677
      %v3952 = vmul.f32 %v3926, 0.70710677
      %v3953 = vmul.f32 %v3931, 0.70710677
      %v3954 = vmul.f32 %v3936, 0.70710677
      %v3955 = verf.f32.pop %v3947
      %v3956 = verf.f32.pop %v3948
      %v3957 = verf.f32.pop %v3949
      %v3958 = verf.f32.pop %v3950
      %v3959 = verf.f32.pop %v3951
      %v3960 = verf.f32.pop %v3952
      %v3961 = verf.f32.pop %v3953
      %v3962 = verf.f32.pop %v3954
      %v3963 = vadd.f32 %v3955, 1.0
      %v3964 = vadd.f32 %v3956, 1.0
      %v3965 = vadd.f32 %v3957, 1.0
      %v3966 = vadd.f32 %v3958, 1.0
      %v3967 = vadd.f32 %v3959, 1.0
      %v3968 = vadd.f32 %v3960, 1.0
      %v3969 = vadd.f32 %v3961, 1.0
      %v3970 = vadd.f32 %v3962, 1.0
      %v3971 = vmul.f32 %v3939, %v3963
      %v3972 = vmul.f32 %v3940, %v3964
      %v3973 = vmul.f32 %v3941, %v3965
      %v3974 = vmul.f32 %v3942, %v3966
      %v3975 = vmul.f32 %v3943, %v3967
      %v3976 = vmul.f32 %v3944, %v3968
      %v3977 = vmul.f32 %v3945, %v3969
      %v3978 = vmul.f32 %v3946, %v3970
      %v3979 = vld [vmem:[%s29] sm:$0xff]
      %v3980 = vld [vmem:[%s29 + $0x8] sm:$0xff]
      %v3981 = vld [vmem:[%s29 + $0x10] sm:$0xff]
      %v3982 = vld [vmem:[%s29 + $0x18] sm:$0xff]
      %v3983 = vld [vmem:[%s29 + $0x20] sm:$0xff]
      %v3984 = vld [vmem:[%s29 + $0x28] sm:$0xff]
      %v3985 = vld [vmem:[%s29 + $0x30] sm:$0xff]
      %v3986 = vld [vmem:[%s29 + $0x38] sm:$0xff]
      %v3987 = vld [vmem:[%s31] sm:$0x1]
      %v3989 = vlaneseq
      %v3990 = vshrl.u32 %v3989, 7
      %v3991 = vsub.s32 0, %v3990
      %v3992 = vrot.slane %v3987, %v3991
      %v3995 = vsel %vm1010, %v3971, 0
      %v3998 = vsel %vm1010, %v3972, 0
      %v4001 = vsel %vm1010, %v3973, 0
      %v4004 = vsel %vm1010, %v3974, 0
      %v4007 = vsel %vm1010, %v3975, 0
      %v4010 = vsel %vm1010, %v3976, 0
      %v4013 = vsel %vm1010, %v3977, 0
      %v4016 = vsel %vm1010, %v3978, 0
      %4018 = vmatprep.subr.mxu0 0.0
      %4019 = vmatpush1.msra.mxu0 0.0
      %4020 = vmatprep.subr.mxu0 0.0
      %4021 = vmatpush1.msra.mxu0 0.0
      %4022 = vmatprep.subr.mxu0 0.0
      %4023 = vmatpush1.msra.mxu0 0.0
      %4024 = vmatprep.subr.mxu0 0.0
      %4025 = vmatpush1.msra.mxu0 0.0
      %4026 = vmatprep.subr.mxu0 0.0
      %4027 = vmatpush1.msra.mxu0 0.0
      %4028 = vmatprep.subr.mxu0 0.0
      %4029 = vmatpush1.msra.mxu0 0.0
      %4030 = vmatprep.subr.mxu0 0.0
      %4031 = vmatpush1.msra.mxu0 0.0
      %4032 = vmatprep.subr.mxu0 0.0
      %4033 = vmatpush1.msra.mxu0 0.0
      %4034 = vmatprep.subr.mxu0 0.0
      %4035 = vmatpush1.msra.mxu0 %v3986
      %4036 = vmatprep.subr.mxu0 0.0
      %4037 = vmatpush1.msra.mxu0 %v3985
      %4038 = vmatprep.subr.mxu0 0.0
      %4039 = vmatpush1.msra.mxu0 %v3984
      %4040 = vmatprep.subr.mxu0 0.0
      %4041 = vmatpush1.msra.mxu0 %v3983
      %4042 = vmatprep.subr.mxu0 0.0
      %4043 = vmatpush1.msra.mxu0 %v3982
      %4044 = vmatprep.subr.mxu0 0.0
      %4045 = vmatpush1.msra.mxu0 %v3981
      %4046 = vmatprep.subr.mxu0 0.0
      %4047 = vmatpush1.msra.mxu0 %v3980
      %4048 = vmatprep.subr.mxu0 0.0
      %4049 = vmatpush1.msra.mxu0 %v3979
      %4050 = vmatprep.subr.mxu0 0.0
      %4051 = vmatpush2.msra.mxu0 0.0
      %4052 = vmatprep.subr.mxu0 0.0
      %4053 = vmatpush2.msra.mxu0 0.0
      %4054 = vmatprep.subr.mxu0 0.0
      %4055 = vmatpush2.msra.mxu0 0.0
      %4056 = vmatprep.subr.mxu0 0.0
      %4057 = vmatpush2.msra.mxu0 0.0
      %4058 = vmatprep.subr.mxu0 0.0
      %4059 = vmatpush2.msra.mxu0 0.0
      %4060 = vmatprep.subr.mxu0 0.0
      %4061 = vmatpush2.msra.mxu0 0.0
      %4062 = vmatprep.subr.mxu0 0.0
      %4063 = vmatpush2.msra.mxu0 0.0
      %4064 = vmatprep.subr.mxu0 0.0
      %4065 = vmatpush2.msra.mxu0 0.0
      %4066 = vmatprep.subr.mxu0 0.0
      %4067 = vmatpush2.msra.mxu0 0.0
      %4068 = vmatprep.subr.mxu0 0.0
      %4069 = vmatpush2.msra.mxu0 0.0
      %4070 = vmatprep.subr.mxu0 0.0
      %4071 = vmatpush2.msra.mxu0 0.0
      %4072 = vmatprep.subr.mxu0 0.0
      %4073 = vmatpush2.msra.mxu0 0.0
      %4074 = vmatprep.subr.mxu0 0.0
      %4075 = vmatpush2.msra.mxu0 0.0
      %4076 = vmatprep.subr.mxu0 0.0
      %4077 = vmatpush2.msra.mxu0 0.0
      %4078 = vmatprep.subr.mxu0 0.0
      %4079 = vmatpush2.msra.mxu0 0.0
      %4080 = vmatprep.subr.mxu0 0.0
      %4081 = vmatpush2.msra.mxu0 0.0
      %4082 = vmatprep.mubr.f32.mxu0 0.0
      %4083 = vmatmul.mubr.f32.gmra.mxu0 %v3995
      %v4084 = vpop.f32.mrf.mxu0
      %v4085 = vadd.f32 %v3992, %v4084
      %v4086 = vpop.f32.mrf.mxu0
      %4087 = vmatprep.mubr.f32.mxu0 0.0
      %4088 = vmatmul.mubr.f32.gmra.mxu0 %v3998
      %v4089 = vpop.f32.mrf.mxu0
      %v4090 = vadd.f32 %v3992, %v4089
      %v4091 = vpop.f32.mrf.mxu0
      %4092 = vmatprep.mubr.f32.mxu0 0.0
      %4093 = vmatmul.mubr.f32.gmra.mxu0 %v4001
      %v4094 = vpop.f32.mrf.mxu0
      %v4095 = vadd.f32 %v3992, %v4094
      %v4096 = vpop.f32.mrf.mxu0
      %4097 = vmatprep.mubr.f32.mxu0 0.0
      %4098 = vmatmul.mubr.f32.gmra.mxu0 %v4004
      %v4099 = vpop.f32.mrf.mxu0
      %v4100 = vadd.f32 %v3992, %v4099
      %v4101 = vpop.f32.mrf.mxu0
      %4102 = vmatprep.mubr.f32.mxu0 0.0
      %4103 = vmatmul.mubr.f32.gmra.mxu0 %v4007
      %v4104 = vpop.f32.mrf.mxu0
      %v4105 = vadd.f32 %v3992, %v4104
      %v4106 = vpop.f32.mrf.mxu0
      %4107 = vmatprep.mubr.f32.mxu0 0.0
      %4108 = vmatmul.mubr.f32.gmra.mxu0 %v4010
      %v4109 = vpop.f32.mrf.mxu0
      %v4110 = vadd.f32 %v3992, %v4109
      %v4111 = vpop.f32.mrf.mxu0
      %4112 = vmatprep.mubr.f32.mxu0 0.0
      %4113 = vmatmul.mubr.f32.gmra.mxu0 %v4013
      %v4114 = vpop.f32.mrf.mxu0
      %v4115 = vadd.f32 %v3992, %v4114
      %v4116 = vpop.f32.mrf.mxu0
      %4117 = vmatprep.mubr.f32.mxu0 0.0
      %4118 = vmatmul.mubr.f32.gmra.mxu0 %v4016
      %v4119 = vpop.f32.mrf.mxu0
      %v4120 = vadd.f32 %v3992, %v4119
      %v4121 = vpop.f32.mrf.mxu0
      %4122 = vdwg.mxu0
      %v4123 = vadd.f32 %v3657, %v4085
      %v4124 = vadd.f32 %v3658, %v4090
      %v4125 = vadd.f32 %v3659, %v4095
      %v4126 = vadd.f32 %v3660, %v4100
      %v4127 = vadd.f32 %v3661, %v4105
      %v4128 = vadd.f32 %v3662, %v4110
      %v4129 = vadd.f32 %v3663, %v4115
      %v4130 = vadd.f32 %v3664, %v4120
      %v4131 = vld [vmem:[%s33] sm:$0x1]
      %v4132 = vld [vmem:[%s35] sm:$0x1]
      %v4133 = vsel %vm1158, %v4123, 0.0
      %4134 = vadd.xlane.f32.xlu0 %v4133
      %v4135 = vpop.xlane.xlu0 %4134
      %v4136 = vsel %vm1158, %v4124, 0.0
      %4137 = vadd.xlane.f32.xlu0 %v4136
      %v4138 = vpop.xlane.xlu0 %4137
      %v4139 = vsel %vm1158, %v4125, 0.0
      %4140 = vadd.xlane.f32.xlu0 %v4139
      %v4141 = vpop.xlane.xlu0 %4140
      %v4142 = vsel %vm1158, %v4126, 0.0
      %4143 = vadd.xlane.f32.xlu0 %v4142
      %v4144 = vpop.xlane.xlu0 %4143
      %v4145 = vsel %vm1158, %v4127, 0.0
      %4146 = vadd.xlane.f32.xlu0 %v4145
      %v4147 = vpop.xlane.xlu0 %4146
      %v4148 = vsel %vm1158, %v4128, 0.0
      %4149 = vadd.xlane.f32.xlu0 %v4148
      %v4150 = vpop.xlane.xlu0 %4149
      %v4151 = vsel %vm1158, %v4129, 0.0
      %4152 = vadd.xlane.f32.xlu0 %v4151
      %v4153 = vpop.xlane.xlu0 %4152
      %v4154 = vsel %vm1158, %v4130, 0.0
      %4155 = vadd.xlane.f32.xlu0 %v4154
      %v4156 = vpop.xlane.xlu0 %4155
      %v4157 = vmul.f32 %v4135, %v1183
      %v4158 = vmul.f32 %v4138, %v1183
      %v4159 = vmul.f32 %v4141, %v1183
      %v4160 = vmul.f32 %v4144, %v1183
      %v4161 = vmul.f32 %v4147, %v1183
      %v4162 = vmul.f32 %v4150, %v1183
      %v4163 = vmul.f32 %v4153, %v1183
      %v4164 = vmul.f32 %v4156, %v1183
      %v4165 = vsub.f32 %v4123, %v4157
      %v4166 = vsub.f32 %v4124, %v4158
      %v4167 = vsub.f32 %v4125, %v4159
      %v4168 = vsub.f32 %v4126, %v4160
      %v4169 = vsub.f32 %v4127, %v4161
      %v4170 = vsub.f32 %v4128, %v4162
      %v4171 = vsub.f32 %v4129, %v4163
      %v4172 = vsub.f32 %v4130, %v4164
      %v4173 = vmul.f32 %v4165, %v4165
      %v4174 = vmul.f32 %v4166, %v4166
      %v4175 = vmul.f32 %v4167, %v4167
      %v4176 = vmul.f32 %v4168, %v4168
      %v4177 = vmul.f32 %v4169, %v4169
      %v4178 = vmul.f32 %v4170, %v4170
      %v4179 = vmul.f32 %v4171, %v4171
      %v4180 = vmul.f32 %v4172, %v4172
      %v4181 = vsel %vm1158, %v4173, 0.0
      %4182 = vadd.xlane.f32.xlu0 %v4181
      %v4183 = vpop.xlane.xlu0 %4182
      %v4184 = vsel %vm1158, %v4174, 0.0
      %4185 = vadd.xlane.f32.xlu0 %v4184
      %v4186 = vpop.xlane.xlu0 %4185
      %v4187 = vsel %vm1158, %v4175, 0.0
      %4188 = vadd.xlane.f32.xlu0 %v4187
      %v4189 = vpop.xlane.xlu0 %4188
      %v4190 = vsel %vm1158, %v4176, 0.0
      %4191 = vadd.xlane.f32.xlu0 %v4190
      %v4192 = vpop.xlane.xlu0 %4191
      %v4193 = vsel %vm1158, %v4177, 0.0
      %4194 = vadd.xlane.f32.xlu0 %v4193
      %v4195 = vpop.xlane.xlu0 %4194
      %v4196 = vsel %vm1158, %v4178, 0.0
      %4197 = vadd.xlane.f32.xlu0 %v4196
      %v4198 = vpop.xlane.xlu0 %4197
      %v4199 = vsel %vm1158, %v4179, 0.0
      %4200 = vadd.xlane.f32.xlu0 %v4199
      %v4201 = vpop.xlane.xlu0 %4200
      %v4202 = vsel %vm1158, %v4180, 0.0
      %4203 = vadd.xlane.f32.xlu0 %v4202
      %v4204 = vpop.xlane.xlu0 %4203
      %v4205 = vmul.f32 %v4183, %v1183
      %v4206 = vmul.f32 %v4186, %v1183
      %v4207 = vmul.f32 %v4189, %v1183
      %v4208 = vmul.f32 %v4192, %v1183
      %v4209 = vmul.f32 %v4195, %v1183
      %v4210 = vmul.f32 %v4198, %v1183
      %v4211 = vmul.f32 %v4201, %v1183
      %v4212 = vmul.f32 %v4204, %v1183
      %v4213 = vadd.f32 %v4205, 1e-06
      %v4214 = vadd.f32 %v4206, 1e-06
      %v4215 = vadd.f32 %v4207, 1e-06
      %v4216 = vadd.f32 %v4208, 1e-06
      %v4217 = vadd.f32 %v4209, 1e-06
      %v4218 = vadd.f32 %v4210, 1e-06
      %v4219 = vadd.f32 %v4211, 1e-06
      %v4220 = vadd.f32 %v4212, 1e-06
      %v4221 = vrsqrt.pop %v4213
      %v4222 = vrsqrt.pop %v4214
      %v4223 = vrsqrt.pop %v4215
      %v4224 = vrsqrt.pop %v4216
      %v4225 = vrsqrt.pop %v4217
      %v4226 = vrsqrt.pop %v4218
      %v4227 = vrsqrt.pop %v4219
      %v4228 = vrsqrt.pop %v4220
      %v4229 = vmul.f32 %v4165, %v4221
      %v4230 = vmul.f32 %v4166, %v4222
      %v4231 = vmul.f32 %v4167, %v4223
      %v4232 = vmul.f32 %v4168, %v4224
      %v4233 = vmul.f32 %v4169, %v4225
      %v4234 = vmul.f32 %v4170, %v4226
      %v4235 = vmul.f32 %v4171, %v4227
      %v4236 = vmul.f32 %v4172, %v4228
      %v4238 = vlaneseq
      %v4239 = vshrl.u32 %v4238, 7
      %v4240 = vsub.s32 0, %v4239
      %v4241 = vrot.slane %v4131, %v4240
      %v4243 = vmul.f32 %v4229, %v4241
      %v4244 = vmul.f32 %v4230, %v4241
      %v4245 = vmul.f32 %v4231, %v4241
      %v4246 = vmul.f32 %v4232, %v4241
      %v4247 = vmul.f32 %v4233, %v4241
      %v4248 = vmul.f32 %v4234, %v4241
      %v4249 = vmul.f32 %v4235, %v4241
      %v4250 = vmul.f32 %v4236, %v4241
      %v4252 = vlaneseq
      %v4253 = vshrl.u32 %v4252, 7
      %v4254 = vsub.s32 0, %v4253
      %v4255 = vrot.slane %v4132, %v4254
      %v4257 = vadd.f32 %v4243, %v4255
      %v4258 = vadd.f32 %v4244, %v4255
      %v4259 = vadd.f32 %v4245, %v4255
      %v4260 = vadd.f32 %v4246, %v4255
      %v4261 = vadd.f32 %v4247, %v4255
      %v4262 = vadd.f32 %v4248, %v4255
      %v4263 = vadd.f32 %v4249, %v4255
      %v4264 = vadd.f32 %v4250, %v4255
      %v4265 = vld [vmem:[%s37] sm:$0xff]
      %v4266 = vld [vmem:[%s37 + $0x8] sm:$0xff]
      %v4267 = vld [vmem:[%s37 + $0x10] sm:$0xff]
      %v4268 = vld [vmem:[%s37 + $0x18] sm:$0xff]
      %v4269 = vld [vmem:[%s39] sm:$0x1]
      %v4271 = vlaneseq
      %v4272 = vshrl.u32 %v4271, 7
      %v4273 = vsub.s32 0, %v4272
      %v4274 = vrot.slane %v4269, %v4273
      %v4277 = vsel %vm1158, %v4257, 0
      %v4280 = vsel %vm1158, %v4258, 0
      %v4283 = vsel %vm1158, %v4259, 0
      %v4286 = vsel %vm1158, %v4260, 0
      %v4289 = vsel %vm1158, %v4261, 0
      %v4292 = vsel %vm1158, %v4262, 0
      %v4295 = vsel %vm1158, %v4263, 0
      %v4298 = vsel %vm1158, %v4264, 0
      %4300 = vmatprep.subr.mxu0 0.0
      %4301 = vmatpush1.msra.mxu0 0.0
      %4302 = vmatprep.subr.mxu0 0.0
      %4303 = vmatpush1.msra.mxu0 0.0
      %4304 = vmatprep.subr.mxu0 0.0
      %4305 = vmatpush1.msra.mxu0 0.0
      %4306 = vmatprep.subr.mxu0 0.0
      %4307 = vmatpush1.msra.mxu0 0.0
      %4308 = vmatprep.subr.mxu0 0.0
      %4309 = vmatpush1.msra.mxu0 0.0
      %4310 = vmatprep.subr.mxu0 0.0
      %4311 = vmatpush1.msra.mxu0 0.0
      %4312 = vmatprep.subr.mxu0 0.0
      %4313 = vmatpush1.msra.mxu0 0.0
      %4314 = vmatprep.subr.mxu0 0.0
      %4315 = vmatpush1.msra.mxu0 0.0
      %4316 = vmatprep.subr.mxu0 0.0
      %4317 = vmatpush1.msra.mxu0 0.0
      %4318 = vmatprep.subr.mxu0 0.0
      %4319 = vmatpush1.msra.mxu0 0.0
      %4320 = vmatprep.subr.mxu0 0.0
      %4321 = vmatpush1.msra.mxu0 0.0
      %4322 = vmatprep.subr.mxu0 0.0
      %4323 = vmatpush1.msra.mxu0 0.0
      %4324 = vmatprep.subr.mxu0 0.0
      %4325 = vmatpush1.msra.mxu0 %v4268
      %4326 = vmatprep.subr.mxu0 0.0
      %4327 = vmatpush1.msra.mxu0 %v4267
      %4328 = vmatprep.subr.mxu0 0.0
      %4329 = vmatpush1.msra.mxu0 %v4266
      %4330 = vmatprep.subr.mxu0 0.0
      %4331 = vmatpush1.msra.mxu0 %v4265
      %4332 = vmatprep.subr.mxu0 0.0
      %4333 = vmatpush2.msra.mxu0 0.0
      %4334 = vmatprep.subr.mxu0 0.0
      %4335 = vmatpush2.msra.mxu0 0.0
      %4336 = vmatprep.subr.mxu0 0.0
      %4337 = vmatpush2.msra.mxu0 0.0
      %4338 = vmatprep.subr.mxu0 0.0
      %4339 = vmatpush2.msra.mxu0 0.0
      %4340 = vmatprep.subr.mxu0 0.0
      %4341 = vmatpush2.msra.mxu0 0.0
      %4342 = vmatprep.subr.mxu0 0.0
      %4343 = vmatpush2.msra.mxu0 0.0
      %4344 = vmatprep.subr.mxu0 0.0
      %4345 = vmatpush2.msra.mxu0 0.0
      %4346 = vmatprep.subr.mxu0 0.0
      %4347 = vmatpush2.msra.mxu0 0.0
      %4348 = vmatprep.subr.mxu0 0.0
      %4349 = vmatpush2.msra.mxu0 0.0
      %4350 = vmatprep.subr.mxu0 0.0
      %4351 = vmatpush2.msra.mxu0 0.0
      %4352 = vmatprep.subr.mxu0 0.0
      %4353 = vmatpush2.msra.mxu0 0.0
      %4354 = vmatprep.subr.mxu0 0.0
      %4355 = vmatpush2.msra.mxu0 0.0
      %4356 = vmatprep.subr.mxu0 0.0
      %4357 = vmatpush2.msra.mxu0 0.0
      %4358 = vmatprep.subr.mxu0 0.0
      %4359 = vmatpush2.msra.mxu0 0.0
      %4360 = vmatprep.subr.mxu0 0.0
      %4361 = vmatpush2.msra.mxu0 0.0
      %4362 = vmatprep.subr.mxu0 0.0
      %4363 = vmatpush2.msra.mxu0 0.0
      %4364 = vmatprep.mubr.f32.mxu0 0.0
      %4365 = vmatmul.mubr.f32.gmra.mxu0 %v4277
      %v4366 = vpop.f32.mrf.mxu0
      %v4367 = vadd.f32 %v4274, %v4366
      %v4368 = vpop.f32.mrf.mxu0
      %4369 = vmatprep.mubr.f32.mxu0 0.0
      %4370 = vmatmul.mubr.f32.gmra.mxu0 %v4280
      %v4371 = vpop.f32.mrf.mxu0
      %v4372 = vadd.f32 %v4274, %v4371
      %v4373 = vpop.f32.mrf.mxu0
      %4374 = vmatprep.mubr.f32.mxu0 0.0
      %4375 = vmatmul.mubr.f32.gmra.mxu0 %v4283
      %v4376 = vpop.f32.mrf.mxu0
      %v4377 = vadd.f32 %v4274, %v4376
      %v4378 = vpop.f32.mrf.mxu0
      %4379 = vmatprep.mubr.f32.mxu0 0.0
      %4380 = vmatmul.mubr.f32.gmra.mxu0 %v4286
      %v4381 = vpop.f32.mrf.mxu0
      %v4382 = vadd.f32 %v4274, %v4381
      %v4383 = vpop.f32.mrf.mxu0
      %4384 = vmatprep.mubr.f32.mxu0 0.0
      %4385 = vmatmul.mubr.f32.gmra.mxu0 %v4289
      %v4386 = vpop.f32.mrf.mxu0
      %v4387 = vadd.f32 %v4274, %v4386
      %v4388 = vpop.f32.mrf.mxu0
      %4389 = vmatprep.mubr.f32.mxu0 0.0
      %4390 = vmatmul.mubr.f32.gmra.mxu0 %v4292
      %v4391 = vpop.f32.mrf.mxu0
      %v4392 = vadd.f32 %v4274, %v4391
      %v4393 = vpop.f32.mrf.mxu0
      %4394 = vmatprep.mubr.f32.mxu0 0.0
      %4395 = vmatmul.mubr.f32.gmra.mxu0 %v4295
      %v4396 = vpop.f32.mrf.mxu0
      %v4397 = vadd.f32 %v4274, %v4396
      %v4398 = vpop.f32.mrf.mxu0
      %4399 = vmatprep.mubr.f32.mxu0 0.0
      %4400 = vmatmul.mubr.f32.gmra.mxu0 %v4298
      %v4401 = vpop.f32.mrf.mxu0
      %v4402 = vadd.f32 %v4274, %v4401
      %v4403 = vpop.f32.mrf.mxu0
      %4404 = vdwg.mxu0
      %v4405 = vld [vmem:[%s41] sm:$0xff]
      %v4406 = vld [vmem:[%s41 + $0x8] sm:$0xff]
      %v4407 = vld [vmem:[%s41 + $0x10] sm:$0xff]
      %v4408 = vld [vmem:[%s41 + $0x18] sm:$0xff]
      %v4409 = vld [vmem:[%s43] sm:$0x1]
      %v4411 = vlaneseq
      %v4412 = vshrl.u32 %v4411, 7
      %v4413 = vsub.s32 0, %v4412
      %v4414 = vrot.slane %v4409, %v4413
      %v4416 = vadd.f32 %v4414, 0.0
      %4425 = vrot.lane.b32.xlu0 %v4367, 96
      %v4426 = vpop.permute.xlu0 %4425
      %4427 = vrot.lane.b32.xlu0 %v4372, 96
      %v4428 = vpop.permute.xlu0 %4427
      %4429 = vrot.lane.b32.xlu0 %v4377, 96
      %v4430 = vpop.permute.xlu0 %4429
      %4431 = vrot.lane.b32.xlu0 %v4382, 96
      %v4432 = vpop.permute.xlu0 %4431
      %4433 = vrot.lane.b32.xlu0 %v4387, 96
      %v4434 = vpop.permute.xlu0 %4433
      %4435 = vrot.lane.b32.xlu0 %v4392, 96
      %v4436 = vpop.permute.xlu0 %4435
      %4437 = vrot.lane.b32.xlu0 %v4397, 96
      %v4438 = vpop.permute.xlu0 %4437
      %4439 = vrot.lane.b32.xlu0 %v4402, 96
      %v4440 = vpop.permute.xlu0 %4439
      %v4441 = vsel %vm1468, %v4367, 0
      %v4443 = vsel %vm1468, %v4372, 0
      %v4445 = vsel %vm1468, %v4377, 0
      %v4447 = vsel %vm1468, %v4382, 0
      %v4449 = vsel %vm1468, %v4387, 0
      %v4451 = vsel %vm1468, %v4392, 0
      %v4453 = vsel %vm1468, %v4397, 0
      %v4455 = vsel %vm1468, %v4402, 0
      %v4457 = vsel %vm1468, %v4426, 0
      %v4459 = vsel %vm1468, %v4428, 0
      %v4461 = vsel %vm1468, %v4430, 0
      %v4463 = vsel %vm1468, %v4432, 0
      %v4465 = vsel %vm1468, %v4434, 0
      %v4467 = vsel %vm1468, %v4436, 0
      %v4469 = vsel %vm1468, %v4438, 0
      %v4471 = vsel %vm1468, %v4440, 0
      %4473 = vmatprep.subr.mxu0 0.0
      %4474 = vmatpush1.xpose.msra.mxu0 0.0
      %4475 = vmatprep.subr.mxu0 0.0
      %4476 = vmatpush1.xpose.msra.mxu0 0.0
      %4477 = vmatprep.subr.mxu0 0.0
      %4478 = vmatpush1.xpose.msra.mxu0 0.0
      %4479 = vmatprep.subr.mxu0 0.0
      %4480 = vmatpush1.xpose.msra.mxu0 0.0
      %4481 = vmatprep.subr.mxu0 0.0
      %4482 = vmatpush1.xpose.msra.mxu0 0.0
      %4483 = vmatprep.subr.mxu0 0.0
      %4484 = vmatpush1.xpose.msra.mxu0 0.0
      %4485 = vmatprep.subr.mxu0 0.0
      %4486 = vmatpush1.xpose.msra.mxu0 0.0
      %4487 = vmatprep.subr.mxu0 0.0
      %4488 = vmatpush1.xpose.msra.mxu0 0.0
      %4489 = vmatprep.subr.mxu0 0.0
      %4490 = vmatpush1.xpose.msra.mxu0 %v4471
      %4491 = vmatprep.subr.mxu0 0.0
      %4492 = vmatpush1.xpose.msra.mxu0 %v4469
      %4493 = vmatprep.subr.mxu0 0.0
      %4494 = vmatpush1.xpose.msra.mxu0 %v4467
      %4495 = vmatprep.subr.mxu0 0.0
      %4496 = vmatpush1.xpose.msra.mxu0 %v4465
      %4497 = vmatprep.subr.mxu0 0.0
      %4498 = vmatpush1.xpose.msra.mxu0 %v4463
      %4499 = vmatprep.subr.mxu0 0.0
      %4500 = vmatpush1.xpose.msra.mxu0 %v4461
      %4501 = vmatprep.subr.mxu0 0.0
      %4502 = vmatpush1.xpose.msra.mxu0 %v4459
      %4503 = vmatprep.subr.mxu0 0.0
      %4504 = vmatpush1.xpose.msra.mxu0 %v4457
      %4505 = vmatprep.subr.mxu0 0.0
      %4506 = vmatpush2.xpose.msra.mxu0 0.0
      %4507 = vmatprep.subr.mxu0 0.0
      %4508 = vmatpush2.xpose.msra.mxu0 0.0
      %4509 = vmatprep.subr.mxu0 0.0
      %4510 = vmatpush2.xpose.msra.mxu0 0.0
      %4511 = vmatprep.subr.mxu0 0.0
      %4512 = vmatpush2.xpose.msra.mxu0 0.0
      %4513 = vmatprep.subr.mxu0 0.0
      %4514 = vmatpush2.xpose.msra.mxu0 0.0
      %4515 = vmatprep.subr.mxu0 0.0
      %4516 = vmatpush2.xpose.msra.mxu0 0.0
      %4517 = vmatprep.subr.mxu0 0.0
      %4518 = vmatpush2.xpose.msra.mxu0 0.0
      %4519 = vmatprep.subr.mxu0 0.0
      %4520 = vmatpush2.xpose.msra.mxu0 0.0
      %4521 = vmatprep.subr.mxu0 0.0
      %4522 = vmatpush2.xpose.msra.mxu0 0.0
      %4523 = vmatprep.subr.mxu0 0.0
      %4524 = vmatpush2.xpose.msra.mxu0 0.0
      %4525 = vmatprep.subr.mxu0 0.0
      %4526 = vmatpush2.xpose.msra.mxu0 0.0
      %4527 = vmatprep.subr.mxu0 0.0
      %4528 = vmatpush2.xpose.msra.mxu0 0.0
      %4529 = vmatprep.subr.mxu0 0.0
      %4530 = vmatpush2.xpose.msra.mxu0 0.0
      %4531 = vmatprep.subr.mxu0 0.0
      %4532 = vmatpush2.xpose.msra.mxu0 0.0
      %4533 = vmatprep.subr.mxu0 0.0
      %4534 = vmatpush2.xpose.msra.mxu0 0.0
      %4535 = vmatprep.subr.mxu0 0.0
      %4536 = vmatpush2.xpose.msra.mxu0 0.0
      %4537 = vmatprep.mubr.f32.mxu0 0.0
      %4538 = vmatmul.mubr.f32.gmra.mxu0 %v4441
      %v4539 = vpop.f32.mrf.mxu0
      %v4540 = vadd.f32 0.0, %v4539
      %v4541 = vpop.f32.mrf.mxu0
      %4542 = vmatprep.mubr.f32.mxu0 0.0
      %4543 = vmatmul.mubr.f32.gmra.mxu0 %v4443
      %v4544 = vpop.f32.mrf.mxu0
      %v4545 = vadd.f32 0.0, %v4544
      %v4546 = vpop.f32.mrf.mxu0
      %4547 = vmatprep.mubr.f32.mxu0 0.0
      %4548 = vmatmul.mubr.f32.gmra.mxu0 %v4445
      %v4549 = vpop.f32.mrf.mxu0
      %v4550 = vadd.f32 0.0, %v4549
      %v4551 = vpop.f32.mrf.mxu0
      %4552 = vmatprep.mubr.f32.mxu0 0.0
      %4553 = vmatmul.mubr.f32.gmra.mxu0 %v4447
      %v4554 = vpop.f32.mrf.mxu0
      %v4555 = vadd.f32 0.0, %v4554
      %v4556 = vpop.f32.mrf.mxu0
      %4557 = vmatprep.mubr.f32.mxu0 0.0
      %4558 = vmatmul.mubr.f32.gmra.mxu0 %v4449
      %v4559 = vpop.f32.mrf.mxu0
      %v4560 = vadd.f32 0.0, %v4559
      %v4561 = vpop.f32.mrf.mxu0
      %4562 = vmatprep.mubr.f32.mxu0 0.0
      %4563 = vmatmul.mubr.f32.gmra.mxu0 %v4451
      %v4564 = vpop.f32.mrf.mxu0
      %v4565 = vadd.f32 0.0, %v4564
      %v4566 = vpop.f32.mrf.mxu0
      %4567 = vmatprep.mubr.f32.mxu0 0.0
      %4568 = vmatmul.mubr.f32.gmra.mxu0 %v4453
      %v4569 = vpop.f32.mrf.mxu0
      %v4570 = vadd.f32 0.0, %v4569
      %v4571 = vpop.f32.mrf.mxu0
      %4572 = vmatprep.mubr.f32.mxu0 0.0
      %4573 = vmatmul.mubr.f32.gmra.mxu0 %v4455
      %v4574 = vpop.f32.mrf.mxu0
      %v4575 = vadd.f32 0.0, %v4574
      %v4576 = vpop.f32.mrf.mxu0
      %4577 = vdwg.mxu0
      %v4578 = vmul.f32 %v4540, 0.35355338
      %v4579 = vmul.f32 %v4545, 0.35355338
      %v4580 = vmul.f32 %v4550, 0.35355338
      %v4581 = vmul.f32 %v4555, 0.35355338
      %v4582 = vmul.f32 %v4560, 0.35355338
      %v4583 = vmul.f32 %v4565, 0.35355338
      %v4584 = vmul.f32 %v4570, 0.35355338
      %v4585 = vmul.f32 %v4575, 0.35355338
      %v4586 = vsel %vm1010, %v4578, -inf
      %4587 = vmax.xlane.f32.xlu0 %v4586
      %v4588 = vpop.xlane.xlu0 %4587
      %v4589 = vsel %vm1010, %v4579, -inf
      %4590 = vmax.xlane.f32.xlu0 %v4589
      %v4591 = vpop.xlane.xlu0 %4590
      %v4592 = vsel %vm1010, %v4580, -inf
      %4593 = vmax.xlane.f32.xlu0 %v4592
      %v4594 = vpop.xlane.xlu0 %4593
      %v4595 = vsel %vm1010, %v4581, -inf
      %4596 = vmax.xlane.f32.xlu0 %v4595
      %v4597 = vpop.xlane.xlu0 %4596
      %v4598 = vsel %vm1010, %v4582, -inf
      %4599 = vmax.xlane.f32.xlu0 %v4598
      %v4600 = vpop.xlane.xlu0 %4599
      %v4601 = vsel %vm1010, %v4583, -inf
      %4602 = vmax.xlane.f32.xlu0 %v4601
      %v4603 = vpop.xlane.xlu0 %4602
      %v4604 = vsel %vm1010, %v4584, -inf
      %4605 = vmax.xlane.f32.xlu0 %v4604
      %v4606 = vpop.xlane.xlu0 %4605
      %v4607 = vsel %vm1010, %v4585, -inf
      %4608 = vmax.xlane.f32.xlu0 %v4607
      %v4609 = vpop.xlane.xlu0 %4608
      %v4610 = vsub.f32 %v4578, %v4588
      %v4611 = vsub.f32 %v4579, %v4591
      %v4612 = vsub.f32 %v4580, %v4594
      %v4613 = vsub.f32 %v4581, %v4597
      %v4614 = vsub.f32 %v4582, %v4600
      %v4615 = vsub.f32 %v4583, %v4603
      %v4616 = vsub.f32 %v4584, %v4606
      %v4617 = vsub.f32 %v4585, %v4609
      %v4618 = vmul.f32 %v4610, 1.442695
      %v4619 = vpow.pop %v4618
      %v4620 = vmul.f32 %v4611, 1.442695
      %v4621 = vpow.pop %v4620
      %v4622 = vmul.f32 %v4612, 1.442695
      %v4623 = vpow.pop %v4622
      %v4624 = vmul.f32 %v4613, 1.442695
      %v4625 = vpow.pop %v4624
      %v4626 = vmul.f32 %v4614, 1.442695
      %v4627 = vpow.pop %v4626
      %v4628 = vmul.f32 %v4615, 1.442695
      %v4629 = vpow.pop %v4628
      %v4630 = vmul.f32 %v4616, 1.442695
      %v4631 = vpow.pop %v4630
      %v4632 = vmul.f32 %v4617, 1.442695
      %v4633 = vpow.pop %v4632
      %v4634 = vsel %vm1010, %v4619, 0.0
      %4635 = vadd.xlane.f32.xlu0 %v4634
      %v4636 = vpop.xlane.xlu0 %4635
      %v4637 = vsel %vm1010, %v4621, 0.0
      %4638 = vadd.xlane.f32.xlu0 %v4637
      %v4639 = vpop.xlane.xlu0 %4638
      %v4640 = vsel %vm1010, %v4623, 0.0
      %4641 = vadd.xlane.f32.xlu0 %v4640
      %v4642 = vpop.xlane.xlu0 %4641
      %v4643 = vsel %vm1010, %v4625, 0.0
      %4644 = vadd.xlane.f32.xlu0 %v4643
      %v4645 = vpop.xlane.xlu0 %4644
      %v4646 = vsel %vm1010, %v4627, 0.0
      %4647 = vadd.xlane.f32.xlu0 %v4646
      %v4648 = vpop.xlane.xlu0 %4647
      %v4649 = vsel %vm1010, %v4629, 0.0
      %4650 = vadd.xlane.f32.xlu0 %v4649
      %v4651 = vpop.xlane.xlu0 %4650
      %v4652 = vsel %vm1010, %v4631, 0.0
      %4653 = vadd.xlane.f32.xlu0 %v4652
      %v4654 = vpop.xlane.xlu0 %4653
      %v4655 = vsel %vm1010, %v4633, 0.0
      %4656 = vadd.xlane.f32.xlu0 %v4655
      %v4657 = vpop.xlane.xlu0 %4656
      %v4658 = vrcp.pop %v4636
      %v4659 = vrcp.pop %v4639
      %v4660 = vrcp.pop %v4642
      %v4661 = vrcp.pop %v4645
      %v4662 = vrcp.pop %v4648
      %v4663 = vrcp.pop %v4651
      %v4664 = vrcp.pop %v4654
      %v4665 = vrcp.pop %v4657
      %v4666 = vmul.f32 %v4619, %v4658
      %v4667 = vmul.f32 %v4621, %v4659
      %v4668 = vmul.f32 %v4623, %v4660
      %v4669 = vmul.f32 %v4625, %v4661
      %v4670 = vmul.f32 %v4627, %v4662
      %v4671 = vmul.f32 %v4629, %v4663
      %v4672 = vmul.f32 %v4631, %v4664
      %v4673 = vmul.f32 %v4633, %v4665
      %4674 = vrot.lane.b32.xlu0 %v4367, 64
      %v4675 = vpop.permute.xlu0 %4674
      %4676 = vrot.lane.b32.xlu0 %v4372, 64
      %v4677 = vpop.permute.xlu0 %4676
      %4678 = vrot.lane.b32.xlu0 %v4377, 64
      %v4679 = vpop.permute.xlu0 %4678
      %4680 = vrot.lane.b32.xlu0 %v4382, 64
      %v4681 = vpop.permute.xlu0 %4680
      %4682 = vrot.lane.b32.xlu0 %v4387, 64
      %v4683 = vpop.permute.xlu0 %4682
      %4684 = vrot.lane.b32.xlu0 %v4392, 64
      %v4685 = vpop.permute.xlu0 %4684
      %4686 = vrot.lane.b32.xlu0 %v4397, 64
      %v4687 = vpop.permute.xlu0 %4686
      %4688 = vrot.lane.b32.xlu0 %v4402, 64
      %v4689 = vpop.permute.xlu0 %4688
      %v4699 = vsel %vm1010, %v4666, 0
      %v4702 = vsel %vm1010, %v4667, 0
      %v4705 = vsel %vm1010, %v4668, 0
      %v4708 = vsel %vm1010, %v4669, 0
      %v4711 = vsel %vm1010, %v4670, 0
      %v4714 = vsel %vm1010, %v4671, 0
      %v4717 = vsel %vm1010, %v4672, 0
      %v4720 = vsel %vm1010, %v4673, 0
      %4722 = vmatprep.subr.mxu0 0.0
      %4723 = vmatpush1.msra.mxu0 0.0
      %4724 = vmatprep.subr.mxu0 0.0
      %4725 = vmatpush1.msra.mxu0 0.0
      %4726 = vmatprep.subr.mxu0 0.0
      %4727 = vmatpush1.msra.mxu0 0.0
      %4728 = vmatprep.subr.mxu0 0.0
      %4729 = vmatpush1.msra.mxu0 0.0
      %4730 = vmatprep.subr.mxu0 0.0
      %4731 = vmatpush1.msra.mxu0 0.0
      %4732 = vmatprep.subr.mxu0 0.0
      %4733 = vmatpush1.msra.mxu0 0.0
      %4734 = vmatprep.subr.mxu0 0.0
      %4735 = vmatpush1.msra.mxu0 0.0
      %4736 = vmatprep.subr.mxu0 0.0
      %4737 = vmatpush1.msra.mxu0 0.0
      %4738 = vmatprep.subr.mxu0 0.0
      %4739 = vmatpush1.msra.mxu0 %v4689
      %4740 = vmatprep.subr.mxu0 0.0
      %4741 = vmatpush1.msra.mxu0 %v4687
      %4742 = vmatprep.subr.mxu0 0.0
      %4743 = vmatpush1.msra.mxu0 %v4685
      %4744 = vmatprep.subr.mxu0 0.0
      %4745 = vmatpush1.msra.mxu0 %v4683
      %4746 = vmatprep.subr.mxu0 0.0
      %4747 = vmatpush1.msra.mxu0 %v4681
      %4748 = vmatprep.subr.mxu0 0.0
      %4749 = vmatpush1.msra.mxu0 %v4679
      %4750 = vmatprep.subr.mxu0 0.0
      %4751 = vmatpush1.msra.mxu0 %v4677
      %4752 = vmatprep.subr.mxu0 0.0
      %4753 = vmatpush1.msra.mxu0 %v4675
      %4754 = vmatprep.subr.mxu0 0.0
      %4755 = vmatpush2.msra.mxu0 0.0
      %4756 = vmatprep.subr.mxu0 0.0
      %4757 = vmatpush2.msra.mxu0 0.0
      %4758 = vmatprep.subr.mxu0 0.0
      %4759 = vmatpush2.msra.mxu0 0.0
      %4760 = vmatprep.subr.mxu0 0.0
      %4761 = vmatpush2.msra.mxu0 0.0
      %4762 = vmatprep.subr.mxu0 0.0
      %4763 = vmatpush2.msra.mxu0 0.0
      %4764 = vmatprep.subr.mxu0 0.0
      %4765 = vmatpush2.msra.mxu0 0.0
      %4766 = vmatprep.subr.mxu0 0.0
      %4767 = vmatpush2.msra.mxu0 0.0
      %4768 = vmatprep.subr.mxu0 0.0
      %4769 = vmatpush2.msra.mxu0 0.0
      %4770 = vmatprep.subr.mxu0 0.0
      %4771 = vmatpush2.msra.mxu0 0.0
      %4772 = vmatprep.subr.mxu0 0.0
      %4773 = vmatpush2.msra.mxu0 0.0
      %4774 = vmatprep.subr.mxu0 0.0
      %4775 = vmatpush2.msra.mxu0 0.0
      %4776 = vmatprep.subr.mxu0 0.0
      %4777 = vmatpush2.msra.mxu0 0.0
      %4778 = vmatprep.subr.mxu0 0.0
      %4779 = vmatpush2.msra.mxu0 0.0
      %4780 = vmatprep.subr.mxu0 0.0
      %4781 = vmatpush2.msra.mxu0 0.0
      %4782 = vmatprep.subr.mxu0 0.0
      %4783 = vmatpush2.msra.mxu0 0.0
      %4784 = vmatprep.subr.mxu0 0.0
      %4785 = vmatpush2.msra.mxu0 0.0
      %4786 = vmatprep.mubr.f32.mxu0 0.0
      %4787 = vmatmul.mubr.f32.gmra.mxu0 %v4699
      %v4788 = vpop.f32.mrf.mxu0
      %v4789 = vadd.f32 0.0, %v4788
      %v4790 = vpop.f32.mrf.mxu0
      %4791 = vmatprep.mubr.f32.mxu0 0.0
      %4792 = vmatmul.mubr.f32.gmra.mxu0 %v4702
      %v4793 = vpop.f32.mrf.mxu0
      %v4794 = vadd.f32 0.0, %v4793
      %v4795 = vpop.f32.mrf.mxu0
      %4796 = vmatprep.mubr.f32.mxu0 0.0
      %4797 = vmatmul.mubr.f32.gmra.mxu0 %v4705
      %v4798 = vpop.f32.mrf.mxu0
      %v4799 = vadd.f32 0.0, %v4798
      %v4800 = vpop.f32.mrf.mxu0
      %4801 = vmatprep.mubr.f32.mxu0 0.0
      %4802 = vmatmul.mubr.f32.gmra.mxu0 %v4708
      %v4803 = vpop.f32.mrf.mxu0
      %v4804 = vadd.f32 0.0, %v4803
      %v4805 = vpop.f32.mrf.mxu0
      %4806 = vmatprep.mubr.f32.mxu0 0.0
      %4807 = vmatmul.mubr.f32.gmra.mxu0 %v4711
      %v4808 = vpop.f32.mrf.mxu0
      %v4809 = vadd.f32 0.0, %v4808
      %v4810 = vpop.f32.mrf.mxu0
      %4811 = vmatprep.mubr.f32.mxu0 0.0
      %4812 = vmatmul.mubr.f32.gmra.mxu0 %v4714
      %v4813 = vpop.f32.mrf.mxu0
      %v4814 = vadd.f32 0.0, %v4813
      %v4815 = vpop.f32.mrf.mxu0
      %4816 = vmatprep.mubr.f32.mxu0 0.0
      %4817 = vmatmul.mubr.f32.gmra.mxu0 %v4717
      %v4818 = vpop.f32.mrf.mxu0
      %v4819 = vadd.f32 0.0, %v4818
      %v4820 = vpop.f32.mrf.mxu0
      %4821 = vmatprep.mubr.f32.mxu0 0.0
      %4822 = vmatmul.mubr.f32.gmra.mxu0 %v4720
      %v4823 = vpop.f32.mrf.mxu0
      %v4824 = vadd.f32 0.0, %v4823
      %v4825 = vpop.f32.mrf.mxu0
      %4826 = vdwg.mxu0
      %v4828 = vsel %vm1468, %v4789, 0
      %v4831 = vsel %vm1468, %v4794, 0
      %v4834 = vsel %vm1468, %v4799, 0
      %v4837 = vsel %vm1468, %v4804, 0
      %v4840 = vsel %vm1468, %v4809, 0
      %v4843 = vsel %vm1468, %v4814, 0
      %v4846 = vsel %vm1468, %v4819, 0
      %v4849 = vsel %vm1468, %v4824, 0
      %4851 = vmatprep.subr.mxu0 0.0
      %4852 = vmatpush1.msra.mxu0 0.0
      %4853 = vmatprep.subr.mxu0 0.0
      %4854 = vmatpush1.msra.mxu0 0.0
      %4855 = vmatprep.subr.mxu0 0.0
      %4856 = vmatpush1.msra.mxu0 0.0
      %4857 = vmatprep.subr.mxu0 0.0
      %4858 = vmatpush1.msra.mxu0 0.0
      %4859 = vmatprep.subr.mxu0 0.0
      %4860 = vmatpush1.msra.mxu0 0.0
      %4861 = vmatprep.subr.mxu0 0.0
      %4862 = vmatpush1.msra.mxu0 0.0
      %4863 = vmatprep.subr.mxu0 0.0
      %4864 = vmatpush1.msra.mxu0 0.0
      %4865 = vmatprep.subr.mxu0 0.0
      %4866 = vmatpush1.msra.mxu0 0.0
      %4867 = vmatprep.subr.mxu0 0.0
      %4868 = vmatpush1.msra.mxu0 0.0
      %4869 = vmatprep.subr.mxu0 0.0
      %4870 = vmatpush1.msra.mxu0 0.0
      %4871 = vmatprep.subr.mxu0 0.0
      %4872 = vmatpush1.msra.mxu0 0.0
      %4873 = vmatprep.subr.mxu0 0.0
      %4874 = vmatpush1.msra.mxu0 0.0
      %4875 = vmatprep.subr.mxu0 0.0
      %4876 = vmatpush1.msra.mxu0 0.0
      %4877 = vmatprep.subr.mxu0 0.0
      %4878 = vmatpush1.msra.mxu0 0.0
      %4879 = vmatprep.subr.mxu0 0.0
      %4880 = vmatpush1.msra.mxu0 0.0
      %4881 = vmatprep.subr.mxu0 0.0
      %4882 = vmatpush1.msra.mxu0 %v4405
      %4883 = vmatprep.subr.mxu0 0.0
      %4884 = vmatpush2.msra.mxu0 0.0
      %4885 = vmatprep.subr.mxu0 0.0
      %4886 = vmatpush2.msra.mxu0 0.0
      %4887 = vmatprep.subr.mxu0 0.0
      %4888 = vmatpush2.msra.mxu0 0.0
      %4889 = vmatprep.subr.mxu0 0.0
      %4890 = vmatpush2.msra.mxu0 0.0
      %4891 = vmatprep.subr.mxu0 0.0
      %4892 = vmatpush2.msra.mxu0 0.0
      %4893 = vmatprep.subr.mxu0 0.0
      %4894 = vmatpush2.msra.mxu0 0.0
      %4895 = vmatprep.subr.mxu0 0.0
      %4896 = vmatpush2.msra.mxu0 0.0
      %4897 = vmatprep.subr.mxu0 0.0
      %4898 = vmatpush2.msra.mxu0 0.0
      %4899 = vmatprep.subr.mxu0 0.0
      %4900 = vmatpush2.msra.mxu0 0.0
      %4901 = vmatprep.subr.mxu0 0.0
      %4902 = vmatpush2.msra.mxu0 0.0
      %4903 = vmatprep.subr.mxu0 0.0
      %4904 = vmatpush2.msra.mxu0 0.0
      %4905 = vmatprep.subr.mxu0 0.0
      %4906 = vmatpush2.msra.mxu0 0.0
      %4907 = vmatprep.subr.mxu0 0.0
      %4908 = vmatpush2.msra.mxu0 0.0
      %4909 = vmatprep.subr.mxu0 0.0
      %4910 = vmatpush2.msra.mxu0 0.0
      %4911 = vmatprep.subr.mxu0 0.0
      %4912 = vmatpush2.msra.mxu0 0.0
      %4913 = vmatprep.subr.mxu0 0.0
      %4914 = vmatpush2.msra.mxu0 0.0
      %4915 = vmatprep.mubr.f32.mxu0 0.0
      %4916 = vmatmul.mubr.f32.gmra.mxu0 %v4828
      %v4917 = vpop.f32.mrf.mxu0
      %v4918 = vadd.f32 0.0, %v4917
      %v4919 = vpop.f32.mrf.mxu0
      %4920 = vmatprep.mubr.f32.mxu0 0.0
      %4921 = vmatmul.mubr.f32.gmra.mxu0 %v4831
      %v4922 = vpop.f32.mrf.mxu0
      %v4923 = vadd.f32 0.0, %v4922
      %v4924 = vpop.f32.mrf.mxu0
      %4925 = vmatprep.mubr.f32.mxu0 0.0
      %4926 = vmatmul.mubr.f32.gmra.mxu0 %v4834
      %v4927 = vpop.f32.mrf.mxu0
      %v4928 = vadd.f32 0.0, %v4927
      %v4929 = vpop.f32.mrf.mxu0
      %4930 = vmatprep.mubr.f32.mxu0 0.0
      %4931 = vmatmul.mubr.f32.gmra.mxu0 %v4837
      %v4932 = vpop.f32.mrf.mxu0
      %v4933 = vadd.f32 0.0, %v4932
      %v4934 = vpop.f32.mrf.mxu0
      %4935 = vmatprep.mubr.f32.mxu0 0.0
      %4936 = vmatmul.mubr.f32.gmra.mxu0 %v4840
      %v4937 = vpop.f32.mrf.mxu0
      %v4938 = vadd.f32 0.0, %v4937
      %v4939 = vpop.f32.mrf.mxu0
      %4940 = vmatprep.mubr.f32.mxu0 0.0
      %4941 = vmatmul.mubr.f32.gmra.mxu0 %v4843
      %v4942 = vpop.f32.mrf.mxu0
      %v4943 = vadd.f32 0.0, %v4942
      %v4944 = vpop.f32.mrf.mxu0
      %4945 = vmatprep.mubr.f32.mxu0 0.0
      %4946 = vmatmul.mubr.f32.gmra.mxu0 %v4846
      %v4947 = vpop.f32.mrf.mxu0
      %v4948 = vadd.f32 0.0, %v4947
      %v4949 = vpop.f32.mrf.mxu0
      %4950 = vmatprep.mubr.f32.mxu0 0.0
      %4951 = vmatmul.mubr.f32.gmra.mxu0 %v4849
      %v4952 = vpop.f32.mrf.mxu0
      %v4953 = vadd.f32 0.0, %v4952
      %v4954 = vpop.f32.mrf.mxu0
      %4955 = vdwg.mxu0
      %v4956 = vadd.f32 %v4416, %v4918
      %v4957 = vadd.f32 %v4416, %v4923
      %v4958 = vadd.f32 %v4416, %v4928
      %v4959 = vadd.f32 %v4416, %v4933
      %v4960 = vadd.f32 %v4416, %v4938
      %v4961 = vadd.f32 %v4416, %v4943
      %v4962 = vadd.f32 %v4416, %v4948
      %v4963 = vadd.f32 %v4416, %v4953
      %4964 = vrot.lane.b32.xlu0 %v4367, 120
      %v4965 = vpop.permute.xlu0 %4964
      %4966 = vrot.lane.b32.xlu0 %v4372, 120
      %v4967 = vpop.permute.xlu0 %4966
      %4968 = vrot.lane.b32.xlu0 %v4377, 120
      %v4969 = vpop.permute.xlu0 %4968
      %4970 = vrot.lane.b32.xlu0 %v4382, 120
      %v4971 = vpop.permute.xlu0 %4970
      %4972 = vrot.lane.b32.xlu0 %v4387, 120
      %v4973 = vpop.permute.xlu0 %4972
      %4974 = vrot.lane.b32.xlu0 %v4392, 120
      %v4975 = vpop.permute.xlu0 %4974
      %4976 = vrot.lane.b32.xlu0 %v4397, 120
      %v4977 = vpop.permute.xlu0 %4976
      %4978 = vrot.lane.b32.xlu0 %v4402, 120
      %v4979 = vpop.permute.xlu0 %4978
      %4980 = vrot.lane.b32.xlu0 %v4367, 88
      %v4981 = vpop.permute.xlu0 %4980
      %4982 = vrot.lane.b32.xlu0 %v4372, 88
      %v4983 = vpop.permute.xlu0 %4982
      %4984 = vrot.lane.b32.xlu0 %v4377, 88
      %v4985 = vpop.permute.xlu0 %4984
      %4986 = vrot.lane.b32.xlu0 %v4382, 88
      %v4987 = vpop.permute.xlu0 %4986
      %4988 = vrot.lane.b32.xlu0 %v4387, 88
      %v4989 = vpop.permute.xlu0 %4988
      %4990 = vrot.lane.b32.xlu0 %v4392, 88
      %v4991 = vpop.permute.xlu0 %4990
      %4992 = vrot.lane.b32.xlu0 %v4397, 88
      %v4993 = vpop.permute.xlu0 %4992
      %4994 = vrot.lane.b32.xlu0 %v4402, 88
      %v4995 = vpop.permute.xlu0 %4994
      %v4996 = vsel %vm1468, %v4965, 0
      %v4998 = vsel %vm1468, %v4967, 0
      %v5000 = vsel %vm1468, %v4969, 0
      %v5002 = vsel %vm1468, %v4971, 0
      %v5004 = vsel %vm1468, %v4973, 0
      %v5006 = vsel %vm1468, %v4975, 0
      %v5008 = vsel %vm1468, %v4977, 0
      %v5010 = vsel %vm1468, %v4979, 0
      %v5012 = vsel %vm1468, %v4981, 0
      %v5014 = vsel %vm1468, %v4983, 0
      %v5016 = vsel %vm1468, %v4985, 0
      %v5018 = vsel %vm1468, %v4987, 0
      %v5020 = vsel %vm1468, %v4989, 0
      %v5022 = vsel %vm1468, %v4991, 0
      %v5024 = vsel %vm1468, %v4993, 0
      %v5026 = vsel %vm1468, %v4995, 0
      %5028 = vmatprep.subr.mxu0 0.0
      %5029 = vmatpush1.xpose.msra.mxu0 0.0
      %5030 = vmatprep.subr.mxu0 0.0
      %5031 = vmatpush1.xpose.msra.mxu0 0.0
      %5032 = vmatprep.subr.mxu0 0.0
      %5033 = vmatpush1.xpose.msra.mxu0 0.0
      %5034 = vmatprep.subr.mxu0 0.0
      %5035 = vmatpush1.xpose.msra.mxu0 0.0
      %5036 = vmatprep.subr.mxu0 0.0
      %5037 = vmatpush1.xpose.msra.mxu0 0.0
      %5038 = vmatprep.subr.mxu0 0.0
      %5039 = vmatpush1.xpose.msra.mxu0 0.0
      %5040 = vmatprep.subr.mxu0 0.0
      %5041 = vmatpush1.xpose.msra.mxu0 0.0
      %5042 = vmatprep.subr.mxu0 0.0
      %5043 = vmatpush1.xpose.msra.mxu0 0.0
      %5044 = vmatprep.subr.mxu0 0.0
      %5045 = vmatpush1.xpose.msra.mxu0 %v5026
      %5046 = vmatprep.subr.mxu0 0.0
      %5047 = vmatpush1.xpose.msra.mxu0 %v5024
      %5048 = vmatprep.subr.mxu0 0.0
      %5049 = vmatpush1.xpose.msra.mxu0 %v5022
      %5050 = vmatprep.subr.mxu0 0.0
      %5051 = vmatpush1.xpose.msra.mxu0 %v5020
      %5052 = vmatprep.subr.mxu0 0.0
      %5053 = vmatpush1.xpose.msra.mxu0 %v5018
      %5054 = vmatprep.subr.mxu0 0.0
      %5055 = vmatpush1.xpose.msra.mxu0 %v5016
      %5056 = vmatprep.subr.mxu0 0.0
      %5057 = vmatpush1.xpose.msra.mxu0 %v5014
      %5058 = vmatprep.subr.mxu0 0.0
      %5059 = vmatpush1.xpose.msra.mxu0 %v5012
      %5060 = vmatprep.subr.mxu0 0.0
      %5061 = vmatpush2.xpose.msra.mxu0 0.0
      %5062 = vmatprep.subr.mxu0 0.0
      %5063 = vmatpush2.xpose.msra.mxu0 0.0
      %5064 = vmatprep.subr.mxu0 0.0
      %5065 = vmatpush2.xpose.msra.mxu0 0.0
      %5066 = vmatprep.subr.mxu0 0.0
      %5067 = vmatpush2.xpose.msra.mxu0 0.0
      %5068 = vmatprep.subr.mxu0 0.0
      %5069 = vmatpush2.xpose.msra.mxu0 0.0
      %5070 = vmatprep.subr.mxu0 0.0
      %5071 = vmatpush2.xpose.msra.mxu0 0.0
      %5072 = vmatprep.subr.mxu0 0.0
      %5073 = vmatpush2.xpose.msra.mxu0 0.0
      %5074 = vmatprep.subr.mxu0 0.0
      %5075 = vmatpush2.xpose.msra.mxu0 0.0
      %5076 = vmatprep.subr.mxu0 0.0
      %5077 = vmatpush2.xpose.msra.mxu0 0.0
      %5078 = vmatprep.subr.mxu0 0.0
      %5079 = vmatpush2.xpose.msra.mxu0 0.0
      %5080 = vmatprep.subr.mxu0 0.0
      %5081 = vmatpush2.xpose.msra.mxu0 0.0
      %5082 = vmatprep.subr.mxu0 0.0
      %5083 = vmatpush2.xpose.msra.mxu0 0.0
      %5084 = vmatprep.subr.mxu0 0.0
      %5085 = vmatpush2.xpose.msra.mxu0 0.0
      %5086 = vmatprep.subr.mxu0 0.0
      %5087 = vmatpush2.xpose.msra.mxu0 0.0
      %5088 = vmatprep.subr.mxu0 0.0
      %5089 = vmatpush2.xpose.msra.mxu0 0.0
      %5090 = vmatprep.subr.mxu0 0.0
      %5091 = vmatpush2.xpose.msra.mxu0 0.0
      %5092 = vmatprep.mubr.f32.mxu0 0.0
      %5093 = vmatmul.mubr.f32.gmra.mxu0 %v4996
      %v5094 = vpop.f32.mrf.mxu0
      %v5095 = vadd.f32 0.0, %v5094
      %v5096 = vpop.f32.mrf.mxu0
      %5097 = vmatprep.mubr.f32.mxu0 0.0
      %5098 = vmatmul.mubr.f32.gmra.mxu0 %v4998
      %v5099 = vpop.f32.mrf.mxu0
      %v5100 = vadd.f32 0.0, %v5099
      %v5101 = vpop.f32.mrf.mxu0
      %5102 = vmatprep.mubr.f32.mxu0 0.0
      %5103 = vmatmul.mubr.f32.gmra.mxu0 %v5000
      %v5104 = vpop.f32.mrf.mxu0
      %v5105 = vadd.f32 0.0, %v5104
      %v5106 = vpop.f32.mrf.mxu0
      %5107 = vmatprep.mubr.f32.mxu0 0.0
      %5108 = vmatmul.mubr.f32.gmra.mxu0 %v5002
      %v5109 = vpop.f32.mrf.mxu0
      %v5110 = vadd.f32 0.0, %v5109
      %v5111 = vpop.f32.mrf.mxu0
      %5112 = vmatprep.mubr.f32.mxu0 0.0
      %5113 = vmatmul.mubr.f32.gmra.mxu0 %v5004
      %v5114 = vpop.f32.mrf.mxu0
      %v5115 = vadd.f32 0.0, %v5114
      %v5116 = vpop.f32.mrf.mxu0
      %5117 = vmatprep.mubr.f32.mxu0 0.0
      %5118 = vmatmul.mubr.f32.gmra.mxu0 %v5006
      %v5119 = vpop.f32.mrf.mxu0
      %v5120 = vadd.f32 0.0, %v5119
      %v5121 = vpop.f32.mrf.mxu0
      %5122 = vmatprep.mubr.f32.mxu0 0.0
      %5123 = vmatmul.mubr.f32.gmra.mxu0 %v5008
      %v5124 = vpop.f32.mrf.mxu0
      %v5125 = vadd.f32 0.0, %v5124
      %v5126 = vpop.f32.mrf.mxu0
      %5127 = vmatprep.mubr.f32.mxu0 0.0
      %5128 = vmatmul.mubr.f32.gmra.mxu0 %v5010
      %v5129 = vpop.f32.mrf.mxu0
      %v5130 = vadd.f32 0.0, %v5129
      %v5131 = vpop.f32.mrf.mxu0
      %5132 = vdwg.mxu0
      %v5133 = vmul.f32 %v5095, 0.35355338
      %v5134 = vmul.f32 %v5100, 0.35355338
      %v5135 = vmul.f32 %v5105, 0.35355338
      %v5136 = vmul.f32 %v5110, 0.35355338
      %v5137 = vmul.f32 %v5115, 0.35355338
      %v5138 = vmul.f32 %v5120, 0.35355338
      %v5139 = vmul.f32 %v5125, 0.35355338
      %v5140 = vmul.f32 %v5130, 0.35355338
      %v5141 = vsel %vm1010, %v5133, -inf
      %5142 = vmax.xlane.f32.xlu0 %v5141
      %v5143 = vpop.xlane.xlu0 %5142
      %v5144 = vsel %vm1010, %v5134, -inf
      %5145 = vmax.xlane.f32.xlu0 %v5144
      %v5146 = vpop.xlane.xlu0 %5145
      %v5147 = vsel %vm1010, %v5135, -inf
      %5148 = vmax.xlane.f32.xlu0 %v5147
      %v5149 = vpop.xlane.xlu0 %5148
      %v5150 = vsel %vm1010, %v5136, -inf
      %5151 = vmax.xlane.f32.xlu0 %v5150
      %v5152 = vpop.xlane.xlu0 %5151
      %v5153 = vsel %vm1010, %v5137, -inf
      %5154 = vmax.xlane.f32.xlu0 %v5153
      %v5155 = vpop.xlane.xlu0 %5154
      %v5156 = vsel %vm1010, %v5138, -inf
      %5157 = vmax.xlane.f32.xlu0 %v5156
      %v5158 = vpop.xlane.xlu0 %5157
      %v5159 = vsel %vm1010, %v5139, -inf
      %5160 = vmax.xlane.f32.xlu0 %v5159
      %v5161 = vpop.xlane.xlu0 %5160
      %v5162 = vsel %vm1010, %v5140, -inf
      %5163 = vmax.xlane.f32.xlu0 %v5162
      %v5164 = vpop.xlane.xlu0 %5163
      %v5165 = vsub.f32 %v5133, %v5143
      %v5166 = vsub.f32 %v5134, %v5146
      %v5167 = vsub.f32 %v5135, %v5149
      %v5168 = vsub.f32 %v5136, %v5152
      %v5169 = vsub.f32 %v5137, %v5155
      %v5170 = vsub.f32 %v5138, %v5158
      %v5171 = vsub.f32 %v5139, %v5161
      %v5172 = vsub.f32 %v5140, %v5164
      %v5173 = vmul.f32 %v5165, 1.442695
      %v5174 = vpow.pop %v5173
      %v5175 = vmul.f32 %v5166, 1.442695
      %v5176 = vpow.pop %v5175
      %v5177 = vmul.f32 %v5167, 1.442695
      %v5178 = vpow.pop %v5177
      %v5179 = vmul.f32 %v5168, 1.442695
      %v5180 = vpow.pop %v5179
      %v5181 = vmul.f32 %v5169, 1.442695
      %v5182 = vpow.pop %v5181
      %v5183 = vmul.f32 %v5170, 1.442695
      %v5184 = vpow.pop %v5183
      %v5185 = vmul.f32 %v5171, 1.442695
      %v5186 = vpow.pop %v5185
      %v5187 = vmul.f32 %v5172, 1.442695
      %v5188 = vpow.pop %v5187
      %v5189 = vsel %vm1010, %v5174, 0.0
      %5190 = vadd.xlane.f32.xlu0 %v5189
      %v5191 = vpop.xlane.xlu0 %5190
      %v5192 = vsel %vm1010, %v5176, 0.0
      %5193 = vadd.xlane.f32.xlu0 %v5192
      %v5194 = vpop.xlane.xlu0 %5193
      %v5195 = vsel %vm1010, %v5178, 0.0
      %5196 = vadd.xlane.f32.xlu0 %v5195
      %v5197 = vpop.xlane.xlu0 %5196
      %v5198 = vsel %vm1010, %v5180, 0.0
      %5199 = vadd.xlane.f32.xlu0 %v5198
      %v5200 = vpop.xlane.xlu0 %5199
      %v5201 = vsel %vm1010, %v5182, 0.0
      %5202 = vadd.xlane.f32.xlu0 %v5201
      %v5203 = vpop.xlane.xlu0 %5202
      %v5204 = vsel %vm1010, %v5184, 0.0
      %5205 = vadd.xlane.f32.xlu0 %v5204
      %v5206 = vpop.xlane.xlu0 %5205
      %v5207 = vsel %vm1010, %v5186, 0.0
      %5208 = vadd.xlane.f32.xlu0 %v5207
      %v5209 = vpop.xlane.xlu0 %5208
      %v5210 = vsel %vm1010, %v5188, 0.0
      %5211 = vadd.xlane.f32.xlu0 %v5210
      %v5212 = vpop.xlane.xlu0 %5211
      %v5213 = vrcp.pop %v5191
      %v5214 = vrcp.pop %v5194
      %v5215 = vrcp.pop %v5197
      %v5216 = vrcp.pop %v5200
      %v5217 = vrcp.pop %v5203
      %v5218 = vrcp.pop %v5206
      %v5219 = vrcp.pop %v5209
      %v5220 = vrcp.pop %v5212
      %v5221 = vmul.f32 %v5174, %v5213
      %v5222 = vmul.f32 %v5176, %v5214
      %v5223 = vmul.f32 %v5178, %v5215
      %v5224 = vmul.f32 %v5180, %v5216
      %v5225 = vmul.f32 %v5182, %v5217
      %v5226 = vmul.f32 %v5184, %v5218
      %v5227 = vmul.f32 %v5186, %v5219
      %v5228 = vmul.f32 %v5188, %v5220
      %5229 = vrot.lane.b32.xlu0 %v4367, 56
      %v5230 = vpop.permute.xlu0 %5229
      %5231 = vrot.lane.b32.xlu0 %v4372, 56
      %v5232 = vpop.permute.xlu0 %5231
      %5233 = vrot.lane.b32.xlu0 %v4377, 56
      %v5234 = vpop.permute.xlu0 %5233
      %5235 = vrot.lane.b32.xlu0 %v4382, 56
      %v5236 = vpop.permute.xlu0 %5235
      %5237 = vrot.lane.b32.xlu0 %v4387, 56
      %v5238 = vpop.permute.xlu0 %5237
      %5239 = vrot.lane.b32.xlu0 %v4392, 56
      %v5240 = vpop.permute.xlu0 %5239
      %5241 = vrot.lane.b32.xlu0 %v4397, 56
      %v5242 = vpop.permute.xlu0 %5241
      %5243 = vrot.lane.b32.xlu0 %v4402, 56
      %v5244 = vpop.permute.xlu0 %5243
      %v5254 = vsel %vm1010, %v5221, 0
      %v5257 = vsel %vm1010, %v5222, 0
      %v5260 = vsel %vm1010, %v5223, 0
      %v5263 = vsel %vm1010, %v5224, 0
      %v5266 = vsel %vm1010, %v5225, 0
      %v5269 = vsel %vm1010, %v5226, 0
      %v5272 = vsel %vm1010, %v5227, 0
      %v5275 = vsel %vm1010, %v5228, 0
      %5277 = vmatprep.subr.mxu0 0.0
      %5278 = vmatpush1.msra.mxu0 0.0
      %5279 = vmatprep.subr.mxu0 0.0
      %5280 = vmatpush1.msra.mxu0 0.0
      %5281 = vmatprep.subr.mxu0 0.0
      %5282 = vmatpush1.msra.mxu0 0.0
      %5283 = vmatprep.subr.mxu0 0.0
      %5284 = vmatpush1.msra.mxu0 0.0
      %5285 = vmatprep.subr.mxu0 0.0
      %5286 = vmatpush1.msra.mxu0 0.0
      %5287 = vmatprep.subr.mxu0 0.0
      %5288 = vmatpush1.msra.mxu0 0.0
      %5289 = vmatprep.subr.mxu0 0.0
      %5290 = vmatpush1.msra.mxu0 0.0
      %5291 = vmatprep.subr.mxu0 0.0
      %5292 = vmatpush1.msra.mxu0 0.0
      %5293 = vmatprep.subr.mxu0 0.0
      %5294 = vmatpush1.msra.mxu0 %v5244
      %5295 = vmatprep.subr.mxu0 0.0
      %5296 = vmatpush1.msra.mxu0 %v5242
      %5297 = vmatprep.subr.mxu0 0.0
      %5298 = vmatpush1.msra.mxu0 %v5240
      %5299 = vmatprep.subr.mxu0 0.0
      %5300 = vmatpush1.msra.mxu0 %v5238
      %5301 = vmatprep.subr.mxu0 0.0
      %5302 = vmatpush1.msra.mxu0 %v5236
      %5303 = vmatprep.subr.mxu0 0.0
      %5304 = vmatpush1.msra.mxu0 %v5234
      %5305 = vmatprep.subr.mxu0 0.0
      %5306 = vmatpush1.msra.mxu0 %v5232
      %5307 = vmatprep.subr.mxu0 0.0
      %5308 = vmatpush1.msra.mxu0 %v5230
      %5309 = vmatprep.subr.mxu0 0.0
      %5310 = vmatpush2.msra.mxu0 0.0
      %5311 = vmatprep.subr.mxu0 0.0
      %5312 = vmatpush2.msra.mxu0 0.0
      %5313 = vmatprep.subr.mxu0 0.0
      %5314 = vmatpush2.msra.mxu0 0.0
      %5315 = vmatprep.subr.mxu0 0.0
      %5316 = vmatpush2.msra.mxu0 0.0
      %5317 = vmatprep.subr.mxu0 0.0
      %5318 = vmatpush2.msra.mxu0 0.0
      %5319 = vmatprep.subr.mxu0 0.0
      %5320 = vmatpush2.msra.mxu0 0.0
      %5321 = vmatprep.subr.mxu0 0.0
      %5322 = vmatpush2.msra.mxu0 0.0
      %5323 = vmatprep.subr.mxu0 0.0
      %5324 = vmatpush2.msra.mxu0 0.0
      %5325 = vmatprep.subr.mxu0 0.0
      %5326 = vmatpush2.msra.mxu0 0.0
      %5327 = vmatprep.subr.mxu0 0.0
      %5328 = vmatpush2.msra.mxu0 0.0
      %5329 = vmatprep.subr.mxu0 0.0
      %5330 = vmatpush2.msra.mxu0 0.0
      %5331 = vmatprep.subr.mxu0 0.0
      %5332 = vmatpush2.msra.mxu0 0.0
      %5333 = vmatprep.subr.mxu0 0.0
      %5334 = vmatpush2.msra.mxu0 0.0
      %5335 = vmatprep.subr.mxu0 0.0
      %5336 = vmatpush2.msra.mxu0 0.0
      %5337 = vmatprep.subr.mxu0 0.0
      %5338 = vmatpush2.msra.mxu0 0.0
      %5339 = vmatprep.subr.mxu0 0.0
      %5340 = vmatpush2.msra.mxu0 0.0
      %5341 = vmatprep.mubr.f32.mxu0 0.0
      %5342 = vmatmul.mubr.f32.gmra.mxu0 %v5254
      %v5343 = vpop.f32.mrf.mxu0
      %v5344 = vadd.f32 0.0, %v5343
      %v5345 = vpop.f32.mrf.mxu0
      %5346 = vmatprep.mubr.f32.mxu0 0.0
      %5347 = vmatmul.mubr.f32.gmra.mxu0 %v5257
      %v5348 = vpop.f32.mrf.mxu0
      %v5349 = vadd.f32 0.0, %v5348
      %v5350 = vpop.f32.mrf.mxu0
      %5351 = vmatprep.mubr.f32.mxu0 0.0
      %5352 = vmatmul.mubr.f32.gmra.mxu0 %v5260
      %v5353 = vpop.f32.mrf.mxu0
      %v5354 = vadd.f32 0.0, %v5353
      %v5355 = vpop.f32.mrf.mxu0
      %5356 = vmatprep.mubr.f32.mxu0 0.0
      %5357 = vmatmul.mubr.f32.gmra.mxu0 %v5263
      %v5358 = vpop.f32.mrf.mxu0
      %v5359 = vadd.f32 0.0, %v5358
      %v5360 = vpop.f32.mrf.mxu0
      %5361 = vmatprep.mubr.f32.mxu0 0.0
      %5362 = vmatmul.mubr.f32.gmra.mxu0 %v5266
      %v5363 = vpop.f32.mrf.mxu0
      %v5364 = vadd.f32 0.0, %v5363
      %v5365 = vpop.f32.mrf.mxu0
      %5366 = vmatprep.mubr.f32.mxu0 0.0
      %5367 = vmatmul.mubr.f32.gmra.mxu0 %v5269
      %v5368 = vpop.f32.mrf.mxu0
      %v5369 = vadd.f32 0.0, %v5368
      %v5370 = vpop.f32.mrf.mxu0
      %5371 = vmatprep.mubr.f32.mxu0 0.0
      %5372 = vmatmul.mubr.f32.gmra.mxu0 %v5272
      %v5373 = vpop.f32.mrf.mxu0
      %v5374 = vadd.f32 0.0, %v5373
      %v5375 = vpop.f32.mrf.mxu0
      %5376 = vmatprep.mubr.f32.mxu0 0.0
      %5377 = vmatmul.mubr.f32.gmra.mxu0 %v5275
      %v5378 = vpop.f32.mrf.mxu0
      %v5379 = vadd.f32 0.0, %v5378
      %v5380 = vpop.f32.mrf.mxu0
      %5381 = vdwg.mxu0
      %v5383 = vsel %vm1468, %v5344, 0
      %v5386 = vsel %vm1468, %v5349, 0
      %v5389 = vsel %vm1468, %v5354, 0
      %v5392 = vsel %vm1468, %v5359, 0
      %v5395 = vsel %vm1468, %v5364, 0
      %v5398 = vsel %vm1468, %v5369, 0
      %v5401 = vsel %vm1468, %v5374, 0
      %v5404 = vsel %vm1468, %v5379, 0
      %5406 = vmatprep.subr.mxu0 0.0
      %5407 = vmatpush1.msra.mxu0 0.0
      %5408 = vmatprep.subr.mxu0 0.0
      %5409 = vmatpush1.msra.mxu0 0.0
      %5410 = vmatprep.subr.mxu0 0.0
      %5411 = vmatpush1.msra.mxu0 0.0
      %5412 = vmatprep.subr.mxu0 0.0
      %5413 = vmatpush1.msra.mxu0 0.0
      %5414 = vmatprep.subr.mxu0 0.0
      %5415 = vmatpush1.msra.mxu0 0.0
      %5416 = vmatprep.subr.mxu0 0.0
      %5417 = vmatpush1.msra.mxu0 0.0
      %5418 = vmatprep.subr.mxu0 0.0
      %5419 = vmatpush1.msra.mxu0 0.0
      %5420 = vmatprep.subr.mxu0 0.0
      %5421 = vmatpush1.msra.mxu0 0.0
      %5422 = vmatprep.subr.mxu0 0.0
      %5423 = vmatpush1.msra.mxu0 0.0
      %5424 = vmatprep.subr.mxu0 0.0
      %5425 = vmatpush1.msra.mxu0 0.0
      %5426 = vmatprep.subr.mxu0 0.0
      %5427 = vmatpush1.msra.mxu0 0.0
      %5428 = vmatprep.subr.mxu0 0.0
      %5429 = vmatpush1.msra.mxu0 0.0
      %5430 = vmatprep.subr.mxu0 0.0
      %5431 = vmatpush1.msra.mxu0 0.0
      %5432 = vmatprep.subr.mxu0 0.0
      %5433 = vmatpush1.msra.mxu0 0.0
      %5434 = vmatprep.subr.mxu0 0.0
      %5435 = vmatpush1.msra.mxu0 0.0
      %5436 = vmatprep.subr.mxu0 0.0
      %5437 = vmatpush1.msra.mxu0 %v4406
      %5438 = vmatprep.subr.mxu0 0.0
      %5439 = vmatpush2.msra.mxu0 0.0
      %5440 = vmatprep.subr.mxu0 0.0
      %5441 = vmatpush2.msra.mxu0 0.0
      %5442 = vmatprep.subr.mxu0 0.0
      %5443 = vmatpush2.msra.mxu0 0.0
      %5444 = vmatprep.subr.mxu0 0.0
      %5445 = vmatpush2.msra.mxu0 0.0
      %5446 = vmatprep.subr.mxu0 0.0
      %5447 = vmatpush2.msra.mxu0 0.0
      %5448 = vmatprep.subr.mxu0 0.0
      %5449 = vmatpush2.msra.mxu0 0.0
      %5450 = vmatprep.subr.mxu0 0.0
      %5451 = vmatpush2.msra.mxu0 0.0
      %5452 = vmatprep.subr.mxu0 0.0
      %5453 = vmatpush2.msra.mxu0 0.0
      %5454 = vmatprep.subr.mxu0 0.0
      %5455 = vmatpush2.msra.mxu0 0.0
      %5456 = vmatprep.subr.mxu0 0.0
      %5457 = vmatpush2.msra.mxu0 0.0
      %5458 = vmatprep.subr.mxu0 0.0
      %5459 = vmatpush2.msra.mxu0 0.0
      %5460 = vmatprep.subr.mxu0 0.0
      %5461 = vmatpush2.msra.mxu0 0.0
      %5462 = vmatprep.subr.mxu0 0.0
      %5463 = vmatpush2.msra.mxu0 0.0
      %5464 = vmatprep.subr.mxu0 0.0
      %5465 = vmatpush2.msra.mxu0 0.0
      %5466 = vmatprep.subr.mxu0 0.0
      %5467 = vmatpush2.msra.mxu0 0.0
      %5468 = vmatprep.subr.mxu0 0.0
      %5469 = vmatpush2.msra.mxu0 0.0
      %5470 = vmatprep.mubr.f32.mxu0 0.0
      %5471 = vmatmul.mubr.f32.gmra.mxu0 %v5383
      %v5472 = vpop.f32.mrf.mxu0
      %v5473 = vadd.f32 0.0, %v5472
      %v5474 = vpop.f32.mrf.mxu0
      %5475 = vmatprep.mubr.f32.mxu0 0.0
      %5476 = vmatmul.mubr.f32.gmra.mxu0 %v5386
      %v5477 = vpop.f32.mrf.mxu0
      %v5478 = vadd.f32 0.0, %v5477
      %v5479 = vpop.f32.mrf.mxu0
      %5480 = vmatprep.mubr.f32.mxu0 0.0
      %5481 = vmatmul.mubr.f32.gmra.mxu0 %v5389
      %v5482 = vpop.f32.mrf.mxu0
      %v5483 = vadd.f32 0.0, %v5482
      %v5484 = vpop.f32.mrf.mxu0
      %5485 = vmatprep.mubr.f32.mxu0 0.0
      %5486 = vmatmul.mubr.f32.gmra.mxu0 %v5392
      %v5487 = vpop.f32.mrf.mxu0
      %v5488 = vadd.f32 0.0, %v5487
      %v5489 = vpop.f32.mrf.mxu0
      %5490 = vmatprep.mubr.f32.mxu0 0.0
      %5491 = vmatmul.mubr.f32.gmra.mxu0 %v5395
      %v5492 = vpop.f32.mrf.mxu0
      %v5493 = vadd.f32 0.0, %v5492
      %v5494 = vpop.f32.mrf.mxu0
      %5495 = vmatprep.mubr.f32.mxu0 0.0
      %5496 = vmatmul.mubr.f32.gmra.mxu0 %v5398
      %v5497 = vpop.f32.mrf.mxu0
      %v5498 = vadd.f32 0.0, %v5497
      %v5499 = vpop.f32.mrf.mxu0
      %5500 = vmatprep.mubr.f32.mxu0 0.0
      %5501 = vmatmul.mubr.f32.gmra.mxu0 %v5401
      %v5502 = vpop.f32.mrf.mxu0
      %v5503 = vadd.f32 0.0, %v5502
      %v5504 = vpop.f32.mrf.mxu0
      %5505 = vmatprep.mubr.f32.mxu0 0.0
      %5506 = vmatmul.mubr.f32.gmra.mxu0 %v5404
      %v5507 = vpop.f32.mrf.mxu0
      %v5508 = vadd.f32 0.0, %v5507
      %v5509 = vpop.f32.mrf.mxu0
      %5510 = vdwg.mxu0
      %v5511 = vadd.f32 %v4956, %v5473
      %v5512 = vadd.f32 %v4957, %v5478
      %v5513 = vadd.f32 %v4958, %v5483
      %v5514 = vadd.f32 %v4959, %v5488
      %v5515 = vadd.f32 %v4960, %v5493
      %v5516 = vadd.f32 %v4961, %v5498
      %v5517 = vadd.f32 %v4962, %v5503
      %v5518 = vadd.f32 %v4963, %v5508
      %5519 = vrot.lane.b32.xlu0 %v4367, 112
      %v5520 = vpop.permute.xlu0 %5519
      %5521 = vrot.lane.b32.xlu0 %v4372, 112
      %v5522 = vpop.permute.xlu0 %5521
      %5523 = vrot.lane.b32.xlu0 %v4377, 112
      %v5524 = vpop.permute.xlu0 %5523
      %5525 = vrot.lane.b32.xlu0 %v4382, 112
      %v5526 = vpop.permute.xlu0 %5525
      %5527 = vrot.lane.b32.xlu0 %v4387, 112
      %v5528 = vpop.permute.xlu0 %5527
      %5529 = vrot.lane.b32.xlu0 %v4392, 112
      %v5530 = vpop.permute.xlu0 %5529
      %5531 = vrot.lane.b32.xlu0 %v4397, 112
      %v5532 = vpop.permute.xlu0 %5531
      %5533 = vrot.lane.b32.xlu0 %v4402, 112
      %v5534 = vpop.permute.xlu0 %5533
      %5535 = vrot.lane.b32.xlu0 %v4367, 80
      %v5536 = vpop.permute.xlu0 %5535
      %5537 = vrot.lane.b32.xlu0 %v4372, 80
      %v5538 = vpop.permute.xlu0 %5537
      %5539 = vrot.lane.b32.xlu0 %v4377, 80
      %v5540 = vpop.permute.xlu0 %5539
      %5541 = vrot.lane.b32.xlu0 %v4382, 80
      %v5542 = vpop.permute.xlu0 %5541
      %5543 = vrot.lane.b32.xlu0 %v4387, 80
      %v5544 = vpop.permute.xlu0 %5543
      %5545 = vrot.lane.b32.xlu0 %v4392, 80
      %v5546 = vpop.permute.xlu0 %5545
      %5547 = vrot.lane.b32.xlu0 %v4397, 80
      %v5548 = vpop.permute.xlu0 %5547
      %5549 = vrot.lane.b32.xlu0 %v4402, 80
      %v5550 = vpop.permute.xlu0 %5549
      %v5551 = vsel %vm1468, %v5520, 0
      %v5553 = vsel %vm1468, %v5522, 0
      %v5555 = vsel %vm1468, %v5524, 0
      %v5557 = vsel %vm1468, %v5526, 0
      %v5559 = vsel %vm1468, %v5528, 0
      %v5561 = vsel %vm1468, %v5530, 0
      %v5563 = vsel %vm1468, %v5532, 0
      %v5565 = vsel %vm1468, %v5534, 0
      %v5567 = vsel %vm1468, %v5536, 0
      %v5569 = vsel %vm1468, %v5538, 0
      %v5571 = vsel %vm1468, %v5540, 0
      %v5573 = vsel %vm1468, %v5542, 0
      %v5575 = vsel %vm1468, %v5544, 0
      %v5577 = vsel %vm1468, %v5546, 0
      %v5579 = vsel %vm1468, %v5548, 0
      %v5581 = vsel %vm1468, %v5550, 0
      %5583 = vmatprep.subr.mxu0 0.0
      %5584 = vmatpush1.xpose.msra.mxu0 0.0
      %5585 = vmatprep.subr.mxu0 0.0
      %5586 = vmatpush1.xpose.msra.mxu0 0.0
      %5587 = vmatprep.subr.mxu0 0.0
      %5588 = vmatpush1.xpose.msra.mxu0 0.0
      %5589 = vmatprep.subr.mxu0 0.0
      %5590 = vmatpush1.xpose.msra.mxu0 0.0
      %5591 = vmatprep.subr.mxu0 0.0
      %5592 = vmatpush1.xpose.msra.mxu0 0.0
      %5593 = vmatprep.subr.mxu0 0.0
      %5594 = vmatpush1.xpose.msra.mxu0 0.0
      %5595 = vmatprep.subr.mxu0 0.0
      %5596 = vmatpush1.xpose.msra.mxu0 0.0
      %5597 = vmatprep.subr.mxu0 0.0
      %5598 = vmatpush1.xpose.msra.mxu0 0.0
      %5599 = vmatprep.subr.mxu0 0.0
      %5600 = vmatpush1.xpose.msra.mxu0 %v5581
      %5601 = vmatprep.subr.mxu0 0.0
      %5602 = vmatpush1.xpose.msra.mxu0 %v5579
      %5603 = vmatprep.subr.mxu0 0.0
      %5604 = vmatpush1.xpose.msra.mxu0 %v5577
      %5605 = vmatprep.subr.mxu0 0.0
      %5606 = vmatpush1.xpose.msra.mxu0 %v5575
      %5607 = vmatprep.subr.mxu0 0.0
      %5608 = vmatpush1.xpose.msra.mxu0 %v5573
      %5609 = vmatprep.subr.mxu0 0.0
      %5610 = vmatpush1.xpose.msra.mxu0 %v5571
      %5611 = vmatprep.subr.mxu0 0.0
      %5612 = vmatpush1.xpose.msra.mxu0 %v5569
      %5613 = vmatprep.subr.mxu0 0.0
      %5614 = vmatpush1.xpose.msra.mxu0 %v5567
      %5615 = vmatprep.subr.mxu0 0.0
      %5616 = vmatpush2.xpose.msra.mxu0 0.0
      %5617 = vmatprep.subr.mxu0 0.0
      %5618 = vmatpush2.xpose.msra.mxu0 0.0
      %5619 = vmatprep.subr.mxu0 0.0
      %5620 = vmatpush2.xpose.msra.mxu0 0.0
      %5621 = vmatprep.subr.mxu0 0.0
      %5622 = vmatpush2.xpose.msra.mxu0 0.0
      %5623 = vmatprep.subr.mxu0 0.0
      %5624 = vmatpush2.xpose.msra.mxu0 0.0
      %5625 = vmatprep.subr.mxu0 0.0
      %5626 = vmatpush2.xpose.msra.mxu0 0.0
      %5627 = vmatprep.subr.mxu0 0.0
      %5628 = vmatpush2.xpose.msra.mxu0 0.0
      %5629 = vmatprep.subr.mxu0 0.0
      %5630 = vmatpush2.xpose.msra.mxu0 0.0
      %5631 = vmatprep.subr.mxu0 0.0
      %5632 = vmatpush2.xpose.msra.mxu0 0.0
      %5633 = vmatprep.subr.mxu0 0.0
      %5634 = vmatpush2.xpose.msra.mxu0 0.0
      %5635 = vmatprep.subr.mxu0 0.0
      %5636 = vmatpush2.xpose.msra.mxu0 0.0
      %5637 = vmatprep.subr.mxu0 0.0
      %5638 = vmatpush2.xpose.msra.mxu0 0.0
      %5639 = vmatprep.subr.mxu0 0.0
      %5640 = vmatpush2.xpose.msra.mxu0 0.0
      %5641 = vmatprep.subr.mxu0 0.0
      %5642 = vmatpush2.xpose.msra.mxu0 0.0
      %5643 = vmatprep.subr.mxu0 0.0
      %5644 = vmatpush2.xpose.msra.mxu0 0.0
      %5645 = vmatprep.subr.mxu0 0.0
      %5646 = vmatpush2.xpose.msra.mxu0 0.0
      %5647 = vmatprep.mubr.f32.mxu0 0.0
      %5648 = vmatmul.mubr.f32.gmra.mxu0 %v5551
      %v5649 = vpop.f32.mrf.mxu0
      %v5650 = vadd.f32 0.0, %v5649
      %v5651 = vpop.f32.mrf.mxu0
      %5652 = vmatprep.mubr.f32.mxu0 0.0
      %5653 = vmatmul.mubr.f32.gmra.mxu0 %v5553
      %v5654 = vpop.f32.mrf.mxu0
      %v5655 = vadd.f32 0.0, %v5654
      %v5656 = vpop.f32.mrf.mxu0
      %5657 = vmatprep.mubr.f32.mxu0 0.0
      %5658 = vmatmul.mubr.f32.gmra.mxu0 %v5555
      %v5659 = vpop.f32.mrf.mxu0
      %v5660 = vadd.f32 0.0, %v5659
      %v5661 = vpop.f32.mrf.mxu0
      %5662 = vmatprep.mubr.f32.mxu0 0.0
      %5663 = vmatmul.mubr.f32.gmra.mxu0 %v5557
      %v5664 = vpop.f32.mrf.mxu0
      %v5665 = vadd.f32 0.0, %v5664
      %v5666 = vpop.f32.mrf.mxu0
      %5667 = vmatprep.mubr.f32.mxu0 0.0
      %5668 = vmatmul.mubr.f32.gmra.mxu0 %v5559
      %v5669 = vpop.f32.mrf.mxu0
      %v5670 = vadd.f32 0.0, %v5669
      %v5671 = vpop.f32.mrf.mxu0
      %5672 = vmatprep.mubr.f32.mxu0 0.0
      %5673 = vmatmul.mubr.f32.gmra.mxu0 %v5561
      %v5674 = vpop.f32.mrf.mxu0
      %v5675 = vadd.f32 0.0, %v5674
      %v5676 = vpop.f32.mrf.mxu0
      %5677 = vmatprep.mubr.f32.mxu0 0.0
      %5678 = vmatmul.mubr.f32.gmra.mxu0 %v5563
      %v5679 = vpop.f32.mrf.mxu0
      %v5680 = vadd.f32 0.0, %v5679
      %v5681 = vpop.f32.mrf.mxu0
      %5682 = vmatprep.mubr.f32.mxu0 0.0
      %5683 = vmatmul.mubr.f32.gmra.mxu0 %v5565
      %v5684 = vpop.f32.mrf.mxu0
      %v5685 = vadd.f32 0.0, %v5684
      %v5686 = vpop.f32.mrf.mxu0
      %5687 = vdwg.mxu0
      %v5688 = vmul.f32 %v5650, 0.35355338
      %v5689 = vmul.f32 %v5655, 0.35355338
      %v5690 = vmul.f32 %v5660, 0.35355338
      %v5691 = vmul.f32 %v5665, 0.35355338
      %v5692 = vmul.f32 %v5670, 0.35355338
      %v5693 = vmul.f32 %v5675, 0.35355338
      %v5694 = vmul.f32 %v5680, 0.35355338
      %v5695 = vmul.f32 %v5685, 0.35355338
      %v5696 = vsel %vm1010, %v5688, -inf
      %5697 = vmax.xlane.f32.xlu0 %v5696
      %v5698 = vpop.xlane.xlu0 %5697
      %v5699 = vsel %vm1010, %v5689, -inf
      %5700 = vmax.xlane.f32.xlu0 %v5699
      %v5701 = vpop.xlane.xlu0 %5700
      %v5702 = vsel %vm1010, %v5690, -inf
      %5703 = vmax.xlane.f32.xlu0 %v5702
      %v5704 = vpop.xlane.xlu0 %5703
      %v5705 = vsel %vm1010, %v5691, -inf
      %5706 = vmax.xlane.f32.xlu0 %v5705
      %v5707 = vpop.xlane.xlu0 %5706
      %v5708 = vsel %vm1010, %v5692, -inf
      %5709 = vmax.xlane.f32.xlu0 %v5708
      %v5710 = vpop.xlane.xlu0 %5709
      %v5711 = vsel %vm1010, %v5693, -inf
      %5712 = vmax.xlane.f32.xlu0 %v5711
      %v5713 = vpop.xlane.xlu0 %5712
      %v5714 = vsel %vm1010, %v5694, -inf
      %5715 = vmax.xlane.f32.xlu0 %v5714
      %v5716 = vpop.xlane.xlu0 %5715
      %v5717 = vsel %vm1010, %v5695, -inf
      %5718 = vmax.xlane.f32.xlu0 %v5717
      %v5719 = vpop.xlane.xlu0 %5718
      %v5720 = vsub.f32 %v5688, %v5698
      %v5721 = vsub.f32 %v5689, %v5701
      %v5722 = vsub.f32 %v5690, %v5704
      %v5723 = vsub.f32 %v5691, %v5707
      %v5724 = vsub.f32 %v5692, %v5710
      %v5725 = vsub.f32 %v5693, %v5713
      %v5726 = vsub.f32 %v5694, %v5716
      %v5727 = vsub.f32 %v5695, %v5719
      %v5728 = vmul.f32 %v5720, 1.442695
      %v5729 = vpow.pop %v5728
      %v5730 = vmul.f32 %v5721, 1.442695
      %v5731 = vpow.pop %v5730
      %v5732 = vmul.f32 %v5722, 1.442695
      %v5733 = vpow.pop %v5732
      %v5734 = vmul.f32 %v5723, 1.442695
      %v5735 = vpow.pop %v5734
      %v5736 = vmul.f32 %v5724, 1.442695
      %v5737 = vpow.pop %v5736
      %v5738 = vmul.f32 %v5725, 1.442695
      %v5739 = vpow.pop %v5738
      %v5740 = vmul.f32 %v5726, 1.442695
      %v5741 = vpow.pop %v5740
      %v5742 = vmul.f32 %v5727, 1.442695
      %v5743 = vpow.pop %v5742
      %v5744 = vsel %vm1010, %v5729, 0.0
      %5745 = vadd.xlane.f32.xlu0 %v5744
      %v5746 = vpop.xlane.xlu0 %5745
      %v5747 = vsel %vm1010, %v5731, 0.0
      %5748 = vadd.xlane.f32.xlu0 %v5747
      %v5749 = vpop.xlane.xlu0 %5748
      %v5750 = vsel %vm1010, %v5733, 0.0
      %5751 = vadd.xlane.f32.xlu0 %v5750
      %v5752 = vpop.xlane.xlu0 %5751
      %v5753 = vsel %vm1010, %v5735, 0.0
      %5754 = vadd.xlane.f32.xlu0 %v5753
      %v5755 = vpop.xlane.xlu0 %5754
      %v5756 = vsel %vm1010, %v5737, 0.0
      %5757 = vadd.xlane.f32.xlu0 %v5756
      %v5758 = vpop.xlane.xlu0 %5757
      %v5759 = vsel %vm1010, %v5739, 0.0
      %5760 = vadd.xlane.f32.xlu0 %v5759
      %v5761 = vpop.xlane.xlu0 %5760
      %v5762 = vsel %vm1010, %v5741, 0.0
      %5763 = vadd.xlane.f32.xlu0 %v5762
      %v5764 = vpop.xlane.xlu0 %5763
      %v5765 = vsel %vm1010, %v5743, 0.0
      %5766 = vadd.xlane.f32.xlu0 %v5765
      %v5767 = vpop.xlane.xlu0 %5766
      %v5768 = vrcp.pop %v5746
      %v5769 = vrcp.pop %v5749
      %v5770 = vrcp.pop %v5752
      %v5771 = vrcp.pop %v5755
      %v5772 = vrcp.pop %v5758
      %v5773 = vrcp.pop %v5761
      %v5774 = vrcp.pop %v5764
      %v5775 = vrcp.pop %v5767
      %v5776 = vmul.f32 %v5729, %v5768
      %v5777 = vmul.f32 %v5731, %v5769
      %v5778 = vmul.f32 %v5733, %v5770
      %v5779 = vmul.f32 %v5735, %v5771
      %v5780 = vmul.f32 %v5737, %v5772
      %v5781 = vmul.f32 %v5739, %v5773
      %v5782 = vmul.f32 %v5741, %v5774
      %v5783 = vmul.f32 %v5743, %v5775
      %5784 = vrot.lane.b32.xlu0 %v4367, 48
      %v5785 = vpop.permute.xlu0 %5784
      %5786 = vrot.lane.b32.xlu0 %v4372, 48
      %v5787 = vpop.permute.xlu0 %5786
      %5788 = vrot.lane.b32.xlu0 %v4377, 48
      %v5789 = vpop.permute.xlu0 %5788
      %5790 = vrot.lane.b32.xlu0 %v4382, 48
      %v5791 = vpop.permute.xlu0 %5790
      %5792 = vrot.lane.b32.xlu0 %v4387, 48
      %v5793 = vpop.permute.xlu0 %5792
      %5794 = vrot.lane.b32.xlu0 %v4392, 48
      %v5795 = vpop.permute.xlu0 %5794
      %5796 = vrot.lane.b32.xlu0 %v4397, 48
      %v5797 = vpop.permute.xlu0 %5796
      %5798 = vrot.lane.b32.xlu0 %v4402, 48
      %v5799 = vpop.permute.xlu0 %5798
      %v5809 = vsel %vm1010, %v5776, 0
      %v5812 = vsel %vm1010, %v5777, 0
      %v5815 = vsel %vm1010, %v5778, 0
      %v5818 = vsel %vm1010, %v5779, 0
      %v5821 = vsel %vm1010, %v5780, 0
      %v5824 = vsel %vm1010, %v5781, 0
      %v5827 = vsel %vm1010, %v5782, 0
      %v5830 = vsel %vm1010, %v5783, 0
      %5832 = vmatprep.subr.mxu0 0.0
      %5833 = vmatpush1.msra.mxu0 0.0
      %5834 = vmatprep.subr.mxu0 0.0
      %5835 = vmatpush1.msra.mxu0 0.0
      %5836 = vmatprep.subr.mxu0 0.0
      %5837 = vmatpush1.msra.mxu0 0.0
      %5838 = vmatprep.subr.mxu0 0.0
      %5839 = vmatpush1.msra.mxu0 0.0
      %5840 = vmatprep.subr.mxu0 0.0
      %5841 = vmatpush1.msra.mxu0 0.0
      %5842 = vmatprep.subr.mxu0 0.0
      %5843 = vmatpush1.msra.mxu0 0.0
      %5844 = vmatprep.subr.mxu0 0.0
      %5845 = vmatpush1.msra.mxu0 0.0
      %5846 = vmatprep.subr.mxu0 0.0
      %5847 = vmatpush1.msra.mxu0 0.0
      %5848 = vmatprep.subr.mxu0 0.0
      %5849 = vmatpush1.msra.mxu0 %v5799
      %5850 = vmatprep.subr.mxu0 0.0
      %5851 = vmatpush1.msra.mxu0 %v5797
      %5852 = vmatprep.subr.mxu0 0.0
      %5853 = vmatpush1.msra.mxu0 %v5795
      %5854 = vmatprep.subr.mxu0 0.0
      %5855 = vmatpush1.msra.mxu0 %v5793
      %5856 = vmatprep.subr.mxu0 0.0
      %5857 = vmatpush1.msra.mxu0 %v5791
      %5858 = vmatprep.subr.mxu0 0.0
      %5859 = vmatpush1.msra.mxu0 %v5789
      %5860 = vmatprep.subr.mxu0 0.0
      %5861 = vmatpush1.msra.mxu0 %v5787
      %5862 = vmatprep.subr.mxu0 0.0
      %5863 = vmatpush1.msra.mxu0 %v5785
      %5864 = vmatprep.subr.mxu0 0.0
      %5865 = vmatpush2.msra.mxu0 0.0
      %5866 = vmatprep.subr.mxu0 0.0
      %5867 = vmatpush2.msra.mxu0 0.0
      %5868 = vmatprep.subr.mxu0 0.0
      %5869 = vmatpush2.msra.mxu0 0.0
      %5870 = vmatprep.subr.mxu0 0.0
      %5871 = vmatpush2.msra.mxu0 0.0
      %5872 = vmatprep.subr.mxu0 0.0
      %5873 = vmatpush2.msra.mxu0 0.0
      %5874 = vmatprep.subr.mxu0 0.0
      %5875 = vmatpush2.msra.mxu0 0.0
      %5876 = vmatprep.subr.mxu0 0.0
      %5877 = vmatpush2.msra.mxu0 0.0
      %5878 = vmatprep.subr.mxu0 0.0
      %5879 = vmatpush2.msra.mxu0 0.0
      %5880 = vmatprep.subr.mxu0 0.0
      %5881 = vmatpush2.msra.mxu0 0.0
      %5882 = vmatprep.subr.mxu0 0.0
      %5883 = vmatpush2.msra.mxu0 0.0
      %5884 = vmatprep.subr.mxu0 0.0
      %5885 = vmatpush2.msra.mxu0 0.0
      %5886 = vmatprep.subr.mxu0 0.0
      %5887 = vmatpush2.msra.mxu0 0.0
      %5888 = vmatprep.subr.mxu0 0.0
      %5889 = vmatpush2.msra.mxu0 0.0
      %5890 = vmatprep.subr.mxu0 0.0
      %5891 = vmatpush2.msra.mxu0 0.0
      %5892 = vmatprep.subr.mxu0 0.0
      %5893 = vmatpush2.msra.mxu0 0.0
      %5894 = vmatprep.subr.mxu0 0.0
      %5895 = vmatpush2.msra.mxu0 0.0
      %5896 = vmatprep.mubr.f32.mxu0 0.0
      %5897 = vmatmul.mubr.f32.gmra.mxu0 %v5809
      %v5898 = vpop.f32.mrf.mxu0
      %v5899 = vadd.f32 0.0, %v5898
      %v5900 = vpop.f32.mrf.mxu0
      %5901 = vmatprep.mubr.f32.mxu0 0.0
      %5902 = vmatmul.mubr.f32.gmra.mxu0 %v5812
      %v5903 = vpop.f32.mrf.mxu0
      %v5904 = vadd.f32 0.0, %v5903
      %v5905 = vpop.f32.mrf.mxu0
      %5906 = vmatprep.mubr.f32.mxu0 0.0
      %5907 = vmatmul.mubr.f32.gmra.mxu0 %v5815
      %v5908 = vpop.f32.mrf.mxu0
      %v5909 = vadd.f32 0.0, %v5908
      %v5910 = vpop.f32.mrf.mxu0
      %5911 = vmatprep.mubr.f32.mxu0 0.0
      %5912 = vmatmul.mubr.f32.gmra.mxu0 %v5818
      %v5913 = vpop.f32.mrf.mxu0
      %v5914 = vadd.f32 0.0, %v5913
      %v5915 = vpop.f32.mrf.mxu0
      %5916 = vmatprep.mubr.f32.mxu0 0.0
      %5917 = vmatmul.mubr.f32.gmra.mxu0 %v5821
      %v5918 = vpop.f32.mrf.mxu0
      %v5919 = vadd.f32 0.0, %v5918
      %v5920 = vpop.f32.mrf.mxu0
      %5921 = vmatprep.mubr.f32.mxu0 0.0
      %5922 = vmatmul.mubr.f32.gmra.mxu0 %v5824
      %v5923 = vpop.f32.mrf.mxu0
      %v5924 = vadd.f32 0.0, %v5923
      %v5925 = vpop.f32.mrf.mxu0
      %5926 = vmatprep.mubr.f32.mxu0 0.0
      %5927 = vmatmul.mubr.f32.gmra.mxu0 %v5827
      %v5928 = vpop.f32.mrf.mxu0
      %v5929 = vadd.f32 0.0, %v5928
      %v5930 = vpop.f32.mrf.mxu0
      %5931 = vmatprep.mubr.f32.mxu0 0.0
      %5932 = vmatmul.mubr.f32.gmra.mxu0 %v5830
      %v5933 = vpop.f32.mrf.mxu0
      %v5934 = vadd.f32 0.0, %v5933
      %v5935 = vpop.f32.mrf.mxu0
      %5936 = vdwg.mxu0
      %v5938 = vsel %vm1468, %v5899, 0
      %v5941 = vsel %vm1468, %v5904, 0
      %v5944 = vsel %vm1468, %v5909, 0
      %v5947 = vsel %vm1468, %v5914, 0
      %v5950 = vsel %vm1468, %v5919, 0
      %v5953 = vsel %vm1468, %v5924, 0
      %v5956 = vsel %vm1468, %v5929, 0
      %v5959 = vsel %vm1468, %v5934, 0
      %5961 = vmatprep.subr.mxu0 0.0
      %5962 = vmatpush1.msra.mxu0 0.0
      %5963 = vmatprep.subr.mxu0 0.0
      %5964 = vmatpush1.msra.mxu0 0.0
      %5965 = vmatprep.subr.mxu0 0.0
      %5966 = vmatpush1.msra.mxu0 0.0
      %5967 = vmatprep.subr.mxu0 0.0
      %5968 = vmatpush1.msra.mxu0 0.0
      %5969 = vmatprep.subr.mxu0 0.0
      %5970 = vmatpush1.msra.mxu0 0.0
      %5971 = vmatprep.subr.mxu0 0.0
      %5972 = vmatpush1.msra.mxu0 0.0
      %5973 = vmatprep.subr.mxu0 0.0
      %5974 = vmatpush1.msra.mxu0 0.0
      %5975 = vmatprep.subr.mxu0 0.0
      %5976 = vmatpush1.msra.mxu0 0.0
      %5977 = vmatprep.subr.mxu0 0.0
      %5978 = vmatpush1.msra.mxu0 0.0
      %5979 = vmatprep.subr.mxu0 0.0
      %5980 = vmatpush1.msra.mxu0 0.0
      %5981 = vmatprep.subr.mxu0 0.0
      %5982 = vmatpush1.msra.mxu0 0.0
      %5983 = vmatprep.subr.mxu0 0.0
      %5984 = vmatpush1.msra.mxu0 0.0
      %5985 = vmatprep.subr.mxu0 0.0
      %5986 = vmatpush1.msra.mxu0 0.0
      %5987 = vmatprep.subr.mxu0 0.0
      %5988 = vmatpush1.msra.mxu0 0.0
      %5989 = vmatprep.subr.mxu0 0.0
      %5990 = vmatpush1.msra.mxu0 0.0
      %5991 = vmatprep.subr.mxu0 0.0
      %5992 = vmatpush1.msra.mxu0 %v4407
      %5993 = vmatprep.subr.mxu0 0.0
      %5994 = vmatpush2.msra.mxu0 0.0
      %5995 = vmatprep.subr.mxu0 0.0
      %5996 = vmatpush2.msra.mxu0 0.0
      %5997 = vmatprep.subr.mxu0 0.0
      %5998 = vmatpush2.msra.mxu0 0.0
      %5999 = vmatprep.subr.mxu0 0.0
      %6000 = vmatpush2.msra.mxu0 0.0
      %6001 = vmatprep.subr.mxu0 0.0
      %6002 = vmatpush2.msra.mxu0 0.0
      %6003 = vmatprep.subr.mxu0 0.0
      %6004 = vmatpush2.msra.mxu0 0.0
      %6005 = vmatprep.subr.mxu0 0.0
      %6006 = vmatpush2.msra.mxu0 0.0
      %6007 = vmatprep.subr.mxu0 0.0
      %6008 = vmatpush2.msra.mxu0 0.0
      %6009 = vmatprep.subr.mxu0 0.0
      %6010 = vmatpush2.msra.mxu0 0.0
      %6011 = vmatprep.subr.mxu0 0.0
      %6012 = vmatpush2.msra.mxu0 0.0
      %6013 = vmatprep.subr.mxu0 0.0
      %6014 = vmatpush2.msra.mxu0 0.0
      %6015 = vmatprep.subr.mxu0 0.0
      %6016 = vmatpush2.msra.mxu0 0.0
      %6017 = vmatprep.subr.mxu0 0.0
      %6018 = vmatpush2.msra.mxu0 0.0
      %6019 = vmatprep.subr.mxu0 0.0
      %6020 = vmatpush2.msra.mxu0 0.0
      %6021 = vmatprep.subr.mxu0 0.0
      %6022 = vmatpush2.msra.mxu0 0.0
      %6023 = vmatprep.subr.mxu0 0.0
      %6024 = vmatpush2.msra.mxu0 0.0
      %6025 = vmatprep.mubr.f32.mxu0 0.0
      %6026 = vmatmul.mubr.f32.gmra.mxu0 %v5938
      %v6027 = vpop.f32.mrf.mxu0
      %v6028 = vadd.f32 0.0, %v6027
      %v6029 = vpop.f32.mrf.mxu0
      %6030 = vmatprep.mubr.f32.mxu0 0.0
      %6031 = vmatmul.mubr.f32.gmra.mxu0 %v5941
      %v6032 = vpop.f32.mrf.mxu0
      %v6033 = vadd.f32 0.0, %v6032
      %v6034 = vpop.f32.mrf.mxu0
      %6035 = vmatprep.mubr.f32.mxu0 0.0
      %6036 = vmatmul.mubr.f32.gmra.mxu0 %v5944
      %v6037 = vpop.f32.mrf.mxu0
      %v6038 = vadd.f32 0.0, %v6037
      %v6039 = vpop.f32.mrf.mxu0
      %6040 = vmatprep.mubr.f32.mxu0 0.0
      %6041 = vmatmul.mubr.f32.gmra.mxu0 %v5947
      %v6042 = vpop.f32.mrf.mxu0
      %v6043 = vadd.f32 0.0, %v6042
      %v6044 = vpop.f32.mrf.mxu0
      %6045 = vmatprep.mubr.f32.mxu0 0.0
      %6046 = vmatmul.mubr.f32.gmra.mxu0 %v5950
      %v6047 = vpop.f32.mrf.mxu0
      %v6048 = vadd.f32 0.0, %v6047
      %v6049 = vpop.f32.mrf.mxu0
      %6050 = vmatprep.mubr.f32.mxu0 0.0
      %6051 = vmatmul.mubr.f32.gmra.mxu0 %v5953
      %v6052 = vpop.f32.mrf.mxu0
      %v6053 = vadd.f32 0.0, %v6052
      %v6054 = vpop.f32.mrf.mxu0
      %6055 = vmatprep.mubr.f32.mxu0 0.0
      %6056 = vmatmul.mubr.f32.gmra.mxu0 %v5956
      %v6057 = vpop.f32.mrf.mxu0
      %v6058 = vadd.f32 0.0, %v6057
      %v6059 = vpop.f32.mrf.mxu0
      %6060 = vmatprep.mubr.f32.mxu0 0.0
      %6061 = vmatmul.mubr.f32.gmra.mxu0 %v5959
      %v6062 = vpop.f32.mrf.mxu0
      %v6063 = vadd.f32 0.0, %v6062
      %v6064 = vpop.f32.mrf.mxu0
      %6065 = vdwg.mxu0
      %v6066 = vadd.f32 %v5511, %v6028
      %v6067 = vadd.f32 %v5512, %v6033
      %v6068 = vadd.f32 %v5513, %v6038
      %v6069 = vadd.f32 %v5514, %v6043
      %v6070 = vadd.f32 %v5515, %v6048
      %v6071 = vadd.f32 %v5516, %v6053
      %v6072 = vadd.f32 %v5517, %v6058
      %v6073 = vadd.f32 %v5518, %v6063
      %6074 = vrot.lane.b32.xlu0 %v4367, 104
      %v6075 = vpop.permute.xlu0 %6074
      %6076 = vrot.lane.b32.xlu0 %v4372, 104
      %v6077 = vpop.permute.xlu0 %6076
      %6078 = vrot.lane.b32.xlu0 %v4377, 104
      %v6079 = vpop.permute.xlu0 %6078
      %6080 = vrot.lane.b32.xlu0 %v4382, 104
      %v6081 = vpop.permute.xlu0 %6080
      %6082 = vrot.lane.b32.xlu0 %v4387, 104
      %v6083 = vpop.permute.xlu0 %6082
      %6084 = vrot.lane.b32.xlu0 %v4392, 104
      %v6085 = vpop.permute.xlu0 %6084
      %6086 = vrot.lane.b32.xlu0 %v4397, 104
      %v6087 = vpop.permute.xlu0 %6086
      %6088 = vrot.lane.b32.xlu0 %v4402, 104
      %v6089 = vpop.permute.xlu0 %6088
      %6090 = vrot.lane.b32.xlu0 %v4367, 72
      %v6091 = vpop.permute.xlu0 %6090
      %6092 = vrot.lane.b32.xlu0 %v4372, 72
      %v6093 = vpop.permute.xlu0 %6092
      %6094 = vrot.lane.b32.xlu0 %v4377, 72
      %v6095 = vpop.permute.xlu0 %6094
      %6096 = vrot.lane.b32.xlu0 %v4382, 72
      %v6097 = vpop.permute.xlu0 %6096
      %6098 = vrot.lane.b32.xlu0 %v4387, 72
      %v6099 = vpop.permute.xlu0 %6098
      %6100 = vrot.lane.b32.xlu0 %v4392, 72
      %v6101 = vpop.permute.xlu0 %6100
      %6102 = vrot.lane.b32.xlu0 %v4397, 72
      %v6103 = vpop.permute.xlu0 %6102
      %6104 = vrot.lane.b32.xlu0 %v4402, 72
      %v6105 = vpop.permute.xlu0 %6104
      %v6106 = vsel %vm1468, %v6075, 0
      %v6108 = vsel %vm1468, %v6077, 0
      %v6110 = vsel %vm1468, %v6079, 0
      %v6112 = vsel %vm1468, %v6081, 0
      %v6114 = vsel %vm1468, %v6083, 0
      %v6116 = vsel %vm1468, %v6085, 0
      %v6118 = vsel %vm1468, %v6087, 0
      %v6120 = vsel %vm1468, %v6089, 0
      %v6122 = vsel %vm1468, %v6091, 0
      %v6124 = vsel %vm1468, %v6093, 0
      %v6126 = vsel %vm1468, %v6095, 0
      %v6128 = vsel %vm1468, %v6097, 0
      %v6130 = vsel %vm1468, %v6099, 0
      %v6132 = vsel %vm1468, %v6101, 0
      %v6134 = vsel %vm1468, %v6103, 0
      %v6136 = vsel %vm1468, %v6105, 0
      %6138 = vmatprep.subr.mxu0 0.0
      %6139 = vmatpush1.xpose.msra.mxu0 0.0
      %6140 = vmatprep.subr.mxu0 0.0
      %6141 = vmatpush1.xpose.msra.mxu0 0.0
      %6142 = vmatprep.subr.mxu0 0.0
      %6143 = vmatpush1.xpose.msra.mxu0 0.0
      %6144 = vmatprep.subr.mxu0 0.0
      %6145 = vmatpush1.xpose.msra.mxu0 0.0
      %6146 = vmatprep.subr.mxu0 0.0
      %6147 = vmatpush1.xpose.msra.mxu0 0.0
      %6148 = vmatprep.subr.mxu0 0.0
      %6149 = vmatpush1.xpose.msra.mxu0 0.0
      %6150 = vmatprep.subr.mxu0 0.0
      %6151 = vmatpush1.xpose.msra.mxu0 0.0
      %6152 = vmatprep.subr.mxu0 0.0
      %6153 = vmatpush1.xpose.msra.mxu0 0.0
      %6154 = vmatprep.subr.mxu0 0.0
      %6155 = vmatpush1.xpose.msra.mxu0 %v6136
      %6156 = vmatprep.subr.mxu0 0.0
      %6157 = vmatpush1.xpose.msra.mxu0 %v6134
      %6158 = vmatprep.subr.mxu0 0.0
      %6159 = vmatpush1.xpose.msra.mxu0 %v6132
      %6160 = vmatprep.subr.mxu0 0.0
      %6161 = vmatpush1.xpose.msra.mxu0 %v6130
      %6162 = vmatprep.subr.mxu0 0.0
      %6163 = vmatpush1.xpose.msra.mxu0 %v6128
      %6164 = vmatprep.subr.mxu0 0.0
      %6165 = vmatpush1.xpose.msra.mxu0 %v6126
      %6166 = vmatprep.subr.mxu0 0.0
      %6167 = vmatpush1.xpose.msra.mxu0 %v6124
      %6168 = vmatprep.subr.mxu0 0.0
      %6169 = vmatpush1.xpose.msra.mxu0 %v6122
      %6170 = vmatprep.subr.mxu0 0.0
      %6171 = vmatpush2.xpose.msra.mxu0 0.0
      %6172 = vmatprep.subr.mxu0 0.0
      %6173 = vmatpush2.xpose.msra.mxu0 0.0
      %6174 = vmatprep.subr.mxu0 0.0
      %6175 = vmatpush2.xpose.msra.mxu0 0.0
      %6176 = vmatprep.subr.mxu0 0.0
      %6177 = vmatpush2.xpose.msra.mxu0 0.0
      %6178 = vmatprep.subr.mxu0 0.0
      %6179 = vmatpush2.xpose.msra.mxu0 0.0
      %6180 = vmatprep.subr.mxu0 0.0
      %6181 = vmatpush2.xpose.msra.mxu0 0.0
      %6182 = vmatprep.subr.mxu0 0.0
      %6183 = vmatpush2.xpose.msra.mxu0 0.0
      %6184 = vmatprep.subr.mxu0 0.0
      %6185 = vmatpush2.xpose.msra.mxu0 0.0
      %6186 = vmatprep.subr.mxu0 0.0
      %6187 = vmatpush2.xpose.msra.mxu0 0.0
      %6188 = vmatprep.subr.mxu0 0.0
      %6189 = vmatpush2.xpose.msra.mxu0 0.0
      %6190 = vmatprep.subr.mxu0 0.0
      %6191 = vmatpush2.xpose.msra.mxu0 0.0
      %6192 = vmatprep.subr.mxu0 0.0
      %6193 = vmatpush2.xpose.msra.mxu0 0.0
      %6194 = vmatprep.subr.mxu0 0.0
      %6195 = vmatpush2.xpose.msra.mxu0 0.0
      %6196 = vmatprep.subr.mxu0 0.0
      %6197 = vmatpush2.xpose.msra.mxu0 0.0
      %6198 = vmatprep.subr.mxu0 0.0
      %6199 = vmatpush2.xpose.msra.mxu0 0.0
      %6200 = vmatprep.subr.mxu0 0.0
      %6201 = vmatpush2.xpose.msra.mxu0 0.0
      %6202 = vmatprep.mubr.f32.mxu0 0.0
      %6203 = vmatmul.mubr.f32.gmra.mxu0 %v6106
      %v6204 = vpop.f32.mrf.mxu0
      %v6205 = vadd.f32 0.0, %v6204
      %v6206 = vpop.f32.mrf.mxu0
      %6207 = vmatprep.mubr.f32.mxu0 0.0
      %6208 = vmatmul.mubr.f32.gmra.mxu0 %v6108
      %v6209 = vpop.f32.mrf.mxu0
      %v6210 = vadd.f32 0.0, %v6209
      %v6211 = vpop.f32.mrf.mxu0
      %6212 = vmatprep.mubr.f32.mxu0 0.0
      %6213 = vmatmul.mubr.f32.gmra.mxu0 %v6110
      %v6214 = vpop.f32.mrf.mxu0
      %v6215 = vadd.f32 0.0, %v6214
      %v6216 = vpop.f32.mrf.mxu0
      %6217 = vmatprep.mubr.f32.mxu0 0.0
      %6218 = vmatmul.mubr.f32.gmra.mxu0 %v6112
      %v6219 = vpop.f32.mrf.mxu0
      %v6220 = vadd.f32 0.0, %v6219
      %v6221 = vpop.f32.mrf.mxu0
      %6222 = vmatprep.mubr.f32.mxu0 0.0
      %6223 = vmatmul.mubr.f32.gmra.mxu0 %v6114
      %v6224 = vpop.f32.mrf.mxu0
      %v6225 = vadd.f32 0.0, %v6224
      %v6226 = vpop.f32.mrf.mxu0
      %6227 = vmatprep.mubr.f32.mxu0 0.0
      %6228 = vmatmul.mubr.f32.gmra.mxu0 %v6116
      %v6229 = vpop.f32.mrf.mxu0
      %v6230 = vadd.f32 0.0, %v6229
      %v6231 = vpop.f32.mrf.mxu0
      %6232 = vmatprep.mubr.f32.mxu0 0.0
      %6233 = vmatmul.mubr.f32.gmra.mxu0 %v6118
      %v6234 = vpop.f32.mrf.mxu0
      %v6235 = vadd.f32 0.0, %v6234
      %v6236 = vpop.f32.mrf.mxu0
      %6237 = vmatprep.mubr.f32.mxu0 0.0
      %6238 = vmatmul.mubr.f32.gmra.mxu0 %v6120
      %v6239 = vpop.f32.mrf.mxu0
      %v6240 = vadd.f32 0.0, %v6239
      %v6241 = vpop.f32.mrf.mxu0
      %6242 = vdwg.mxu0
      %v6243 = vmul.f32 %v6205, 0.35355338
      %v6244 = vmul.f32 %v6210, 0.35355338
      %v6245 = vmul.f32 %v6215, 0.35355338
      %v6246 = vmul.f32 %v6220, 0.35355338
      %v6247 = vmul.f32 %v6225, 0.35355338
      %v6248 = vmul.f32 %v6230, 0.35355338
      %v6249 = vmul.f32 %v6235, 0.35355338
      %v6250 = vmul.f32 %v6240, 0.35355338
      %v6251 = vsel %vm1010, %v6243, -inf
      %6252 = vmax.xlane.f32.xlu0 %v6251
      %v6253 = vpop.xlane.xlu0 %6252
      %v6254 = vsel %vm1010, %v6244, -inf
      %6255 = vmax.xlane.f32.xlu0 %v6254
      %v6256 = vpop.xlane.xlu0 %6255
      %v6257 = vsel %vm1010, %v6245, -inf
      %6258 = vmax.xlane.f32.xlu0 %v6257
      %v6259 = vpop.xlane.xlu0 %6258
      %v6260 = vsel %vm1010, %v6246, -inf
      %6261 = vmax.xlane.f32.xlu0 %v6260
      %v6262 = vpop.xlane.xlu0 %6261
      %v6263 = vsel %vm1010, %v6247, -inf
      %6264 = vmax.xlane.f32.xlu0 %v6263
      %v6265 = vpop.xlane.xlu0 %6264
      %v6266 = vsel %vm1010, %v6248, -inf
      %6267 = vmax.xlane.f32.xlu0 %v6266
      %v6268 = vpop.xlane.xlu0 %6267
      %v6269 = vsel %vm1010, %v6249, -inf
      %6270 = vmax.xlane.f32.xlu0 %v6269
      %v6271 = vpop.xlane.xlu0 %6270
      %v6272 = vsel %vm1010, %v6250, -inf
      %6273 = vmax.xlane.f32.xlu0 %v6272
      %v6274 = vpop.xlane.xlu0 %6273
      %v6275 = vsub.f32 %v6243, %v6253
      %v6276 = vsub.f32 %v6244, %v6256
      %v6277 = vsub.f32 %v6245, %v6259
      %v6278 = vsub.f32 %v6246, %v6262
      %v6279 = vsub.f32 %v6247, %v6265
      %v6280 = vsub.f32 %v6248, %v6268
      %v6281 = vsub.f32 %v6249, %v6271
      %v6282 = vsub.f32 %v6250, %v6274
      %v6283 = vmul.f32 %v6275, 1.442695
      %v6284 = vpow.pop %v6283
      %v6285 = vmul.f32 %v6276, 1.442695
      %v6286 = vpow.pop %v6285
      %v6287 = vmul.f32 %v6277, 1.442695
      %v6288 = vpow.pop %v6287
      %v6289 = vmul.f32 %v6278, 1.442695
      %v6290 = vpow.pop %v6289
      %v6291 = vmul.f32 %v6279, 1.442695
      %v6292 = vpow.pop %v6291
      %v6293 = vmul.f32 %v6280, 1.442695
      %v6294 = vpow.pop %v6293
      %v6295 = vmul.f32 %v6281, 1.442695
      %v6296 = vpow.pop %v6295
      %v6297 = vmul.f32 %v6282, 1.442695
      %v6298 = vpow.pop %v6297
      %v6299 = vsel %vm1010, %v6284, 0.0
      %6300 = vadd.xlane.f32.xlu0 %v6299
      %v6301 = vpop.xlane.xlu0 %6300
      %v6302 = vsel %vm1010, %v6286, 0.0
      %6303 = vadd.xlane.f32.xlu0 %v6302
      %v6304 = vpop.xlane.xlu0 %6303
      %v6305 = vsel %vm1010, %v6288, 0.0
      %6306 = vadd.xlane.f32.xlu0 %v6305
      %v6307 = vpop.xlane.xlu0 %6306
      %v6308 = vsel %vm1010, %v6290, 0.0
      %6309 = vadd.xlane.f32.xlu0 %v6308
      %v6310 = vpop.xlane.xlu0 %6309
      %v6311 = vsel %vm1010, %v6292, 0.0
      %6312 = vadd.xlane.f32.xlu0 %v6311
      %v6313 = vpop.xlane.xlu0 %6312
      %v6314 = vsel %vm1010, %v6294, 0.0
      %6315 = vadd.xlane.f32.xlu0 %v6314
      %v6316 = vpop.xlane.xlu0 %6315
      %v6317 = vsel %vm1010, %v6296, 0.0
      %6318 = vadd.xlane.f32.xlu0 %v6317
      %v6319 = vpop.xlane.xlu0 %6318
      %v6320 = vsel %vm1010, %v6298, 0.0
      %6321 = vadd.xlane.f32.xlu0 %v6320
      %v6322 = vpop.xlane.xlu0 %6321
      %v6323 = vrcp.pop %v6301
      %v6324 = vrcp.pop %v6304
      %v6325 = vrcp.pop %v6307
      %v6326 = vrcp.pop %v6310
      %v6327 = vrcp.pop %v6313
      %v6328 = vrcp.pop %v6316
      %v6329 = vrcp.pop %v6319
      %v6330 = vrcp.pop %v6322
      %v6331 = vmul.f32 %v6284, %v6323
      %v6332 = vmul.f32 %v6286, %v6324
      %v6333 = vmul.f32 %v6288, %v6325
      %v6334 = vmul.f32 %v6290, %v6326
      %v6335 = vmul.f32 %v6292, %v6327
      %v6336 = vmul.f32 %v6294, %v6328
      %v6337 = vmul.f32 %v6296, %v6329
      %v6338 = vmul.f32 %v6298, %v6330
      %6339 = vrot.lane.b32.xlu0 %v4367, 40
      %v6340 = vpop.permute.xlu0 %6339
      %6341 = vrot.lane.b32.xlu0 %v4372, 40
      %v6342 = vpop.permute.xlu0 %6341
      %6343 = vrot.lane.b32.xlu0 %v4377, 40
      %v6344 = vpop.permute.xlu0 %6343
      %6345 = vrot.lane.b32.xlu0 %v4382, 40
      %v6346 = vpop.permute.xlu0 %6345
      %6347 = vrot.lane.b32.xlu0 %v4387, 40
      %v6348 = vpop.permute.xlu0 %6347
      %6349 = vrot.lane.b32.xlu0 %v4392, 40
      %v6350 = vpop.permute.xlu0 %6349
      %6351 = vrot.lane.b32.xlu0 %v4397, 40
      %v6352 = vpop.permute.xlu0 %6351
      %6353 = vrot.lane.b32.xlu0 %v4402, 40
      %v6354 = vpop.permute.xlu0 %6353
      %v6364 = vsel %vm1010, %v6331, 0
      %v6367 = vsel %vm1010, %v6332, 0
      %v6370 = vsel %vm1010, %v6333, 0
      %v6373 = vsel %vm1010, %v6334, 0
      %v6376 = vsel %vm1010, %v6335, 0
      %v6379 = vsel %vm1010, %v6336, 0
      %v6382 = vsel %vm1010, %v6337, 0
      %v6385 = vsel %vm1010, %v6338, 0
      %6387 = vmatprep.subr.mxu0 0.0
      %6388 = vmatpush1.msra.mxu0 0.0
      %6389 = vmatprep.subr.mxu0 0.0
      %6390 = vmatpush1.msra.mxu0 0.0
      %6391 = vmatprep.subr.mxu0 0.0
      %6392 = vmatpush1.msra.mxu0 0.0
      %6393 = vmatprep.subr.mxu0 0.0
      %6394 = vmatpush1.msra.mxu0 0.0
      %6395 = vmatprep.subr.mxu0 0.0
      %6396 = vmatpush1.msra.mxu0 0.0
      %6397 = vmatprep.subr.mxu0 0.0
      %6398 = vmatpush1.msra.mxu0 0.0
      %6399 = vmatprep.subr.mxu0 0.0
      %6400 = vmatpush1.msra.mxu0 0.0
      %6401 = vmatprep.subr.mxu0 0.0
      %6402 = vmatpush1.msra.mxu0 0.0
      %6403 = vmatprep.subr.mxu0 0.0
      %6404 = vmatpush1.msra.mxu0 %v6354
      %6405 = vmatprep.subr.mxu0 0.0
      %6406 = vmatpush1.msra.mxu0 %v6352
      %6407 = vmatprep.subr.mxu0 0.0
      %6408 = vmatpush1.msra.mxu0 %v6350
      %6409 = vmatprep.subr.mxu0 0.0
      %6410 = vmatpush1.msra.mxu0 %v6348
      %6411 = vmatprep.subr.mxu0 0.0
      %6412 = vmatpush1.msra.mxu0 %v6346
      %6413 = vmatprep.subr.mxu0 0.0
      %6414 = vmatpush1.msra.mxu0 %v6344
      %6415 = vmatprep.subr.mxu0 0.0
      %6416 = vmatpush1.msra.mxu0 %v6342
      %6417 = vmatprep.subr.mxu0 0.0
      %6418 = vmatpush1.msra.mxu0 %v6340
      %6419 = vmatprep.subr.mxu0 0.0
      %6420 = vmatpush2.msra.mxu0 0.0
      %6421 = vmatprep.subr.mxu0 0.0
      %6422 = vmatpush2.msra.mxu0 0.0
      %6423 = vmatprep.subr.mxu0 0.0
      %6424 = vmatpush2.msra.mxu0 0.0
      %6425 = vmatprep.subr.mxu0 0.0
      %6426 = vmatpush2.msra.mxu0 0.0
      %6427 = vmatprep.subr.mxu0 0.0
      %6428 = vmatpush2.msra.mxu0 0.0
      %6429 = vmatprep.subr.mxu0 0.0
      %6430 = vmatpush2.msra.mxu0 0.0
      %6431 = vmatprep.subr.mxu0 0.0
      %6432 = vmatpush2.msra.mxu0 0.0
      %6433 = vmatprep.subr.mxu0 0.0
      %6434 = vmatpush2.msra.mxu0 0.0
      %6435 = vmatprep.subr.mxu0 0.0
      %6436 = vmatpush2.msra.mxu0 0.0
      %6437 = vmatprep.subr.mxu0 0.0
      %6438 = vmatpush2.msra.mxu0 0.0
      %6439 = vmatprep.subr.mxu0 0.0
      %6440 = vmatpush2.msra.mxu0 0.0
      %6441 = vmatprep.subr.mxu0 0.0
      %6442 = vmatpush2.msra.mxu0 0.0
      %6443 = vmatprep.subr.mxu0 0.0
      %6444 = vmatpush2.msra.mxu0 0.0
      %6445 = vmatprep.subr.mxu0 0.0
      %6446 = vmatpush2.msra.mxu0 0.0
      %6447 = vmatprep.subr.mxu0 0.0
      %6448 = vmatpush2.msra.mxu0 0.0
      %6449 = vmatprep.subr.mxu0 0.0
      %6450 = vmatpush2.msra.mxu0 0.0
      %6451 = vmatprep.mubr.f32.mxu0 0.0
      %6452 = vmatmul.mubr.f32.gmra.mxu0 %v6364
      %v6453 = vpop.f32.mrf.mxu0
      %v6454 = vadd.f32 0.0, %v6453
      %v6455 = vpop.f32.mrf.mxu0
      %6456 = vmatprep.mubr.f32.mxu0 0.0
      %6457 = vmatmul.mubr.f32.gmra.mxu0 %v6367
      %v6458 = vpop.f32.mrf.mxu0
      %v6459 = vadd.f32 0.0, %v6458
      %v6460 = vpop.f32.mrf.mxu0
      %6461 = vmatprep.mubr.f32.mxu0 0.0
      %6462 = vmatmul.mubr.f32.gmra.mxu0 %v6370
      %v6463 = vpop.f32.mrf.mxu0
      %v6464 = vadd.f32 0.0, %v6463
      %v6465 = vpop.f32.mrf.mxu0
      %6466 = vmatprep.mubr.f32.mxu0 0.0
      %6467 = vmatmul.mubr.f32.gmra.mxu0 %v6373
      %v6468 = vpop.f32.mrf.mxu0
      %v6469 = vadd.f32 0.0, %v6468
      %v6470 = vpop.f32.mrf.mxu0
      %6471 = vmatprep.mubr.f32.mxu0 0.0
      %6472 = vmatmul.mubr.f32.gmra.mxu0 %v6376
      %v6473 = vpop.f32.mrf.mxu0
      %v6474 = vadd.f32 0.0, %v6473
      %v6475 = vpop.f32.mrf.mxu0
      %6476 = vmatprep.mubr.f32.mxu0 0.0
      %6477 = vmatmul.mubr.f32.gmra.mxu0 %v6379
      %v6478 = vpop.f32.mrf.mxu0
      %v6479 = vadd.f32 0.0, %v6478
      %v6480 = vpop.f32.mrf.mxu0
      %6481 = vmatprep.mubr.f32.mxu0 0.0
      %6482 = vmatmul.mubr.f32.gmra.mxu0 %v6382
      %v6483 = vpop.f32.mrf.mxu0
      %v6484 = vadd.f32 0.0, %v6483
      %v6485 = vpop.f32.mrf.mxu0
      %6486 = vmatprep.mubr.f32.mxu0 0.0
      %6487 = vmatmul.mubr.f32.gmra.mxu0 %v6385
      %v6488 = vpop.f32.mrf.mxu0
      %v6489 = vadd.f32 0.0, %v6488
      %v6490 = vpop.f32.mrf.mxu0
      %6491 = vdwg.mxu0
      %v6493 = vsel %vm1468, %v6454, 0
      %v6496 = vsel %vm1468, %v6459, 0
      %v6499 = vsel %vm1468, %v6464, 0
      %v6502 = vsel %vm1468, %v6469, 0
      %v6505 = vsel %vm1468, %v6474, 0
      %v6508 = vsel %vm1468, %v6479, 0
      %v6511 = vsel %vm1468, %v6484, 0
      %v6514 = vsel %vm1468, %v6489, 0
      %6516 = vmatprep.subr.mxu0 0.0
      %6517 = vmatpush1.msra.mxu0 0.0
      %6518 = vmatprep.subr.mxu0 0.0
      %6519 = vmatpush1.msra.mxu0 0.0
      %6520 = vmatprep.subr.mxu0 0.0
      %6521 = vmatpush1.msra.mxu0 0.0
      %6522 = vmatprep.subr.mxu0 0.0
      %6523 = vmatpush1.msra.mxu0 0.0
      %6524 = vmatprep.subr.mxu0 0.0
      %6525 = vmatpush1.msra.mxu0 0.0
      %6526 = vmatprep.subr.mxu0 0.0
      %6527 = vmatpush1.msra.mxu0 0.0
      %6528 = vmatprep.subr.mxu0 0.0
      %6529 = vmatpush1.msra.mxu0 0.0
      %6530 = vmatprep.subr.mxu0 0.0
      %6531 = vmatpush1.msra.mxu0 0.0
      %6532 = vmatprep.subr.mxu0 0.0
      %6533 = vmatpush1.msra.mxu0 0.0
      %6534 = vmatprep.subr.mxu0 0.0
      %6535 = vmatpush1.msra.mxu0 0.0
      %6536 = vmatprep.subr.mxu0 0.0
      %6537 = vmatpush1.msra.mxu0 0.0
      %6538 = vmatprep.subr.mxu0 0.0
      %6539 = vmatpush1.msra.mxu0 0.0
      %6540 = vmatprep.subr.mxu0 0.0
      %6541 = vmatpush1.msra.mxu0 0.0
      %6542 = vmatprep.subr.mxu0 0.0
      %6543 = vmatpush1.msra.mxu0 0.0
      %6544 = vmatprep.subr.mxu0 0.0
      %6545 = vmatpush1.msra.mxu0 0.0
      %6546 = vmatprep.subr.mxu0 0.0
      %6547 = vmatpush1.msra.mxu0 %v4408
      %6548 = vmatprep.subr.mxu0 0.0
      %6549 = vmatpush2.msra.mxu0 0.0
      %6550 = vmatprep.subr.mxu0 0.0
      %6551 = vmatpush2.msra.mxu0 0.0
      %6552 = vmatprep.subr.mxu0 0.0
      %6553 = vmatpush2.msra.mxu0 0.0
      %6554 = vmatprep.subr.mxu0 0.0
      %6555 = vmatpush2.msra.mxu0 0.0
      %6556 = vmatprep.subr.mxu0 0.0
      %6557 = vmatpush2.msra.mxu0 0.0
      %6558 = vmatprep.subr.mxu0 0.0
      %6559 = vmatpush2.msra.mxu0 0.0
      %6560 = vmatprep.subr.mxu0 0.0
      %6561 = vmatpush2.msra.mxu0 0.0
      %6562 = vmatprep.subr.mxu0 0.0
      %6563 = vmatpush2.msra.mxu0 0.0
      %6564 = vmatprep.subr.mxu0 0.0
      %6565 = vmatpush2.msra.mxu0 0.0
      %6566 = vmatprep.subr.mxu0 0.0
      %6567 = vmatpush2.msra.mxu0 0.0
      %6568 = vmatprep.subr.mxu0 0.0
      %6569 = vmatpush2.msra.mxu0 0.0
      %6570 = vmatprep.subr.mxu0 0.0
      %6571 = vmatpush2.msra.mxu0 0.0
      %6572 = vmatprep.subr.mxu0 0.0
      %6573 = vmatpush2.msra.mxu0 0.0
      %6574 = vmatprep.subr.mxu0 0.0
      %6575 = vmatpush2.msra.mxu0 0.0
      %6576 = vmatprep.subr.mxu0 0.0
      %6577 = vmatpush2.msra.mxu0 0.0
      %6578 = vmatprep.subr.mxu0 0.0
      %6579 = vmatpush2.msra.mxu0 0.0
      %6580 = vmatprep.mubr.f32.mxu0 0.0
      %6581 = vmatmul.mubr.f32.gmra.mxu0 %v6493
      %v6582 = vpop.f32.mrf.mxu0
      %v6583 = vadd.f32 0.0, %v6582
      %v6584 = vpop.f32.mrf.mxu0
      %6585 = vmatprep.mubr.f32.mxu0 0.0
      %6586 = vmatmul.mubr.f32.gmra.mxu0 %v6496
      %v6587 = vpop.f32.mrf.mxu0
      %v6588 = vadd.f32 0.0, %v6587
      %v6589 = vpop.f32.mrf.mxu0
      %6590 = vmatprep.mubr.f32.mxu0 0.0
      %6591 = vmatmul.mubr.f32.gmra.mxu0 %v6499
      %v6592 = vpop.f32.mrf.mxu0
      %v6593 = vadd.f32 0.0, %v6592
      %v6594 = vpop.f32.mrf.mxu0
      %6595 = vmatprep.mubr.f32.mxu0 0.0
      %6596 = vmatmul.mubr.f32.gmra.mxu0 %v6502
      %v6597 = vpop.f32.mrf.mxu0
      %v6598 = vadd.f32 0.0, %v6597
      %v6599 = vpop.f32.mrf.mxu0
      %6600 = vmatprep.mubr.f32.mxu0 0.0
      %6601 = vmatmul.mubr.f32.gmra.mxu0 %v6505
      %v6602 = vpop.f32.mrf.mxu0
      %v6603 = vadd.f32 0.0, %v6602
      %v6604 = vpop.f32.mrf.mxu0
      %6605 = vmatprep.mubr.f32.mxu0 0.0
      %6606 = vmatmul.mubr.f32.gmra.mxu0 %v6508
      %v6607 = vpop.f32.mrf.mxu0
      %v6608 = vadd.f32 0.0, %v6607
      %v6609 = vpop.f32.mrf.mxu0
      %6610 = vmatprep.mubr.f32.mxu0 0.0
      %6611 = vmatmul.mubr.f32.gmra.mxu0 %v6511
      %v6612 = vpop.f32.mrf.mxu0
      %v6613 = vadd.f32 0.0, %v6612
      %v6614 = vpop.f32.mrf.mxu0
      %6615 = vmatprep.mubr.f32.mxu0 0.0
      %6616 = vmatmul.mubr.f32.gmra.mxu0 %v6514
      %v6617 = vpop.f32.mrf.mxu0
      %v6618 = vadd.f32 0.0, %v6617
      %v6619 = vpop.f32.mrf.mxu0
      %6620 = vdwg.mxu0
      %v6621 = vadd.f32 %v6066, %v6583
      %v6622 = vadd.f32 %v6067, %v6588
      %v6623 = vadd.f32 %v6068, %v6593
      %v6624 = vadd.f32 %v6069, %v6598
      %v6625 = vadd.f32 %v6070, %v6603
      %v6626 = vadd.f32 %v6071, %v6608
      %v6627 = vadd.f32 %v6072, %v6613
      %v6628 = vadd.f32 %v6073, %v6618
      %v6629 = vadd.f32 %v4123, %v6621
      %v6630 = vadd.f32 %v4124, %v6622
      %v6631 = vadd.f32 %v4125, %v6623
      %v6632 = vadd.f32 %v4126, %v6624
      %v6633 = vadd.f32 %v4127, %v6625
      %v6634 = vadd.f32 %v4128, %v6626
      %v6635 = vadd.f32 %v4129, %v6627
      %v6636 = vadd.f32 %v4130, %v6628
      %v6637 = vld [vmem:[%s45] sm:$0x1]
      %v6638 = vld [vmem:[%s47] sm:$0x1]
      %v6639 = vsel %vm1158, %v6629, 0.0
      %6640 = vadd.xlane.f32.xlu0 %v6639
      %v6641 = vpop.xlane.xlu0 %6640
      %v6642 = vsel %vm1158, %v6630, 0.0
      %6643 = vadd.xlane.f32.xlu0 %v6642
      %v6644 = vpop.xlane.xlu0 %6643
      %v6645 = vsel %vm1158, %v6631, 0.0
      %6646 = vadd.xlane.f32.xlu0 %v6645
      %v6647 = vpop.xlane.xlu0 %6646
      %v6648 = vsel %vm1158, %v6632, 0.0
      %6649 = vadd.xlane.f32.xlu0 %v6648
      %v6650 = vpop.xlane.xlu0 %6649
      %v6651 = vsel %vm1158, %v6633, 0.0
      %6652 = vadd.xlane.f32.xlu0 %v6651
      %v6653 = vpop.xlane.xlu0 %6652
      %v6654 = vsel %vm1158, %v6634, 0.0
      %6655 = vadd.xlane.f32.xlu0 %v6654
      %v6656 = vpop.xlane.xlu0 %6655
      %v6657 = vsel %vm1158, %v6635, 0.0
      %6658 = vadd.xlane.f32.xlu0 %v6657
      %v6659 = vpop.xlane.xlu0 %6658
      %v6660 = vsel %vm1158, %v6636, 0.0
      %6661 = vadd.xlane.f32.xlu0 %v6660
      %v6662 = vpop.xlane.xlu0 %6661
      %v6663 = vmul.f32 %v6641, %v1183
      %v6664 = vmul.f32 %v6644, %v1183
      %v6665 = vmul.f32 %v6647, %v1183
      %v6666 = vmul.f32 %v6650, %v1183
      %v6667 = vmul.f32 %v6653, %v1183
      %v6668 = vmul.f32 %v6656, %v1183
      %v6669 = vmul.f32 %v6659, %v1183
      %v6670 = vmul.f32 %v6662, %v1183
      %v6671 = vsub.f32 %v6629, %v6663
      %v6672 = vsub.f32 %v6630, %v6664
      %v6673 = vsub.f32 %v6631, %v6665
      %v6674 = vsub.f32 %v6632, %v6666
      %v6675 = vsub.f32 %v6633, %v6667
      %v6676 = vsub.f32 %v6634, %v6668
      %v6677 = vsub.f32 %v6635, %v6669
      %v6678 = vsub.f32 %v6636, %v6670
      %v6679 = vmul.f32 %v6671, %v6671
      %v6680 = vmul.f32 %v6672, %v6672
      %v6681 = vmul.f32 %v6673, %v6673
      %v6682 = vmul.f32 %v6674, %v6674
      %v6683 = vmul.f32 %v6675, %v6675
      %v6684 = vmul.f32 %v6676, %v6676
      %v6685 = vmul.f32 %v6677, %v6677
      %v6686 = vmul.f32 %v6678, %v6678
      %v6687 = vsel %vm1158, %v6679, 0.0
      %6688 = vadd.xlane.f32.xlu0 %v6687
      %v6689 = vpop.xlane.xlu0 %6688
      %v6690 = vsel %vm1158, %v6680, 0.0
      %6691 = vadd.xlane.f32.xlu0 %v6690
      %v6692 = vpop.xlane.xlu0 %6691
      %v6693 = vsel %vm1158, %v6681, 0.0
      %6694 = vadd.xlane.f32.xlu0 %v6693
      %v6695 = vpop.xlane.xlu0 %6694
      %v6696 = vsel %vm1158, %v6682, 0.0
      %6697 = vadd.xlane.f32.xlu0 %v6696
      %v6698 = vpop.xlane.xlu0 %6697
      %v6699 = vsel %vm1158, %v6683, 0.0
      %6700 = vadd.xlane.f32.xlu0 %v6699
      %v6701 = vpop.xlane.xlu0 %6700
      %v6702 = vsel %vm1158, %v6684, 0.0
      %6703 = vadd.xlane.f32.xlu0 %v6702
      %v6704 = vpop.xlane.xlu0 %6703
      %v6705 = vsel %vm1158, %v6685, 0.0
      %6706 = vadd.xlane.f32.xlu0 %v6705
      %v6707 = vpop.xlane.xlu0 %6706
      %v6708 = vsel %vm1158, %v6686, 0.0
      %6709 = vadd.xlane.f32.xlu0 %v6708
      %v6710 = vpop.xlane.xlu0 %6709
      %v6711 = vmul.f32 %v6689, %v1183
      %v6712 = vmul.f32 %v6692, %v1183
      %v6713 = vmul.f32 %v6695, %v1183
      %v6714 = vmul.f32 %v6698, %v1183
      %v6715 = vmul.f32 %v6701, %v1183
      %v6716 = vmul.f32 %v6704, %v1183
      %v6717 = vmul.f32 %v6707, %v1183
      %v6718 = vmul.f32 %v6710, %v1183
      %v6719 = vadd.f32 %v6711, 1e-06
      %v6720 = vadd.f32 %v6712, 1e-06
      %v6721 = vadd.f32 %v6713, 1e-06
      %v6722 = vadd.f32 %v6714, 1e-06
      %v6723 = vadd.f32 %v6715, 1e-06
      %v6724 = vadd.f32 %v6716, 1e-06
      %v6725 = vadd.f32 %v6717, 1e-06
      %v6726 = vadd.f32 %v6718, 1e-06
      %v6727 = vrsqrt.pop %v6719
      %v6728 = vrsqrt.pop %v6720
      %v6729 = vrsqrt.pop %v6721
      %v6730 = vrsqrt.pop %v6722
      %v6731 = vrsqrt.pop %v6723
      %v6732 = vrsqrt.pop %v6724
      %v6733 = vrsqrt.pop %v6725
      %v6734 = vrsqrt.pop %v6726
      %v6735 = vmul.f32 %v6671, %v6727
      %v6736 = vmul.f32 %v6672, %v6728
      %v6737 = vmul.f32 %v6673, %v6729
      %v6738 = vmul.f32 %v6674, %v6730
      %v6739 = vmul.f32 %v6675, %v6731
      %v6740 = vmul.f32 %v6676, %v6732
      %v6741 = vmul.f32 %v6677, %v6733
      %v6742 = vmul.f32 %v6678, %v6734
      %v6744 = vlaneseq
      %v6745 = vshrl.u32 %v6744, 7
      %v6746 = vsub.s32 0, %v6745
      %v6747 = vrot.slane %v6637, %v6746
      %v6749 = vmul.f32 %v6735, %v6747
      %v6750 = vmul.f32 %v6736, %v6747
      %v6751 = vmul.f32 %v6737, %v6747
      %v6752 = vmul.f32 %v6738, %v6747
      %v6753 = vmul.f32 %v6739, %v6747
      %v6754 = vmul.f32 %v6740, %v6747
      %v6755 = vmul.f32 %v6741, %v6747
      %v6756 = vmul.f32 %v6742, %v6747
      %v6758 = vlaneseq
      %v6759 = vshrl.u32 %v6758, 7
      %v6760 = vsub.s32 0, %v6759
      %v6761 = vrot.slane %v6638, %v6760
      %v6763 = vadd.f32 %v6749, %v6761
      %v6764 = vadd.f32 %v6750, %v6761
      %v6765 = vadd.f32 %v6751, %v6761
      %v6766 = vadd.f32 %v6752, %v6761
      %v6767 = vadd.f32 %v6753, %v6761
      %v6768 = vadd.f32 %v6754, %v6761
      %v6769 = vadd.f32 %v6755, %v6761
      %v6770 = vadd.f32 %v6756, %v6761
      %v6771 = vld [vmem:[%s49] sm:$0xff]
      %v6772 = vld [vmem:[%s49 + $0x8] sm:$0xff]
      %v6773 = vld [vmem:[%s49 + $0x10] sm:$0xff]
      %v6774 = vld [vmem:[%s49 + $0x18] sm:$0xff]
      %v6775 = vld [vmem:[%s51] sm:$0x1]
      %v6777 = vlaneseq
      %v6778 = vshrl.u32 %v6777, 7
      %v6779 = vsub.s32 0, %v6778
      %v6780 = vrot.slane %v6775, %v6779
      %v6783 = vsel %vm1158, %v6763, 0
      %v6786 = vsel %vm1158, %v6764, 0
      %v6789 = vsel %vm1158, %v6765, 0
      %v6792 = vsel %vm1158, %v6766, 0
      %v6795 = vsel %vm1158, %v6767, 0
      %v6798 = vsel %vm1158, %v6768, 0
      %v6801 = vsel %vm1158, %v6769, 0
      %v6804 = vsel %vm1158, %v6770, 0
      %6806 = vmatprep.subr.mxu0 0.0
      %6807 = vmatpush1.msra.mxu0 0.0
      %6808 = vmatprep.subr.mxu0 0.0
      %6809 = vmatpush1.msra.mxu0 0.0
      %6810 = vmatprep.subr.mxu0 0.0
      %6811 = vmatpush1.msra.mxu0 0.0
      %6812 = vmatprep.subr.mxu0 0.0
      %6813 = vmatpush1.msra.mxu0 0.0
      %6814 = vmatprep.subr.mxu0 0.0
      %6815 = vmatpush1.msra.mxu0 0.0
      %6816 = vmatprep.subr.mxu0 0.0
      %6817 = vmatpush1.msra.mxu0 0.0
      %6818 = vmatprep.subr.mxu0 0.0
      %6819 = vmatpush1.msra.mxu0 0.0
      %6820 = vmatprep.subr.mxu0 0.0
      %6821 = vmatpush1.msra.mxu0 0.0
      %6822 = vmatprep.subr.mxu0 0.0
      %6823 = vmatpush1.msra.mxu0 0.0
      %6824 = vmatprep.subr.mxu0 0.0
      %6825 = vmatpush1.msra.mxu0 0.0
      %6826 = vmatprep.subr.mxu0 0.0
      %6827 = vmatpush1.msra.mxu0 0.0
      %6828 = vmatprep.subr.mxu0 0.0
      %6829 = vmatpush1.msra.mxu0 0.0
      %6830 = vmatprep.subr.mxu0 0.0
      %6831 = vmatpush1.msra.mxu0 %v6774
      %6832 = vmatprep.subr.mxu0 0.0
      %6833 = vmatpush1.msra.mxu0 %v6773
      %6834 = vmatprep.subr.mxu0 0.0
      %6835 = vmatpush1.msra.mxu0 %v6772
      %6836 = vmatprep.subr.mxu0 0.0
      %6837 = vmatpush1.msra.mxu0 %v6771
      %6838 = vmatprep.subr.mxu0 0.0
      %6839 = vmatpush2.msra.mxu0 0.0
      %6840 = vmatprep.subr.mxu0 0.0
      %6841 = vmatpush2.msra.mxu0 0.0
      %6842 = vmatprep.subr.mxu0 0.0
      %6843 = vmatpush2.msra.mxu0 0.0
      %6844 = vmatprep.subr.mxu0 0.0
      %6845 = vmatpush2.msra.mxu0 0.0
      %6846 = vmatprep.subr.mxu0 0.0
      %6847 = vmatpush2.msra.mxu0 0.0
      %6848 = vmatprep.subr.mxu0 0.0
      %6849 = vmatpush2.msra.mxu0 0.0
      %6850 = vmatprep.subr.mxu0 0.0
      %6851 = vmatpush2.msra.mxu0 0.0
      %6852 = vmatprep.subr.mxu0 0.0
      %6853 = vmatpush2.msra.mxu0 0.0
      %6854 = vmatprep.subr.mxu0 0.0
      %6855 = vmatpush2.msra.mxu0 0.0
      %6856 = vmatprep.subr.mxu0 0.0
      %6857 = vmatpush2.msra.mxu0 0.0
      %6858 = vmatprep.subr.mxu0 0.0
      %6859 = vmatpush2.msra.mxu0 0.0
      %6860 = vmatprep.subr.mxu0 0.0
      %6861 = vmatpush2.msra.mxu0 0.0
      %6862 = vmatprep.subr.mxu0 0.0
      %6863 = vmatpush2.msra.mxu0 0.0
      %6864 = vmatprep.subr.mxu0 0.0
      %6865 = vmatpush2.msra.mxu0 0.0
      %6866 = vmatprep.subr.mxu0 0.0
      %6867 = vmatpush2.msra.mxu0 0.0
      %6868 = vmatprep.subr.mxu0 0.0
      %6869 = vmatpush2.msra.mxu0 0.0
      %6870 = vmatprep.mubr.f32.mxu0 0.0
      %6871 = vmatmul.mubr.f32.gmra.mxu0 %v6783
      %v6872 = vpop.f32.mrf.mxu0
      %v6873 = vadd.f32 %v6780, %v6872
      %v6874 = vpop.f32.mrf.mxu0
      %6875 = vmatprep.mubr.f32.mxu0 0.0
      %6876 = vmatmul.mubr.f32.gmra.mxu0 %v6786
      %v6877 = vpop.f32.mrf.mxu0
      %v6878 = vadd.f32 %v6780, %v6877
      %v6879 = vpop.f32.mrf.mxu0
      %6880 = vmatprep.mubr.f32.mxu0 0.0
      %6881 = vmatmul.mubr.f32.gmra.mxu0 %v6789
      %v6882 = vpop.f32.mrf.mxu0
      %v6883 = vadd.f32 %v6780, %v6882
      %v6884 = vpop.f32.mrf.mxu0
      %6885 = vmatprep.mubr.f32.mxu0 0.0
      %6886 = vmatmul.mubr.f32.gmra.mxu0 %v6792
      %v6887 = vpop.f32.mrf.mxu0
      %v6888 = vadd.f32 %v6780, %v6887
      %v6889 = vpop.f32.mrf.mxu0
      %6890 = vmatprep.mubr.f32.mxu0 0.0
      %6891 = vmatmul.mubr.f32.gmra.mxu0 %v6795
      %v6892 = vpop.f32.mrf.mxu0
      %v6893 = vadd.f32 %v6780, %v6892
      %v6894 = vpop.f32.mrf.mxu0
      %6895 = vmatprep.mubr.f32.mxu0 0.0
      %6896 = vmatmul.mubr.f32.gmra.mxu0 %v6798
      %v6897 = vpop.f32.mrf.mxu0
      %v6898 = vadd.f32 %v6780, %v6897
      %v6899 = vpop.f32.mrf.mxu0
      %6900 = vmatprep.mubr.f32.mxu0 0.0
      %6901 = vmatmul.mubr.f32.gmra.mxu0 %v6801
      %v6902 = vpop.f32.mrf.mxu0
      %v6903 = vadd.f32 %v6780, %v6902
      %v6904 = vpop.f32.mrf.mxu0
      %6905 = vmatprep.mubr.f32.mxu0 0.0
      %6906 = vmatmul.mubr.f32.gmra.mxu0 %v6804
      %v6907 = vpop.f32.mrf.mxu0
      %v6908 = vadd.f32 %v6780, %v6907
      %v6909 = vpop.f32.mrf.mxu0
      %6910 = vdwg.mxu0
      %v6911 = vmul.f32 %v6873, 0.5
      %v6912 = vmul.f32 %v6878, 0.5
      %v6913 = vmul.f32 %v6883, 0.5
      %v6914 = vmul.f32 %v6888, 0.5
      %v6915 = vmul.f32 %v6893, 0.5
      %v6916 = vmul.f32 %v6898, 0.5
      %v6917 = vmul.f32 %v6903, 0.5
      %v6918 = vmul.f32 %v6908, 0.5
      %v6919 = vmul.f32 %v6873, 0.70710677
      %v6920 = vmul.f32 %v6878, 0.70710677
      %v6921 = vmul.f32 %v6883, 0.70710677
      %v6922 = vmul.f32 %v6888, 0.70710677
      %v6923 = vmul.f32 %v6893, 0.70710677
      %v6924 = vmul.f32 %v6898, 0.70710677
      %v6925 = vmul.f32 %v6903, 0.70710677
      %v6926 = vmul.f32 %v6908, 0.70710677
      %v6927 = verf.f32.pop %v6919
      %v6928 = verf.f32.pop %v6920
      %v6929 = verf.f32.pop %v6921
      %v6930 = verf.f32.pop %v6922
      %v6931 = verf.f32.pop %v6923
      %v6932 = verf.f32.pop %v6924
      %v6933 = verf.f32.pop %v6925
      %v6934 = verf.f32.pop %v6926
      %v6935 = vadd.f32 %v6927, 1.0
      %v6936 = vadd.f32 %v6928, 1.0
      %v6937 = vadd.f32 %v6929, 1.0
      %v6938 = vadd.f32 %v6930, 1.0
      %v6939 = vadd.f32 %v6931, 1.0
      %v6940 = vadd.f32 %v6932, 1.0
      %v6941 = vadd.f32 %v6933, 1.0
      %v6942 = vadd.f32 %v6934, 1.0
      %v6943 = vmul.f32 %v6911, %v6935
      %v6944 = vmul.f32 %v6912, %v6936
      %v6945 = vmul.f32 %v6913, %v6937
      %v6946 = vmul.f32 %v6914, %v6938
      %v6947 = vmul.f32 %v6915, %v6939
      %v6948 = vmul.f32 %v6916, %v6940
      %v6949 = vmul.f32 %v6917, %v6941
      %v6950 = vmul.f32 %v6918, %v6942
      %v6951 = vld [vmem:[%s53] sm:$0xff]
      %v6952 = vld [vmem:[%s53 + $0x8] sm:$0xff]
      %v6953 = vld [vmem:[%s53 + $0x10] sm:$0xff]
      %v6954 = vld [vmem:[%s53 + $0x18] sm:$0xff]
      %v6955 = vld [vmem:[%s53 + $0x20] sm:$0xff]
      %v6956 = vld [vmem:[%s53 + $0x28] sm:$0xff]
      %v6957 = vld [vmem:[%s53 + $0x30] sm:$0xff]
      %v6958 = vld [vmem:[%s53 + $0x38] sm:$0xff]
      %v6959 = vld [vmem:[%s55] sm:$0x1]
      %v6961 = vlaneseq
      %v6962 = vshrl.u32 %v6961, 7
      %v6963 = vsub.s32 0, %v6962
      %v6964 = vrot.slane %v6959, %v6963
      %v6967 = vsel %vm1010, %v6943, 0
      %v6970 = vsel %vm1010, %v6944, 0
      %v6973 = vsel %vm1010, %v6945, 0
      %v6976 = vsel %vm1010, %v6946, 0
      %v6979 = vsel %vm1010, %v6947, 0
      %v6982 = vsel %vm1010, %v6948, 0
      %v6985 = vsel %vm1010, %v6949, 0
      %v6988 = vsel %vm1010, %v6950, 0
      %6990 = vmatprep.subr.mxu0 0.0
      %6991 = vmatpush1.msra.mxu0 0.0
      %6992 = vmatprep.subr.mxu0 0.0
      %6993 = vmatpush1.msra.mxu0 0.0
      %6994 = vmatprep.subr.mxu0 0.0
      %6995 = vmatpush1.msra.mxu0 0.0
      %6996 = vmatprep.subr.mxu0 0.0
      %6997 = vmatpush1.msra.mxu0 0.0
      %6998 = vmatprep.subr.mxu0 0.0
      %6999 = vmatpush1.msra.mxu0 0.0
      %7000 = vmatprep.subr.mxu0 0.0
      %7001 = vmatpush1.msra.mxu0 0.0
      %7002 = vmatprep.subr.mxu0 0.0
      %7003 = vmatpush1.msra.mxu0 0.0
      %7004 = vmatprep.subr.mxu0 0.0
      %7005 = vmatpush1.msra.mxu0 0.0
      %7006 = vmatprep.subr.mxu0 0.0
      %7007 = vmatpush1.msra.mxu0 %v6958
      %7008 = vmatprep.subr.mxu0 0.0
      %7009 = vmatpush1.msra.mxu0 %v6957
      %7010 = vmatprep.subr.mxu0 0.0
      %7011 = vmatpush1.msra.mxu0 %v6956
      %7012 = vmatprep.subr.mxu0 0.0
      %7013 = vmatpush1.msra.mxu0 %v6955
      %7014 = vmatprep.subr.mxu0 0.0
      %7015 = vmatpush1.msra.mxu0 %v6954
      %7016 = vmatprep.subr.mxu0 0.0
      %7017 = vmatpush1.msra.mxu0 %v6953
      %7018 = vmatprep.subr.mxu0 0.0
      %7019 = vmatpush1.msra.mxu0 %v6952
      %7020 = vmatprep.subr.mxu0 0.0
      %7021 = vmatpush1.msra.mxu0 %v6951
      %7022 = vmatprep.subr.mxu0 0.0
      %7023 = vmatpush2.msra.mxu0 0.0
      %7024 = vmatprep.subr.mxu0 0.0
      %7025 = vmatpush2.msra.mxu0 0.0
      %7026 = vmatprep.subr.mxu0 0.0
      %7027 = vmatpush2.msra.mxu0 0.0
      %7028 = vmatprep.subr.mxu0 0.0
      %7029 = vmatpush2.msra.mxu0 0.0
      %7030 = vmatprep.subr.mxu0 0.0
      %7031 = vmatpush2.msra.mxu0 0.0
      %7032 = vmatprep.subr.mxu0 0.0
      %7033 = vmatpush2.msra.mxu0 0.0
      %7034 = vmatprep.subr.mxu0 0.0
      %7035 = vmatpush2.msra.mxu0 0.0
      %7036 = vmatprep.subr.mxu0 0.0
      %7037 = vmatpush2.msra.mxu0 0.0
      %7038 = vmatprep.subr.mxu0 0.0
      %7039 = vmatpush2.msra.mxu0 0.0
      %7040 = vmatprep.subr.mxu0 0.0
      %7041 = vmatpush2.msra.mxu0 0.0
      %7042 = vmatprep.subr.mxu0 0.0
      %7043 = vmatpush2.msra.mxu0 0.0
      %7044 = vmatprep.subr.mxu0 0.0
      %7045 = vmatpush2.msra.mxu0 0.0
      %7046 = vmatprep.subr.mxu0 0.0
      %7047 = vmatpush2.msra.mxu0 0.0
      %7048 = vmatprep.subr.mxu0 0.0
      %7049 = vmatpush2.msra.mxu0 0.0
      %7050 = vmatprep.subr.mxu0 0.0
      %7051 = vmatpush2.msra.mxu0 0.0
      %7052 = vmatprep.subr.mxu0 0.0
      %7053 = vmatpush2.msra.mxu0 0.0
      %7054 = vmatprep.mubr.f32.mxu0 0.0
      %7055 = vmatmul.mubr.f32.gmra.mxu0 %v6967
      %v7056 = vpop.f32.mrf.mxu0
      %v7057 = vadd.f32 %v6964, %v7056
      %v7058 = vpop.f32.mrf.mxu0
      %7059 = vmatprep.mubr.f32.mxu0 0.0
      %7060 = vmatmul.mubr.f32.gmra.mxu0 %v6970
      %v7061 = vpop.f32.mrf.mxu0
      %v7062 = vadd.f32 %v6964, %v7061
      %v7063 = vpop.f32.mrf.mxu0
      %7064 = vmatprep.mubr.f32.mxu0 0.0
      %7065 = vmatmul.mubr.f32.gmra.mxu0 %v6973
      %v7066 = vpop.f32.mrf.mxu0
      %v7067 = vadd.f32 %v6964, %v7066
      %v7068 = vpop.f32.mrf.mxu0
      %7069 = vmatprep.mubr.f32.mxu0 0.0
      %7070 = vmatmul.mubr.f32.gmra.mxu0 %v6976
      %v7071 = vpop.f32.mrf.mxu0
      %v7072 = vadd.f32 %v6964, %v7071
      %v7073 = vpop.f32.mrf.mxu0
      %7074 = vmatprep.mubr.f32.mxu0 0.0
      %7075 = vmatmul.mubr.f32.gmra.mxu0 %v6979
      %v7076 = vpop.f32.mrf.mxu0
      %v7077 = vadd.f32 %v6964, %v7076
      %v7078 = vpop.f32.mrf.mxu0
      %7079 = vmatprep.mubr.f32.mxu0 0.0
      %7080 = vmatmul.mubr.f32.gmra.mxu0 %v6982
      %v7081 = vpop.f32.mrf.mxu0
      %v7082 = vadd.f32 %v6964, %v7081
      %v7083 = vpop.f32.mrf.mxu0
      %7084 = vmatprep.mubr.f32.mxu0 0.0
      %7085 = vmatmul.mubr.f32.gmra.mxu0 %v6985
      %v7086 = vpop.f32.mrf.mxu0
      %v7087 = vadd.f32 %v6964, %v7086
      %v7088 = vpop.f32.mrf.mxu0
      %7089 = vmatprep.mubr.f32.mxu0 0.0
      %7090 = vmatmul.mubr.f32.gmra.mxu0 %v6988
      %v7091 = vpop.f32.mrf.mxu0
      %v7092 = vadd.f32 %v6964, %v7091
      %v7093 = vpop.f32.mrf.mxu0
      %7094 = vdwg.mxu0
      %v7095 = vadd.f32 %v6629, %v7057
      %v7096 = vadd.f32 %v6630, %v7062
      %v7097 = vadd.f32 %v6631, %v7067
      %v7098 = vadd.f32 %v6632, %v7072
      %v7099 = vadd.f32 %v6633, %v7077
      %v7100 = vadd.f32 %v6634, %v7082
      %v7101 = vadd.f32 %v6635, %v7087
      %v7102 = vadd.f32 %v6636, %v7092
      %v7103 = vld [vmem:[%s57] sm:$0x1]
      %v7104 = vld [vmem:[%s59] sm:$0x1]
      %v7105 = vsel %vm1158, %v7095, 0.0
      %7106 = vadd.xlane.f32.xlu0 %v7105
      %v7107 = vpop.xlane.xlu0 %7106
      %v7108 = vsel %vm1158, %v7096, 0.0
      %7109 = vadd.xlane.f32.xlu0 %v7108
      %v7110 = vpop.xlane.xlu0 %7109
      %v7111 = vsel %vm1158, %v7097, 0.0
      %7112 = vadd.xlane.f32.xlu0 %v7111
      %v7113 = vpop.xlane.xlu0 %7112
      %v7114 = vsel %vm1158, %v7098, 0.0
      %7115 = vadd.xlane.f32.xlu0 %v7114
      %v7116 = vpop.xlane.xlu0 %7115
      %v7117 = vsel %vm1158, %v7099, 0.0
      %7118 = vadd.xlane.f32.xlu0 %v7117
      %v7119 = vpop.xlane.xlu0 %7118
      %v7120 = vsel %vm1158, %v7100, 0.0
      %7121 = vadd.xlane.f32.xlu0 %v7120
      %v7122 = vpop.xlane.xlu0 %7121
      %v7123 = vsel %vm1158, %v7101, 0.0
      %7124 = vadd.xlane.f32.xlu0 %v7123
      %v7125 = vpop.xlane.xlu0 %7124
      %v7126 = vsel %vm1158, %v7102, 0.0
      %7127 = vadd.xlane.f32.xlu0 %v7126
      %v7128 = vpop.xlane.xlu0 %7127
      %v7129 = vmul.f32 %v7107, %v1183
      %v7130 = vmul.f32 %v7110, %v1183
      %v7131 = vmul.f32 %v7113, %v1183
      %v7132 = vmul.f32 %v7116, %v1183
      %v7133 = vmul.f32 %v7119, %v1183
      %v7134 = vmul.f32 %v7122, %v1183
      %v7135 = vmul.f32 %v7125, %v1183
      %v7136 = vmul.f32 %v7128, %v1183
      %v7137 = vsub.f32 %v7095, %v7129
      %v7138 = vsub.f32 %v7096, %v7130
      %v7139 = vsub.f32 %v7097, %v7131
      %v7140 = vsub.f32 %v7098, %v7132
      %v7141 = vsub.f32 %v7099, %v7133
      %v7142 = vsub.f32 %v7100, %v7134
      %v7143 = vsub.f32 %v7101, %v7135
      %v7144 = vsub.f32 %v7102, %v7136
      %v7145 = vmul.f32 %v7137, %v7137
      %v7146 = vmul.f32 %v7138, %v7138
      %v7147 = vmul.f32 %v7139, %v7139
      %v7148 = vmul.f32 %v7140, %v7140
      %v7149 = vmul.f32 %v7141, %v7141
      %v7150 = vmul.f32 %v7142, %v7142
      %v7151 = vmul.f32 %v7143, %v7143
      %v7152 = vmul.f32 %v7144, %v7144
      %v7153 = vsel %vm1158, %v7145, 0.0
      %7154 = vadd.xlane.f32.xlu0 %v7153
      %v7155 = vpop.xlane.xlu0 %7154
      %v7156 = vsel %vm1158, %v7146, 0.0
      %7157 = vadd.xlane.f32.xlu0 %v7156
      %v7158 = vpop.xlane.xlu0 %7157
      %v7159 = vsel %vm1158, %v7147, 0.0
      %7160 = vadd.xlane.f32.xlu0 %v7159
      %v7161 = vpop.xlane.xlu0 %7160
      %v7162 = vsel %vm1158, %v7148, 0.0
      %7163 = vadd.xlane.f32.xlu0 %v7162
      %v7164 = vpop.xlane.xlu0 %7163
      %v7165 = vsel %vm1158, %v7149, 0.0
      %7166 = vadd.xlane.f32.xlu0 %v7165
      %v7167 = vpop.xlane.xlu0 %7166
      %v7168 = vsel %vm1158, %v7150, 0.0
      %7169 = vadd.xlane.f32.xlu0 %v7168
      %v7170 = vpop.xlane.xlu0 %7169
      %v7171 = vsel %vm1158, %v7151, 0.0
      %7172 = vadd.xlane.f32.xlu0 %v7171
      %v7173 = vpop.xlane.xlu0 %7172
      %v7174 = vsel %vm1158, %v7152, 0.0
      %7175 = vadd.xlane.f32.xlu0 %v7174
      %v7176 = vpop.xlane.xlu0 %7175
      %v7177 = vmul.f32 %v7155, %v1183
      %v7178 = vmul.f32 %v7158, %v1183
      %v7179 = vmul.f32 %v7161, %v1183
      %v7180 = vmul.f32 %v7164, %v1183
      %v7181 = vmul.f32 %v7167, %v1183
      %v7182 = vmul.f32 %v7170, %v1183
      %v7183 = vmul.f32 %v7173, %v1183
      %v7184 = vmul.f32 %v7176, %v1183
      %v7185 = vadd.f32 %v7177, 1e-06
      %v7186 = vadd.f32 %v7178, 1e-06
      %v7187 = vadd.f32 %v7179, 1e-06
      %v7188 = vadd.f32 %v7180, 1e-06
      %v7189 = vadd.f32 %v7181, 1e-06
      %v7190 = vadd.f32 %v7182, 1e-06
      %v7191 = vadd.f32 %v7183, 1e-06
      %v7192 = vadd.f32 %v7184, 1e-06
      %v7193 = vrsqrt.pop %v7185
      %v7194 = vrsqrt.pop %v7186
      %v7195 = vrsqrt.pop %v7187
      %v7196 = vrsqrt.pop %v7188
      %v7197 = vrsqrt.pop %v7189
      %v7198 = vrsqrt.pop %v7190
      %v7199 = vrsqrt.pop %v7191
      %v7200 = vrsqrt.pop %v7192
      %v7201 = vmul.f32 %v7137, %v7193
      %v7202 = vmul.f32 %v7138, %v7194
      %v7203 = vmul.f32 %v7139, %v7195
      %v7204 = vmul.f32 %v7140, %v7196
      %v7205 = vmul.f32 %v7141, %v7197
      %v7206 = vmul.f32 %v7142, %v7198
      %v7207 = vmul.f32 %v7143, %v7199
      %v7208 = vmul.f32 %v7144, %v7200
      %v7210 = vlaneseq
      %v7211 = vshrl.u32 %v7210, 7
      %v7212 = vsub.s32 0, %v7211
      %v7213 = vrot.slane %v7103, %v7212
      %v7215 = vmul.f32 %v7201, %v7213
      %v7216 = vmul.f32 %v7202, %v7213
      %v7217 = vmul.f32 %v7203, %v7213
      %v7218 = vmul.f32 %v7204, %v7213
      %v7219 = vmul.f32 %v7205, %v7213
      %v7220 = vmul.f32 %v7206, %v7213
      %v7221 = vmul.f32 %v7207, %v7213
      %v7222 = vmul.f32 %v7208, %v7213
      %v7224 = vlaneseq
      %v7225 = vshrl.u32 %v7224, 7
      %v7226 = vsub.s32 0, %v7225
      %v7227 = vrot.slane %v7104, %v7226
      %v7229 = vadd.f32 %v7215, %v7227
      %v7230 = vadd.f32 %v7216, %v7227
      %v7231 = vadd.f32 %v7217, %v7227
      %v7232 = vadd.f32 %v7218, %v7227
      %v7233 = vadd.f32 %v7219, %v7227
      %v7234 = vadd.f32 %v7220, %v7227
      %v7235 = vadd.f32 %v7221, %v7227
      %v7236 = vadd.f32 %v7222, %v7227
      %v7237 = vld [vmem:[%s61] sm:$0x1]
      %v7238 = vld [vmem:[%s63] sm:$0x1]
      %v7239 = vsel %vm1158, %v7229, 0.0
      %7240 = vadd.xlane.f32.xlu0 %v7239
      %v7241 = vpop.xlane.xlu0 %7240
      %v7242 = vsel %vm1158, %v7230, 0.0
      %7243 = vadd.xlane.f32.xlu0 %v7242
      %v7244 = vpop.xlane.xlu0 %7243
      %v7245 = vsel %vm1158, %v7231, 0.0
      %7246 = vadd.xlane.f32.xlu0 %v7245
      %v7247 = vpop.xlane.xlu0 %7246
      %v7248 = vsel %vm1158, %v7232, 0.0
      %7249 = vadd.xlane.f32.xlu0 %v7248
      %v7250 = vpop.xlane.xlu0 %7249
      %v7251 = vsel %vm1158, %v7233, 0.0
      %7252 = vadd.xlane.f32.xlu0 %v7251
      %v7253 = vpop.xlane.xlu0 %7252
      %v7254 = vsel %vm1158, %v7234, 0.0
      %7255 = vadd.xlane.f32.xlu0 %v7254
      %v7256 = vpop.xlane.xlu0 %7255
      %v7257 = vsel %vm1158, %v7235, 0.0
      %7258 = vadd.xlane.f32.xlu0 %v7257
      %v7259 = vpop.xlane.xlu0 %7258
      %v7260 = vsel %vm1158, %v7236, 0.0
      %7261 = vadd.xlane.f32.xlu0 %v7260
      %v7262 = vpop.xlane.xlu0 %7261
      %v7263 = vmul.f32 %v7241, %v1183
      %v7264 = vmul.f32 %v7244, %v1183
      %v7265 = vmul.f32 %v7247, %v1183
      %v7266 = vmul.f32 %v7250, %v1183
      %v7267 = vmul.f32 %v7253, %v1183
      %v7268 = vmul.f32 %v7256, %v1183
      %v7269 = vmul.f32 %v7259, %v1183
      %v7270 = vmul.f32 %v7262, %v1183
      %v7271 = vsub.f32 %v7229, %v7263
      %v7272 = vsub.f32 %v7230, %v7264
      %v7273 = vsub.f32 %v7231, %v7265
      %v7274 = vsub.f32 %v7232, %v7266
      %v7275 = vsub.f32 %v7233, %v7267
      %v7276 = vsub.f32 %v7234, %v7268
      %v7277 = vsub.f32 %v7235, %v7269
      %v7278 = vsub.f32 %v7236, %v7270
      %v7279 = vmul.f32 %v7271, %v7271
      %v7280 = vmul.f32 %v7272, %v7272
      %v7281 = vmul.f32 %v7273, %v7273
      %v7282 = vmul.f32 %v7274, %v7274
      %v7283 = vmul.f32 %v7275, %v7275
      %v7284 = vmul.f32 %v7276, %v7276
      %v7285 = vmul.f32 %v7277, %v7277
      %v7286 = vmul.f32 %v7278, %v7278
      %v7287 = vsel %vm1158, %v7279, 0.0
      %7288 = vadd.xlane.f32.xlu0 %v7287
      %v7289 = vpop.xlane.xlu0 %7288
      %v7290 = vsel %vm1158, %v7280, 0.0
      %7291 = vadd.xlane.f32.xlu0 %v7290
      %v7292 = vpop.xlane.xlu0 %7291
      %v7293 = vsel %vm1158, %v7281, 0.0
      %7294 = vadd.xlane.f32.xlu0 %v7293
      %v7295 = vpop.xlane.xlu0 %7294
      %v7296 = vsel %vm1158, %v7282, 0.0
      %7297 = vadd.xlane.f32.xlu0 %v7296
      %v7298 = vpop.xlane.xlu0 %7297
      %v7299 = vsel %vm1158, %v7283, 0.0
      %7300 = vadd.xlane.f32.xlu0 %v7299
      %v7301 = vpop.xlane.xlu0 %7300
      %v7302 = vsel %vm1158, %v7284, 0.0
      %7303 = vadd.xlane.f32.xlu0 %v7302
      %v7304 = vpop.xlane.xlu0 %7303
      %v7305 = vsel %vm1158, %v7285, 0.0
      %7306 = vadd.xlane.f32.xlu0 %v7305
      %v7307 = vpop.xlane.xlu0 %7306
      %v7308 = vsel %vm1158, %v7286, 0.0
      %7309 = vadd.xlane.f32.xlu0 %v7308
      %v7310 = vpop.xlane.xlu0 %7309
      %v7311 = vmul.f32 %v7289, %v1183
      %v7312 = vmul.f32 %v7292, %v1183
      %v7313 = vmul.f32 %v7295, %v1183
      %v7314 = vmul.f32 %v7298, %v1183
      %v7315 = vmul.f32 %v7301, %v1183
      %v7316 = vmul.f32 %v7304, %v1183
      %v7317 = vmul.f32 %v7307, %v1183
      %v7318 = vmul.f32 %v7310, %v1183
      %v7319 = vadd.f32 %v7311, 1e-05
      %v7320 = vadd.f32 %v7312, 1e-05
      %v7321 = vadd.f32 %v7313, 1e-05
      %v7322 = vadd.f32 %v7314, 1e-05
      %v7323 = vadd.f32 %v7315, 1e-05
      %v7324 = vadd.f32 %v7316, 1e-05
      %v7325 = vadd.f32 %v7317, 1e-05
      %v7326 = vadd.f32 %v7318, 1e-05
      %v7327 = vrsqrt.pop %v7319
      %v7328 = vrsqrt.pop %v7320
      %v7329 = vrsqrt.pop %v7321
      %v7330 = vrsqrt.pop %v7322
      %v7331 = vrsqrt.pop %v7323
      %v7332 = vrsqrt.pop %v7324
      %v7333 = vrsqrt.pop %v7325
      %v7334 = vrsqrt.pop %v7326
      %v7335 = vmul.f32 %v7271, %v7327
      %v7336 = vmul.f32 %v7272, %v7328
      %v7337 = vmul.f32 %v7273, %v7329
      %v7338 = vmul.f32 %v7274, %v7330
      %v7339 = vmul.f32 %v7275, %v7331
      %v7340 = vmul.f32 %v7276, %v7332
      %v7341 = vmul.f32 %v7277, %v7333
      %v7342 = vmul.f32 %v7278, %v7334
      %v7344 = vlaneseq
      %v7345 = vshrl.u32 %v7344, 7
      %v7346 = vsub.s32 0, %v7345
      %v7347 = vrot.slane %v7237, %v7346
      %v7349 = vmul.f32 %v7335, %v7347
      %v7350 = vmul.f32 %v7336, %v7347
      %v7351 = vmul.f32 %v7337, %v7347
      %v7352 = vmul.f32 %v7338, %v7347
      %v7353 = vmul.f32 %v7339, %v7347
      %v7354 = vmul.f32 %v7340, %v7347
      %v7355 = vmul.f32 %v7341, %v7347
      %v7356 = vmul.f32 %v7342, %v7347
      %v7358 = vlaneseq
      %v7359 = vshrl.u32 %v7358, 7
      %v7360 = vsub.s32 0, %v7359
      %v7361 = vrot.slane %v7238, %v7360
      %v7363 = vadd.f32 %v7349, %v7361
      %v7364 = vadd.f32 %v7350, %v7361
      %v7365 = vadd.f32 %v7351, %v7361
      %v7366 = vadd.f32 %v7352, %v7361
      %v7367 = vadd.f32 %v7353, %v7361
      %v7368 = vadd.f32 %v7354, %v7361
      %v7369 = vadd.f32 %v7355, %v7361
      %v7370 = vadd.f32 %v7356, %v7361
      %7371 = vst.msk [vmem:[%s986] sm:$0xff] %vm1158, %v7363
      %7372 = vst.msk [vmem:[%s986 + $0x8] sm:$0xff] %vm1158, %v7364
      %7373 = vst.msk [vmem:[%s986 + $0x10] sm:$0xff] %vm1158, %v7365
      %7374 = vst.msk [vmem:[%s986 + $0x18] sm:$0xff] %vm1158, %v7366
      %7375 = vst.msk [vmem:[%s986 + $0x20] sm:$0xff] %vm1158, %v7367
      %7376 = vst.msk [vmem:[%s986 + $0x28] sm:$0xff] %vm1158, %v7368
      %7377 = vst.msk [vmem:[%s986 + $0x30] sm:$0xff] %vm1158, %v7369
      %7378 = vst.msk [vmem:[%s986 + $0x38] sm:$0xff] %vm1158, %v7370
      %p7379 = scmp.lt.s32.totalorder %s76, 1
      %s7380 = scalar_select %p7379, %s76, 1
      %s7381 = smul.addr %s7380, 8
      %s7382 = smul.addr %s7381, 8
      %s7383 = scalar_lea.vmem %s65, %s7382
      // Predicated region
      $region149: #{teacher_forward.1} parent=147 // pred_check
        %p7384 = pneg %p771
      $region150: #{teacher_forward.1} parent=147 // pred_check_branch
        %7386 = sbr.rel (%p7384) target = $region152
      $region151: #{teacher_forward.1} parent=147 // pred_region
        _
      $region152: #{teacher_forward.1} parent=147 // pred_fallthru
        _
    $region148: #{teacher_forward.1} parent=5 // pred_fallthru
      _
    %p7387 = scmp.le.s32.totalorder 2, %s71
    // Predicated region
    $region153: #{teacher_forward.1} parent=5 // pred_check
      %p7388 = pneg %p7387
    $region154: #{teacher_forward.1} parent=5 // pred_check_branch
      %7390 = sbr.rel (%p7388) target = $region156
    $region155: #{teacher_forward.1} parent=5 // pred_region
      %s7391 = ssub.s32 %s71, 2
      // Predicated region
      $region157: #{teacher_forward.1} parent=155 // pred_check
        %p7392 = pneg %p777
      $region158: #{teacher_forward.1} parent=155 // pred_check_branch
        %7394 = sbr.rel (%p7392) target = $region160
      $region159: #{teacher_forward.1} parent=155 // pred_region
        %p7395 = scmp.lt.s32.totalorder %s77, 1
        %s7396 = scalar_select %p7395, %s77, 1
        %s7397 = smul.addr %s7396, 8
        %s7398 = smul.addr %s7397, 8
        %s7399 = scalar_lea.vmem %s65, %s7398
      $region160: #{teacher_forward.1} parent=155 // pred_fallthru
        _
    $region156: #{teacher_forward.1} parent=5 // pred_fallthru
      _
  $region6: #{teacher_forward.1} parent=0 // loop_footer
    %s75 = sadd.s32 1, %s71
  $region7: #{teacher_forward.1} parent=0 // loop_footer_branch
    %70 = sbr.rel target = $region3
  $region8: #{teacher_forward.1} parent=0 // loop_exit
    _

</llo_original>
